<compile_context>
chip_gen: v5e
topology: v5e:2x2
jax: 0.10.0
libtpu: 0.0.40
codegen_flags: <defaults>
</compile_context>

<pallas_src>
import jax
import jax.numpy as jnp
from jax import lax
from jax.experimental import pallas as pl
from jax.experimental.pallas import tpu as pltpu
import numpy as np


# Padded lane widths (lane-dense layouts).
N1 = 256    # conv1 stage columns per parity half: 20 ch * 12 pooled width = 240 -> 256
N2 = 256    # conv2 stage columns per parity half: 50 ch *  4 pooled width = 200 -> 256
NF1 = 512   # fc1 width: 500 -> 512
NF2 = 128   # fc2 width:  10 -> 128


# ----------------------------- fused Pallas kernel ---------------------------

def _lenet_kernel(x_ref, w1_ref, b1_ref, w2_ref, b2_ref,
                  wf1_ref, bf1_ref, wf2_ref, bf2_ref,
                  o_ref,
                  c1_ref, p1_ref, c2_ref, q0_ref, q1_ref, q2_ref, q3_ref):
    f32 = jnp.float32
    TB = x_ref.shape[0]                      # images per grid step
    q_refs = (q0_ref, q1_ref, q2_ref, q3_ref)

    for tb in range(TB):
        # ---- conv1 (1->20, 5x5) + bias + ReLU + 2x2 max-pool -----------------
        # even/odd pooled-width outputs come from the two 256-lane halves of a
        # single 512-lane matmul per kernel row.
        acc1 = jnp.zeros((24, 2 * N1), f32)
        for kh in range(5):
            acc1 = acc1 + jnp.dot(x_ref[tb, kh:kh + 24, :], w1_ref[kh],
                                  preferred_element_type=f32)
        b1 = b1_ref[...]
        c1_ref[...] = jnp.maximum(jnp.maximum(acc1[:, :N1] + b1, 0.0),
                                  jnp.maximum(acc1[:, N1:] + b1, 0.0))   # width-pooled [24, N1]
        for p in range(12):                                              # height pool -> [12, N1]
            p1_ref[p:p + 1, :] = jnp.maximum(c1_ref[2 * p:2 * p + 1, :],
                                             c1_ref[2 * p + 1:2 * p + 2, :])

        # ---- conv2 (20->50, 5x5) + bias + ReLU + 2x2 max-pool ----------------
        acc2 = jnp.zeros((8, 2 * N2), f32)
        for kh in range(5):
            acc2 = acc2 + jnp.dot(p1_ref[kh:kh + 8, :], w2_ref[kh],
                                  preferred_element_type=f32)
        b2 = b2_ref[...]
        c2_ref[...] = jnp.maximum(jnp.maximum(acc2[:, :N2] + b2, 0.0),
                                  jnp.maximum(acc2[:, N2:] + b2, 0.0))   # width-pooled [8, N2]
        for p in range(4):                     # height pool, scattered per pooled row / image
            q_refs[p][tb:tb + 1, :] = jnp.maximum(c2_ref[2 * p:2 * p + 1, :],
                                                  c2_ref[2 * p + 1:2 * p + 2, :])

    # ---- fc1 (800->500) + ReLU, batched across the TB-image tile -------------
    # The PyTorch NCHW flatten permutation is folded into wf1 (one matrix per
    # pooled conv2 row).
    fc1 = bf1_ref[...]
    for p in range(4):
        fc1 = fc1 + jnp.dot(q_refs[p][...], wf1_ref[p], preferred_element_type=f32)
    fc1 = jnp.maximum(fc1, 0.0)                                          # [TB, NF1]

    # ---- fc2 (500->10), padded to 128 lanes, batched --------------------------
    o_ref[...] = jnp.dot(fc1, wf2_ref[...], preferred_element_type=f32) + bf2_ref[...]


# ----------------------------- parameter preparation -------------------------

def prepare_params(params):
    """Fold the convs into Toeplitz-along-width matrices (even|odd pooled-width
    halves concatenated along lanes), tile the biases, fold the NCHW flatten +
    transposes into the FC weights, zero-pad everything to lane-dense widths.
    Pure host-side prep (runs once)."""
    w1, b1, w2, b2, wfc1, bfc1, wfc2, bfc2 = [np.asarray(p, np.float32) for p in params]
    C1, C2 = 20, 50          # conv output channels
    PW1, PW2 = 12, 4         # pooled output widths

    # conv1: W1[kh][w, co*12 + j]        = w1[co, 0, kh, w - 2j]      (even ow = 2j)
    #        W1[kh][w, N1 + co*12 + j]   = w1[co, 0, kh, w - 2j - 1]  (odd  ow = 2j+1)
    W1 = np.zeros((5, 28, 2 * N1), np.float32)
    for kh in range(5):
        for kw in range(5):
            for j in range(PW1):
                cols = np.arange(C1) * PW1 + j
                W1[kh, 2 * j + kw, cols] = w1[:, 0, kh, kw]
                W1[kh, 2 * j + 1 + kw, N1 + cols] = w1[:, 0, kh, kw]
    b1t = np.zeros((1, N1), np.float32)
    b1t[0, :C1 * PW1] = np.repeat(b1, PW1)

    # conv2: W2[kh][c*12 + w, co*4 + j]      = w2[co, c, kh, w - 2j]      (even)
    #        W2[kh][c*12 + w, N2 + co*4 + j] = w2[co, c, kh, w - 2j - 1]  (odd)
    W2 = np.zeros((5, N1, 2 * N2), np.float32)
    for kh in range(5):
        for kw in range(5):
            for j in range(PW2):
                rows_e = np.arange(C1) * PW1 + 2 * j + kw
                rows_o = np.arange(C1) * PW1 + 2 * j + 1 + kw
                cols = np.arange(C2) * PW2 + j
                blk = w2[:, :, kh, kw].T                     # [c_in=20, c_out=50]
                W2[kh, rows_e[:, None], cols[None, :]] = blk
                W2[kh, rows_o[:, None], N2 + cols[None, :]] = blk
    b2t = np.zeros((1, N2), np.float32)
    b2t[0, :C2 * PW2] = np.repeat(b2, PW2)

    # fc1: PyTorch flatten index is co*16 + h*4 + w; split per pooled row h so
    # the kernel never reshapes: wf1[h][co*4 + w, n] = wfc1[n, co*16 + h*4 + w]
    wf1 = np.zeros((4, N2, NF1), np.float32)
    wfc1_r = wfc1.reshape(500, C2, 4, 4)                     # [n, co, h, w]
    for h in range(4):
        blk = np.transpose(wfc1_r[:, :, h, :], (1, 2, 0)).reshape(C2 * 4, 500)
        wf1[h, :C2 * 4, :500] = blk
    bf1t = np.zeros((1, NF1), np.float32)
    bf1t[0, :500] = bfc1

    # fc2 (pre-transposed, padded to 128 output lanes)
    wf2 = np.zeros((NF1, NF2), np.float32)
    wf2[:500, :10] = wfc2.T
    bf2t = np.zeros((1, NF2), np.float32)
    bf2t[0, :10] = bfc2

    return tuple(jnp.asarray(a) for a in (W1, b1t, W2, b2t, wf1, bf1t, wf2, bf2t))


# ----------------------------- wrapper ----------------------------------------

def lenet_forward(x_nchw, prep):
    W1, b1t, W2, b2t, wf1, bf1t, wf2, bf2t = prep
    B = x_nchw.shape[0]
    assert x_nchw.shape[1:] == (1, 28, 28)
    x = x_nchw.reshape(B, 28, 28).astype(jnp.float32)

    # Batch tile: full batch in one step for small B, 8 images per step otherwise.
    TB = 8 if B >= 8 else B
    Bp = -(-B // TB) * TB
    if Bp != B:
        x = jnp.concatenate([x, jnp.zeros((Bp - B, 28, 28), jnp.float32)], axis=0)

    def const3(shape):
        return pl.BlockSpec(shape, lambda b: (0, 0, 0))

    def const2(shape):
        return pl.BlockSpec(shape, lambda b: (0, 0))

    out = pl.pallas_call(
        _lenet_kernel,
        out_shape=jax.ShapeDtypeStruct((Bp, NF2), jnp.float32),
        grid=(Bp // TB,),
        in_specs=[
            pl.BlockSpec((TB, 28, 28), lambda b: (b, 0, 0)),  # image tile
            const3((5, 28, 2 * N1)),                          # conv1 Toeplitz (even|odd)
            const2((1, N1)),                                  # conv1 bias, tiled
            const3((5, N1, 2 * N2)),                          # conv2 Toeplitz (even|odd)
            const2((1, N2)),                                  # conv2 bias, tiled
            const3((4, N2, NF1)),                             # fc1 (per pooled conv2 row)
            const2((1, NF1)),                                 # fc1 bias
            const2((NF1, NF2)),                               # fc2
            const2((1, NF2)),                                 # fc2 bias
        ],
        out_specs=pl.BlockSpec((TB, NF2), lambda b: (b, 0)),
        scratch_shapes=[
            pltpu.VMEM((24, N1), jnp.float32),                # conv1 width-pooled
            pltpu.VMEM((12, N1), jnp.float32),                # pool1 (conv2 input)
            pltpu.VMEM((8, N2), jnp.float32),                 # conv2 width-pooled
        ] + [pltpu.VMEM((TB, N2), jnp.float32) for _ in range(4)],  # pooled conv2 rows, batched
        compiler_params=pltpu.CompilerParams(
            dimension_semantics=("parallel",),
            vmem_limit_bytes=32 * 1024 * 1024),
    )(x, W1, b1t, W2, b2t, wf1, bf1t, wf2, bf2t)
    return out[:B, :10]


# ----------------------------- pure-JAX reference -----------------------------

def lenet_reference(x_nchw, params):
    w1, b1, w2, b2, wfc1, bfc1, wfc2, bfc2 = params
    hp = lax.Precision.HIGHEST

    def conv(x, w, b):
        y = lax.conv_general_dilated(
            x, w, window_strides=(1, 1), padding="VALID",
            dimension_numbers=("NCHW", "OIHW", "NCHW"), precision=hp)
        return jnp.maximum(y + b[None, :, None, None], 0.0)

    def pool(x):
        return lax.reduce_window(x, -jnp.inf, lax.max,
                                 (1, 1, 2, 2), (1, 1, 2, 2), "VALID")

    x = pool(conv(x_nchw, w1, b1))
    x = pool(conv(x, w2, b2))
    x = x.reshape(x.shape[0], -1)
    x = jnp.maximum(jnp.dot(x, wfc1.T, precision=hp) + bfc1, 0.0)
    return jnp.dot(x, wfc2.T, precision=hp) + bfc2


# ----------------------------- main -------------------------------------------

if __name__ == "__main__":
    key = jax.random.PRNGKey(0)
    keys = jax.random.split(key, 9)

    # Deterministic synthetic parameters (PyTorch shape conventions).
    w_conv1 = jax.random.normal(keys[0], (20, 1, 5, 5), jnp.float32) * 0.1
    b_conv1 = jax.random.normal(keys[1], (20,), jnp.float32) * 0.1
    w_conv2 = jax.random.normal(keys[2], (50, 20, 5, 5), jnp.float32) * 0.05
    b_conv2 = jax.random.normal(keys[3], (50,), jnp.float32) * 0.05
    w_fc1 = jax.random.normal(keys[4], (500, 800), jnp.float32) * 0.03
    b_fc1 = jax.random.normal(keys[5], (500,), jnp.float32) * 0.03
    w_fc2 = jax.random.normal(keys[6], (10, 500), jnp.float32) * 0.03
    b_fc2 = jax.random.normal(keys[7], (10,), jnp.float32) * 0.03
    params = (w_conv1, b_conv1, w_conv2, b_conv2, w_fc1, b_fc1, w_fc2, b_fc2)

    # The 800-wide flatten in the module implies 1x28x28 inputs.
    x = jax.random.normal(keys[8], (2, 1, 28, 28), jnp.float32)

    prep = prepare_params(params)
    out = jax.block_until_ready(lenet_forward(x, prep))
    assert out.shape == (2, 10)

    ref = jax.block_until_ready(lenet_reference(x, params))
    if not np.allclose(np.asarray(out), np.asarray(ref), rtol=2e-3, atol=2e-3):
        raise AssertionError("Pallas LeNet output does not match reference")

    print("KERNEL_OK")
</pallas_src>

<mosaic_0001>
module attributes {stable_mosaic.version = 11 : i64} {
  func.func @_lenet_kernel(%arg0: i32, %arg1: memref<2x28x28xf32, #tpu.memory_space<vmem>>, %arg2: memref<5x28x512xf32, #tpu.memory_space<vmem>>, %arg3: memref<1x256xf32, #tpu.memory_space<vmem>>, %arg4: memref<5x256x512xf32, #tpu.memory_space<vmem>>, %arg5: memref<1x256xf32, #tpu.memory_space<vmem>>, %arg6: memref<4x256x512xf32, #tpu.memory_space<vmem>>, %arg7: memref<1x512xf32, #tpu.memory_space<vmem>>, %arg8: memref<512x128xf32, #tpu.memory_space<vmem>>, %arg9: memref<1x128xf32, #tpu.memory_space<vmem>>, %arg10: memref<2x128xf32, #tpu.memory_space<vmem>>, %arg11: memref<24x256xf32, #tpu.memory_space<vmem>>, %arg12: memref<12x256xf32, #tpu.memory_space<vmem>>, %arg13: memref<8x256xf32, #tpu.memory_space<vmem>>, %arg14: memref<2x256xf32, #tpu.memory_space<vmem>>, %arg15: memref<2x256xf32, #tpu.memory_space<vmem>>, %arg16: memref<2x256xf32, #tpu.memory_space<vmem>>, %arg17: memref<2x256xf32, #tpu.memory_space<vmem>>) attributes {dimension_semantics = [#tpu.dimension_semantics<parallel>], iteration_bounds = array<i64: 1>, scalar_prefetch = 0 : i64, scratch_operands = 7 : i64, tpu.core_type = #tpu.core_type<tc>, window_params = [{transform_indices = @transform_0, window_bounds = array<i64: 2, 28, 28>}, {pipeline_mode = #tpu.pipeline_mode<synchronous>, transform_indices = @transform_1, window_bounds = array<i64: 5, 28, 512>}, {pipeline_mode = #tpu.pipeline_mode<synchronous>, transform_indices = @transform_2, window_bounds = array<i64: 1, 256>}, {pipeline_mode = #tpu.pipeline_mode<synchronous>, transform_indices = @transform_3, window_bounds = array<i64: 5, 256, 512>}, {pipeline_mode = #tpu.pipeline_mode<synchronous>, transform_indices = @transform_4, window_bounds = array<i64: 1, 256>}, {pipeline_mode = #tpu.pipeline_mode<synchronous>, transform_indices = @transform_5, window_bounds = array<i64: 4, 256, 512>}, {pipeline_mode = #tpu.pipeline_mode<synchronous>, transform_indices = @transform_6, window_bounds = array<i64: 1, 512>}, {pipeline_mode = #tpu.pipeline_mode<synchronous>, transform_indices = @transform_7, window_bounds = array<i64: 512, 128>}, {pipeline_mode = #tpu.pipeline_mode<synchronous>, transform_indices = @transform_8, window_bounds = array<i64: 1, 128>}, {transform_indices = @transform_9, window_bounds = array<i64: 2, 128>}]} {
    %cst = arith.constant 0.000000e+00 : f32
    %0 = vector.broadcast %cst : f32 to vector<24x512xf32>
    %c0 = arith.constant 0 : index
    %c0_0 = arith.constant 0 : index
    %c0_1 = arith.constant 0 : index
    %1 = vector.load %arg1[%c0, %c0_0, %c0_1] : memref<2x28x28xf32, #tpu.memory_space<vmem>>, vector<1x24x28xf32>
    %2 = vector.shape_cast %1 : vector<1x24x28xf32> to vector<24x28xf32>
    %c0_2 = arith.constant 0 : index
    %c0_3 = arith.constant 0 : index
    %c0_4 = arith.constant 0 : index
    %3 = vector.load %arg2[%c0_2, %c0_3, %c0_4] : memref<5x28x512xf32, #tpu.memory_space<vmem>>, vector<1x28x512xf32>
    %4 = vector.shape_cast %3 : vector<1x28x512xf32> to vector<28x512xf32>
    %cst_5 = arith.constant dense<0.000000e+00> : vector<24x512xf32>
    %5 = tpu.matmul %2, %4, %cst_5 {dimension_numbers = #tpu.dot_dimension_numbers<[1], [0], [0], [1], [0, 0, 1, 1], [], []>} : vector<24x28xf32>, vector<28x512xf32>, vector<24x512xf32> -> vector<24x512xf32>
    %6 = arith.addf %0, %5 : vector<24x512xf32>
    %c0_6 = arith.constant 0 : index
    %c1 = arith.constant 1 : index
    %c0_7 = arith.constant 0 : index
    %7 = vector.load %arg1[%c0_6, %c1, %c0_7] : memref<2x28x28xf32, #tpu.memory_space<vmem>>, vector<1x24x28xf32>
    %8 = vector.shape_cast %7 : vector<1x24x28xf32> to vector<24x28xf32>
    %c1_8 = arith.constant 1 : index
    %c0_9 = arith.constant 0 : index
    %c0_10 = arith.constant 0 : index
    %9 = vector.load %arg2[%c1_8, %c0_9, %c0_10] : memref<5x28x512xf32, #tpu.memory_space<vmem>>, vector<1x28x512xf32>
    %10 = vector.shape_cast %9 : vector<1x28x512xf32> to vector<28x512xf32>
    %cst_11 = arith.constant dense<0.000000e+00> : vector<24x512xf32>
    %11 = tpu.matmul %8, %10, %cst_11 {dimension_numbers = #tpu.dot_dimension_numbers<[1], [0], [0], [1], [0, 0, 1, 1], [], []>} : vector<24x28xf32>, vector<28x512xf32>, vector<24x512xf32> -> vector<24x512xf32>
    %12 = arith.addf %6, %11 : vector<24x512xf32>
    %c0_12 = arith.constant 0 : index
    %c2 = arith.constant 2 : index
    %c0_13 = arith.constant 0 : index
    %13 = vector.load %arg1[%c0_12, %c2, %c0_13] : memref<2x28x28xf32, #tpu.memory_space<vmem>>, vector<1x24x28xf32>
    %14 = vector.shape_cast %13 : vector<1x24x28xf32> to vector<24x28xf32>
    %c2_14 = arith.constant 2 : index
    %c0_15 = arith.constant 0 : index
    %c0_16 = arith.constant 0 : index
    %15 = vector.load %arg2[%c2_14, %c0_15, %c0_16] : memref<5x28x512xf32, #tpu.memory_space<vmem>>, vector<1x28x512xf32>
    %16 = vector.shape_cast %15 : vector<1x28x512xf32> to vector<28x512xf32>
    %cst_17 = arith.constant dense<0.000000e+00> : vector<24x512xf32>
    %17 = tpu.matmul %14, %16, %cst_17 {dimension_numbers = #tpu.dot_dimension_numbers<[1], [0], [0], [1], [0, 0, 1, 1], [], []>} : vector<24x28xf32>, vector<28x512xf32>, vector<24x512xf32> -> vector<24x512xf32>
    %18 = arith.addf %12, %17 : vector<24x512xf32>
    %c0_18 = arith.constant 0 : index
    %c3 = arith.constant 3 : index
    %c0_19 = arith.constant 0 : index
    %19 = vector.load %arg1[%c0_18, %c3, %c0_19] : memref<2x28x28xf32, #tpu.memory_space<vmem>>, vector<1x24x28xf32>
    %20 = vector.shape_cast %19 : vector<1x24x28xf32> to vector<24x28xf32>
    %c3_20 = arith.constant 3 : index
    %c0_21 = arith.constant 0 : index
    %c0_22 = arith.constant 0 : index
    %21 = vector.load %arg2[%c3_20, %c0_21, %c0_22] : memref<5x28x512xf32, #tpu.memory_space<vmem>>, vector<1x28x512xf32>
    %22 = vector.shape_cast %21 : vector<1x28x512xf32> to vector<28x512xf32>
    %cst_23 = arith.constant dense<0.000000e+00> : vector<24x512xf32>
    %23 = tpu.matmul %20, %22, %cst_23 {dimension_numbers = #tpu.dot_dimension_numbers<[1], [0], [0], [1], [0, 0, 1, 1], [], []>} : vector<24x28xf32>, vector<28x512xf32>, vector<24x512xf32> -> vector<24x512xf32>
    %24 = arith.addf %18, %23 : vector<24x512xf32>
    %c0_24 = arith.constant 0 : index
    %c4 = arith.constant 4 : index
    %c0_25 = arith.constant 0 : index
    %25 = vector.load %arg1[%c0_24, %c4, %c0_25] : memref<2x28x28xf32, #tpu.memory_space<vmem>>, vector<1x24x28xf32>
    %26 = vector.shape_cast %25 : vector<1x24x28xf32> to vector<24x28xf32>
    %c4_26 = arith.constant 4 : index
    %c0_27 = arith.constant 0 : index
    %c0_28 = arith.constant 0 : index
    %27 = vector.load %arg2[%c4_26, %c0_27, %c0_28] : memref<5x28x512xf32, #tpu.memory_space<vmem>>, vector<1x28x512xf32>
    %28 = vector.shape_cast %27 : vector<1x28x512xf32> to vector<28x512xf32>
    %cst_29 = arith.constant dense<0.000000e+00> : vector<24x512xf32>
    %29 = tpu.matmul %26, %28, %cst_29 {dimension_numbers = #tpu.dot_dimension_numbers<[1], [0], [0], [1], [0, 0, 1, 1], [], []>} : vector<24x28xf32>, vector<28x512xf32>, vector<24x512xf32> -> vector<24x512xf32>
    %30 = arith.addf %24, %29 : vector<24x512xf32>
    %c0_30 = arith.constant 0 : index
    %c0_31 = arith.constant 0 : index
    %31 = vector.load %arg3[%c0_30, %c0_31] : memref<1x256xf32, #tpu.memory_space<vmem>>, vector<1x256xf32>
    %32 = vector.extract_strided_slice %30 {offsets = [0, 0], sizes = [24, 256], strides = [1, 1]} : vector<24x512xf32> to vector<24x256xf32>
    %33 = vector.broadcast %31 : vector<1x256xf32> to vector<24x256xf32>
    %34 = arith.addf %32, %33 : vector<24x256xf32>
    %cst_32 = arith.constant 0.000000e+00 : f32
    %35 = vector.broadcast %cst_32 : f32 to vector<24x256xf32>
    %36 = arith.maximumf %34, %35 : vector<24x256xf32>
    %37 = vector.extract_strided_slice %30 {offsets = [0, 256], sizes = [24, 256], strides = [1, 1]} : vector<24x512xf32> to vector<24x256xf32>
    %38 = vector.broadcast %31 : vector<1x256xf32> to vector<24x256xf32>
    %39 = arith.addf %37, %38 : vector<24x256xf32>
    %cst_33 = arith.constant 0.000000e+00 : f32
    %40 = vector.broadcast %cst_33 : f32 to vector<24x256xf32>
    %41 = arith.maximumf %39, %40 : vector<24x256xf32>
    %42 = arith.maximumf %36, %41 : vector<24x256xf32>
    %c0_34 = arith.constant 0 : index
    %c0_35 = arith.constant 0 : index
    %43 = vector.load %arg11[%c0_34, %c0_35] : memref<24x256xf32, #tpu.memory_space<vmem>>, vector<24x256xf32>
    tpu.vector_store %arg11[%c0_34, %c0_35], %42 {strides = array<i32>} : memref<24x256xf32, #tpu.memory_space<vmem>>, vector<24x256xf32>,
    %c0_36 = arith.constant 0 : index
    %c0_37 = arith.constant 0 : index
    %44 = vector.load %arg11[%c0_36, %c0_37] : memref<24x256xf32, #tpu.memory_space<vmem>>, vector<1x256xf32>
    %c1_38 = arith.constant 1 : index
    %c0_39 = arith.constant 0 : index
    %45 = vector.load %arg11[%c1_38, %c0_39] : memref<24x256xf32, #tpu.memory_space<vmem>>, vector<1x256xf32>
    %46 = arith.maximumf %44, %45 : vector<1x256xf32>
    %c0_40 = arith.constant 0 : index
    %c0_41 = arith.constant 0 : index
    %47 = vector.load %arg12[%c0_40, %c0_41] : memref<12x256xf32, #tpu.memory_space<vmem>>, vector<1x256xf32>
    tpu.vector_store %arg12[%c0_40, %c0_41], %46 {strides = array<i32>} : memref<12x256xf32, #tpu.memory_space<vmem>>, vector<1x256xf32>,
    %c2_42 = arith.constant 2 : index
    %c0_43 = arith.constant 0 : index
    %48 = vector.load %arg11[%c2_42, %c0_43] : memref<24x256xf32, #tpu.memory_space<vmem>>, vector<1x256xf32>
    %c3_44 = arith.constant 3 : index
    %c0_45 = arith.constant 0 : index
    %49 = vector.load %arg11[%c3_44, %c0_45] : memref<24x256xf32, #tpu.memory_space<vmem>>, vector<1x256xf32>
    %50 = arith.maximumf %48, %49 : vector<1x256xf32>
    %c1_46 = arith.constant 1 : index
    %c0_47 = arith.constant 0 : index
    %51 = vector.load %arg12[%c1_46, %c0_47] : memref<12x256xf32, #tpu.memory_space<vmem>>, vector<1x256xf32>
    tpu.vector_store %arg12[%c1_46, %c0_47], %50 {strides = array<i32>} : memref<12x256xf32, #tpu.memory_space<vmem>>, vector<1x256xf32>,
    %c4_48 = arith.constant 4 : index
    %c0_49 = arith.constant 0 : index
    %52 = vector.load %arg11[%c4_48, %c0_49] : memref<24x256xf32, #tpu.memory_space<vmem>>, vector<1x256xf32>
    %c5 = arith.constant 5 : index
    %c0_50 = arith.constant 0 : index
    %53 = vector.load %arg11[%c5, %c0_50] : memref<24x256xf32, #tpu.memory_space<vmem>>, vector<1x256xf32>
    %54 = arith.maximumf %52, %53 : vector<1x256xf32>
    %c2_51 = arith.constant 2 : index
    %c0_52 = arith.constant 0 : index
    %55 = vector.load %arg12[%c2_51, %c0_52] : memref<12x256xf32, #tpu.memory_space<vmem>>, vector<1x256xf32>
    tpu.vector_store %arg12[%c2_51, %c0_52], %54 {strides = array<i32>} : memref<12x256xf32, #tpu.memory_space<vmem>>, vector<1x256xf32>,
    %c6 = arith.constant 6 : index
    %c0_53 = arith.constant 0 : index
    %56 = vector.load %arg11[%c6, %c0_53] : memref<24x256xf32, #tpu.memory_space<vmem>>, vector<1x256xf32>
    %c7 = arith.constant 7 : index
    %c0_54 = arith.constant 0 : index
    %57 = vector.load %arg11[%c7, %c0_54] : memref<24x256xf32, #tpu.memory_space<vmem>>, vector<1x256xf32>
    %58 = arith.maximumf %56, %57 : vector<1x256xf32>
    %c3_55 = arith.constant 3 : index
    %c0_56 = arith.constant 0 : index
    %59 = vector.load %arg12[%c3_55, %c0_56] : memref<12x256xf32, #tpu.memory_space<vmem>>, vector<1x256xf32>
    tpu.vector_store %arg12[%c3_55, %c0_56], %58 {strides = array<i32>} : memref<12x256xf32, #tpu.memory_space<vmem>>, vector<1x256xf32>,
    %c8 = arith.constant 8 : index
    %c0_57 = arith.constant 0 : index
    %60 = vector.load %arg11[%c8, %c0_57] : memref<24x256xf32, #tpu.memory_space<vmem>>, vector<1x256xf32>
    %c9 = arith.constant 9 : index
    %c0_58 = arith.constant 0 : index
    %61 = vector.load %arg11[%c9, %c0_58] : memref<24x256xf32, #tpu.memory_space<vmem>>, vector<1x256xf32>
    %62 = arith.maximumf %60, %61 : vector<1x256xf32>
    %c4_59 = arith.constant 4 : index
    %c0_60 = arith.constant 0 : index
    %63 = vector.load %arg12[%c4_59, %c0_60] : memref<12x256xf32, #tpu.memory_space<vmem>>, vector<1x256xf32>
    tpu.vector_store %arg12[%c4_59, %c0_60], %62 {strides = array<i32>} : memref<12x256xf32, #tpu.memory_space<vmem>>, vector<1x256xf32>,
    %c10 = arith.constant 10 : index
    %c0_61 = arith.constant 0 : index
    %64 = vector.load %arg11[%c10, %c0_61] : memref<24x256xf32, #tpu.memory_space<vmem>>, vector<1x256xf32>
    %c11 = arith.constant 11 : index
    %c0_62 = arith.constant 0 : index
    %65 = vector.load %arg11[%c11, %c0_62] : memref<24x256xf32, #tpu.memory_space<vmem>>, vector<1x256xf32>
    %66 = arith.maximumf %64, %65 : vector<1x256xf32>
    %c5_63 = arith.constant 5 : index
    %c0_64 = arith.constant 0 : index
    %67 = vector.load %arg12[%c5_63, %c0_64] : memref<12x256xf32, #tpu.memory_space<vmem>>, vector<1x256xf32>
    tpu.vector_store %arg12[%c5_63, %c0_64], %66 {strides = array<i32>} : memref<12x256xf32, #tpu.memory_space<vmem>>, vector<1x256xf32>,
    %c12 = arith.constant 12 : index
    %c0_65 = arith.constant 0 : index
    %68 = vector.load %arg11[%c12, %c0_65] : memref<24x256xf32, #tpu.memory_space<vmem>>, vector<1x256xf32>
    %c13 = arith.constant 13 : index
    %c0_66 = arith.constant 0 : index
    %69 = vector.load %arg11[%c13, %c0_66] : memref<24x256xf32, #tpu.memory_space<vmem>>, vector<1x256xf32>
    %70 = arith.maximumf %68, %69 : vector<1x256xf32>
    %c6_67 = arith.constant 6 : index
    %c0_68 = arith.constant 0 : index
    %71 = vector.load %arg12[%c6_67, %c0_68] : memref<12x256xf32, #tpu.memory_space<vmem>>, vector<1x256xf32>
    tpu.vector_store %arg12[%c6_67, %c0_68], %70 {strides = array<i32>} : memref<12x256xf32, #tpu.memory_space<vmem>>, vector<1x256xf32>,
    %c14 = arith.constant 14 : index
    %c0_69 = arith.constant 0 : index
    %72 = vector.load %arg11[%c14, %c0_69] : memref<24x256xf32, #tpu.memory_space<vmem>>, vector<1x256xf32>
    %c15 = arith.constant 15 : index
    %c0_70 = arith.constant 0 : index
    %73 = vector.load %arg11[%c15, %c0_70] : memref<24x256xf32, #tpu.memory_space<vmem>>, vector<1x256xf32>
    %74 = arith.maximumf %72, %73 : vector<1x256xf32>
    %c7_71 = arith.constant 7 : index
    %c0_72 = arith.constant 0 : index
    %75 = vector.load %arg12[%c7_71, %c0_72] : memref<12x256xf32, #tpu.memory_space<vmem>>, vector<1x256xf32>
    tpu.vector_store %arg12[%c7_71, %c0_72], %74 {strides = array<i32>} : memref<12x256xf32, #tpu.memory_space<vmem>>, vector<1x256xf32>,
    %c16 = arith.constant 16 : index
    %c0_73 = arith.constant 0 : index
    %76 = vector.load %arg11[%c16, %c0_73] : memref<24x256xf32, #tpu.memory_space<vmem>>, vector<1x256xf32>
    %c17 = arith.constant 17 : index
    %c0_74 = arith.constant 0 : index
    %77 = vector.load %arg11[%c17, %c0_74] : memref<24x256xf32, #tpu.memory_space<vmem>>, vector<1x256xf32>
    %78 = arith.maximumf %76, %77 : vector<1x256xf32>
    %c8_75 = arith.constant 8 : index
    %c0_76 = arith.constant 0 : index
    %79 = vector.load %arg12[%c8_75, %c0_76] : memref<12x256xf32, #tpu.memory_space<vmem>>, vector<1x256xf32>
    tpu.vector_store %arg12[%c8_75, %c0_76], %78 {strides = array<i32>} : memref<12x256xf32, #tpu.memory_space<vmem>>, vector<1x256xf32>,
    %c18 = arith.constant 18 : index
    %c0_77 = arith.constant 0 : index
    %80 = vector.load %arg11[%c18, %c0_77] : memref<24x256xf32, #tpu.memory_space<vmem>>, vector<1x256xf32>
    %c19 = arith.constant 19 : index
    %c0_78 = arith.constant 0 : index
    %81 = vector.load %arg11[%c19, %c0_78] : memref<24x256xf32, #tpu.memory_space<vmem>>, vector<1x256xf32>
    %82 = arith.maximumf %80, %81 : vector<1x256xf32>
    %c9_79 = arith.constant 9 : index
    %c0_80 = arith.constant 0 : index
    %83 = vector.load %arg12[%c9_79, %c0_80] : memref<12x256xf32, #tpu.memory_space<vmem>>, vector<1x256xf32>
    tpu.vector_store %arg12[%c9_79, %c0_80], %82 {strides = array<i32>} : memref<12x256xf32, #tpu.memory_space<vmem>>, vector<1x256xf32>,
    %c20 = arith.constant 20 : index
    %c0_81 = arith.constant 0 : index
    %84 = vector.load %arg11[%c20, %c0_81] : memref<24x256xf32, #tpu.memory_space<vmem>>, vector<1x256xf32>
    %c21 = arith.constant 21 : index
    %c0_82 = arith.constant 0 : index
    %85 = vector.load %arg11[%c21, %c0_82] : memref<24x256xf32, #tpu.memory_space<vmem>>, vector<1x256xf32>
    %86 = arith.maximumf %84, %85 : vector<1x256xf32>
    %c10_83 = arith.constant 10 : index
    %c0_84 = arith.constant 0 : index
    %87 = vector.load %arg12[%c10_83, %c0_84] : memref<12x256xf32, #tpu.memory_space<vmem>>, vector<1x256xf32>
    tpu.vector_store %arg12[%c10_83, %c0_84], %86 {strides = array<i32>} : memref<12x256xf32, #tpu.memory_space<vmem>>, vector<1x256xf32>,
    %c22 = arith.constant 22 : index
    %c0_85 = arith.constant 0 : index
    %88 = vector.load %arg11[%c22, %c0_85] : memref<24x256xf32, #tpu.memory_space<vmem>>, vector<1x256xf32>
    %c23 = arith.constant 23 : index
    %c0_86 = arith.constant 0 : index
    %89 = vector.load %arg11[%c23, %c0_86] : memref<24x256xf32, #tpu.memory_space<vmem>>, vector<1x256xf32>
    %90 = arith.maximumf %88, %89 : vector<1x256xf32>
    %c11_87 = arith.constant 11 : index
    %c0_88 = arith.constant 0 : index
    %91 = vector.load %arg12[%c11_87, %c0_88] : memref<12x256xf32, #tpu.memory_space<vmem>>, vector<1x256xf32>
    tpu.vector_store %arg12[%c11_87, %c0_88], %90 {strides = array<i32>} : memref<12x256xf32, #tpu.memory_space<vmem>>, vector<1x256xf32>,
    %cst_89 = arith.constant 0.000000e+00 : f32
    %92 = vector.broadcast %cst_89 : f32 to vector<8x512xf32>
    %c0_90 = arith.constant 0 : index
    %c0_91 = arith.constant 0 : index
    %93 = vector.load %arg12[%c0_90, %c0_91] : memref<12x256xf32, #tpu.memory_space<vmem>>, vector<8x256xf32>
    %c0_92 = arith.constant 0 : index
    %c0_93 = arith.constant 0 : index
    %c0_94 = arith.constant 0 : index
    %94 = vector.load %arg4[%c0_92, %c0_93, %c0_94] : memref<5x256x512xf32, #tpu.memory_space<vmem>>, vector<1x256x512xf32>
    %95 = vector.shape_cast %94 : vector<1x256x512xf32> to vector<256x512xf32>
    %cst_95 = arith.constant dense<0.000000e+00> : vector<8x512xf32>
    %96 = tpu.matmul %93, %95, %cst_95 {dimension_numbers = #tpu.dot_dimension_numbers<[1], [0], [0], [1], [0, 0, 1, 1], [], []>} : vector<8x256xf32>, vector<256x512xf32>, vector<8x512xf32> -> vector<8x512xf32>
    %97 = arith.addf %92, %96 : vector<8x512xf32>
    %c1_96 = arith.constant 1 : index
    %c0_97 = arith.constant 0 : index
    %98 = vector.load %arg12[%c1_96, %c0_97] : memref<12x256xf32, #tpu.memory_space<vmem>>, vector<8x256xf32>
    %c1_98 = arith.constant 1 : index
    %c0_99 = arith.constant 0 : index
    %c0_100 = arith.constant 0 : index
    %99 = vector.load %arg4[%c1_98, %c0_99, %c0_100] : memref<5x256x512xf32, #tpu.memory_space<vmem>>, vector<1x256x512xf32>
    %100 = vector.shape_cast %99 : vector<1x256x512xf32> to vector<256x512xf32>
    %cst_101 = arith.constant dense<0.000000e+00> : vector<8x512xf32>
    %101 = tpu.matmul %98, %100, %cst_101 {dimension_numbers = #tpu.dot_dimension_numbers<[1], [0], [0], [1], [0, 0, 1, 1], [], []>} : vector<8x256xf32>, vector<256x512xf32>, vector<8x512xf32> -> vector<8x512xf32>
    %102 = arith.addf %97, %101 : vector<8x512xf32>
    %c2_102 = arith.constant 2 : index
    %c0_103 = arith.constant 0 : index
    %103 = vector.load %arg12[%c2_102, %c0_103] : memref<12x256xf32, #tpu.memory_space<vmem>>, vector<8x256xf32>
    %c2_104 = arith.constant 2 : index
    %c0_105 = arith.constant 0 : index
    %c0_106 = arith.constant 0 : index
    %104 = vector.load %arg4[%c2_104, %c0_105, %c0_106] : memref<5x256x512xf32, #tpu.memory_space<vmem>>, vector<1x256x512xf32>
    %105 = vector.shape_cast %104 : vector<1x256x512xf32> to vector<256x512xf32>
    %cst_107 = arith.constant dense<0.000000e+00> : vector<8x512xf32>
    %106 = tpu.matmul %103, %105, %cst_107 {dimension_numbers = #tpu.dot_dimension_numbers<[1], [0], [0], [1], [0, 0, 1, 1], [], []>} : vector<8x256xf32>, vector<256x512xf32>, vector<8x512xf32> -> vector<8x512xf32>
    %107 = arith.addf %102, %106 : vector<8x512xf32>
    %c3_108 = arith.constant 3 : index
    %c0_109 = arith.constant 0 : index
    %108 = vector.load %arg12[%c3_108, %c0_109] : memref<12x256xf32, #tpu.memory_space<vmem>>, vector<8x256xf32>
    %c3_110 = arith.constant 3 : index
    %c0_111 = arith.constant 0 : index
    %c0_112 = arith.constant 0 : index
    %109 = vector.load %arg4[%c3_110, %c0_111, %c0_112] : memref<5x256x512xf32, #tpu.memory_space<vmem>>, vector<1x256x512xf32>
    %110 = vector.shape_cast %109 : vector<1x256x512xf32> to vector<256x512xf32>
    %cst_113 = arith.constant dense<0.000000e+00> : vector<8x512xf32>
    %111 = tpu.matmul %108, %110, %cst_113 {dimension_numbers = #tpu.dot_dimension_numbers<[1], [0], [0], [1], [0, 0, 1, 1], [], []>} : vector<8x256xf32>, vector<256x512xf32>, vector<8x512xf32> -> vector<8x512xf32>
    %112 = arith.addf %107, %111 : vector<8x512xf32>
    %c4_114 = arith.constant 4 : index
    %c0_115 = arith.constant 0 : index
    %113 = vector.load %arg12[%c4_114, %c0_115] : memref<12x256xf32, #tpu.memory_space<vmem>>, vector<8x256xf32>
    %c4_116 = arith.constant 4 : index
    %c0_117 = arith.constant 0 : index
    %c0_118 = arith.constant 0 : index
    %114 = vector.load %arg4[%c4_116, %c0_117, %c0_118] : memref<5x256x512xf32, #tpu.memory_space<vmem>>, vector<1x256x512xf32>
    %115 = vector.shape_cast %114 : vector<1x256x512xf32> to vector<256x512xf32>
    %cst_119 = arith.constant dense<0.000000e+00> : vector<8x512xf32>
    %116 = tpu.matmul %113, %115, %cst_119 {dimension_numbers = #tpu.dot_dimension_numbers<[1], [0], [0], [1], [0, 0, 1, 1], [], []>} : vector<8x256xf32>, vector<256x512xf32>, vector<8x512xf32> -> vector<8x512xf32>
    %117 = arith.addf %112, %116 : vector<8x512xf32>
    %c0_120 = arith.constant 0 : index
    %c0_121 = arith.constant 0 : index
    %118 = vector.load %arg5[%c0_120, %c0_121] : memref<1x256xf32, #tpu.memory_space<vmem>>, vector<1x256xf32>
    %119 = vector.extract_strided_slice %117 {offsets = [0, 0], sizes = [8, 256], strides = [1, 1]} : vector<8x512xf32> to vector<8x256xf32>
    %120 = vector.broadcast %118 : vector<1x256xf32> to vector<8x256xf32>
    %121 = arith.addf %119, %120 : vector<8x256xf32>
    %cst_122 = arith.constant 0.000000e+00 : f32
    %122 = vector.broadcast %cst_122 : f32 to vector<8x256xf32>
    %123 = arith.maximumf %121, %122 : vector<8x256xf32>
    %124 = vector.extract_strided_slice %117 {offsets = [0, 256], sizes = [8, 256], strides = [1, 1]} : vector<8x512xf32> to vector<8x256xf32>
    %125 = vector.broadcast %118 : vector<1x256xf32> to vector<8x256xf32>
    %126 = arith.addf %124, %125 : vector<8x256xf32>
    %cst_123 = arith.constant 0.000000e+00 : f32
    %127 = vector.broadcast %cst_123 : f32 to vector<8x256xf32>
    %128 = arith.maximumf %126, %127 : vector<8x256xf32>
    %129 = arith.maximumf %123, %128 : vector<8x256xf32>
    %c0_124 = arith.constant 0 : index
    %c0_125 = arith.constant 0 : index
    %130 = vector.load %arg13[%c0_124, %c0_125] : memref<8x256xf32, #tpu.memory_space<vmem>>, vector<8x256xf32>
    tpu.vector_store %arg13[%c0_124, %c0_125], %129 {strides = array<i32>} : memref<8x256xf32, #tpu.memory_space<vmem>>, vector<8x256xf32>,
    %c0_126 = arith.constant 0 : index
    %c0_127 = arith.constant 0 : index
    %131 = vector.load %arg13[%c0_126, %c0_127] : memref<8x256xf32, #tpu.memory_space<vmem>>, vector<1x256xf32>
    %c1_128 = arith.constant 1 : index
    %c0_129 = arith.constant 0 : index
    %132 = vector.load %arg13[%c1_128, %c0_129] : memref<8x256xf32, #tpu.memory_space<vmem>>, vector<1x256xf32>
    %133 = arith.maximumf %131, %132 : vector<1x256xf32>
    %c0_130 = arith.constant 0 : index
    %c0_131 = arith.constant 0 : index
    %134 = vector.load %arg14[%c0_130, %c0_131] : memref<2x256xf32, #tpu.memory_space<vmem>>, vector<1x256xf32>
    tpu.vector_store %arg14[%c0_130, %c0_131], %133 {strides = array<i32>} : memref<2x256xf32, #tpu.memory_space<vmem>>, vector<1x256xf32>,
    %c2_132 = arith.constant 2 : index
    %c0_133 = arith.constant 0 : index
    %135 = vector.load %arg13[%c2_132, %c0_133] : memref<8x256xf32, #tpu.memory_space<vmem>>, vector<1x256xf32>
    %c3_134 = arith.constant 3 : index
    %c0_135 = arith.constant 0 : index
    %136 = vector.load %arg13[%c3_134, %c0_135] : memref<8x256xf32, #tpu.memory_space<vmem>>, vector<1x256xf32>
    %137 = arith.maximumf %135, %136 : vector<1x256xf32>
    %c0_136 = arith.constant 0 : index
    %c0_137 = arith.constant 0 : index
    %138 = vector.load %arg15[%c0_136, %c0_137] : memref<2x256xf32, #tpu.memory_space<vmem>>, vector<1x256xf32>
    tpu.vector_store %arg15[%c0_136, %c0_137], %137 {strides = array<i32>} : memref<2x256xf32, #tpu.memory_space<vmem>>, vector<1x256xf32>,
    %c4_138 = arith.constant 4 : index
    %c0_139 = arith.constant 0 : index
    %139 = vector.load %arg13[%c4_138, %c0_139] : memref<8x256xf32, #tpu.memory_space<vmem>>, vector<1x256xf32>
    %c5_140 = arith.constant 5 : index
    %c0_141 = arith.constant 0 : index
    %140 = vector.load %arg13[%c5_140, %c0_141] : memref<8x256xf32, #tpu.memory_space<vmem>>, vector<1x256xf32>
    %141 = arith.maximumf %139, %140 : vector<1x256xf32>
    %c0_142 = arith.constant 0 : index
    %c0_143 = arith.constant 0 : index
    %142 = vector.load %arg16[%c0_142, %c0_143] : memref<2x256xf32, #tpu.memory_space<vmem>>, vector<1x256xf32>
    tpu.vector_store %arg16[%c0_142, %c0_143], %141 {strides = array<i32>} : memref<2x256xf32, #tpu.memory_space<vmem>>, vector<1x256xf32>,
    %c6_144 = arith.constant 6 : index
    %c0_145 = arith.constant 0 : index
    %143 = vector.load %arg13[%c6_144, %c0_145] : memref<8x256xf32, #tpu.memory_space<vmem>>, vector<1x256xf32>
    %c7_146 = arith.constant 7 : index
    %c0_147 = arith.constant 0 : index
    %144 = vector.load %arg13[%c7_146, %c0_147] : memref<8x256xf32, #tpu.memory_space<vmem>>, vector<1x256xf32>
    %145 = arith.maximumf %143, %144 : vector<1x256xf32>
    %c0_148 = arith.constant 0 : index
    %c0_149 = arith.constant 0 : index
    %146 = vector.load %arg17[%c0_148, %c0_149] : memref<2x256xf32, #tpu.memory_space<vmem>>, vector<1x256xf32>
    tpu.vector_store %arg17[%c0_148, %c0_149], %145 {strides = array<i32>} : memref<2x256xf32, #tpu.memory_space<vmem>>, vector<1x256xf32>,
    %cst_150 = arith.constant 0.000000e+00 : f32
    %147 = vector.broadcast %cst_150 : f32 to vector<24x512xf32>
    %c1_151 = arith.constant 1 : index
    %c0_152 = arith.constant 0 : index
    %c0_153 = arith.constant 0 : index
    %148 = vector.load %arg1[%c1_151, %c0_152, %c0_153] : memref<2x28x28xf32, #tpu.memory_space<vmem>>, vector<1x24x28xf32>
    %149 = vector.shape_cast %148 : vector<1x24x28xf32> to vector<24x28xf32>
    %c0_154 = arith.constant 0 : index
    %c0_155 = arith.constant 0 : index
    %c0_156 = arith.constant 0 : index
    %150 = vector.load %arg2[%c0_154, %c0_155, %c0_156] : memref<5x28x512xf32, #tpu.memory_space<vmem>>, vector<1x28x512xf32>
    %151 = vector.shape_cast %150 : vector<1x28x512xf32> to vector<28x512xf32>
    %cst_157 = arith.constant dense<0.000000e+00> : vector<24x512xf32>
    %152 = tpu.matmul %149, %151, %cst_157 {dimension_numbers = #tpu.dot_dimension_numbers<[1], [0], [0], [1], [0, 0, 1, 1], [], []>} : vector<24x28xf32>, vector<28x512xf32>, vector<24x512xf32> -> vector<24x512xf32>
    %153 = arith.addf %147, %152 : vector<24x512xf32>
    %c1_158 = arith.constant 1 : index
    %c1_159 = arith.constant 1 : index
    %c0_160 = arith.constant 0 : index
    %154 = vector.load %arg1[%c1_158, %c1_159, %c0_160] : memref<2x28x28xf32, #tpu.memory_space<vmem>>, vector<1x24x28xf32>
    %155 = vector.shape_cast %154 : vector<1x24x28xf32> to vector<24x28xf32>
    %c1_161 = arith.constant 1 : index
    %c0_162 = arith.constant 0 : index
    %c0_163 = arith.constant 0 : index
    %156 = vector.load %arg2[%c1_161, %c0_162, %c0_163] : memref<5x28x512xf32, #tpu.memory_space<vmem>>, vector<1x28x512xf32>
    %157 = vector.shape_cast %156 : vector<1x28x512xf32> to vector<28x512xf32>
    %cst_164 = arith.constant dense<0.000000e+00> : vector<24x512xf32>
    %158 = tpu.matmul %155, %157, %cst_164 {dimension_numbers = #tpu.dot_dimension_numbers<[1], [0], [0], [1], [0, 0, 1, 1], [], []>} : vector<24x28xf32>, vector<28x512xf32>, vector<24x512xf32> -> vector<24x512xf32>
    %159 = arith.addf %153, %158 : vector<24x512xf32>
    %c1_165 = arith.constant 1 : index
    %c2_166 = arith.constant 2 : index
    %c0_167 = arith.constant 0 : index
    %160 = vector.load %arg1[%c1_165, %c2_166, %c0_167] : memref<2x28x28xf32, #tpu.memory_space<vmem>>, vector<1x24x28xf32>
    %161 = vector.shape_cast %160 : vector<1x24x28xf32> to vector<24x28xf32>
    %c2_168 = arith.constant 2 : index
    %c0_169 = arith.constant 0 : index
    %c0_170 = arith.constant 0 : index
    %162 = vector.load %arg2[%c2_168, %c0_169, %c0_170] : memref<5x28x512xf32, #tpu.memory_space<vmem>>, vector<1x28x512xf32>
    %163 = vector.shape_cast %162 : vector<1x28x512xf32> to vector<28x512xf32>
    %cst_171 = arith.constant dense<0.000000e+00> : vector<24x512xf32>
    %164 = tpu.matmul %161, %163, %cst_171 {dimension_numbers = #tpu.dot_dimension_numbers<[1], [0], [0], [1], [0, 0, 1, 1], [], []>} : vector<24x28xf32>, vector<28x512xf32>, vector<24x512xf32> -> vector<24x512xf32>
    %165 = arith.addf %159, %164 : vector<24x512xf32>
    %c1_172 = arith.constant 1 : index
    %c3_173 = arith.constant 3 : index
    %c0_174 = arith.constant 0 : index
    %166 = vector.load %arg1[%c1_172, %c3_173, %c0_174] : memref<2x28x28xf32, #tpu.memory_space<vmem>>, vector<1x24x28xf32>
    %167 = vector.shape_cast %166 : vector<1x24x28xf32> to vector<24x28xf32>
    %c3_175 = arith.constant 3 : index
    %c0_176 = arith.constant 0 : index
    %c0_177 = arith.constant 0 : index
    %168 = vector.load %arg2[%c3_175, %c0_176, %c0_177] : memref<5x28x512xf32, #tpu.memory_space<vmem>>, vector<1x28x512xf32>
    %169 = vector.shape_cast %168 : vector<1x28x512xf32> to vector<28x512xf32>
    %cst_178 = arith.constant dense<0.000000e+00> : vector<24x512xf32>
    %170 = tpu.matmul %167, %169, %cst_178 {dimension_numbers = #tpu.dot_dimension_numbers<[1], [0], [0], [1], [0, 0, 1, 1], [], []>} : vector<24x28xf32>, vector<28x512xf32>, vector<24x512xf32> -> vector<24x512xf32>
    %171 = arith.addf %165, %170 : vector<24x512xf32>
    %c1_179 = arith.constant 1 : index
    %c4_180 = arith.constant 4 : index
    %c0_181 = arith.constant 0 : index
    %172 = vector.load %arg1[%c1_179, %c4_180, %c0_181] : memref<2x28x28xf32, #tpu.memory_space<vmem>>, vector<1x24x28xf32>
    %173 = vector.shape_cast %172 : vector<1x24x28xf32> to vector<24x28xf32>
    %c4_182 = arith.constant 4 : index
    %c0_183 = arith.constant 0 : index
    %c0_184 = arith.constant 0 : index
    %174 = vector.load %arg2[%c4_182, %c0_183, %c0_184] : memref<5x28x512xf32, #tpu.memory_space<vmem>>, vector<1x28x512xf32>
    %175 = vector.shape_cast %174 : vector<1x28x512xf32> to vector<28x512xf32>
    %cst_185 = arith.constant dense<0.000000e+00> : vector<24x512xf32>
    %176 = tpu.matmul %173, %175, %cst_185 {dimension_numbers = #tpu.dot_dimension_numbers<[1], [0], [0], [1], [0, 0, 1, 1], [], []>} : vector<24x28xf32>, vector<28x512xf32>, vector<24x512xf32> -> vector<24x512xf32>
    %177 = arith.addf %171, %176 : vector<24x512xf32>
    %c0_186 = arith.constant 0 : index
    %c0_187 = arith.constant 0 : index
    %178 = vector.load %arg3[%c0_186, %c0_187] : memref<1x256xf32, #tpu.memory_space<vmem>>, vector<1x256xf32>
    %179 = vector.extract_strided_slice %177 {offsets = [0, 0], sizes = [24, 256], strides = [1, 1]} : vector<24x512xf32> to vector<24x256xf32>
    %180 = vector.broadcast %178 : vector<1x256xf32> to vector<24x256xf32>
    %181 = arith.addf %179, %180 : vector<24x256xf32>
    %cst_188 = arith.constant 0.000000e+00 : f32
    %182 = vector.broadcast %cst_188 : f32 to vector<24x256xf32>
    %183 = arith.maximumf %181, %182 : vector<24x256xf32>
    %184 = vector.extract_strided_slice %177 {offsets = [0, 256], sizes = [24, 256], strides = [1, 1]} : vector<24x512xf32> to vector<24x256xf32>
    %185 = vector.broadcast %178 : vector<1x256xf32> to vector<24x256xf32>
    %186 = arith.addf %184, %185 : vector<24x256xf32>
    %cst_189 = arith.constant 0.000000e+00 : f32
    %187 = vector.broadcast %cst_189 : f32 to vector<24x256xf32>
    %188 = arith.maximumf %186, %187 : vector<24x256xf32>
    %189 = arith.maximumf %183, %188 : vector<24x256xf32>
    %c0_190 = arith.constant 0 : index
    %c0_191 = arith.constant 0 : index
    %190 = vector.load %arg11[%c0_190, %c0_191] : memref<24x256xf32, #tpu.memory_space<vmem>>, vector<24x256xf32>
    tpu.vector_store %arg11[%c0_190, %c0_191], %189 {strides = array<i32>} : memref<24x256xf32, #tpu.memory_space<vmem>>, vector<24x256xf32>,
    %c0_192 = arith.constant 0 : index
    %c0_193 = arith.constant 0 : index
    %191 = vector.load %arg11[%c0_192, %c0_193] : memref<24x256xf32, #tpu.memory_space<vmem>>, vector<1x256xf32>
    %c1_194 = arith.constant 1 : index
    %c0_195 = arith.constant 0 : index
    %192 = vector.load %arg11[%c1_194, %c0_195] : memref<24x256xf32, #tpu.memory_space<vmem>>, vector<1x256xf32>
    %193 = arith.maximumf %191, %192 : vector<1x256xf32>
    %c0_196 = arith.constant 0 : index
    %c0_197 = arith.constant 0 : index
    %194 = vector.load %arg12[%c0_196, %c0_197] : memref<12x256xf32, #tpu.memory_space<vmem>>, vector<1x256xf32>
    tpu.vector_store %arg12[%c0_196, %c0_197], %193 {strides = array<i32>} : memref<12x256xf32, #tpu.memory_space<vmem>>, vector<1x256xf32>,
    %c2_198 = arith.constant 2 : index
    %c0_199 = arith.constant 0 : index
    %195 = vector.load %arg11[%c2_198, %c0_199] : memref<24x256xf32, #tpu.memory_space<vmem>>, vector<1x256xf32>
    %c3_200 = arith.constant 3 : index
    %c0_201 = arith.constant 0 : index
    %196 = vector.load %arg11[%c3_200, %c0_201] : memref<24x256xf32, #tpu.memory_space<vmem>>, vector<1x256xf32>
    %197 = arith.maximumf %195, %196 : vector<1x256xf32>
    %c1_202 = arith.constant 1 : index
    %c0_203 = arith.constant 0 : index
    %198 = vector.load %arg12[%c1_202, %c0_203] : memref<12x256xf32, #tpu.memory_space<vmem>>, vector<1x256xf32>
    tpu.vector_store %arg12[%c1_202, %c0_203], %197 {strides = array<i32>} : memref<12x256xf32, #tpu.memory_space<vmem>>, vector<1x256xf32>,
    %c4_204 = arith.constant 4 : index
    %c0_205 = arith.constant 0 : index
    %199 = vector.load %arg11[%c4_204, %c0_205] : memref<24x256xf32, #tpu.memory_space<vmem>>, vector<1x256xf32>
    %c5_206 = arith.constant 5 : index
    %c0_207 = arith.constant 0 : index
    %200 = vector.load %arg11[%c5_206, %c0_207] : memref<24x256xf32, #tpu.memory_space<vmem>>, vector<1x256xf32>
    %201 = arith.maximumf %199, %200 : vector<1x256xf32>
    %c2_208 = arith.constant 2 : index
    %c0_209 = arith.constant 0 : index
    %202 = vector.load %arg12[%c2_208, %c0_209] : memref<12x256xf32, #tpu.memory_space<vmem>>, vector<1x256xf32>
    tpu.vector_store %arg12[%c2_208, %c0_209], %201 {strides = array<i32>} : memref<12x256xf32, #tpu.memory_space<vmem>>, vector<1x256xf32>,
    %c6_210 = arith.constant 6 : index
    %c0_211 = arith.constant 0 : index
    %203 = vector.load %arg11[%c6_210, %c0_211] : memref<24x256xf32, #tpu.memory_space<vmem>>, vector<1x256xf32>
    %c7_212 = arith.constant 7 : index
    %c0_213 = arith.constant 0 : index
    %204 = vector.load %arg11[%c7_212, %c0_213] : memref<24x256xf32, #tpu.memory_space<vmem>>, vector<1x256xf32>
    %205 = arith.maximumf %203, %204 : vector<1x256xf32>
    %c3_214 = arith.constant 3 : index
    %c0_215 = arith.constant 0 : index
    %206 = vector.load %arg12[%c3_214, %c0_215] : memref<12x256xf32, #tpu.memory_space<vmem>>, vector<1x256xf32>
    tpu.vector_store %arg12[%c3_214, %c0_215], %205 {strides = array<i32>} : memref<12x256xf32, #tpu.memory_space<vmem>>, vector<1x256xf32>,
    %c8_216 = arith.constant 8 : index
    %c0_217 = arith.constant 0 : index
    %207 = vector.load %arg11[%c8_216, %c0_217] : memref<24x256xf32, #tpu.memory_space<vmem>>, vector<1x256xf32>
    %c9_218 = arith.constant 9 : index
    %c0_219 = arith.constant 0 : index
    %208 = vector.load %arg11[%c9_218, %c0_219] : memref<24x256xf32, #tpu.memory_space<vmem>>, vector<1x256xf32>
    %209 = arith.maximumf %207, %208 : vector<1x256xf32>
    %c4_220 = arith.constant 4 : index
    %c0_221 = arith.constant 0 : index
    %210 = vector.load %arg12[%c4_220, %c0_221] : memref<12x256xf32, #tpu.memory_space<vmem>>, vector<1x256xf32>
    tpu.vector_store %arg12[%c4_220, %c0_221], %209 {strides = array<i32>} : memref<12x256xf32, #tpu.memory_space<vmem>>, vector<1x256xf32>,
    %c10_222 = arith.constant 10 : index
    %c0_223 = arith.constant 0 : index
    %211 = vector.load %arg11[%c10_222, %c0_223] : memref<24x256xf32, #tpu.memory_space<vmem>>, vector<1x256xf32>
    %c11_224 = arith.constant 11 : index
    %c0_225 = arith.constant 0 : index
    %212 = vector.load %arg11[%c11_224, %c0_225] : memref<24x256xf32, #tpu.memory_space<vmem>>, vector<1x256xf32>
    %213 = arith.maximumf %211, %212 : vector<1x256xf32>
    %c5_226 = arith.constant 5 : index
    %c0_227 = arith.constant 0 : index
    %214 = vector.load %arg12[%c5_226, %c0_227] : memref<12x256xf32, #tpu.memory_space<vmem>>, vector<1x256xf32>
    tpu.vector_store %arg12[%c5_226, %c0_227], %213 {strides = array<i32>} : memref<12x256xf32, #tpu.memory_space<vmem>>, vector<1x256xf32>,
    %c12_228 = arith.constant 12 : index
    %c0_229 = arith.constant 0 : index
    %215 = vector.load %arg11[%c12_228, %c0_229] : memref<24x256xf32, #tpu.memory_space<vmem>>, vector<1x256xf32>
    %c13_230 = arith.constant 13 : index
    %c0_231 = arith.constant 0 : index
    %216 = vector.load %arg11[%c13_230, %c0_231] : memref<24x256xf32, #tpu.memory_space<vmem>>, vector<1x256xf32>
    %217 = arith.maximumf %215, %216 : vector<1x256xf32>
    %c6_232 = arith.constant 6 : index
    %c0_233 = arith.constant 0 : index
    %218 = vector.load %arg12[%c6_232, %c0_233] : memref<12x256xf32, #tpu.memory_space<vmem>>, vector<1x256xf32>
    tpu.vector_store %arg12[%c6_232, %c0_233], %217 {strides = array<i32>} : memref<12x256xf32, #tpu.memory_space<vmem>>, vector<1x256xf32>,
    %c14_234 = arith.constant 14 : index
    %c0_235 = arith.constant 0 : index
    %219 = vector.load %arg11[%c14_234, %c0_235] : memref<24x256xf32, #tpu.memory_space<vmem>>, vector<1x256xf32>
    %c15_236 = arith.constant 15 : index
    %c0_237 = arith.constant 0 : index
    %220 = vector.load %arg11[%c15_236, %c0_237] : memref<24x256xf32, #tpu.memory_space<vmem>>, vector<1x256xf32>
    %221 = arith.maximumf %219, %220 : vector<1x256xf32>
    %c7_238 = arith.constant 7 : index
    %c0_239 = arith.constant 0 : index
    %222 = vector.load %arg12[%c7_238, %c0_239] : memref<12x256xf32, #tpu.memory_space<vmem>>, vector<1x256xf32>
    tpu.vector_store %arg12[%c7_238, %c0_239], %221 {strides = array<i32>} : memref<12x256xf32, #tpu.memory_space<vmem>>, vector<1x256xf32>,
    %c16_240 = arith.constant 16 : index
    %c0_241 = arith.constant 0 : index
    %223 = vector.load %arg11[%c16_240, %c0_241] : memref<24x256xf32, #tpu.memory_space<vmem>>, vector<1x256xf32>
    %c17_242 = arith.constant 17 : index
    %c0_243 = arith.constant 0 : index
    %224 = vector.load %arg11[%c17_242, %c0_243] : memref<24x256xf32, #tpu.memory_space<vmem>>, vector<1x256xf32>
    %225 = arith.maximumf %223, %224 : vector<1x256xf32>
    %c8_244 = arith.constant 8 : index
    %c0_245 = arith.constant 0 : index
    %226 = vector.load %arg12[%c8_244, %c0_245] : memref<12x256xf32, #tpu.memory_space<vmem>>, vector<1x256xf32>
    tpu.vector_store %arg12[%c8_244, %c0_245], %225 {strides = array<i32>} : memref<12x256xf32, #tpu.memory_space<vmem>>, vector<1x256xf32>,
    %c18_246 = arith.constant 18 : index
    %c0_247 = arith.constant 0 : index
    %227 = vector.load %arg11[%c18_246, %c0_247] : memref<24x256xf32, #tpu.memory_space<vmem>>, vector<1x256xf32>
    %c19_248 = arith.constant 19 : index
    %c0_249 = arith.constant 0 : index
    %228 = vector.load %arg11[%c19_248, %c0_249] : memref<24x256xf32, #tpu.memory_space<vmem>>, vector<1x256xf32>
    %229 = arith.maximumf %227, %228 : vector<1x256xf32>
    %c9_250 = arith.constant 9 : index
    %c0_251 = arith.constant 0 : index
    %230 = vector.load %arg12[%c9_250, %c0_251] : memref<12x256xf32, #tpu.memory_space<vmem>>, vector<1x256xf32>
    tpu.vector_store %arg12[%c9_250, %c0_251], %229 {strides = array<i32>} : memref<12x256xf32, #tpu.memory_space<vmem>>, vector<1x256xf32>,
    %c20_252 = arith.constant 20 : index
    %c0_253 = arith.constant 0 : index
    %231 = vector.load %arg11[%c20_252, %c0_253] : memref<24x256xf32, #tpu.memory_space<vmem>>, vector<1x256xf32>
    %c21_254 = arith.constant 21 : index
    %c0_255 = arith.constant 0 : index
    %232 = vector.load %arg11[%c21_254, %c0_255] : memref<24x256xf32, #tpu.memory_space<vmem>>, vector<1x256xf32>
    %233 = arith.maximumf %231, %232 : vector<1x256xf32>
    %c10_256 = arith.constant 10 : index
    %c0_257 = arith.constant 0 : index
    %234 = vector.load %arg12[%c10_256, %c0_257] : memref<12x256xf32, #tpu.memory_space<vmem>>, vector<1x256xf32>
    tpu.vector_store %arg12[%c10_256, %c0_257], %233 {strides = array<i32>} : memref<12x256xf32, #tpu.memory_space<vmem>>, vector<1x256xf32>,
    %c22_258 = arith.constant 22 : index
    %c0_259 = arith.constant 0 : index
    %235 = vector.load %arg11[%c22_258, %c0_259] : memref<24x256xf32, #tpu.memory_space<vmem>>, vector<1x256xf32>
    %c23_260 = arith.constant 23 : index
    %c0_261 = arith.constant 0 : index
    %236 = vector.load %arg11[%c23_260, %c0_261] : memref<24x256xf32, #tpu.memory_space<vmem>>, vector<1x256xf32>
    %237 = arith.maximumf %235, %236 : vector<1x256xf32>
    %c11_262 = arith.constant 11 : index
    %c0_263 = arith.constant 0 : index
    %238 = vector.load %arg12[%c11_262, %c0_263] : memref<12x256xf32, #tpu.memory_space<vmem>>, vector<1x256xf32>
    tpu.vector_store %arg12[%c11_262, %c0_263], %237 {strides = array<i32>} : memref<12x256xf32, #tpu.memory_space<vmem>>, vector<1x256xf32>,
    %cst_264 = arith.constant 0.000000e+00 : f32
    %239 = vector.broadcast %cst_264 : f32 to vector<8x512xf32>
    %c0_265 = arith.constant 0 : index
    %c0_266 = arith.constant 0 : index
    %240 = vector.load %arg12[%c0_265, %c0_266] : memref<12x256xf32, #tpu.memory_space<vmem>>, vector<8x256xf32>
    %c0_267 = arith.constant 0 : index
    %c0_268 = arith.constant 0 : index
    %c0_269 = arith.constant 0 : index
    %241 = vector.load %arg4[%c0_267, %c0_268, %c0_269] : memref<5x256x512xf32, #tpu.memory_space<vmem>>, vector<1x256x512xf32>
    %242 = vector.shape_cast %241 : vector<1x256x512xf32> to vector<256x512xf32>
    %cst_270 = arith.constant dense<0.000000e+00> : vector<8x512xf32>
    %243 = tpu.matmul %240, %242, %cst_270 {dimension_numbers = #tpu.dot_dimension_numbers<[1], [0], [0], [1], [0, 0, 1, 1], [], []>} : vector<8x256xf32>, vector<256x512xf32>, vector<8x512xf32> -> vector<8x512xf32>
    %244 = arith.addf %239, %243 : vector<8x512xf32>
    %c1_271 = arith.constant 1 : index
    %c0_272 = arith.constant 0 : index
    %245 = vector.load %arg12[%c1_271, %c0_272] : memref<12x256xf32, #tpu.memory_space<vmem>>, vector<8x256xf32>
    %c1_273 = arith.constant 1 : index
    %c0_274 = arith.constant 0 : index
    %c0_275 = arith.constant 0 : index
    %246 = vector.load %arg4[%c1_273, %c0_274, %c0_275] : memref<5x256x512xf32, #tpu.memory_space<vmem>>, vector<1x256x512xf32>
    %247 = vector.shape_cast %246 : vector<1x256x512xf32> to vector<256x512xf32>
    %cst_276 = arith.constant dense<0.000000e+00> : vector<8x512xf32>
    %248 = tpu.matmul %245, %247, %cst_276 {dimension_numbers = #tpu.dot_dimension_numbers<[1], [0], [0], [1], [0, 0, 1, 1], [], []>} : vector<8x256xf32>, vector<256x512xf32>, vector<8x512xf32> -> vector<8x512xf32>
    %249 = arith.addf %244, %248 : vector<8x512xf32>
    %c2_277 = arith.constant 2 : index
    %c0_278 = arith.constant 0 : index
    %250 = vector.load %arg12[%c2_277, %c0_278] : memref<12x256xf32, #tpu.memory_space<vmem>>, vector<8x256xf32>
    %c2_279 = arith.constant 2 : index
    %c0_280 = arith.constant 0 : index
    %c0_281 = arith.constant 0 : index
    %251 = vector.load %arg4[%c2_279, %c0_280, %c0_281] : memref<5x256x512xf32, #tpu.memory_space<vmem>>, vector<1x256x512xf32>
    %252 = vector.shape_cast %251 : vector<1x256x512xf32> to vector<256x512xf32>
    %cst_282 = arith.constant dense<0.000000e+00> : vector<8x512xf32>
    %253 = tpu.matmul %250, %252, %cst_282 {dimension_numbers = #tpu.dot_dimension_numbers<[1], [0], [0], [1], [0, 0, 1, 1], [], []>} : vector<8x256xf32>, vector<256x512xf32>, vector<8x512xf32> -> vector<8x512xf32>
    %254 = arith.addf %249, %253 : vector<8x512xf32>
    %c3_283 = arith.constant 3 : index
    %c0_284 = arith.constant 0 : index
    %255 = vector.load %arg12[%c3_283, %c0_284] : memref<12x256xf32, #tpu.memory_space<vmem>>, vector<8x256xf32>
    %c3_285 = arith.constant 3 : index
    %c0_286 = arith.constant 0 : index
    %c0_287 = arith.constant 0 : index
    %256 = vector.load %arg4[%c3_285, %c0_286, %c0_287] : memref<5x256x512xf32, #tpu.memory_space<vmem>>, vector<1x256x512xf32>
    %257 = vector.shape_cast %256 : vector<1x256x512xf32> to vector<256x512xf32>
    %cst_288 = arith.constant dense<0.000000e+00> : vector<8x512xf32>
    %258 = tpu.matmul %255, %257, %cst_288 {dimension_numbers = #tpu.dot_dimension_numbers<[1], [0], [0], [1], [0, 0, 1, 1], [], []>} : vector<8x256xf32>, vector<256x512xf32>, vector<8x512xf32> -> vector<8x512xf32>
    %259 = arith.addf %254, %258 : vector<8x512xf32>
    %c4_289 = arith.constant 4 : index
    %c0_290 = arith.constant 0 : index
    %260 = vector.load %arg12[%c4_289, %c0_290] : memref<12x256xf32, #tpu.memory_space<vmem>>, vector<8x256xf32>
    %c4_291 = arith.constant 4 : index
    %c0_292 = arith.constant 0 : index
    %c0_293 = arith.constant 0 : index
    %261 = vector.load %arg4[%c4_291, %c0_292, %c0_293] : memref<5x256x512xf32, #tpu.memory_space<vmem>>, vector<1x256x512xf32>
    %262 = vector.shape_cast %261 : vector<1x256x512xf32> to vector<256x512xf32>
    %cst_294 = arith.constant dense<0.000000e+00> : vector<8x512xf32>
    %263 = tpu.matmul %260, %262, %cst_294 {dimension_numbers = #tpu.dot_dimension_numbers<[1], [0], [0], [1], [0, 0, 1, 1], [], []>} : vector<8x256xf32>, vector<256x512xf32>, vector<8x512xf32> -> vector<8x512xf32>
    %264 = arith.addf %259, %263 : vector<8x512xf32>
    %c0_295 = arith.constant 0 : index
    %c0_296 = arith.constant 0 : index
    %265 = vector.load %arg5[%c0_295, %c0_296] : memref<1x256xf32, #tpu.memory_space<vmem>>, vector<1x256xf32>
    %266 = vector.extract_strided_slice %264 {offsets = [0, 0], sizes = [8, 256], strides = [1, 1]} : vector<8x512xf32> to vector<8x256xf32>
    %267 = vector.broadcast %265 : vector<1x256xf32> to vector<8x256xf32>
    %268 = arith.addf %266, %267 : vector<8x256xf32>
    %cst_297 = arith.constant 0.000000e+00 : f32
    %269 = vector.broadcast %cst_297 : f32 to vector<8x256xf32>
    %270 = arith.maximumf %268, %269 : vector<8x256xf32>
    %271 = vector.extract_strided_slice %264 {offsets = [0, 256], sizes = [8, 256], strides = [1, 1]} : vector<8x512xf32> to vector<8x256xf32>
    %272 = vector.broadcast %265 : vector<1x256xf32> to vector<8x256xf32>
    %273 = arith.addf %271, %272 : vector<8x256xf32>
    %cst_298 = arith.constant 0.000000e+00 : f32
    %274 = vector.broadcast %cst_298 : f32 to vector<8x256xf32>
    %275 = arith.maximumf %273, %274 : vector<8x256xf32>
    %276 = arith.maximumf %270, %275 : vector<8x256xf32>
    %c0_299 = arith.constant 0 : index
    %c0_300 = arith.constant 0 : index
    %277 = vector.load %arg13[%c0_299, %c0_300] : memref<8x256xf32, #tpu.memory_space<vmem>>, vector<8x256xf32>
    tpu.vector_store %arg13[%c0_299, %c0_300], %276 {strides = array<i32>} : memref<8x256xf32, #tpu.memory_space<vmem>>, vector<8x256xf32>,
    %c0_301 = arith.constant 0 : index
    %c0_302 = arith.constant 0 : index
    %278 = vector.load %arg13[%c0_301, %c0_302] : memref<8x256xf32, #tpu.memory_space<vmem>>, vector<1x256xf32>
    %c1_303 = arith.constant 1 : index
    %c0_304 = arith.constant 0 : index
    %279 = vector.load %arg13[%c1_303, %c0_304] : memref<8x256xf32, #tpu.memory_space<vmem>>, vector<1x256xf32>
    %280 = arith.maximumf %278, %279 : vector<1x256xf32>
    %c1_305 = arith.constant 1 : index
    %c0_306 = arith.constant 0 : index
    %281 = vector.load %arg14[%c1_305, %c0_306] : memref<2x256xf32, #tpu.memory_space<vmem>>, vector<1x256xf32>
    tpu.vector_store %arg14[%c1_305, %c0_306], %280 {strides = array<i32>} : memref<2x256xf32, #tpu.memory_space<vmem>>, vector<1x256xf32>,
    %c2_307 = arith.constant 2 : index
    %c0_308 = arith.constant 0 : index
    %282 = vector.load %arg13[%c2_307, %c0_308] : memref<8x256xf32, #tpu.memory_space<vmem>>, vector<1x256xf32>
    %c3_309 = arith.constant 3 : index
    %c0_310 = arith.constant 0 : index
    %283 = vector.load %arg13[%c3_309, %c0_310] : memref<8x256xf32, #tpu.memory_space<vmem>>, vector<1x256xf32>
    %284 = arith.maximumf %282, %283 : vector<1x256xf32>
    %c1_311 = arith.constant 1 : index
    %c0_312 = arith.constant 0 : index
    %285 = vector.load %arg15[%c1_311, %c0_312] : memref<2x256xf32, #tpu.memory_space<vmem>>, vector<1x256xf32>
    tpu.vector_store %arg15[%c1_311, %c0_312], %284 {strides = array<i32>} : memref<2x256xf32, #tpu.memory_space<vmem>>, vector<1x256xf32>,
    %c4_313 = arith.constant 4 : index
    %c0_314 = arith.constant 0 : index
    %286 = vector.load %arg13[%c4_313, %c0_314] : memref<8x256xf32, #tpu.memory_space<vmem>>, vector<1x256xf32>
    %c5_315 = arith.constant 5 : index
    %c0_316 = arith.constant 0 : index
    %287 = vector.load %arg13[%c5_315, %c0_316] : memref<8x256xf32, #tpu.memory_space<vmem>>, vector<1x256xf32>
    %288 = arith.maximumf %286, %287 : vector<1x256xf32>
    %c1_317 = arith.constant 1 : index
    %c0_318 = arith.constant 0 : index
    %289 = vector.load %arg16[%c1_317, %c0_318] : memref<2x256xf32, #tpu.memory_space<vmem>>, vector<1x256xf32>
    tpu.vector_store %arg16[%c1_317, %c0_318], %288 {strides = array<i32>} : memref<2x256xf32, #tpu.memory_space<vmem>>, vector<1x256xf32>,
    %c6_319 = arith.constant 6 : index
    %c0_320 = arith.constant 0 : index
    %290 = vector.load %arg13[%c6_319, %c0_320] : memref<8x256xf32, #tpu.memory_space<vmem>>, vector<1x256xf32>
    %c7_321 = arith.constant 7 : index
    %c0_322 = arith.constant 0 : index
    %291 = vector.load %arg13[%c7_321, %c0_322] : memref<8x256xf32, #tpu.memory_space<vmem>>, vector<1x256xf32>
    %292 = arith.maximumf %290, %291 : vector<1x256xf32>
    %c1_323 = arith.constant 1 : index
    %c0_324 = arith.constant 0 : index
    %293 = vector.load %arg17[%c1_323, %c0_324] : memref<2x256xf32, #tpu.memory_space<vmem>>, vector<1x256xf32>
    tpu.vector_store %arg17[%c1_323, %c0_324], %292 {strides = array<i32>} : memref<2x256xf32, #tpu.memory_space<vmem>>, vector<1x256xf32>,
    %c0_325 = arith.constant 0 : index
    %c0_326 = arith.constant 0 : index
    %294 = vector.load %arg7[%c0_325, %c0_326] : memref<1x512xf32, #tpu.memory_space<vmem>>, vector<1x512xf32>
    %c0_327 = arith.constant 0 : index
    %c0_328 = arith.constant 0 : index
    %295 = vector.load %arg14[%c0_327, %c0_328] : memref<2x256xf32, #tpu.memory_space<vmem>>, vector<2x256xf32>
    %c0_329 = arith.constant 0 : index
    %c0_330 = arith.constant 0 : index
    %c0_331 = arith.constant 0 : index
    %296 = vector.load %arg6[%c0_329, %c0_330, %c0_331] : memref<4x256x512xf32, #tpu.memory_space<vmem>>, vector<1x256x512xf32>
    %297 = vector.shape_cast %296 : vector<1x256x512xf32> to vector<256x512xf32>
    %cst_332 = arith.constant dense<0.000000e+00> : vector<2x512xf32>
    %298 = tpu.matmul %295, %297, %cst_332 {dimension_numbers = #tpu.dot_dimension_numbers<[1], [0], [0], [1], [0, 0, 1, 1], [], []>} : vector<2x256xf32>, vector<256x512xf32>, vector<2x512xf32> -> vector<2x512xf32>
    %299 = vector.broadcast %294 : vector<1x512xf32> to vector<2x512xf32>
    %300 = arith.addf %299, %298 : vector<2x512xf32>
    %c0_333 = arith.constant 0 : index
    %c0_334 = arith.constant 0 : index
    %301 = vector.load %arg15[%c0_333, %c0_334] : memref<2x256xf32, #tpu.memory_space<vmem>>, vector<2x256xf32>
    %c1_335 = arith.constant 1 : index
    %c0_336 = arith.constant 0 : index
    %c0_337 = arith.constant 0 : index
    %302 = vector.load %arg6[%c1_335, %c0_336, %c0_337] : memref<4x256x512xf32, #tpu.memory_space<vmem>>, vector<1x256x512xf32>
    %303 = vector.shape_cast %302 : vector<1x256x512xf32> to vector<256x512xf32>
    %cst_338 = arith.constant dense<0.000000e+00> : vector<2x512xf32>
    %304 = tpu.matmul %301, %303, %cst_338 {dimension_numbers = #tpu.dot_dimension_numbers<[1], [0], [0], [1], [0, 0, 1, 1], [], []>} : vector<2x256xf32>, vector<256x512xf32>, vector<2x512xf32> -> vector<2x512xf32>
    %305 = arith.addf %300, %304 : vector<2x512xf32>
    %c0_339 = arith.constant 0 : index
    %c0_340 = arith.constant 0 : index
    %306 = vector.load %arg16[%c0_339, %c0_340] : memref<2x256xf32, #tpu.memory_space<vmem>>, vector<2x256xf32>
    %c2_341 = arith.constant 2 : index
    %c0_342 = arith.constant 0 : index
    %c0_343 = arith.constant 0 : index
    %307 = vector.load %arg6[%c2_341, %c0_342, %c0_343] : memref<4x256x512xf32, #tpu.memory_space<vmem>>, vector<1x256x512xf32>
    %308 = vector.shape_cast %307 : vector<1x256x512xf32> to vector<256x512xf32>
    %cst_344 = arith.constant dense<0.000000e+00> : vector<2x512xf32>
    %309 = tpu.matmul %306, %308, %cst_344 {dimension_numbers = #tpu.dot_dimension_numbers<[1], [0], [0], [1], [0, 0, 1, 1], [], []>} : vector<2x256xf32>, vector<256x512xf32>, vector<2x512xf32> -> vector<2x512xf32>
    %310 = arith.addf %305, %309 : vector<2x512xf32>
    %c0_345 = arith.constant 0 : index
    %c0_346 = arith.constant 0 : index
    %311 = vector.load %arg17[%c0_345, %c0_346] : memref<2x256xf32, #tpu.memory_space<vmem>>, vector<2x256xf32>
    %c3_347 = arith.constant 3 : index
    %c0_348 = arith.constant 0 : index
    %c0_349 = arith.constant 0 : index
    %312 = vector.load %arg6[%c3_347, %c0_348, %c0_349] : memref<4x256x512xf32, #tpu.memory_space<vmem>>, vector<1x256x512xf32>
    %313 = vector.shape_cast %312 : vector<1x256x512xf32> to vector<256x512xf32>
    %cst_350 = arith.constant dense<0.000000e+00> : vector<2x512xf32>
    %314 = tpu.matmul %311, %313, %cst_350 {dimension_numbers = #tpu.dot_dimension_numbers<[1], [0], [0], [1], [0, 0, 1, 1], [], []>} : vector<2x256xf32>, vector<256x512xf32>, vector<2x512xf32> -> vector<2x512xf32>
    %315 = arith.addf %310, %314 : vector<2x512xf32>
    %cst_351 = arith.constant 0.000000e+00 : f32
    %316 = vector.broadcast %cst_351 : f32 to vector<2x512xf32>
    %317 = arith.maximumf %315, %316 : vector<2x512xf32>
    %c0_352 = arith.constant 0 : index
    %c0_353 = arith.constant 0 : index
    %318 = vector.load %arg8[%c0_352, %c0_353] : memref<512x128xf32, #tpu.memory_space<vmem>>, vector<512x128xf32>
    %cst_354 = arith.constant dense<0.000000e+00> : vector<2x128xf32>
    %319 = tpu.matmul %317, %318, %cst_354 {dimension_numbers = #tpu.dot_dimension_numbers<[1], [0], [0], [1], [0, 0, 1, 1], [], []>} : vector<2x512xf32>, vector<512x128xf32>, vector<2x128xf32> -> vector<2x128xf32>
    %c0_355 = arith.constant 0 : index
    %c0_356 = arith.constant 0 : index
    %320 = vector.load %arg9[%c0_355, %c0_356] : memref<1x128xf32, #tpu.memory_space<vmem>>, vector<1x128xf32>
    %321 = vector.broadcast %320 : vector<1x128xf32> to vector<2x128xf32>
    %322 = arith.addf %319, %321 : vector<2x128xf32>
    %c0_357 = arith.constant 0 : index
    %c0_358 = arith.constant 0 : index
    %323 = vector.load %arg10[%c0_357, %c0_358] : memref<2x128xf32, #tpu.memory_space<vmem>>, vector<2x128xf32>
    tpu.vector_store %arg10[%c0_357, %c0_358], %322 {strides = array<i32>} : memref<2x128xf32, #tpu.memory_space<vmem>>, vector<2x128xf32>,
    return
  }
  func.func @transform_0(%arg0: i32) -> (i32, i32, i32) {
    %c0_i32 = arith.constant 0 : i32
    %c0_i32_0 = arith.constant 0 : i32
    %c0_i32_1 = arith.constant 0 : i32
    return %arg0, %c0_i32, %c0_i32_0 : i32, i32, i32
  }
  func.func @transform_1(%arg0: i32) -> (i32, i32, i32) {
    %c0_i32 = arith.constant 0 : i32
    %c0_i32_0 = arith.constant 0 : i32
    %c0_i32_1 = arith.constant 0 : i32
    %c0_i32_2 = arith.constant 0 : i32
    return %c0_i32, %c0_i32_0, %c0_i32_1 : i32, i32, i32
  }
  func.func @transform_2(%arg0: i32) -> (i32, i32) {
    %c0_i32 = arith.constant 0 : i32
    %c0_i32_0 = arith.constant 0 : i32
    %c0_i32_1 = arith.constant 0 : i32
    return %c0_i32, %c0_i32_0 : i32, i32
  }
  func.func @transform_3(%arg0: i32) -> (i32, i32, i32) {
    %c0_i32 = arith.constant 0 : i32
    %c0_i32_0 = arith.constant 0 : i32
    %c0_i32_1 = arith.constant 0 : i32
    %c0_i32_2 = arith.constant 0 : i32
    return %c0_i32, %c0_i32_0, %c0_i32_1 : i32, i32, i32
  }
  func.func @transform_4(%arg0: i32) -> (i32, i32) {
    %c0_i32 = arith.constant 0 : i32
    %c0_i32_0 = arith.constant 0 : i32
    %c0_i32_1 = arith.constant 0 : i32
    return %c0_i32, %c0_i32_0 : i32, i32
  }
  func.func @transform_5(%arg0: i32) -> (i32, i32, i32) {
    %c0_i32 = arith.constant 0 : i32
    %c0_i32_0 = arith.constant 0 : i32
    %c0_i32_1 = arith.constant 0 : i32
    %c0_i32_2 = arith.constant 0 : i32
    return %c0_i32, %c0_i32_0, %c0_i32_1 : i32, i32, i32
  }
  func.func @transform_6(%arg0: i32) -> (i32, i32) {
    %c0_i32 = arith.constant 0 : i32
    %c0_i32_0 = arith.constant 0 : i32
    %c0_i32_1 = arith.constant 0 : i32
    return %c0_i32, %c0_i32_0 : i32, i32
  }
  func.func @transform_7(%arg0: i32) -> (i32, i32) {
    %c0_i32 = arith.constant 0 : i32
    %c0_i32_0 = arith.constant 0 : i32
    %c0_i32_1 = arith.constant 0 : i32
    return %c0_i32, %c0_i32_0 : i32, i32
  }
  func.func @transform_8(%arg0: i32) -> (i32, i32) {
    %c0_i32 = arith.constant 0 : i32
    %c0_i32_0 = arith.constant 0 : i32
    %c0_i32_1 = arith.constant 0 : i32
    return %c0_i32, %c0_i32_0 : i32, i32
  }
  func.func @transform_9(%arg0: i32) -> (i32, i32) {
    %c0_i32 = arith.constant 0 : i32
    %c0_i32_0 = arith.constant 0 : i32
    return %arg0, %c0_i32 : i32, i32
  }
}

</mosaic_0001>

<llo_original>
// kernel: tpu_custom_call.1
$region0: #{tpu_custom_call.1}
  #allocation0 [shape = 'u32[]', space=smem, size = 0x4, offset = 0x4, fixed_abs, tag = 'smem constant byte address 0x4 - core index']
  #allocation1 [shape = 'u32[72,128]{1,0:T(1,128)}', space=vmem, size = 0x9000, scoped, tag = 'internal scratch']
  #allocation2 [shape = 'f32[24,256]{1,0:T(8,128)}', space=vmem, size = 0x6000, scoped, tag = 'scratch operand']
  #allocation3 [shape = 'f32[12,256]{1,0:T(8,128)}', space=vmem, size = 0x4000, scoped, tag = 'scratch operand']
  #allocation4 [shape = 'f32[8,256]{1,0:T(8,128)}', space=vmem, size = 0x2000, scoped, tag = 'scratch operand']
  #allocation5 [shape = 'f32[2,256]{1,0:T(2,128)}', space=vmem, size = 0x800, scoped, tag = 'scratch operand']
  #allocation6 [shape = 'f32[2,256]{1,0:T(2,128)}', space=vmem, size = 0x800, scoped, tag = 'scratch operand']
  #allocation7 [shape = 'f32[2,256]{1,0:T(2,128)}', space=vmem, size = 0x800, scoped, tag = 'scratch operand']
  #allocation8 [shape = 'f32[2,256]{1,0:T(2,128)}', space=vmem, size = 0x800, scoped, tag = 'scratch operand']
  %s0 = inlined_call_operand.vmem [shape: f32[2,28,28], index: 0, kind: input, shape index: {}]
  %s1 = inlined_call_operand.hbm [shape: f32[5,28,512], index: 1, kind: input, shape index: {}]
  %s2 = inlined_call_operand.hbm [shape: f32[1,256], index: 2, kind: input, shape index: {}]
  %s3 = inlined_call_operand.hbm [shape: f32[5,256,512], index: 3, kind: input, shape index: {}]
  %s4 = inlined_call_operand.hbm [shape: f32[1,256], index: 4, kind: input, shape index: {}]
  %s5 = inlined_call_operand.hbm [shape: f32[4,256,512], index: 5, kind: input, shape index: {}]
  %s6 = inlined_call_operand.hbm [shape: f32[1,512], index: 6, kind: input, shape index: {}]
  %s7 = inlined_call_operand.hbm [shape: f32[512,128], index: 7, kind: input, shape index: {}]
  %s8 = inlined_call_operand.hbm [shape: f32[1,128], index: 8, kind: input, shape index: {}]
  %s9 = inlined_call_operand.hbm [shape: f32[2,128], index: 9, kind: output, shape index: {}]
  %s10 = sld [smem:[#allocation0]]
  $region78: #{tpu_custom_call.1} parent=0
    _
  %s12 = ssub.s32 1, %s10
  %s13 = scalar_select 0, %s12, %s10
  $region1: #{tpu_custom_call.1} parent=0
    #allocation9 [shape = 'u8[327680]{0}', space=vmem, size = 0x50000, scoped, tag = 'input window, operand 1, single buffered']
    #allocation10 [shape = 's32[1]{0}', space=sflag, size = 0x4, scoped, tag = 'scoped memory for tpu_custom_call.1']
    #allocation11 [shape = 's32[1]{0}', space=sflag, size = 0x4, scoped, tag = 'scoped memory for tpu_custom_call.1']
    #allocation12 [shape = 'u8[1024]{0}', space=vmem, size = 0x400, scoped, tag = 'input window, operand 2, single buffered']
    #allocation13 [shape = 's32[1]{0}', space=sflag, size = 0x4, scoped, tag = 'scoped memory for tpu_custom_call.1']
    #allocation14 [shape = 'u8[2621440]{0}', space=vmem, size = 0x280000, scoped, tag = 'input window, operand 3, single buffered']
    #allocation15 [shape = 'u8[1024]{0}', space=vmem, size = 0x400, scoped, tag = 'input window, operand 4, single buffered']
    #allocation16 [shape = 's32[1]{0}', space=sflag, size = 0x4, scoped, tag = 'scoped memory for tpu_custom_call.1']
    #allocation17 [shape = 'u8[2097152]{0}', space=vmem, size = 0x200000, scoped, tag = 'input window, operand 5, single buffered']
    #allocation18 [shape = 'u8[2048]{0}', space=vmem, size = 0x800, scoped, tag = 'input window, operand 6, single buffered']
    #allocation19 [shape = 's32[1]{0}', space=sflag, size = 0x4, scoped, tag = 'scoped memory for tpu_custom_call.1']
    #allocation20 [shape = 'u8[262144]{0}', space=vmem, size = 0x40000, scoped, tag = 'input window, operand 7, single buffered']
    #allocation21 [shape = 'u8[512]{0}', space=vmem, size = 0x400, scoped, tag = 'input window, operand 8, single buffered']
    #allocation22 [shape = 's32[1]{0}', space=sflag, size = 0x4, scoped, tag = 'scoped memory for tpu_custom_call.1']
    #allocation23 [shape = 'u8[1024]{0}', space=vmem, size = 0x400, scoped, tag = 'output window, operand 0, single buffered']
    %14 = vsyncpa [#allocation10], 0
    %15 = vsyncpa [#allocation13], 0
    %16 = vsyncpa [#allocation16], 0
    %17 = vsyncpa [#allocation19], 0
    %18 = vsyncpa [#allocation22], 0
    %19 = vsyncpa [#allocation11], 0
    // Predicated region
    $region2: #{tpu_custom_call.1} parent=1 // pred_check
      _
    $region3: #{tpu_custom_call.1} parent=1 // pred_check_branch
      %21 = sbr.rel (0) target = $region5
    $region4: #{tpu_custom_call.1} parent=1 // pred_region
      _
    $region5: #{tpu_custom_call.1} parent=1 // pred_fallthru
      _
    // Predicated region
    $region6: #{tpu_custom_call.1} parent=1 // pred_check
      _
    $region7: #{tpu_custom_call.1} parent=1 // pred_check_branch
      %23 = sbr.rel (0) target = $region9
    $region8: #{tpu_custom_call.1} parent=1 // pred_region
      %25 = vsyncadd [#allocation10], 0
      %s26 = sshll.u32 %s1, 4
      %s27 = int_to_ptr.hbm [resolvable:$true] %s26
      %s28 = sshll.u32 [#allocation9], 4
      %s29 = int_to_ptr.vmem [resolvable:$true] %s28
      %34 = dma.hbm_to_vmem [thread:$0]  %s27, 10240, %s29, [#allocation10], 512, 512, 32
    $region9: #{tpu_custom_call.1} parent=1 // pred_fallthru
      _
    // Predicated region
    $region10: #{tpu_custom_call.1} parent=1 // pred_check
      _
    $region11: #{tpu_custom_call.1} parent=1 // pred_check_branch
      %36 = sbr.rel (0) target = $region13
    $region12: #{tpu_custom_call.1} parent=1 // pred_region
      %38 = vsyncadd [#allocation13], 0
      %s40 = sshll.u32 %s2, 4
      %s41 = int_to_ptr.hbm [resolvable:$true] %s40
      %s42 = sshll.u32 [#allocation12], 4
      %s43 = int_to_ptr.vmem [resolvable:$true] %s42
      %45 = dma.hbm_to_vmem [thread:$0]  %s41, 32, %s43, [#allocation13]
    $region13: #{tpu_custom_call.1} parent=1 // pred_fallthru
      _
    // Predicated region
    $region14: #{tpu_custom_call.1} parent=1 // pred_check
      _
    $region15: #{tpu_custom_call.1} parent=1 // pred_check_branch
      %47 = sbr.rel (0) target = $region17
    $region16: #{tpu_custom_call.1} parent=1 // pred_region
      %49 = vsyncadd [#allocation13], 0
      %s50 = sshll.u32 %s3, 4
      %s51 = int_to_ptr.hbm [resolvable:$true] %s50
      %s52 = sshll.u32 [#allocation14], 4
      %s53 = int_to_ptr.vmem [resolvable:$true] %s52
      %58 = dma.hbm_to_vmem [thread:$0]  %s51, 81920, %s53, [#allocation13], 512, 512, 32
    $region17: #{tpu_custom_call.1} parent=1 // pred_fallthru
      _
    // Predicated region
    $region18: #{tpu_custom_call.1} parent=1 // pred_check
      _
    $region19: #{tpu_custom_call.1} parent=1 // pred_check_branch
      %60 = sbr.rel (0) target = $region21
    $region20: #{tpu_custom_call.1} parent=1 // pred_region
      %62 = vsyncadd [#allocation16], 0
      %s64 = sshll.u32 %s4, 4
      %s65 = int_to_ptr.hbm [resolvable:$true] %s64
      %s66 = sshll.u32 [#allocation15], 4
      %s67 = int_to_ptr.vmem [resolvable:$true] %s66
      %69 = dma.hbm_to_vmem [thread:$0]  %s65, 32, %s67, [#allocation16]
    $region21: #{tpu_custom_call.1} parent=1 // pred_fallthru
      _
    // Predicated region
    $region22: #{tpu_custom_call.1} parent=1 // pred_check
      _
    $region23: #{tpu_custom_call.1} parent=1 // pred_check_branch
      %71 = sbr.rel (0) target = $region25
    $region24: #{tpu_custom_call.1} parent=1 // pred_region
      %73 = vsyncadd [#allocation16], 0
      %s74 = sshll.u32 %s5, 4
      %s75 = int_to_ptr.hbm [resolvable:$true] %s74
      %s76 = sshll.u32 [#allocation17], 4
      %s77 = int_to_ptr.vmem [resolvable:$true] %s76
      %82 = dma.hbm_to_vmem [thread:$0]  %s75, 65536, %s77, [#allocation16], 512, 512, 32
    $region25: #{tpu_custom_call.1} parent=1 // pred_fallthru
      _
    // Predicated region
    $region26: #{tpu_custom_call.1} parent=1 // pred_check
      _
    $region27: #{tpu_custom_call.1} parent=1 // pred_check_branch
      %84 = sbr.rel (0) target = $region29
    $region28: #{tpu_custom_call.1} parent=1 // pred_region
      %86 = vsyncadd [#allocation19], 0
      %s88 = sshll.u32 %s6, 4
      %s89 = int_to_ptr.hbm [resolvable:$true] %s88
      %s90 = sshll.u32 [#allocation18], 4
      %s91 = int_to_ptr.vmem [resolvable:$true] %s90
      %93 = dma.hbm_to_vmem [thread:$0]  %s89, 64, %s91, [#allocation19]
    $region29: #{tpu_custom_call.1} parent=1 // pred_fallthru
      _
    // Predicated region
    $region30: #{tpu_custom_call.1} parent=1 // pred_check
      _
    $region31: #{tpu_custom_call.1} parent=1 // pred_check_branch
      %95 = sbr.rel (0) target = $region33
    $region32: #{tpu_custom_call.1} parent=1 // pred_region
      %97 = vsyncadd [#allocation19], 0
      %s98 = sshll.u32 %s7, 4
      %s99 = int_to_ptr.hbm [resolvable:$true] %s98
      %s100 = sshll.u32 [#allocation20], 4
      %s101 = int_to_ptr.vmem [resolvable:$true] %s100
      %106 = dma.hbm_to_vmem [thread:$0]  %s99, 8192, %s101, [#allocation19], 128, 128, 8
    $region33: #{tpu_custom_call.1} parent=1 // pred_fallthru
      _
    // Predicated region
    $region34: #{tpu_custom_call.1} parent=1 // pred_check
      _
    $region35: #{tpu_custom_call.1} parent=1 // pred_check_branch
      %108 = sbr.rel (0) target = $region37
    $region36: #{tpu_custom_call.1} parent=1 // pred_region
      %110 = vsyncadd [#allocation22], 0
      %s112 = sshll.u32 %s8, 4
      %s113 = int_to_ptr.hbm [resolvable:$true] %s112
      %s114 = sshll.u32 [#allocation21], 4
      %s115 = int_to_ptr.vmem [resolvable:$true] %s114
      %117 = dma.hbm_to_vmem [thread:$0]  %s113, 16, %s115, [#allocation22]
    $region37: #{tpu_custom_call.1} parent=1 // pred_fallthru
      _
    // Predicated region
    $region38: #{tpu_custom_call.1} parent=1 // pred_check
      _
    $region39: #{tpu_custom_call.1} parent=1 // pred_check_branch
      %119 = sbr.rel (0) target = $region41
    $region40: #{tpu_custom_call.1} parent=1 // pred_region
      %121 = dma.done [#allocation10], 10240
    $region41: #{tpu_custom_call.1} parent=1 // pred_fallthru
      _
    // Predicated region
    $region42: #{tpu_custom_call.1} parent=1 // pred_check
      _
    $region43: #{tpu_custom_call.1} parent=1 // pred_check_branch
      %123 = sbr.rel (0) target = $region45
    $region44: #{tpu_custom_call.1} parent=1 // pred_region
      %125 = dma.done [#allocation13], 32
    $region45: #{tpu_custom_call.1} parent=1 // pred_fallthru
      _
    // Predicated region
    $region46: #{tpu_custom_call.1} parent=1 // pred_check
      _
    $region47: #{tpu_custom_call.1} parent=1 // pred_check_branch
      %127 = sbr.rel (0) target = $region49
    $region48: #{tpu_custom_call.1} parent=1 // pred_region
      %129 = dma.done [#allocation13], 81920
    $region49: #{tpu_custom_call.1} parent=1 // pred_fallthru
      _
    // Predicated region
    $region50: #{tpu_custom_call.1} parent=1 // pred_check
      _
    $region51: #{tpu_custom_call.1} parent=1 // pred_check_branch
      %131 = sbr.rel (0) target = $region53
    $region52: #{tpu_custom_call.1} parent=1 // pred_region
      %133 = dma.done [#allocation16], 32
    $region53: #{tpu_custom_call.1} parent=1 // pred_fallthru
      _
    // Predicated region
    $region54: #{tpu_custom_call.1} parent=1 // pred_check
      _
    $region55: #{tpu_custom_call.1} parent=1 // pred_check_branch
      %135 = sbr.rel (0) target = $region57
    $region56: #{tpu_custom_call.1} parent=1 // pred_region
      %137 = dma.done [#allocation16], 65536
    $region57: #{tpu_custom_call.1} parent=1 // pred_fallthru
      _
    // Predicated region
    $region58: #{tpu_custom_call.1} parent=1 // pred_check
      _
    $region59: #{tpu_custom_call.1} parent=1 // pred_check_branch
      %139 = sbr.rel (0) target = $region61
    $region60: #{tpu_custom_call.1} parent=1 // pred_region
      %141 = dma.done [#allocation19], 64
    $region61: #{tpu_custom_call.1} parent=1 // pred_fallthru
      _
    // Predicated region
    $region62: #{tpu_custom_call.1} parent=1 // pred_check
      _
    $region63: #{tpu_custom_call.1} parent=1 // pred_check_branch
      %143 = sbr.rel (0) target = $region65
    $region64: #{tpu_custom_call.1} parent=1 // pred_region
      %145 = dma.done [#allocation19], 8192
    $region65: #{tpu_custom_call.1} parent=1 // pred_fallthru
      _
    // Predicated region
    $region66: #{tpu_custom_call.1} parent=1 // pred_check
      _
    $region67: #{tpu_custom_call.1} parent=1 // pred_check_branch
      %147 = sbr.rel (0) target = $region69
    $region68: #{tpu_custom_call.1} parent=1 // pred_region
      %149 = dma.done [#allocation22], 16
    $region69: #{tpu_custom_call.1} parent=1 // pred_fallthru
      _
    %v150 = vld [vmem:[%s0] sm:$0xff]
    %v151 = vld [vmem:[%s0 + $0x8] sm:$0xff]
    %v152 = vld [vmem:[%s0 + $0x10] sm:$0xff]
    %v153 = vld [vmem:[#allocation9] sm:$0xff]
    %v154 = vld [vmem:[#allocation9 + $0x8] sm:$0xff]
    %v155 = vld [vmem:[#allocation9 + $0x10] sm:$0xff]
    %v156 = vld [vmem:[#allocation9 + $0x18] sm:$0xff]
    %v157 = vld [vmem:[#allocation9 + $0x20] sm:$0xff]
    %v158 = vld [vmem:[#allocation9 + $0x28] sm:$0xff]
    %v159 = vld [vmem:[#allocation9 + $0x30] sm:$0xff]
    %v160 = vld [vmem:[#allocation9 + $0x38] sm:$0xff]
    %v161 = vld [vmem:[#allocation9 + $0x40] sm:$0xff]
    %v162 = vld [vmem:[#allocation9 + $0x48] sm:$0xff]
    %v163 = vld [vmem:[#allocation9 + $0x50] sm:$0xff]
    %v164 = vld [vmem:[#allocation9 + $0x58] sm:$0xff]
    %v165 = vld [vmem:[#allocation9 + $0x60] sm:$0xf]
    %v166 = vld [vmem:[#allocation9 + $0x68] sm:$0xf]
    %v167 = vld [vmem:[#allocation9 + $0x70] sm:$0xf]
    %v168 = vld [vmem:[#allocation9 + $0x78] sm:$0xf]
    %v169 = vld [vmem:[%s0 + $0x1] sm:$0xff]
    %v170 = vld [vmem:[%s0 + $0x9] sm:$0xff]
    %v171 = vld [vmem:[%s0 + $0x11] sm:$0xff]
    %s172 = scalar_lea.vmem [#allocation9], 128
    %v173 = vld [vmem:[%s172] sm:$0xff]
    %v174 = vld [vmem:[%s172 + $0x8] sm:$0xff]
    %v175 = vld [vmem:[%s172 + $0x10] sm:$0xff]
    %v176 = vld [vmem:[%s172 + $0x18] sm:$0xff]
    %v177 = vld [vmem:[%s172 + $0x20] sm:$0xff]
    %v178 = vld [vmem:[%s172 + $0x28] sm:$0xff]
    %v179 = vld [vmem:[%s172 + $0x30] sm:$0xff]
    %v180 = vld [vmem:[%s172 + $0x38] sm:$0xff]
    %v181 = vld [vmem:[%s172 + $0x40] sm:$0xff]
    %v182 = vld [vmem:[%s172 + $0x48] sm:$0xff]
    %v183 = vld [vmem:[%s172 + $0x50] sm:$0xff]
    %v184 = vld [vmem:[%s172 + $0x58] sm:$0xff]
    %v185 = vld [vmem:[%s172 + $0x60] sm:$0xf]
    %v186 = vld [vmem:[%s172 + $0x68] sm:$0xf]
    %v187 = vld [vmem:[%s172 + $0x70] sm:$0xf]
    %v188 = vld [vmem:[%s172 + $0x78] sm:$0xf]
    %vm189 = vcmask 228352
    %v191 = vsel %vm189, %v169, 0
    %v194 = vsel %vm189, %v170, 0
    %v197 = vsel %vm189, %v171, 0
    %vm199 = vcmask 1043456
    %v201 = vsel %vm199, %v185, 0
    %v204 = vsel %vm199, %v186, 0
    %v207 = vsel %vm199, %v187, 0
    %v210 = vsel %vm199, %v188, 0
    %212 = vmatpush.msra.mxu0 0.0
    %213 = vmatpush.msra.mxu0 0.0
    %214 = vmatpush.msra.mxu0 0.0
    %215 = vmatpush.msra.mxu0 0.0
    %216 = vmatpush.msra.mxu0 0.0
    %217 = vmatpush.msra.mxu0 0.0
    %218 = vmatpush.msra.mxu0 0.0
    %219 = vmatpush.msra.mxu0 0.0
    %220 = vmatpush.msra.mxu0 0.0
    %221 = vmatpush.msra.mxu0 0.0
    %222 = vmatpush.msra.mxu0 0.0
    %223 = vmatpush.msra.mxu0 0.0
    %224 = vmatpush.msra.mxu0 %v201
    %225 = vmatpush.msra.mxu0 %v181
    %226 = vmatpush.msra.mxu0 %v177
    %227 = vmatpush.msra.mxu0 %v173
    %228 = vmatmul.f32.gmra.mxu0 %v191
    %v229 = vpop.f32.mrf.mxu0
    %v230 = vadd.f32 0.0, %v229
    %231 = vmatmul.f32.gmra.mxu0 %v194
    %v232 = vpop.f32.mrf.mxu0
    %v233 = vadd.f32 0.0, %v232
    %234 = vmatmul.f32.gmra.mxu0 %v197
    %v235 = vpop.f32.mrf.mxu0
    %v236 = vadd.f32 0.0, %v235
    %237 = vdwg.mxu0
    %238 = vmatpush.msra.mxu0 0.0
    %239 = vmatpush.msra.mxu0 0.0
    %240 = vmatpush.msra.mxu0 0.0
    %241 = vmatpush.msra.mxu0 0.0
    %242 = vmatpush.msra.mxu0 0.0
    %243 = vmatpush.msra.mxu0 0.0
    %244 = vmatpush.msra.mxu0 0.0
    %245 = vmatpush.msra.mxu0 0.0
    %246 = vmatpush.msra.mxu0 0.0
    %247 = vmatpush.msra.mxu0 0.0
    %248 = vmatpush.msra.mxu0 0.0
    %249 = vmatpush.msra.mxu0 0.0
    %250 = vmatpush.msra.mxu0 %v204
    %251 = vmatpush.msra.mxu0 %v182
    %252 = vmatpush.msra.mxu0 %v178
    %253 = vmatpush.msra.mxu0 %v174
    %254 = vmatmul.f32.gmra.mxu0 %v191
    %v255 = vpop.f32.mrf.mxu0
    %v256 = vadd.f32 0.0, %v255
    %257 = vmatmul.f32.gmra.mxu0 %v194
    %v258 = vpop.f32.mrf.mxu0
    %v259 = vadd.f32 0.0, %v258
    %260 = vmatmul.f32.gmra.mxu0 %v197
    %v261 = vpop.f32.mrf.mxu0
    %v262 = vadd.f32 0.0, %v261
    %263 = vdwg.mxu0
    %264 = vmatpush.msra.mxu0 0.0
    %265 = vmatpush.msra.mxu0 0.0
    %266 = vmatpush.msra.mxu0 0.0
    %267 = vmatpush.msra.mxu0 0.0
    %268 = vmatpush.msra.mxu0 0.0
    %269 = vmatpush.msra.mxu0 0.0
    %270 = vmatpush.msra.mxu0 0.0
    %271 = vmatpush.msra.mxu0 0.0
    %272 = vmatpush.msra.mxu0 0.0
    %273 = vmatpush.msra.mxu0 0.0
    %274 = vmatpush.msra.mxu0 0.0
    %275 = vmatpush.msra.mxu0 0.0
    %276 = vmatpush.msra.mxu0 %v207
    %277 = vmatpush.msra.mxu0 %v183
    %278 = vmatpush.msra.mxu0 %v179
    %279 = vmatpush.msra.mxu0 %v175
    %280 = vmatmul.f32.gmra.mxu0 %v191
    %v281 = vpop.f32.mrf.mxu0
    %v282 = vadd.f32 0.0, %v281
    %283 = vmatmul.f32.gmra.mxu0 %v194
    %v284 = vpop.f32.mrf.mxu0
    %v285 = vadd.f32 0.0, %v284
    %286 = vmatmul.f32.gmra.mxu0 %v197
    %v287 = vpop.f32.mrf.mxu0
    %v288 = vadd.f32 0.0, %v287
    %289 = vdwg.mxu0
    %290 = vmatpush.msra.mxu0 0.0
    %291 = vmatpush.msra.mxu0 0.0
    %292 = vmatpush.msra.mxu0 0.0
    %293 = vmatpush.msra.mxu0 0.0
    %294 = vmatpush.msra.mxu0 0.0
    %295 = vmatpush.msra.mxu0 0.0
    %296 = vmatpush.msra.mxu0 0.0
    %297 = vmatpush.msra.mxu0 0.0
    %298 = vmatpush.msra.mxu0 0.0
    %299 = vmatpush.msra.mxu0 0.0
    %300 = vmatpush.msra.mxu0 0.0
    %301 = vmatpush.msra.mxu0 0.0
    %302 = vmatpush.msra.mxu0 %v210
    %303 = vmatpush.msra.mxu0 %v184
    %304 = vmatpush.msra.mxu0 %v180
    %305 = vmatpush.msra.mxu0 %v176
    %306 = vmatmul.f32.gmra.mxu0 %v191
    %v307 = vpop.f32.mrf.mxu0
    %v308 = vadd.f32 0.0, %v307
    %309 = vmatmul.f32.gmra.mxu0 %v194
    %v310 = vpop.f32.mrf.mxu0
    %v311 = vadd.f32 0.0, %v310
    %312 = vmatmul.f32.gmra.mxu0 %v197
    %v313 = vpop.f32.mrf.mxu0
    %v314 = vadd.f32 0.0, %v313
    %315 = vdwg.mxu0
    %v317 = vsel %vm189, %v150, 0
    %v320 = vsel %vm189, %v151, 0
    %v323 = vsel %vm189, %v152, 0
    %v326 = vsel %vm199, %v165, 0
    %v329 = vsel %vm199, %v166, 0
    %v332 = vsel %vm199, %v167, 0
    %v335 = vsel %vm199, %v168, 0
    %337 = vmatpush.msra.mxu0 0.0
    %338 = vmatpush.msra.mxu0 0.0
    %339 = vmatpush.msra.mxu0 0.0
    %340 = vmatpush.msra.mxu0 0.0
    %341 = vmatpush.msra.mxu0 0.0
    %342 = vmatpush.msra.mxu0 0.0
    %343 = vmatpush.msra.mxu0 0.0
    %344 = vmatpush.msra.mxu0 0.0
    %345 = vmatpush.msra.mxu0 0.0
    %346 = vmatpush.msra.mxu0 0.0
    %347 = vmatpush.msra.mxu0 0.0
    %348 = vmatpush.msra.mxu0 0.0
    %349 = vmatpush.msra.mxu0 %v326
    %350 = vmatpush.msra.mxu0 %v161
    %351 = vmatpush.msra.mxu0 %v157
    %352 = vmatpush.msra.mxu0 %v153
    %353 = vmatmul.f32.gmra.mxu0 %v317
    %v354 = vpop.f32.mrf.mxu0
    %v355 = vadd.f32 %v230, %v354
    %356 = vmatmul.f32.gmra.mxu0 %v320
    %v357 = vpop.f32.mrf.mxu0
    %v358 = vadd.f32 %v233, %v357
    %359 = vmatmul.f32.gmra.mxu0 %v323
    %v360 = vpop.f32.mrf.mxu0
    %v361 = vadd.f32 %v236, %v360
    %362 = vdwg.mxu0
    %363 = vmatpush.msra.mxu0 0.0
    %364 = vmatpush.msra.mxu0 0.0
    %365 = vmatpush.msra.mxu0 0.0
    %366 = vmatpush.msra.mxu0 0.0
    %367 = vmatpush.msra.mxu0 0.0
    %368 = vmatpush.msra.mxu0 0.0
    %369 = vmatpush.msra.mxu0 0.0
    %370 = vmatpush.msra.mxu0 0.0
    %371 = vmatpush.msra.mxu0 0.0
    %372 = vmatpush.msra.mxu0 0.0
    %373 = vmatpush.msra.mxu0 0.0
    %374 = vmatpush.msra.mxu0 0.0
    %375 = vmatpush.msra.mxu0 %v329
    %376 = vmatpush.msra.mxu0 %v162
    %377 = vmatpush.msra.mxu0 %v158
    %378 = vmatpush.msra.mxu0 %v154
    %379 = vmatmul.f32.gmra.mxu0 %v317
    %v380 = vpop.f32.mrf.mxu0
    %v381 = vadd.f32 %v256, %v380
    %382 = vmatmul.f32.gmra.mxu0 %v320
    %v383 = vpop.f32.mrf.mxu0
    %v384 = vadd.f32 %v259, %v383
    %385 = vmatmul.f32.gmra.mxu0 %v323
    %v386 = vpop.f32.mrf.mxu0
    %v387 = vadd.f32 %v262, %v386
    %388 = vdwg.mxu0
    %389 = vmatpush.msra.mxu0 0.0
    %390 = vmatpush.msra.mxu0 0.0
    %391 = vmatpush.msra.mxu0 0.0
    %392 = vmatpush.msra.mxu0 0.0
    %393 = vmatpush.msra.mxu0 0.0
    %394 = vmatpush.msra.mxu0 0.0
    %395 = vmatpush.msra.mxu0 0.0
    %396 = vmatpush.msra.mxu0 0.0
    %397 = vmatpush.msra.mxu0 0.0
    %398 = vmatpush.msra.mxu0 0.0
    %399 = vmatpush.msra.mxu0 0.0
    %400 = vmatpush.msra.mxu0 0.0
    %401 = vmatpush.msra.mxu0 %v332
    %402 = vmatpush.msra.mxu0 %v163
    %403 = vmatpush.msra.mxu0 %v159
    %404 = vmatpush.msra.mxu0 %v155
    %405 = vmatmul.f32.gmra.mxu0 %v317
    %v406 = vpop.f32.mrf.mxu0
    %v407 = vadd.f32 %v282, %v406
    %408 = vmatmul.f32.gmra.mxu0 %v320
    %v409 = vpop.f32.mrf.mxu0
    %v410 = vadd.f32 %v285, %v409
    %411 = vmatmul.f32.gmra.mxu0 %v323
    %v412 = vpop.f32.mrf.mxu0
    %v413 = vadd.f32 %v288, %v412
    %414 = vdwg.mxu0
    %415 = vmatpush.msra.mxu0 0.0
    %416 = vmatpush.msra.mxu0 0.0
    %417 = vmatpush.msra.mxu0 0.0
    %418 = vmatpush.msra.mxu0 0.0
    %419 = vmatpush.msra.mxu0 0.0
    %420 = vmatpush.msra.mxu0 0.0
    %421 = vmatpush.msra.mxu0 0.0
    %422 = vmatpush.msra.mxu0 0.0
    %423 = vmatpush.msra.mxu0 0.0
    %424 = vmatpush.msra.mxu0 0.0
    %425 = vmatpush.msra.mxu0 0.0
    %426 = vmatpush.msra.mxu0 0.0
    %427 = vmatpush.msra.mxu0 %v335
    %428 = vmatpush.msra.mxu0 %v164
    %429 = vmatpush.msra.mxu0 %v160
    %430 = vmatpush.msra.mxu0 %v156
    %431 = vmatmul.f32.gmra.mxu0 %v317
    %v432 = vpop.f32.mrf.mxu0
    %v433 = vadd.f32 %v308, %v432
    %434 = vmatmul.f32.gmra.mxu0 %v320
    %v435 = vpop.f32.mrf.mxu0
    %v436 = vadd.f32 %v311, %v435
    %437 = vmatmul.f32.gmra.mxu0 %v323
    %v438 = vpop.f32.mrf.mxu0
    %v439 = vadd.f32 %v314, %v438
    %440 = vdwg.mxu0
    %v441 = vld [vmem:[%s0 + $0x2] sm:$0xff]
    %v442 = vld [vmem:[%s0 + $0xa] sm:$0xff]
    %v443 = vld [vmem:[%s0 + $0x12] sm:$0xff]
    %s444 = scalar_lea.vmem [#allocation9], 256
    %v445 = vld [vmem:[%s444] sm:$0xff]
    %v446 = vld [vmem:[%s444 + $0x8] sm:$0xff]
    %v447 = vld [vmem:[%s444 + $0x10] sm:$0xff]
    %v448 = vld [vmem:[%s444 + $0x18] sm:$0xff]
    %v449 = vld [vmem:[%s444 + $0x20] sm:$0xff]
    %v450 = vld [vmem:[%s444 + $0x28] sm:$0xff]
    %v451 = vld [vmem:[%s444 + $0x30] sm:$0xff]
    %v452 = vld [vmem:[%s444 + $0x38] sm:$0xff]
    %v453 = vld [vmem:[%s444 + $0x40] sm:$0xff]
    %v454 = vld [vmem:[%s444 + $0x48] sm:$0xff]
    %v455 = vld [vmem:[%s444 + $0x50] sm:$0xff]
    %v456 = vld [vmem:[%s444 + $0x58] sm:$0xff]
    %v457 = vld [vmem:[%s444 + $0x60] sm:$0xf]
    %v458 = vld [vmem:[%s444 + $0x68] sm:$0xf]
    %v459 = vld [vmem:[%s444 + $0x70] sm:$0xf]
    %v460 = vld [vmem:[%s444 + $0x78] sm:$0xf]
    %v462 = vsel %vm189, %v441, 0
    %v465 = vsel %vm189, %v442, 0
    %v468 = vsel %vm189, %v443, 0
    %v471 = vsel %vm199, %v457, 0
    %v474 = vsel %vm199, %v458, 0
    %v477 = vsel %vm199, %v459, 0
    %v480 = vsel %vm199, %v460, 0
    %482 = vmatpush.msra.mxu0 0.0
    %483 = vmatpush.msra.mxu0 0.0
    %484 = vmatpush.msra.mxu0 0.0
    %485 = vmatpush.msra.mxu0 0.0
    %486 = vmatpush.msra.mxu0 0.0
    %487 = vmatpush.msra.mxu0 0.0
    %488 = vmatpush.msra.mxu0 0.0
    %489 = vmatpush.msra.mxu0 0.0
    %490 = vmatpush.msra.mxu0 0.0
    %491 = vmatpush.msra.mxu0 0.0
    %492 = vmatpush.msra.mxu0 0.0
    %493 = vmatpush.msra.mxu0 0.0
    %494 = vmatpush.msra.mxu0 %v471
    %495 = vmatpush.msra.mxu0 %v453
    %496 = vmatpush.msra.mxu0 %v449
    %497 = vmatpush.msra.mxu0 %v445
    %498 = vmatmul.f32.gmra.mxu0 %v462
    %v499 = vpop.f32.mrf.mxu0
    %v500 = vadd.f32 0.0, %v499
    %501 = vmatmul.f32.gmra.mxu0 %v465
    %v502 = vpop.f32.mrf.mxu0
    %v503 = vadd.f32 0.0, %v502
    %504 = vmatmul.f32.gmra.mxu0 %v468
    %v505 = vpop.f32.mrf.mxu0
    %v506 = vadd.f32 0.0, %v505
    %507 = vdwg.mxu0
    %508 = vmatpush.msra.mxu0 0.0
    %509 = vmatpush.msra.mxu0 0.0
    %510 = vmatpush.msra.mxu0 0.0
    %511 = vmatpush.msra.mxu0 0.0
    %512 = vmatpush.msra.mxu0 0.0
    %513 = vmatpush.msra.mxu0 0.0
    %514 = vmatpush.msra.mxu0 0.0
    %515 = vmatpush.msra.mxu0 0.0
    %516 = vmatpush.msra.mxu0 0.0
    %517 = vmatpush.msra.mxu0 0.0
    %518 = vmatpush.msra.mxu0 0.0
    %519 = vmatpush.msra.mxu0 0.0
    %520 = vmatpush.msra.mxu0 %v474
    %521 = vmatpush.msra.mxu0 %v454
    %522 = vmatpush.msra.mxu0 %v450
    %523 = vmatpush.msra.mxu0 %v446
    %524 = vmatmul.f32.gmra.mxu0 %v462
    %v525 = vpop.f32.mrf.mxu0
    %v526 = vadd.f32 0.0, %v525
    %527 = vmatmul.f32.gmra.mxu0 %v465
    %v528 = vpop.f32.mrf.mxu0
    %v529 = vadd.f32 0.0, %v528
    %530 = vmatmul.f32.gmra.mxu0 %v468
    %v531 = vpop.f32.mrf.mxu0
    %v532 = vadd.f32 0.0, %v531
    %533 = vdwg.mxu0
    %534 = vmatpush.msra.mxu0 0.0
    %535 = vmatpush.msra.mxu0 0.0
    %536 = vmatpush.msra.mxu0 0.0
    %537 = vmatpush.msra.mxu0 0.0
    %538 = vmatpush.msra.mxu0 0.0
    %539 = vmatpush.msra.mxu0 0.0
    %540 = vmatpush.msra.mxu0 0.0
    %541 = vmatpush.msra.mxu0 0.0
    %542 = vmatpush.msra.mxu0 0.0
    %543 = vmatpush.msra.mxu0 0.0
    %544 = vmatpush.msra.mxu0 0.0
    %545 = vmatpush.msra.mxu0 0.0
    %546 = vmatpush.msra.mxu0 %v477
    %547 = vmatpush.msra.mxu0 %v455
    %548 = vmatpush.msra.mxu0 %v451
    %549 = vmatpush.msra.mxu0 %v447
    %550 = vmatmul.f32.gmra.mxu0 %v462
    %v551 = vpop.f32.mrf.mxu0
    %v552 = vadd.f32 0.0, %v551
    %553 = vmatmul.f32.gmra.mxu0 %v465
    %v554 = vpop.f32.mrf.mxu0
    %v555 = vadd.f32 0.0, %v554
    %556 = vmatmul.f32.gmra.mxu0 %v468
    %v557 = vpop.f32.mrf.mxu0
    %v558 = vadd.f32 0.0, %v557
    %559 = vdwg.mxu0
    %560 = vmatpush.msra.mxu0 0.0
    %561 = vmatpush.msra.mxu0 0.0
    %562 = vmatpush.msra.mxu0 0.0
    %563 = vmatpush.msra.mxu0 0.0
    %564 = vmatpush.msra.mxu0 0.0
    %565 = vmatpush.msra.mxu0 0.0
    %566 = vmatpush.msra.mxu0 0.0
    %567 = vmatpush.msra.mxu0 0.0
    %568 = vmatpush.msra.mxu0 0.0
    %569 = vmatpush.msra.mxu0 0.0
    %570 = vmatpush.msra.mxu0 0.0
    %571 = vmatpush.msra.mxu0 0.0
    %572 = vmatpush.msra.mxu0 %v480
    %573 = vmatpush.msra.mxu0 %v456
    %574 = vmatpush.msra.mxu0 %v452
    %575 = vmatpush.msra.mxu0 %v448
    %576 = vmatmul.f32.gmra.mxu0 %v462
    %v577 = vpop.f32.mrf.mxu0
    %v578 = vadd.f32 0.0, %v577
    %579 = vmatmul.f32.gmra.mxu0 %v465
    %v580 = vpop.f32.mrf.mxu0
    %v581 = vadd.f32 0.0, %v580
    %582 = vmatmul.f32.gmra.mxu0 %v468
    %v583 = vpop.f32.mrf.mxu0
    %v584 = vadd.f32 0.0, %v583
    %585 = vdwg.mxu0
    %v586 = vadd.f32 %v355, %v500
    %v587 = vadd.f32 %v381, %v526
    %v588 = vadd.f32 %v407, %v552
    %v589 = vadd.f32 %v433, %v578
    %v590 = vadd.f32 %v358, %v503
    %v591 = vadd.f32 %v384, %v529
    %v592 = vadd.f32 %v410, %v555
    %v593 = vadd.f32 %v436, %v581
    %v594 = vadd.f32 %v361, %v506
    %v595 = vadd.f32 %v387, %v532
    %v596 = vadd.f32 %v413, %v558
    %v597 = vadd.f32 %v439, %v584
    %v598 = vld [vmem:[%s0 + $0x3] sm:$0xff]
    %v599 = vld [vmem:[%s0 + $0xb] sm:$0xff]
    %v600 = vld [vmem:[%s0 + $0x13] sm:$0xff]
    %s601 = scalar_lea.vmem [#allocation9], 384
    %v602 = vld [vmem:[%s601] sm:$0xff]
    %v603 = vld [vmem:[%s601 + $0x8] sm:$0xff]
    %v604 = vld [vmem:[%s601 + $0x10] sm:$0xff]
    %v605 = vld [vmem:[%s601 + $0x18] sm:$0xff]
    %v606 = vld [vmem:[%s601 + $0x20] sm:$0xff]
    %v607 = vld [vmem:[%s601 + $0x28] sm:$0xff]
    %v608 = vld [vmem:[%s601 + $0x30] sm:$0xff]
    %v609 = vld [vmem:[%s601 + $0x38] sm:$0xff]
    %v610 = vld [vmem:[%s601 + $0x40] sm:$0xff]
    %v611 = vld [vmem:[%s601 + $0x48] sm:$0xff]
    %v612 = vld [vmem:[%s601 + $0x50] sm:$0xff]
    %v613 = vld [vmem:[%s601 + $0x58] sm:$0xff]
    %v614 = vld [vmem:[%s601 + $0x60] sm:$0xf]
    %v615 = vld [vmem:[%s601 + $0x68] sm:$0xf]
    %v616 = vld [vmem:[%s601 + $0x70] sm:$0xf]
    %v617 = vld [vmem:[%s601 + $0x78] sm:$0xf]
    %v619 = vsel %vm189, %v598, 0
    %v622 = vsel %vm189, %v599, 0
    %v625 = vsel %vm189, %v600, 0
    %v628 = vsel %vm199, %v614, 0
    %v631 = vsel %vm199, %v615, 0
    %v634 = vsel %vm199, %v616, 0
    %v637 = vsel %vm199, %v617, 0
    %639 = vmatpush.msra.mxu0 0.0
    %640 = vmatpush.msra.mxu0 0.0
    %641 = vmatpush.msra.mxu0 0.0
    %642 = vmatpush.msra.mxu0 0.0
    %643 = vmatpush.msra.mxu0 0.0
    %644 = vmatpush.msra.mxu0 0.0
    %645 = vmatpush.msra.mxu0 0.0
    %646 = vmatpush.msra.mxu0 0.0
    %647 = vmatpush.msra.mxu0 0.0
    %648 = vmatpush.msra.mxu0 0.0
    %649 = vmatpush.msra.mxu0 0.0
    %650 = vmatpush.msra.mxu0 0.0
    %651 = vmatpush.msra.mxu0 %v628
    %652 = vmatpush.msra.mxu0 %v610
    %653 = vmatpush.msra.mxu0 %v606
    %654 = vmatpush.msra.mxu0 %v602
    %655 = vmatmul.f32.gmra.mxu0 %v619
    %v656 = vpop.f32.mrf.mxu0
    %v657 = vadd.f32 0.0, %v656
    %658 = vmatmul.f32.gmra.mxu0 %v622
    %v659 = vpop.f32.mrf.mxu0
    %v660 = vadd.f32 0.0, %v659
    %661 = vmatmul.f32.gmra.mxu0 %v625
    %v662 = vpop.f32.mrf.mxu0
    %v663 = vadd.f32 0.0, %v662
    %664 = vdwg.mxu0
    %665 = vmatpush.msra.mxu0 0.0
    %666 = vmatpush.msra.mxu0 0.0
    %667 = vmatpush.msra.mxu0 0.0
    %668 = vmatpush.msra.mxu0 0.0
    %669 = vmatpush.msra.mxu0 0.0
    %670 = vmatpush.msra.mxu0 0.0
    %671 = vmatpush.msra.mxu0 0.0
    %672 = vmatpush.msra.mxu0 0.0
    %673 = vmatpush.msra.mxu0 0.0
    %674 = vmatpush.msra.mxu0 0.0
    %675 = vmatpush.msra.mxu0 0.0
    %676 = vmatpush.msra.mxu0 0.0
    %677 = vmatpush.msra.mxu0 %v631
    %678 = vmatpush.msra.mxu0 %v611
    %679 = vmatpush.msra.mxu0 %v607
    %680 = vmatpush.msra.mxu0 %v603
    %681 = vmatmul.f32.gmra.mxu0 %v619
    %v682 = vpop.f32.mrf.mxu0
    %v683 = vadd.f32 0.0, %v682
    %684 = vmatmul.f32.gmra.mxu0 %v622
    %v685 = vpop.f32.mrf.mxu0
    %v686 = vadd.f32 0.0, %v685
    %687 = vmatmul.f32.gmra.mxu0 %v625
    %v688 = vpop.f32.mrf.mxu0
    %v689 = vadd.f32 0.0, %v688
    %690 = vdwg.mxu0
    %691 = vmatpush.msra.mxu0 0.0
    %692 = vmatpush.msra.mxu0 0.0
    %693 = vmatpush.msra.mxu0 0.0
    %694 = vmatpush.msra.mxu0 0.0
    %695 = vmatpush.msra.mxu0 0.0
    %696 = vmatpush.msra.mxu0 0.0
    %697 = vmatpush.msra.mxu0 0.0
    %698 = vmatpush.msra.mxu0 0.0
    %699 = vmatpush.msra.mxu0 0.0
    %700 = vmatpush.msra.mxu0 0.0
    %701 = vmatpush.msra.mxu0 0.0
    %702 = vmatpush.msra.mxu0 0.0
    %703 = vmatpush.msra.mxu0 %v634
    %704 = vmatpush.msra.mxu0 %v612
    %705 = vmatpush.msra.mxu0 %v608
    %706 = vmatpush.msra.mxu0 %v604
    %707 = vmatmul.f32.gmra.mxu0 %v619
    %v708 = vpop.f32.mrf.mxu0
    %v709 = vadd.f32 0.0, %v708
    %710 = vmatmul.f32.gmra.mxu0 %v622
    %v711 = vpop.f32.mrf.mxu0
    %v712 = vadd.f32 0.0, %v711
    %713 = vmatmul.f32.gmra.mxu0 %v625
    %v714 = vpop.f32.mrf.mxu0
    %v715 = vadd.f32 0.0, %v714
    %716 = vdwg.mxu0
    %717 = vmatpush.msra.mxu0 0.0
    %718 = vmatpush.msra.mxu0 0.0
    %719 = vmatpush.msra.mxu0 0.0
    %720 = vmatpush.msra.mxu0 0.0
    %721 = vmatpush.msra.mxu0 0.0
    %722 = vmatpush.msra.mxu0 0.0
    %723 = vmatpush.msra.mxu0 0.0
    %724 = vmatpush.msra.mxu0 0.0
    %725 = vmatpush.msra.mxu0 0.0
    %726 = vmatpush.msra.mxu0 0.0
    %727 = vmatpush.msra.mxu0 0.0
    %728 = vmatpush.msra.mxu0 0.0
    %729 = vmatpush.msra.mxu0 %v637
    %730 = vmatpush.msra.mxu0 %v613
    %731 = vmatpush.msra.mxu0 %v609
    %732 = vmatpush.msra.mxu0 %v605
    %733 = vmatmul.f32.gmra.mxu0 %v619
    %v734 = vpop.f32.mrf.mxu0
    %v735 = vadd.f32 0.0, %v734
    %736 = vmatmul.f32.gmra.mxu0 %v622
    %v737 = vpop.f32.mrf.mxu0
    %v738 = vadd.f32 0.0, %v737
    %739 = vmatmul.f32.gmra.mxu0 %v625
    %v740 = vpop.f32.mrf.mxu0
    %v741 = vadd.f32 0.0, %v740
    %742 = vdwg.mxu0
    %v743 = vadd.f32 %v586, %v657
    %v744 = vadd.f32 %v587, %v683
    %v745 = vadd.f32 %v588, %v709
    %v746 = vadd.f32 %v589, %v735
    %v747 = vadd.f32 %v590, %v660
    %v748 = vadd.f32 %v591, %v686
    %v749 = vadd.f32 %v592, %v712
    %v750 = vadd.f32 %v593, %v738
    %v751 = vadd.f32 %v594, %v663
    %v752 = vadd.f32 %v595, %v689
    %v753 = vadd.f32 %v596, %v715
    %v754 = vadd.f32 %v597, %v741
    %v755 = vld [vmem:[%s0 + $0x4] sm:$0xff]
    %v756 = vld [vmem:[%s0 + $0xc] sm:$0xff]
    %v757 = vld [vmem:[%s0 + $0x14] sm:$0xff]
    %s758 = scalar_lea.vmem [#allocation9], 512
    %v759 = vld [vmem:[%s758] sm:$0xff]
    %v760 = vld [vmem:[%s758 + $0x8] sm:$0xff]
    %v761 = vld [vmem:[%s758 + $0x10] sm:$0xff]
    %v762 = vld [vmem:[%s758 + $0x18] sm:$0xff]
    %v763 = vld [vmem:[%s758 + $0x20] sm:$0xff]
    %v764 = vld [vmem:[%s758 + $0x28] sm:$0xff]
    %v765 = vld [vmem:[%s758 + $0x30] sm:$0xff]
    %v766 = vld [vmem:[%s758 + $0x38] sm:$0xff]
    %v767 = vld [vmem:[%s758 + $0x40] sm:$0xff]
    %v768 = vld [vmem:[%s758 + $0x48] sm:$0xff]
    %v769 = vld [vmem:[%s758 + $0x50] sm:$0xff]
    %v770 = vld [vmem:[%s758 + $0x58] sm:$0xff]
    %v771 = vld [vmem:[%s758 + $0x60] sm:$0xf]
    %v772 = vld [vmem:[%s758 + $0x68] sm:$0xf]
    %v773 = vld [vmem:[%s758 + $0x70] sm:$0xf]
    %v774 = vld [vmem:[%s758 + $0x78] sm:$0xf]
    %v776 = vsel %vm189, %v755, 0
    %v779 = vsel %vm189, %v756, 0
    %v782 = vsel %vm189, %v757, 0
    %v785 = vsel %vm199, %v771, 0
    %v788 = vsel %vm199, %v772, 0
    %v791 = vsel %vm199, %v773, 0
    %v794 = vsel %vm199, %v774, 0
    %796 = vmatpush.msra.mxu0 0.0
    %797 = vmatpush.msra.mxu0 0.0
    %798 = vmatpush.msra.mxu0 0.0
    %799 = vmatpush.msra.mxu0 0.0
    %800 = vmatpush.msra.mxu0 0.0
    %801 = vmatpush.msra.mxu0 0.0
    %802 = vmatpush.msra.mxu0 0.0
    %803 = vmatpush.msra.mxu0 0.0
    %804 = vmatpush.msra.mxu0 0.0
    %805 = vmatpush.msra.mxu0 0.0
    %806 = vmatpush.msra.mxu0 0.0
    %807 = vmatpush.msra.mxu0 0.0
    %808 = vmatpush.msra.mxu0 %v785
    %809 = vmatpush.msra.mxu0 %v767
    %810 = vmatpush.msra.mxu0 %v763
    %811 = vmatpush.msra.mxu0 %v759
    %812 = vmatmul.f32.gmra.mxu0 %v776
    %v813 = vpop.f32.mrf.mxu0
    %v814 = vadd.f32 0.0, %v813
    %815 = vmatmul.f32.gmra.mxu0 %v779
    %v816 = vpop.f32.mrf.mxu0
    %v817 = vadd.f32 0.0, %v816
    %818 = vmatmul.f32.gmra.mxu0 %v782
    %v819 = vpop.f32.mrf.mxu0
    %v820 = vadd.f32 0.0, %v819
    %821 = vdwg.mxu0
    %822 = vmatpush.msra.mxu0 0.0
    %823 = vmatpush.msra.mxu0 0.0
    %824 = vmatpush.msra.mxu0 0.0
    %825 = vmatpush.msra.mxu0 0.0
    %826 = vmatpush.msra.mxu0 0.0
    %827 = vmatpush.msra.mxu0 0.0
    %828 = vmatpush.msra.mxu0 0.0
    %829 = vmatpush.msra.mxu0 0.0
    %830 = vmatpush.msra.mxu0 0.0
    %831 = vmatpush.msra.mxu0 0.0
    %832 = vmatpush.msra.mxu0 0.0
    %833 = vmatpush.msra.mxu0 0.0
    %834 = vmatpush.msra.mxu0 %v788
    %835 = vmatpush.msra.mxu0 %v768
    %836 = vmatpush.msra.mxu0 %v764
    %837 = vmatpush.msra.mxu0 %v760
    %838 = vmatmul.f32.gmra.mxu0 %v776
    %v839 = vpop.f32.mrf.mxu0
    %v840 = vadd.f32 0.0, %v839
    %841 = vmatmul.f32.gmra.mxu0 %v779
    %v842 = vpop.f32.mrf.mxu0
    %v843 = vadd.f32 0.0, %v842
    %844 = vmatmul.f32.gmra.mxu0 %v782
    %v845 = vpop.f32.mrf.mxu0
    %v846 = vadd.f32 0.0, %v845
    %847 = vdwg.mxu0
    %848 = vmatpush.msra.mxu0 0.0
    %849 = vmatpush.msra.mxu0 0.0
    %850 = vmatpush.msra.mxu0 0.0
    %851 = vmatpush.msra.mxu0 0.0
    %852 = vmatpush.msra.mxu0 0.0
    %853 = vmatpush.msra.mxu0 0.0
    %854 = vmatpush.msra.mxu0 0.0
    %855 = vmatpush.msra.mxu0 0.0
    %856 = vmatpush.msra.mxu0 0.0
    %857 = vmatpush.msra.mxu0 0.0
    %858 = vmatpush.msra.mxu0 0.0
    %859 = vmatpush.msra.mxu0 0.0
    %860 = vmatpush.msra.mxu0 %v791
    %861 = vmatpush.msra.mxu0 %v769
    %862 = vmatpush.msra.mxu0 %v765
    %863 = vmatpush.msra.mxu0 %v761
    %864 = vmatmul.f32.gmra.mxu0 %v776
    %v865 = vpop.f32.mrf.mxu0
    %v866 = vadd.f32 0.0, %v865
    %867 = vmatmul.f32.gmra.mxu0 %v779
    %v868 = vpop.f32.mrf.mxu0
    %v869 = vadd.f32 0.0, %v868
    %870 = vmatmul.f32.gmra.mxu0 %v782
    %v871 = vpop.f32.mrf.mxu0
    %v872 = vadd.f32 0.0, %v871
    %873 = vdwg.mxu0
    %874 = vmatpush.msra.mxu0 0.0
    %875 = vmatpush.msra.mxu0 0.0
    %876 = vmatpush.msra.mxu0 0.0
    %877 = vmatpush.msra.mxu0 0.0
    %878 = vmatpush.msra.mxu0 0.0
    %879 = vmatpush.msra.mxu0 0.0
    %880 = vmatpush.msra.mxu0 0.0
    %881 = vmatpush.msra.mxu0 0.0
    %882 = vmatpush.msra.mxu0 0.0
    %883 = vmatpush.msra.mxu0 0.0
    %884 = vmatpush.msra.mxu0 0.0
    %885 = vmatpush.msra.mxu0 0.0
    %886 = vmatpush.msra.mxu0 %v794
    %887 = vmatpush.msra.mxu0 %v770
    %888 = vmatpush.msra.mxu0 %v766
    %889 = vmatpush.msra.mxu0 %v762
    %890 = vmatmul.f32.gmra.mxu0 %v776
    %v891 = vpop.f32.mrf.mxu0
    %v892 = vadd.f32 0.0, %v891
    %893 = vmatmul.f32.gmra.mxu0 %v779
    %v894 = vpop.f32.mrf.mxu0
    %v895 = vadd.f32 0.0, %v894
    %896 = vmatmul.f32.gmra.mxu0 %v782
    %v897 = vpop.f32.mrf.mxu0
    %v898 = vadd.f32 0.0, %v897
    %899 = vdwg.mxu0
    %v900 = vadd.f32 %v743, %v814
    %v901 = vadd.f32 %v744, %v840
    %v902 = vadd.f32 %v745, %v866
    %v903 = vadd.f32 %v746, %v892
    %v904 = vadd.f32 %v747, %v817
    %v905 = vadd.f32 %v748, %v843
    %v906 = vadd.f32 %v749, %v869
    %v907 = vadd.f32 %v750, %v895
    %v908 = vadd.f32 %v751, %v820
    %v909 = vadd.f32 %v752, %v846
    %v910 = vadd.f32 %v753, %v872
    %v911 = vadd.f32 %v754, %v898
    %v912 = vld [vmem:[#allocation12] sm:$0x3]
    %v914 = vperm.slane %v912, 0
    %v915 = vperm.slane %v912, 1
    %v918 = vadd.f32 %v900, %v914
    %v919 = vadd.f32 %v901, %v915
    %v920 = vadd.f32 %v904, %v914
    %v921 = vadd.f32 %v905, %v915
    %v922 = vadd.f32 %v908, %v914
    %v923 = vadd.f32 %v909, %v915
    %v924 = vmax.f32 %v918, 0.0
    %v925 = vmax.f32 %v919, 0.0
    %v926 = vmax.f32 %v920, 0.0
    %v927 = vmax.f32 %v921, 0.0
    %v928 = vmax.f32 %v922, 0.0
    %v929 = vmax.f32 %v923, 0.0
    %v930 = vadd.f32 %v902, %v914
    %v931 = vadd.f32 %v903, %v915
    %v932 = vadd.f32 %v906, %v914
    %v933 = vadd.f32 %v907, %v915
    %v934 = vadd.f32 %v910, %v914
    %v935 = vadd.f32 %v911, %v915
    %v936 = vmax.f32 %v930, 0.0
    %v937 = vmax.f32 %v931, 0.0
    %v938 = vmax.f32 %v932, 0.0
    %v939 = vmax.f32 %v933, 0.0
    %v940 = vmax.f32 %v934, 0.0
    %v941 = vmax.f32 %v935, 0.0
    %v942 = vmax.f32 %v924, %v936
    %v943 = vmax.f32 %v925, %v937
    %v944 = vmax.f32 %v926, %v938
    %v945 = vmax.f32 %v927, %v939
    %v946 = vmax.f32 %v928, %v940
    %v947 = vmax.f32 %v929, %v941
    %948 = vst [vmem:[#allocation2] sm:$0xff] %v942
    %949 = vst [vmem:[#allocation2 + $0x8] sm:$0xff] %v943
    %950 = vst [vmem:[#allocation2 + $0x10] sm:$0xff] %v944
    %951 = vst [vmem:[#allocation2 + $0x18] sm:$0xff] %v945
    %952 = vst [vmem:[#allocation2 + $0x20] sm:$0xff] %v946
    %953 = vst [vmem:[#allocation2 + $0x28] sm:$0xff] %v947
    %v954 = vld [vmem:[#allocation2] ss:$8 sm:$0x3]
    %s955 = scalar_lea.vmem [#allocation2], 1
    %v956 = vld [vmem:[%s955] ss:$8 sm:$0x3]
    %v957 = vmax.f32 %v954, %v956
    %v958 = vlaneseq
    %vm959 = vcmp.ge.s32.totalorder %v958, 0
    %vm960 = vcmp.lt.s32.totalorder %v958, 256
    %vm961 = vmand %vm959, %vm960
    %962 = vst.msk [vmem:[#allocation3] ss:$8 sm:$0x3] %vm961, %v957
    %963 = vst.msk [vmem:[#allocation3] ss:$8 sm:$0x0] %vm961, %v957
    %s964 = scalar_lea.vmem [#allocation2], 2
    %v965 = vld [vmem:[%s964] ss:$8 sm:$0x3]
    %s966 = scalar_lea.vmem [#allocation2], 3
    %v967 = vld [vmem:[%s966] ss:$8 sm:$0x3]
    %v968 = vmax.f32 %v965, %v967
    %s969 = scalar_lea.vmem [#allocation3], 1
    %970 = vst.msk [vmem:[%s969] ss:$8 sm:$0x3] %vm961, %v968
    %971 = vst.msk [vmem:[%s969] ss:$8 sm:$0x0] %vm961, %v968
    %s972 = scalar_lea.vmem [#allocation2], 4
    %v973 = vld [vmem:[%s972] ss:$8 sm:$0x3]
    %s974 = scalar_lea.vmem [#allocation2], 5
    %v975 = vld [vmem:[%s974] ss:$8 sm:$0x3]
    %v976 = vmax.f32 %v973, %v975
    %s977 = scalar_lea.vmem [#allocation3], 2
    %978 = vst.msk [vmem:[%s977] ss:$8 sm:$0x3] %vm961, %v976
    %979 = vst.msk [vmem:[%s977] ss:$8 sm:$0x0] %vm961, %v976
    %s980 = scalar_lea.vmem [#allocation2], 6
    %v981 = vld [vmem:[%s980] ss:$8 sm:$0x3]
    %s982 = scalar_lea.vmem [#allocation2], 7
    %v983 = vld [vmem:[%s982] ss:$8 sm:$0x3]
    %v984 = vmax.f32 %v981, %v983
    %s985 = scalar_lea.vmem [#allocation3], 3
    %986 = vst.msk [vmem:[%s985] ss:$8 sm:$0x3] %vm961, %v984
    %987 = vst.msk [vmem:[%s985] ss:$8 sm:$0x0] %vm961, %v984
    %s988 = scalar_lea.vmem [#allocation2], 16
    %v989 = vld [vmem:[%s988] ss:$8 sm:$0x3]
    %s990 = scalar_lea.vmem [#allocation2], 17
    %v991 = vld [vmem:[%s990] ss:$8 sm:$0x3]
    %v992 = vmax.f32 %v989, %v991
    %s993 = scalar_lea.vmem [#allocation3], 4
    %994 = vst.msk [vmem:[%s993] ss:$8 sm:$0x3] %vm961, %v992
    %995 = vst.msk [vmem:[%s993] ss:$8 sm:$0x0] %vm961, %v992
    %s996 = scalar_lea.vmem [#allocation2], 18
    %v997 = vld [vmem:[%s996] ss:$8 sm:$0x3]
    %s998 = scalar_lea.vmem [#allocation2], 19
    %v999 = vld [vmem:[%s998] ss:$8 sm:$0x3]
    %v1000 = vmax.f32 %v997, %v999
    %s1001 = scalar_lea.vmem [#allocation3], 5
    %1002 = vst.msk [vmem:[%s1001] ss:$8 sm:$0x3] %vm961, %v1000
    %1003 = vst.msk [vmem:[%s1001] ss:$8 sm:$0x0] %vm961, %v1000
    %s1004 = scalar_lea.vmem [#allocation2], 20
    %v1005 = vld [vmem:[%s1004] ss:$8 sm:$0x3]
    %s1006 = scalar_lea.vmem [#allocation2], 21
    %v1007 = vld [vmem:[%s1006] ss:$8 sm:$0x3]
    %v1008 = vmax.f32 %v1005, %v1007
    %s1009 = scalar_lea.vmem [#allocation3], 6
    %1010 = vst.msk [vmem:[%s1009] ss:$8 sm:$0x3] %vm961, %v1008
    %1011 = vst.msk [vmem:[%s1009] ss:$8 sm:$0x0] %vm961, %v1008
    %s1012 = scalar_lea.vmem [#allocation2], 22
    %v1013 = vld [vmem:[%s1012] ss:$8 sm:$0x3]
    %s1014 = scalar_lea.vmem [#allocation2], 23
    %v1015 = vld [vmem:[%s1014] ss:$8 sm:$0x3]
    %v1016 = vmax.f32 %v1013, %v1015
    %s1017 = scalar_lea.vmem [#allocation3], 7
    %1018 = vst.msk [vmem:[%s1017] ss:$8 sm:$0x3] %vm961, %v1016
    %1019 = vst.msk [vmem:[%s1017] ss:$8 sm:$0x0] %vm961, %v1016
    %s1020 = scalar_lea.vmem [#allocation2], 32
    %v1021 = vld [vmem:[%s1020] ss:$8 sm:$0x3]
    %s1022 = scalar_lea.vmem [#allocation2], 33
    %v1023 = vld [vmem:[%s1022] ss:$8 sm:$0x3]
    %v1024 = vmax.f32 %v1021, %v1023
    %s1025 = scalar_lea.vmem [#allocation3], 16
    %1026 = vst.msk [vmem:[%s1025] ss:$8 sm:$0x3] %vm961, %v1024
    %1027 = vst.msk [vmem:[%s1025] ss:$8 sm:$0x0] %vm961, %v1024
    %s1028 = scalar_lea.vmem [#allocation2], 34
    %v1029 = vld [vmem:[%s1028] ss:$8 sm:$0x3]
    %s1030 = scalar_lea.vmem [#allocation2], 35
    %v1031 = vld [vmem:[%s1030] ss:$8 sm:$0x3]
    %v1032 = vmax.f32 %v1029, %v1031
    %s1033 = scalar_lea.vmem [#allocation3], 17
    %1034 = vst.msk [vmem:[%s1033] ss:$8 sm:$0x3] %vm961, %v1032
    %1035 = vst.msk [vmem:[%s1033] ss:$8 sm:$0x0] %vm961, %v1032
    %s1036 = scalar_lea.vmem [#allocation2], 36
    %v1037 = vld [vmem:[%s1036] ss:$8 sm:$0x3]
    %s1038 = scalar_lea.vmem [#allocation2], 37
    %v1039 = vld [vmem:[%s1038] ss:$8 sm:$0x3]
    %v1040 = vmax.f32 %v1037, %v1039
    %s1041 = scalar_lea.vmem [#allocation3], 18
    %1042 = vst.msk [vmem:[%s1041] ss:$8 sm:$0x3] %vm961, %v1040
    %1043 = vst.msk [vmem:[%s1041] ss:$8 sm:$0x0] %vm961, %v1040
    %s1044 = scalar_lea.vmem [#allocation2], 38
    %v1045 = vld [vmem:[%s1044] ss:$8 sm:$0x3]
    %s1046 = scalar_lea.vmem [#allocation2], 39
    %v1047 = vld [vmem:[%s1046] ss:$8 sm:$0x3]
    %v1048 = vmax.f32 %v1045, %v1047
    %s1049 = scalar_lea.vmem [#allocation3], 19
    %1050 = vst.msk [vmem:[%s1049] ss:$8 sm:$0x3] %vm961, %v1048
    %1051 = vst.msk [vmem:[%s1049] ss:$8 sm:$0x0] %vm961, %v1048
    %v1052 = vld [vmem:[#allocation3] sm:$0xff]
    %v1053 = vld [vmem:[#allocation3 + $0x8] sm:$0xff]
    %v1054 = vld [vmem:[#allocation14] sm:$0xff]
    %v1055 = vld [vmem:[#allocation14 + $0x8] sm:$0xff]
    %v1056 = vld [vmem:[#allocation14 + $0x10] sm:$0xff]
    %v1057 = vld [vmem:[#allocation14 + $0x18] sm:$0xff]
    %v1058 = vld [vmem:[#allocation14 + $0x20] sm:$0xff]
    %v1059 = vld [vmem:[#allocation14 + $0x28] sm:$0xff]
    %v1060 = vld [vmem:[#allocation14 + $0x30] sm:$0xff]
    %v1061 = vld [vmem:[#allocation14 + $0x38] sm:$0xff]
    %v1062 = vld [vmem:[#allocation14 + $0x40] sm:$0xff]
    %v1063 = vld [vmem:[#allocation14 + $0x48] sm:$0xff]
    %v1064 = vld [vmem:[#allocation14 + $0x50] sm:$0xff]
    %v1065 = vld [vmem:[#allocation14 + $0x58] sm:$0xff]
    %v1066 = vld [vmem:[#allocation14 + $0x60] sm:$0xff]
    %v1067 = vld [vmem:[#allocation14 + $0x68] sm:$0xff]
    %v1068 = vld [vmem:[#allocation14 + $0x70] sm:$0xff]
    %v1069 = vld [vmem:[#allocation14 + $0x78] sm:$0xff]
    %v1070 = vld [vmem:[#allocation14 + $0x80] sm:$0xff]
    %v1071 = vld [vmem:[#allocation14 + $0x88] sm:$0xff]
    %v1072 = vld [vmem:[#allocation14 + $0x90] sm:$0xff]
    %v1073 = vld [vmem:[#allocation14 + $0x98] sm:$0xff]
    %v1074 = vld [vmem:[#allocation14 + $0xa0] sm:$0xff]
    %v1075 = vld [vmem:[#allocation14 + $0xa8] sm:$0xff]
    %v1076 = vld [vmem:[#allocation14 + $0xb0] sm:$0xff]
    %v1077 = vld [vmem:[#allocation14 + $0xb8] sm:$0xff]
    %v1078 = vld [vmem:[#allocation14 + $0xc0] sm:$0xff]
    %v1079 = vld [vmem:[#allocation14 + $0xc8] sm:$0xff]
    %v1080 = vld [vmem:[#allocation14 + $0xd0] sm:$0xff]
    %v1081 = vld [vmem:[#allocation14 + $0xd8] sm:$0xff]
    %v1082 = vld [vmem:[#allocation14 + $0xe0] sm:$0xff]
    %v1083 = vld [vmem:[#allocation14 + $0xe8] sm:$0xff]
    %v1084 = vld [vmem:[#allocation14 + $0xf0] sm:$0xff]
    %v1085 = vld [vmem:[#allocation14 + $0xf8] sm:$0xff]
    %v1086 = vld [vmem:[#allocation14 + $0x100] sm:$0xff]
    %v1087 = vld [vmem:[#allocation14 + $0x108] sm:$0xff]
    %v1088 = vld [vmem:[#allocation14 + $0x110] sm:$0xff]
    %v1089 = vld [vmem:[#allocation14 + $0x118] sm:$0xff]
    %v1090 = vld [vmem:[#allocation14 + $0x120] sm:$0xff]
    %v1091 = vld [vmem:[#allocation14 + $0x128] sm:$0xff]
    %v1092 = vld [vmem:[#allocation14 + $0x130] sm:$0xff]
    %v1093 = vld [vmem:[#allocation14 + $0x138] sm:$0xff]
    %v1094 = vld [vmem:[#allocation14 + $0x140] sm:$0xff]
    %v1095 = vld [vmem:[#allocation14 + $0x148] sm:$0xff]
    %v1096 = vld [vmem:[#allocation14 + $0x150] sm:$0xff]
    %v1097 = vld [vmem:[#allocation14 + $0x158] sm:$0xff]
    %v1098 = vld [vmem:[#allocation14 + $0x160] sm:$0xff]
    %v1099 = vld [vmem:[#allocation14 + $0x168] sm:$0xff]
    %v1100 = vld [vmem:[#allocation14 + $0x170] sm:$0xff]
    %v1101 = vld [vmem:[#allocation14 + $0x178] sm:$0xff]
    %v1102 = vld [vmem:[#allocation14 + $0x180] sm:$0xff]
    %v1103 = vld [vmem:[#allocation14 + $0x188] sm:$0xff]
    %v1104 = vld [vmem:[#allocation14 + $0x190] sm:$0xff]
    %v1105 = vld [vmem:[#allocation14 + $0x198] sm:$0xff]
    %v1106 = vld [vmem:[#allocation14 + $0x1a0] sm:$0xff]
    %v1107 = vld [vmem:[#allocation14 + $0x1a8] sm:$0xff]
    %v1108 = vld [vmem:[#allocation14 + $0x1b0] sm:$0xff]
    %v1109 = vld [vmem:[#allocation14 + $0x1b8] sm:$0xff]
    %v1110 = vld [vmem:[#allocation14 + $0x1c0] sm:$0xff]
    %v1111 = vld [vmem:[#allocation14 + $0x1c8] sm:$0xff]
    %v1112 = vld [vmem:[#allocation14 + $0x1d0] sm:$0xff]
    %v1113 = vld [vmem:[#allocation14 + $0x1d8] sm:$0xff]
    %v1114 = vld [vmem:[#allocation14 + $0x1e0] sm:$0xff]
    %v1115 = vld [vmem:[#allocation14 + $0x1e8] sm:$0xff]
    %v1116 = vld [vmem:[#allocation14 + $0x1f0] sm:$0xff]
    %v1117 = vld [vmem:[#allocation14 + $0x1f8] sm:$0xff]
    %v1118 = vld [vmem:[#allocation14 + $0x200] sm:$0xff]
    %v1119 = vld [vmem:[#allocation14 + $0x208] sm:$0xff]
    %v1120 = vld [vmem:[#allocation14 + $0x210] sm:$0xff]
    %v1121 = vld [vmem:[#allocation14 + $0x218] sm:$0xff]
    %v1122 = vld [vmem:[#allocation14 + $0x220] sm:$0xff]
    %v1123 = vld [vmem:[#allocation14 + $0x228] sm:$0xff]
    %v1124 = vld [vmem:[#allocation14 + $0x230] sm:$0xff]
    %v1125 = vld [vmem:[#allocation14 + $0x238] sm:$0xff]
    %v1126 = vld [vmem:[#allocation14 + $0x240] sm:$0xff]
    %v1127 = vld [vmem:[#allocation14 + $0x248] sm:$0xff]
    %v1128 = vld [vmem:[#allocation14 + $0x250] sm:$0xff]
    %v1129 = vld [vmem:[#allocation14 + $0x258] sm:$0xff]
    %v1130 = vld [vmem:[#allocation14 + $0x260] sm:$0xff]
    %v1131 = vld [vmem:[#allocation14 + $0x268] sm:$0xff]
    %v1132 = vld [vmem:[#allocation14 + $0x270] sm:$0xff]
    %v1133 = vld [vmem:[#allocation14 + $0x278] sm:$0xff]
    %v1134 = vld [vmem:[#allocation14 + $0x280] sm:$0xff]
    %v1135 = vld [vmem:[#allocation14 + $0x288] sm:$0xff]
    %v1136 = vld [vmem:[#allocation14 + $0x290] sm:$0xff]
    %v1137 = vld [vmem:[#allocation14 + $0x298] sm:$0xff]
    %v1138 = vld [vmem:[#allocation14 + $0x2a0] sm:$0xff]
    %v1139 = vld [vmem:[#allocation14 + $0x2a8] sm:$0xff]
    %v1140 = vld [vmem:[#allocation14 + $0x2b0] sm:$0xff]
    %v1141 = vld [vmem:[#allocation14 + $0x2b8] sm:$0xff]
    %v1142 = vld [vmem:[#allocation14 + $0x2c0] sm:$0xff]
    %v1143 = vld [vmem:[#allocation14 + $0x2c8] sm:$0xff]
    %v1144 = vld [vmem:[#allocation14 + $0x2d0] sm:$0xff]
    %v1145 = vld [vmem:[#allocation14 + $0x2d8] sm:$0xff]
    %v1146 = vld [vmem:[#allocation14 + $0x2e0] sm:$0xff]
    %v1147 = vld [vmem:[#allocation14 + $0x2e8] sm:$0xff]
    %v1148 = vld [vmem:[#allocation14 + $0x2f0] sm:$0xff]
    %v1149 = vld [vmem:[#allocation14 + $0x2f8] sm:$0xff]
    %v1150 = vld [vmem:[#allocation14 + $0x300] sm:$0xff]
    %v1151 = vld [vmem:[#allocation14 + $0x308] sm:$0xff]
    %v1152 = vld [vmem:[#allocation14 + $0x310] sm:$0xff]
    %v1153 = vld [vmem:[#allocation14 + $0x318] sm:$0xff]
    %v1154 = vld [vmem:[#allocation14 + $0x320] sm:$0xff]
    %v1155 = vld [vmem:[#allocation14 + $0x328] sm:$0xff]
    %v1156 = vld [vmem:[#allocation14 + $0x330] sm:$0xff]
    %v1157 = vld [vmem:[#allocation14 + $0x338] sm:$0xff]
    %v1158 = vld [vmem:[#allocation14 + $0x340] sm:$0xff]
    %v1159 = vld [vmem:[#allocation14 + $0x348] sm:$0xff]
    %v1160 = vld [vmem:[#allocation14 + $0x350] sm:$0xff]
    %v1161 = vld [vmem:[#allocation14 + $0x358] sm:$0xff]
    %v1162 = vld [vmem:[#allocation14 + $0x360] sm:$0xff]
    %v1163 = vld [vmem:[#allocation14 + $0x368] sm:$0xff]
    %v1164 = vld [vmem:[#allocation14 + $0x370] sm:$0xff]
    %v1165 = vld [vmem:[#allocation14 + $0x378] sm:$0xff]
    %v1166 = vld [vmem:[#allocation14 + $0x380] sm:$0xff]
    %v1167 = vld [vmem:[#allocation14 + $0x388] sm:$0xff]
    %v1168 = vld [vmem:[#allocation14 + $0x390] sm:$0xff]
    %v1169 = vld [vmem:[#allocation14 + $0x398] sm:$0xff]
    %v1170 = vld [vmem:[#allocation14 + $0x3a0] sm:$0xff]
    %v1171 = vld [vmem:[#allocation14 + $0x3a8] sm:$0xff]
    %v1172 = vld [vmem:[#allocation14 + $0x3b0] sm:$0xff]
    %v1173 = vld [vmem:[#allocation14 + $0x3b8] sm:$0xff]
    %v1174 = vld [vmem:[#allocation14 + $0x3c0] sm:$0xff]
    %v1175 = vld [vmem:[#allocation14 + $0x3c8] sm:$0xff]
    %v1176 = vld [vmem:[#allocation14 + $0x3d0] sm:$0xff]
    %v1177 = vld [vmem:[#allocation14 + $0x3d8] sm:$0xff]
    %v1178 = vld [vmem:[#allocation14 + $0x3e0] sm:$0xff]
    %v1179 = vld [vmem:[#allocation14 + $0x3e8] sm:$0xff]
    %v1180 = vld [vmem:[#allocation14 + $0x3f0] sm:$0xff]
    %v1181 = vld [vmem:[#allocation14 + $0x3f8] sm:$0xff]
    %v1182 = vld [vmem:[#allocation3] sm:$0xfe]
    %v1183 = vld [vmem:[#allocation3 + $0x8] sm:$0xfe]
    %v1184 = vld [vmem:[#allocation3 + $0x10] sm:$0x1]
    %v1185 = vld [vmem:[#allocation3 + $0x18] sm:$0x1]
    %s1186 = scalar_lea.vmem [#allocation14], 1024
    %v1187 = vld [vmem:[%s1186] sm:$0xff]
    %v1188 = vld [vmem:[%s1186 + $0x8] sm:$0xff]
    %v1189 = vld [vmem:[%s1186 + $0x10] sm:$0xff]
    %v1190 = vld [vmem:[%s1186 + $0x18] sm:$0xff]
    %v1191 = vld [vmem:[%s1186 + $0x20] sm:$0xff]
    %v1192 = vld [vmem:[%s1186 + $0x28] sm:$0xff]
    %v1193 = vld [vmem:[%s1186 + $0x30] sm:$0xff]
    %v1194 = vld [vmem:[%s1186 + $0x38] sm:$0xff]
    %v1195 = vld [vmem:[%s1186 + $0x40] sm:$0xff]
    %v1196 = vld [vmem:[%s1186 + $0x48] sm:$0xff]
    %v1197 = vld [vmem:[%s1186 + $0x50] sm:$0xff]
    %v1198 = vld [vmem:[%s1186 + $0x58] sm:$0xff]
    %v1199 = vld [vmem:[%s1186 + $0x60] sm:$0xff]
    %v1200 = vld [vmem:[%s1186 + $0x68] sm:$0xff]
    %v1201 = vld [vmem:[%s1186 + $0x70] sm:$0xff]
    %v1202 = vld [vmem:[%s1186 + $0x78] sm:$0xff]
    %v1203 = vld [vmem:[%s1186 + $0x80] sm:$0xff]
    %v1204 = vld [vmem:[%s1186 + $0x88] sm:$0xff]
    %v1205 = vld [vmem:[%s1186 + $0x90] sm:$0xff]
    %v1206 = vld [vmem:[%s1186 + $0x98] sm:$0xff]
    %v1207 = vld [vmem:[%s1186 + $0xa0] sm:$0xff]
    %v1208 = vld [vmem:[%s1186 + $0xa8] sm:$0xff]
    %v1209 = vld [vmem:[%s1186 + $0xb0] sm:$0xff]
    %v1210 = vld [vmem:[%s1186 + $0xb8] sm:$0xff]
    %v1211 = vld [vmem:[%s1186 + $0xc0] sm:$0xff]
    %v1212 = vld [vmem:[%s1186 + $0xc8] sm:$0xff]
    %v1213 = vld [vmem:[%s1186 + $0xd0] sm:$0xff]
    %v1214 = vld [vmem:[%s1186 + $0xd8] sm:$0xff]
    %v1215 = vld [vmem:[%s1186 + $0xe0] sm:$0xff]
    %v1216 = vld [vmem:[%s1186 + $0xe8] sm:$0xff]
    %v1217 = vld [vmem:[%s1186 + $0xf0] sm:$0xff]
    %v1218 = vld [vmem:[%s1186 + $0xf8] sm:$0xff]
    %v1219 = vld [vmem:[%s1186 + $0x100] sm:$0xff]
    %v1220 = vld [vmem:[%s1186 + $0x108] sm:$0xff]
    %v1221 = vld [vmem:[%s1186 + $0x110] sm:$0xff]
    %v1222 = vld [vmem:[%s1186 + $0x118] sm:$0xff]
    %v1223 = vld [vmem:[%s1186 + $0x120] sm:$0xff]
    %v1224 = vld [vmem:[%s1186 + $0x128] sm:$0xff]
    %v1225 = vld [vmem:[%s1186 + $0x130] sm:$0xff]
    %v1226 = vld [vmem:[%s1186 + $0x138] sm:$0xff]
    %v1227 = vld [vmem:[%s1186 + $0x140] sm:$0xff]
    %v1228 = vld [vmem:[%s1186 + $0x148] sm:$0xff]
    %v1229 = vld [vmem:[%s1186 + $0x150] sm:$0xff]
    %v1230 = vld [vmem:[%s1186 + $0x158] sm:$0xff]
    %v1231 = vld [vmem:[%s1186 + $0x160] sm:$0xff]
    %v1232 = vld [vmem:[%s1186 + $0x168] sm:$0xff]
    %v1233 = vld [vmem:[%s1186 + $0x170] sm:$0xff]
    %v1234 = vld [vmem:[%s1186 + $0x178] sm:$0xff]
    %v1235 = vld [vmem:[%s1186 + $0x180] sm:$0xff]
    %v1236 = vld [vmem:[%s1186 + $0x188] sm:$0xff]
    %v1237 = vld [vmem:[%s1186 + $0x190] sm:$0xff]
    %v1238 = vld [vmem:[%s1186 + $0x198] sm:$0xff]
    %v1239 = vld [vmem:[%s1186 + $0x1a0] sm:$0xff]
    %v1240 = vld [vmem:[%s1186 + $0x1a8] sm:$0xff]
    %v1241 = vld [vmem:[%s1186 + $0x1b0] sm:$0xff]
    %v1242 = vld [vmem:[%s1186 + $0x1b8] sm:$0xff]
    %v1243 = vld [vmem:[%s1186 + $0x1c0] sm:$0xff]
    %v1244 = vld [vmem:[%s1186 + $0x1c8] sm:$0xff]
    %v1245 = vld [vmem:[%s1186 + $0x1d0] sm:$0xff]
    %v1246 = vld [vmem:[%s1186 + $0x1d8] sm:$0xff]
    %v1247 = vld [vmem:[%s1186 + $0x1e0] sm:$0xff]
    %v1248 = vld [vmem:[%s1186 + $0x1e8] sm:$0xff]
    %v1249 = vld [vmem:[%s1186 + $0x1f0] sm:$0xff]
    %v1250 = vld [vmem:[%s1186 + $0x1f8] sm:$0xff]
    %v1251 = vld [vmem:[%s1186 + $0x200] sm:$0xff]
    %v1252 = vld [vmem:[%s1186 + $0x208] sm:$0xff]
    %v1253 = vld [vmem:[%s1186 + $0x210] sm:$0xff]
    %v1254 = vld [vmem:[%s1186 + $0x218] sm:$0xff]
    %v1255 = vld [vmem:[%s1186 + $0x220] sm:$0xff]
    %v1256 = vld [vmem:[%s1186 + $0x228] sm:$0xff]
    %v1257 = vld [vmem:[%s1186 + $0x230] sm:$0xff]
    %v1258 = vld [vmem:[%s1186 + $0x238] sm:$0xff]
    %v1259 = vld [vmem:[%s1186 + $0x240] sm:$0xff]
    %v1260 = vld [vmem:[%s1186 + $0x248] sm:$0xff]
    %v1261 = vld [vmem:[%s1186 + $0x250] sm:$0xff]
    %v1262 = vld [vmem:[%s1186 + $0x258] sm:$0xff]
    %v1263 = vld [vmem:[%s1186 + $0x260] sm:$0xff]
    %v1264 = vld [vmem:[%s1186 + $0x268] sm:$0xff]
    %v1265 = vld [vmem:[%s1186 + $0x270] sm:$0xff]
    %v1266 = vld [vmem:[%s1186 + $0x278] sm:$0xff]
    %v1267 = vld [vmem:[%s1186 + $0x280] sm:$0xff]
    %v1268 = vld [vmem:[%s1186 + $0x288] sm:$0xff]
    %v1269 = vld [vmem:[%s1186 + $0x290] sm:$0xff]
    %v1270 = vld [vmem:[%s1186 + $0x298] sm:$0xff]
    %v1271 = vld [vmem:[%s1186 + $0x2a0] sm:$0xff]
    %v1272 = vld [vmem:[%s1186 + $0x2a8] sm:$0xff]
    %v1273 = vld [vmem:[%s1186 + $0x2b0] sm:$0xff]
    %v1274 = vld [vmem:[%s1186 + $0x2b8] sm:$0xff]
    %v1275 = vld [vmem:[%s1186 + $0x2c0] sm:$0xff]
    %v1276 = vld [vmem:[%s1186 + $0x2c8] sm:$0xff]
    %v1277 = vld [vmem:[%s1186 + $0x2d0] sm:$0xff]
    %v1278 = vld [vmem:[%s1186 + $0x2d8] sm:$0xff]
    %v1279 = vld [vmem:[%s1186 + $0x2e0] sm:$0xff]
    %v1280 = vld [vmem:[%s1186 + $0x2e8] sm:$0xff]
    %v1281 = vld [vmem:[%s1186 + $0x2f0] sm:$0xff]
    %v1282 = vld [vmem:[%s1186 + $0x2f8] sm:$0xff]
    %v1283 = vld [vmem:[%s1186 + $0x300] sm:$0xff]
    %v1284 = vld [vmem:[%s1186 + $0x308] sm:$0xff]
    %v1285 = vld [vmem:[%s1186 + $0x310] sm:$0xff]
    %v1286 = vld [vmem:[%s1186 + $0x318] sm:$0xff]
    %v1287 = vld [vmem:[%s1186 + $0x320] sm:$0xff]
    %v1288 = vld [vmem:[%s1186 + $0x328] sm:$0xff]
    %v1289 = vld [vmem:[%s1186 + $0x330] sm:$0xff]
    %v1290 = vld [vmem:[%s1186 + $0x338] sm:$0xff]
    %v1291 = vld [vmem:[%s1186 + $0x340] sm:$0xff]
    %v1292 = vld [vmem:[%s1186 + $0x348] sm:$0xff]
    %v1293 = vld [vmem:[%s1186 + $0x350] sm:$0xff]
    %v1294 = vld [vmem:[%s1186 + $0x358] sm:$0xff]
    %v1295 = vld [vmem:[%s1186 + $0x360] sm:$0xff]
    %v1296 = vld [vmem:[%s1186 + $0x368] sm:$0xff]
    %v1297 = vld [vmem:[%s1186 + $0x370] sm:$0xff]
    %v1298 = vld [vmem:[%s1186 + $0x378] sm:$0xff]
    %v1299 = vld [vmem:[%s1186 + $0x380] sm:$0xff]
    %v1300 = vld [vmem:[%s1186 + $0x388] sm:$0xff]
    %v1301 = vld [vmem:[%s1186 + $0x390] sm:$0xff]
    %v1302 = vld [vmem:[%s1186 + $0x398] sm:$0xff]
    %v1303 = vld [vmem:[%s1186 + $0x3a0] sm:$0xff]
    %v1304 = vld [vmem:[%s1186 + $0x3a8] sm:$0xff]
    %v1305 = vld [vmem:[%s1186 + $0x3b0] sm:$0xff]
    %v1306 = vld [vmem:[%s1186 + $0x3b8] sm:$0xff]
    %v1307 = vld [vmem:[%s1186 + $0x3c0] sm:$0xff]
    %v1308 = vld [vmem:[%s1186 + $0x3c8] sm:$0xff]
    %v1309 = vld [vmem:[%s1186 + $0x3d0] sm:$0xff]
    %v1310 = vld [vmem:[%s1186 + $0x3d8] sm:$0xff]
    %v1311 = vld [vmem:[%s1186 + $0x3e0] sm:$0xff]
    %v1312 = vld [vmem:[%s1186 + $0x3e8] sm:$0xff]
    %v1313 = vld [vmem:[%s1186 + $0x3f0] sm:$0xff]
    %v1314 = vld [vmem:[%s1186 + $0x3f8] sm:$0xff]
    %vm1319 = vcmask 1046528
    %v1320 = vrot.slane %v1182, 1
    %v1321 = vrot.slane %v1184, 1
    %v1322 = vsel %vm1319, %v1320, %v1321
    %v1323 = vrot.slane %v1183, 1
    %v1324 = vrot.slane %v1185, 1
    %v1325 = vsel %vm1319, %v1323, %v1324
    %1328 = vmatpush.msra.mxu0 %v1247
    %1329 = vmatpush.msra.mxu0 %v1243
    %1330 = vmatpush.msra.mxu0 %v1239
    %1331 = vmatpush.msra.mxu0 %v1235
    %1332 = vmatpush.msra.mxu0 %v1231
    %1333 = vmatpush.msra.mxu0 %v1227
    %1334 = vmatpush.msra.mxu0 %v1223
    %1335 = vmatpush.msra.mxu0 %v1219
    %1336 = vmatpush.msra.mxu0 %v1215
    %1337 = vmatpush.msra.mxu0 %v1211
    %1338 = vmatpush.msra.mxu0 %v1207
    %1339 = vmatpush.msra.mxu0 %v1203
    %1340 = vmatpush.msra.mxu0 %v1199
    %1341 = vmatpush.msra.mxu0 %v1195
    %1342 = vmatpush.msra.mxu0 %v1191
    %1343 = vmatpush.msra.mxu0 %v1187
    %1344 = vmatmul.f32.gmra.mxu0 %v1322
    %v1345 = vpop.f32.mrf.mxu0
    %v1346 = vadd.f32 0.0, %v1345
    %1347 = vdwg.mxu0
    %1348 = vmatpush.msra.mxu0 %v1311
    %1349 = vmatpush.msra.mxu0 %v1307
    %1350 = vmatpush.msra.mxu0 %v1303
    %1351 = vmatpush.msra.mxu0 %v1299
    %1352 = vmatpush.msra.mxu0 %v1295
    %1353 = vmatpush.msra.mxu0 %v1291
    %1354 = vmatpush.msra.mxu0 %v1287
    %1355 = vmatpush.msra.mxu0 %v1283
    %1356 = vmatpush.msra.mxu0 %v1279
    %1357 = vmatpush.msra.mxu0 %v1275
    %1358 = vmatpush.msra.mxu0 %v1271
    %1359 = vmatpush.msra.mxu0 %v1267
    %1360 = vmatpush.msra.mxu0 %v1263
    %1361 = vmatpush.msra.mxu0 %v1259
    %1362 = vmatpush.msra.mxu0 %v1255
    %1363 = vmatpush.msra.mxu0 %v1251
    %1364 = vmatmul.f32.gmra.mxu0 %v1325
    %v1365 = vpop.f32.mrf.mxu0
    %v1366 = vadd.f32 %v1346, %v1365
    %1367 = vdwg.mxu0
    %1368 = vmatpush.msra.mxu0 %v1248
    %1369 = vmatpush.msra.mxu0 %v1244
    %1370 = vmatpush.msra.mxu0 %v1240
    %1371 = vmatpush.msra.mxu0 %v1236
    %1372 = vmatpush.msra.mxu0 %v1232
    %1373 = vmatpush.msra.mxu0 %v1228
    %1374 = vmatpush.msra.mxu0 %v1224
    %1375 = vmatpush.msra.mxu0 %v1220
    %1376 = vmatpush.msra.mxu0 %v1216
    %1377 = vmatpush.msra.mxu0 %v1212
    %1378 = vmatpush.msra.mxu0 %v1208
    %1379 = vmatpush.msra.mxu0 %v1204
    %1380 = vmatpush.msra.mxu0 %v1200
    %1381 = vmatpush.msra.mxu0 %v1196
    %1382 = vmatpush.msra.mxu0 %v1192
    %1383 = vmatpush.msra.mxu0 %v1188
    %1384 = vmatmul.f32.gmra.mxu0 %v1322
    %v1385 = vpop.f32.mrf.mxu0
    %v1386 = vadd.f32 0.0, %v1385
    %1387 = vdwg.mxu0
    %1388 = vmatpush.msra.mxu0 %v1312
    %1389 = vmatpush.msra.mxu0 %v1308
    %1390 = vmatpush.msra.mxu0 %v1304
    %1391 = vmatpush.msra.mxu0 %v1300
    %1392 = vmatpush.msra.mxu0 %v1296
    %1393 = vmatpush.msra.mxu0 %v1292
    %1394 = vmatpush.msra.mxu0 %v1288
    %1395 = vmatpush.msra.mxu0 %v1284
    %1396 = vmatpush.msra.mxu0 %v1280
    %1397 = vmatpush.msra.mxu0 %v1276
    %1398 = vmatpush.msra.mxu0 %v1272
    %1399 = vmatpush.msra.mxu0 %v1268
    %1400 = vmatpush.msra.mxu0 %v1264
    %1401 = vmatpush.msra.mxu0 %v1260
    %1402 = vmatpush.msra.mxu0 %v1256
    %1403 = vmatpush.msra.mxu0 %v1252
    %1404 = vmatmul.f32.gmra.mxu0 %v1325
    %v1405 = vpop.f32.mrf.mxu0
    %v1406 = vadd.f32 %v1386, %v1405
    %1407 = vdwg.mxu0
    %1408 = vmatpush.msra.mxu0 %v1249
    %1409 = vmatpush.msra.mxu0 %v1245
    %1410 = vmatpush.msra.mxu0 %v1241
    %1411 = vmatpush.msra.mxu0 %v1237
    %1412 = vmatpush.msra.mxu0 %v1233
    %1413 = vmatpush.msra.mxu0 %v1229
    %1414 = vmatpush.msra.mxu0 %v1225
    %1415 = vmatpush.msra.mxu0 %v1221
    %1416 = vmatpush.msra.mxu0 %v1217
    %1417 = vmatpush.msra.mxu0 %v1213
    %1418 = vmatpush.msra.mxu0 %v1209
    %1419 = vmatpush.msra.mxu0 %v1205
    %1420 = vmatpush.msra.mxu0 %v1201
    %1421 = vmatpush.msra.mxu0 %v1197
    %1422 = vmatpush.msra.mxu0 %v1193
    %1423 = vmatpush.msra.mxu0 %v1189
    %1424 = vmatmul.f32.gmra.mxu0 %v1322
    %v1425 = vpop.f32.mrf.mxu0
    %v1426 = vadd.f32 0.0, %v1425
    %1427 = vdwg.mxu0
    %1428 = vmatpush.msra.mxu0 %v1313
    %1429 = vmatpush.msra.mxu0 %v1309
    %1430 = vmatpush.msra.mxu0 %v1305
    %1431 = vmatpush.msra.mxu0 %v1301
    %1432 = vmatpush.msra.mxu0 %v1297
    %1433 = vmatpush.msra.mxu0 %v1293
    %1434 = vmatpush.msra.mxu0 %v1289
    %1435 = vmatpush.msra.mxu0 %v1285
    %1436 = vmatpush.msra.mxu0 %v1281
    %1437 = vmatpush.msra.mxu0 %v1277
    %1438 = vmatpush.msra.mxu0 %v1273
    %1439 = vmatpush.msra.mxu0 %v1269
    %1440 = vmatpush.msra.mxu0 %v1265
    %1441 = vmatpush.msra.mxu0 %v1261
    %1442 = vmatpush.msra.mxu0 %v1257
    %1443 = vmatpush.msra.mxu0 %v1253
    %1444 = vmatmul.f32.gmra.mxu0 %v1325
    %v1445 = vpop.f32.mrf.mxu0
    %v1446 = vadd.f32 %v1426, %v1445
    %1447 = vdwg.mxu0
    %1448 = vmatpush.msra.mxu0 %v1250
    %1449 = vmatpush.msra.mxu0 %v1246
    %1450 = vmatpush.msra.mxu0 %v1242
    %1451 = vmatpush.msra.mxu0 %v1238
    %1452 = vmatpush.msra.mxu0 %v1234
    %1453 = vmatpush.msra.mxu0 %v1230
    %1454 = vmatpush.msra.mxu0 %v1226
    %1455 = vmatpush.msra.mxu0 %v1222
    %1456 = vmatpush.msra.mxu0 %v1218
    %1457 = vmatpush.msra.mxu0 %v1214
    %1458 = vmatpush.msra.mxu0 %v1210
    %1459 = vmatpush.msra.mxu0 %v1206
    %1460 = vmatpush.msra.mxu0 %v1202
    %1461 = vmatpush.msra.mxu0 %v1198
    %1462 = vmatpush.msra.mxu0 %v1194
    %1463 = vmatpush.msra.mxu0 %v1190
    %1464 = vmatmul.f32.gmra.mxu0 %v1322
    %v1465 = vpop.f32.mrf.mxu0
    %v1466 = vadd.f32 0.0, %v1465
    %1467 = vdwg.mxu0
    %1468 = vmatpush.msra.mxu0 %v1314
    %1469 = vmatpush.msra.mxu0 %v1310
    %1470 = vmatpush.msra.mxu0 %v1306
    %1471 = vmatpush.msra.mxu0 %v1302
    %1472 = vmatpush.msra.mxu0 %v1298
    %1473 = vmatpush.msra.mxu0 %v1294
    %1474 = vmatpush.msra.mxu0 %v1290
    %1475 = vmatpush.msra.mxu0 %v1286
    %1476 = vmatpush.msra.mxu0 %v1282
    %1477 = vmatpush.msra.mxu0 %v1278
    %1478 = vmatpush.msra.mxu0 %v1274
    %1479 = vmatpush.msra.mxu0 %v1270
    %1480 = vmatpush.msra.mxu0 %v1266
    %1481 = vmatpush.msra.mxu0 %v1262
    %1482 = vmatpush.msra.mxu0 %v1258
    %1483 = vmatpush.msra.mxu0 %v1254
    %1484 = vmatmul.f32.gmra.mxu0 %v1325
    %v1485 = vpop.f32.mrf.mxu0
    %v1486 = vadd.f32 %v1466, %v1485
    %1487 = vdwg.mxu0
    %1488 = vmatpush.msra.mxu0 %v1114
    %1489 = vmatpush.msra.mxu0 %v1110
    %1490 = vmatpush.msra.mxu0 %v1106
    %1491 = vmatpush.msra.mxu0 %v1102
    %1492 = vmatpush.msra.mxu0 %v1098
    %1493 = vmatpush.msra.mxu0 %v1094
    %1494 = vmatpush.msra.mxu0 %v1090
    %1495 = vmatpush.msra.mxu0 %v1086
    %1496 = vmatpush.msra.mxu0 %v1082
    %1497 = vmatpush.msra.mxu0 %v1078
    %1498 = vmatpush.msra.mxu0 %v1074
    %1499 = vmatpush.msra.mxu0 %v1070
    %1500 = vmatpush.msra.mxu0 %v1066
    %1501 = vmatpush.msra.mxu0 %v1062
    %1502 = vmatpush.msra.mxu0 %v1058
    %1503 = vmatpush.msra.mxu0 %v1054
    %1504 = vmatmul.f32.gmra.mxu0 %v1052
    %v1505 = vpop.f32.mrf.mxu0
    %v1506 = vadd.f32 %v1366, %v1505
    %1507 = vdwg.mxu0
    %1508 = vmatpush.msra.mxu0 %v1178
    %1509 = vmatpush.msra.mxu0 %v1174
    %1510 = vmatpush.msra.mxu0 %v1170
    %1511 = vmatpush.msra.mxu0 %v1166
    %1512 = vmatpush.msra.mxu0 %v1162
    %1513 = vmatpush.msra.mxu0 %v1158
    %1514 = vmatpush.msra.mxu0 %v1154
    %1515 = vmatpush.msra.mxu0 %v1150
    %1516 = vmatpush.msra.mxu0 %v1146
    %1517 = vmatpush.msra.mxu0 %v1142
    %1518 = vmatpush.msra.mxu0 %v1138
    %1519 = vmatpush.msra.mxu0 %v1134
    %1520 = vmatpush.msra.mxu0 %v1130
    %1521 = vmatpush.msra.mxu0 %v1126
    %1522 = vmatpush.msra.mxu0 %v1122
    %1523 = vmatpush.msra.mxu0 %v1118
    %1524 = vmatmul.f32.gmra.mxu0 %v1053
    %v1525 = vpop.f32.mrf.mxu0
    %v1526 = vadd.f32 %v1506, %v1525
    %1527 = vdwg.mxu0
    %1528 = vmatpush.msra.mxu0 %v1115
    %1529 = vmatpush.msra.mxu0 %v1111
    %1530 = vmatpush.msra.mxu0 %v1107
    %1531 = vmatpush.msra.mxu0 %v1103
    %1532 = vmatpush.msra.mxu0 %v1099
    %1533 = vmatpush.msra.mxu0 %v1095
    %1534 = vmatpush.msra.mxu0 %v1091
    %1535 = vmatpush.msra.mxu0 %v1087
    %1536 = vmatpush.msra.mxu0 %v1083
    %1537 = vmatpush.msra.mxu0 %v1079
    %1538 = vmatpush.msra.mxu0 %v1075
    %1539 = vmatpush.msra.mxu0 %v1071
    %1540 = vmatpush.msra.mxu0 %v1067
    %1541 = vmatpush.msra.mxu0 %v1063
    %1542 = vmatpush.msra.mxu0 %v1059
    %1543 = vmatpush.msra.mxu0 %v1055
    %1544 = vmatmul.f32.gmra.mxu0 %v1052
    %v1545 = vpop.f32.mrf.mxu0
    %v1546 = vadd.f32 %v1406, %v1545
    %1547 = vdwg.mxu0
    %1548 = vmatpush.msra.mxu0 %v1179
    %1549 = vmatpush.msra.mxu0 %v1175
    %1550 = vmatpush.msra.mxu0 %v1171
    %1551 = vmatpush.msra.mxu0 %v1167
    %1552 = vmatpush.msra.mxu0 %v1163
    %1553 = vmatpush.msra.mxu0 %v1159
    %1554 = vmatpush.msra.mxu0 %v1155
    %1555 = vmatpush.msra.mxu0 %v1151
    %1556 = vmatpush.msra.mxu0 %v1147
    %1557 = vmatpush.msra.mxu0 %v1143
    %1558 = vmatpush.msra.mxu0 %v1139
    %1559 = vmatpush.msra.mxu0 %v1135
    %1560 = vmatpush.msra.mxu0 %v1131
    %1561 = vmatpush.msra.mxu0 %v1127
    %1562 = vmatpush.msra.mxu0 %v1123
    %1563 = vmatpush.msra.mxu0 %v1119
    %1564 = vmatmul.f32.gmra.mxu0 %v1053
    %v1565 = vpop.f32.mrf.mxu0
    %v1566 = vadd.f32 %v1546, %v1565
    %1567 = vdwg.mxu0
    %1568 = vmatpush.msra.mxu0 %v1116
    %1569 = vmatpush.msra.mxu0 %v1112
    %1570 = vmatpush.msra.mxu0 %v1108
    %1571 = vmatpush.msra.mxu0 %v1104
    %1572 = vmatpush.msra.mxu0 %v1100
    %1573 = vmatpush.msra.mxu0 %v1096
    %1574 = vmatpush.msra.mxu0 %v1092
    %1575 = vmatpush.msra.mxu0 %v1088
    %1576 = vmatpush.msra.mxu0 %v1084
    %1577 = vmatpush.msra.mxu0 %v1080
    %1578 = vmatpush.msra.mxu0 %v1076
    %1579 = vmatpush.msra.mxu0 %v1072
    %1580 = vmatpush.msra.mxu0 %v1068
    %1581 = vmatpush.msra.mxu0 %v1064
    %1582 = vmatpush.msra.mxu0 %v1060
    %1583 = vmatpush.msra.mxu0 %v1056
    %1584 = vmatmul.f32.gmra.mxu0 %v1052
    %v1585 = vpop.f32.mrf.mxu0
    %v1586 = vadd.f32 %v1446, %v1585
    %1587 = vdwg.mxu0
    %1588 = vmatpush.msra.mxu0 %v1180
    %1589 = vmatpush.msra.mxu0 %v1176
    %1590 = vmatpush.msra.mxu0 %v1172
    %1591 = vmatpush.msra.mxu0 %v1168
    %1592 = vmatpush.msra.mxu0 %v1164
    %1593 = vmatpush.msra.mxu0 %v1160
    %1594 = vmatpush.msra.mxu0 %v1156
    %1595 = vmatpush.msra.mxu0 %v1152
    %1596 = vmatpush.msra.mxu0 %v1148
    %1597 = vmatpush.msra.mxu0 %v1144
    %1598 = vmatpush.msra.mxu0 %v1140
    %1599 = vmatpush.msra.mxu0 %v1136
    %1600 = vmatpush.msra.mxu0 %v1132
    %1601 = vmatpush.msra.mxu0 %v1128
    %1602 = vmatpush.msra.mxu0 %v1124
    %1603 = vmatpush.msra.mxu0 %v1120
    %1604 = vmatmul.f32.gmra.mxu0 %v1053
    %v1605 = vpop.f32.mrf.mxu0
    %v1606 = vadd.f32 %v1586, %v1605
    %1607 = vdwg.mxu0
    %1608 = vmatpush.msra.mxu0 %v1117
    %1609 = vmatpush.msra.mxu0 %v1113
    %1610 = vmatpush.msra.mxu0 %v1109
    %1611 = vmatpush.msra.mxu0 %v1105
    %1612 = vmatpush.msra.mxu0 %v1101
    %1613 = vmatpush.msra.mxu0 %v1097
    %1614 = vmatpush.msra.mxu0 %v1093
    %1615 = vmatpush.msra.mxu0 %v1089
    %1616 = vmatpush.msra.mxu0 %v1085
    %1617 = vmatpush.msra.mxu0 %v1081
    %1618 = vmatpush.msra.mxu0 %v1077
    %1619 = vmatpush.msra.mxu0 %v1073
    %1620 = vmatpush.msra.mxu0 %v1069
    %1621 = vmatpush.msra.mxu0 %v1065
    %1622 = vmatpush.msra.mxu0 %v1061
    %1623 = vmatpush.msra.mxu0 %v1057
    %1624 = vmatmul.f32.gmra.mxu0 %v1052
    %v1625 = vpop.f32.mrf.mxu0
    %v1626 = vadd.f32 %v1486, %v1625
    %1627 = vdwg.mxu0
    %1628 = vmatpush.msra.mxu0 %v1181
    %1629 = vmatpush.msra.mxu0 %v1177
    %1630 = vmatpush.msra.mxu0 %v1173
    %1631 = vmatpush.msra.mxu0 %v1169
    %1632 = vmatpush.msra.mxu0 %v1165
    %1633 = vmatpush.msra.mxu0 %v1161
    %1634 = vmatpush.msra.mxu0 %v1157
    %1635 = vmatpush.msra.mxu0 %v1153
    %1636 = vmatpush.msra.mxu0 %v1149
    %1637 = vmatpush.msra.mxu0 %v1145
    %1638 = vmatpush.msra.mxu0 %v1141
    %1639 = vmatpush.msra.mxu0 %v1137
    %1640 = vmatpush.msra.mxu0 %v1133
    %1641 = vmatpush.msra.mxu0 %v1129
    %1642 = vmatpush.msra.mxu0 %v1125
    %1643 = vmatpush.msra.mxu0 %v1121
    %1644 = vmatmul.f32.gmra.mxu0 %v1053
    %v1645 = vpop.f32.mrf.mxu0
    %v1646 = vadd.f32 %v1626, %v1645
    %1647 = vdwg.mxu0
    %v1648 = vld [vmem:[#allocation3] sm:$0xfc]
    %v1649 = vld [vmem:[#allocation3 + $0x8] sm:$0xfc]
    %v1650 = vld [vmem:[#allocation3 + $0x10] sm:$0x3]
    %v1651 = vld [vmem:[#allocation3 + $0x18] sm:$0x3]
    %s1652 = scalar_lea.vmem [#allocation14], 2048
    %v1653 = vld [vmem:[%s1652] sm:$0xff]
    %v1654 = vld [vmem:[%s1652 + $0x8] sm:$0xff]
    %v1655 = vld [vmem:[%s1652 + $0x10] sm:$0xff]
    %v1656 = vld [vmem:[%s1652 + $0x18] sm:$0xff]
    %v1657 = vld [vmem:[%s1652 + $0x20] sm:$0xff]
    %v1658 = vld [vmem:[%s1652 + $0x28] sm:$0xff]
    %v1659 = vld [vmem:[%s1652 + $0x30] sm:$0xff]
    %v1660 = vld [vmem:[%s1652 + $0x38] sm:$0xff]
    %v1661 = vld [vmem:[%s1652 + $0x40] sm:$0xff]
    %v1662 = vld [vmem:[%s1652 + $0x48] sm:$0xff]
    %v1663 = vld [vmem:[%s1652 + $0x50] sm:$0xff]
    %v1664 = vld [vmem:[%s1652 + $0x58] sm:$0xff]
    %v1665 = vld [vmem:[%s1652 + $0x60] sm:$0xff]
    %v1666 = vld [vmem:[%s1652 + $0x68] sm:$0xff]
    %v1667 = vld [vmem:[%s1652 + $0x70] sm:$0xff]
    %v1668 = vld [vmem:[%s1652 + $0x78] sm:$0xff]
    %v1669 = vld [vmem:[%s1652 + $0x80] sm:$0xff]
    %v1670 = vld [vmem:[%s1652 + $0x88] sm:$0xff]
    %v1671 = vld [vmem:[%s1652 + $0x90] sm:$0xff]
    %v1672 = vld [vmem:[%s1652 + $0x98] sm:$0xff]
    %v1673 = vld [vmem:[%s1652 + $0xa0] sm:$0xff]
    %v1674 = vld [vmem:[%s1652 + $0xa8] sm:$0xff]
    %v1675 = vld [vmem:[%s1652 + $0xb0] sm:$0xff]
    %v1676 = vld [vmem:[%s1652 + $0xb8] sm:$0xff]
    %v1677 = vld [vmem:[%s1652 + $0xc0] sm:$0xff]
    %v1678 = vld [vmem:[%s1652 + $0xc8] sm:$0xff]
    %v1679 = vld [vmem:[%s1652 + $0xd0] sm:$0xff]
    %v1680 = vld [vmem:[%s1652 + $0xd8] sm:$0xff]
    %v1681 = vld [vmem:[%s1652 + $0xe0] sm:$0xff]
    %v1682 = vld [vmem:[%s1652 + $0xe8] sm:$0xff]
    %v1683 = vld [vmem:[%s1652 + $0xf0] sm:$0xff]
    %v1684 = vld [vmem:[%s1652 + $0xf8] sm:$0xff]
    %v1685 = vld [vmem:[%s1652 + $0x100] sm:$0xff]
    %v1686 = vld [vmem:[%s1652 + $0x108] sm:$0xff]
    %v1687 = vld [vmem:[%s1652 + $0x110] sm:$0xff]
    %v1688 = vld [vmem:[%s1652 + $0x118] sm:$0xff]
    %v1689 = vld [vmem:[%s1652 + $0x120] sm:$0xff]
    %v1690 = vld [vmem:[%s1652 + $0x128] sm:$0xff]
    %v1691 = vld [vmem:[%s1652 + $0x130] sm:$0xff]
    %v1692 = vld [vmem:[%s1652 + $0x138] sm:$0xff]
    %v1693 = vld [vmem:[%s1652 + $0x140] sm:$0xff]
    %v1694 = vld [vmem:[%s1652 + $0x148] sm:$0xff]
    %v1695 = vld [vmem:[%s1652 + $0x150] sm:$0xff]
    %v1696 = vld [vmem:[%s1652 + $0x158] sm:$0xff]
    %v1697 = vld [vmem:[%s1652 + $0x160] sm:$0xff]
    %v1698 = vld [vmem:[%s1652 + $0x168] sm:$0xff]
    %v1699 = vld [vmem:[%s1652 + $0x170] sm:$0xff]
    %v1700 = vld [vmem:[%s1652 + $0x178] sm:$0xff]
    %v1701 = vld [vmem:[%s1652 + $0x180] sm:$0xff]
    %v1702 = vld [vmem:[%s1652 + $0x188] sm:$0xff]
    %v1703 = vld [vmem:[%s1652 + $0x190] sm:$0xff]
    %v1704 = vld [vmem:[%s1652 + $0x198] sm:$0xff]
    %v1705 = vld [vmem:[%s1652 + $0x1a0] sm:$0xff]
    %v1706 = vld [vmem:[%s1652 + $0x1a8] sm:$0xff]
    %v1707 = vld [vmem:[%s1652 + $0x1b0] sm:$0xff]
    %v1708 = vld [vmem:[%s1652 + $0x1b8] sm:$0xff]
    %v1709 = vld [vmem:[%s1652 + $0x1c0] sm:$0xff]
    %v1710 = vld [vmem:[%s1652 + $0x1c8] sm:$0xff]
    %v1711 = vld [vmem:[%s1652 + $0x1d0] sm:$0xff]
    %v1712 = vld [vmem:[%s1652 + $0x1d8] sm:$0xff]
    %v1713 = vld [vmem:[%s1652 + $0x1e0] sm:$0xff]
    %v1714 = vld [vmem:[%s1652 + $0x1e8] sm:$0xff]
    %v1715 = vld [vmem:[%s1652 + $0x1f0] sm:$0xff]
    %v1716 = vld [vmem:[%s1652 + $0x1f8] sm:$0xff]
    %v1717 = vld [vmem:[%s1652 + $0x200] sm:$0xff]
    %v1718 = vld [vmem:[%s1652 + $0x208] sm:$0xff]
    %v1719 = vld [vmem:[%s1652 + $0x210] sm:$0xff]
    %v1720 = vld [vmem:[%s1652 + $0x218] sm:$0xff]
    %v1721 = vld [vmem:[%s1652 + $0x220] sm:$0xff]
    %v1722 = vld [vmem:[%s1652 + $0x228] sm:$0xff]
    %v1723 = vld [vmem:[%s1652 + $0x230] sm:$0xff]
    %v1724 = vld [vmem:[%s1652 + $0x238] sm:$0xff]
    %v1725 = vld [vmem:[%s1652 + $0x240] sm:$0xff]
    %v1726 = vld [vmem:[%s1652 + $0x248] sm:$0xff]
    %v1727 = vld [vmem:[%s1652 + $0x250] sm:$0xff]
    %v1728 = vld [vmem:[%s1652 + $0x258] sm:$0xff]
    %v1729 = vld [vmem:[%s1652 + $0x260] sm:$0xff]
    %v1730 = vld [vmem:[%s1652 + $0x268] sm:$0xff]
    %v1731 = vld [vmem:[%s1652 + $0x270] sm:$0xff]
    %v1732 = vld [vmem:[%s1652 + $0x278] sm:$0xff]
    %v1733 = vld [vmem:[%s1652 + $0x280] sm:$0xff]
    %v1734 = vld [vmem:[%s1652 + $0x288] sm:$0xff]
    %v1735 = vld [vmem:[%s1652 + $0x290] sm:$0xff]
    %v1736 = vld [vmem:[%s1652 + $0x298] sm:$0xff]
    %v1737 = vld [vmem:[%s1652 + $0x2a0] sm:$0xff]
    %v1738 = vld [vmem:[%s1652 + $0x2a8] sm:$0xff]
    %v1739 = vld [vmem:[%s1652 + $0x2b0] sm:$0xff]
    %v1740 = vld [vmem:[%s1652 + $0x2b8] sm:$0xff]
    %v1741 = vld [vmem:[%s1652 + $0x2c0] sm:$0xff]
    %v1742 = vld [vmem:[%s1652 + $0x2c8] sm:$0xff]
    %v1743 = vld [vmem:[%s1652 + $0x2d0] sm:$0xff]
    %v1744 = vld [vmem:[%s1652 + $0x2d8] sm:$0xff]
    %v1745 = vld [vmem:[%s1652 + $0x2e0] sm:$0xff]
    %v1746 = vld [vmem:[%s1652 + $0x2e8] sm:$0xff]
    %v1747 = vld [vmem:[%s1652 + $0x2f0] sm:$0xff]
    %v1748 = vld [vmem:[%s1652 + $0x2f8] sm:$0xff]
    %v1749 = vld [vmem:[%s1652 + $0x300] sm:$0xff]
    %v1750 = vld [vmem:[%s1652 + $0x308] sm:$0xff]
    %v1751 = vld [vmem:[%s1652 + $0x310] sm:$0xff]
    %v1752 = vld [vmem:[%s1652 + $0x318] sm:$0xff]
    %v1753 = vld [vmem:[%s1652 + $0x320] sm:$0xff]
    %v1754 = vld [vmem:[%s1652 + $0x328] sm:$0xff]
    %v1755 = vld [vmem:[%s1652 + $0x330] sm:$0xff]
    %v1756 = vld [vmem:[%s1652 + $0x338] sm:$0xff]
    %v1757 = vld [vmem:[%s1652 + $0x340] sm:$0xff]
    %v1758 = vld [vmem:[%s1652 + $0x348] sm:$0xff]
    %v1759 = vld [vmem:[%s1652 + $0x350] sm:$0xff]
    %v1760 = vld [vmem:[%s1652 + $0x358] sm:$0xff]
    %v1761 = vld [vmem:[%s1652 + $0x360] sm:$0xff]
    %v1762 = vld [vmem:[%s1652 + $0x368] sm:$0xff]
    %v1763 = vld [vmem:[%s1652 + $0x370] sm:$0xff]
    %v1764 = vld [vmem:[%s1652 + $0x378] sm:$0xff]
    %v1765 = vld [vmem:[%s1652 + $0x380] sm:$0xff]
    %v1766 = vld [vmem:[%s1652 + $0x388] sm:$0xff]
    %v1767 = vld [vmem:[%s1652 + $0x390] sm:$0xff]
    %v1768 = vld [vmem:[%s1652 + $0x398] sm:$0xff]
    %v1769 = vld [vmem:[%s1652 + $0x3a0] sm:$0xff]
    %v1770 = vld [vmem:[%s1652 + $0x3a8] sm:$0xff]
    %v1771 = vld [vmem:[%s1652 + $0x3b0] sm:$0xff]
    %v1772 = vld [vmem:[%s1652 + $0x3b8] sm:$0xff]
    %v1773 = vld [vmem:[%s1652 + $0x3c0] sm:$0xff]
    %v1774 = vld [vmem:[%s1652 + $0x3c8] sm:$0xff]
    %v1775 = vld [vmem:[%s1652 + $0x3d0] sm:$0xff]
    %v1776 = vld [vmem:[%s1652 + $0x3d8] sm:$0xff]
    %v1777 = vld [vmem:[%s1652 + $0x3e0] sm:$0xff]
    %v1778 = vld [vmem:[%s1652 + $0x3e8] sm:$0xff]
    %v1779 = vld [vmem:[%s1652 + $0x3f0] sm:$0xff]
    %v1780 = vld [vmem:[%s1652 + $0x3f8] sm:$0xff]
    %vm1785 = vcmask 1045504
    %v1786 = vrot.slane %v1648, 2
    %v1787 = vrot.slane %v1650, 2
    %v1788 = vsel %vm1785, %v1786, %v1787
    %v1789 = vrot.slane %v1649, 2
    %v1790 = vrot.slane %v1651, 2
    %v1791 = vsel %vm1785, %v1789, %v1790
    %1794 = vmatpush.msra.mxu0 %v1713
    %1795 = vmatpush.msra.mxu0 %v1709
    %1796 = vmatpush.msra.mxu0 %v1705
    %1797 = vmatpush.msra.mxu0 %v1701
    %1798 = vmatpush.msra.mxu0 %v1697
    %1799 = vmatpush.msra.mxu0 %v1693
    %1800 = vmatpush.msra.mxu0 %v1689
    %1801 = vmatpush.msra.mxu0 %v1685
    %1802 = vmatpush.msra.mxu0 %v1681
    %1803 = vmatpush.msra.mxu0 %v1677
    %1804 = vmatpush.msra.mxu0 %v1673
    %1805 = vmatpush.msra.mxu0 %v1669
    %1806 = vmatpush.msra.mxu0 %v1665
    %1807 = vmatpush.msra.mxu0 %v1661
    %1808 = vmatpush.msra.mxu0 %v1657
    %1809 = vmatpush.msra.mxu0 %v1653
    %1810 = vmatmul.f32.gmra.mxu0 %v1788
    %v1811 = vpop.f32.mrf.mxu0
    %v1812 = vadd.f32 0.0, %v1811
    %1813 = vdwg.mxu0
    %1814 = vmatpush.msra.mxu0 %v1777
    %1815 = vmatpush.msra.mxu0 %v1773
    %1816 = vmatpush.msra.mxu0 %v1769
    %1817 = vmatpush.msra.mxu0 %v1765
    %1818 = vmatpush.msra.mxu0 %v1761
    %1819 = vmatpush.msra.mxu0 %v1757
    %1820 = vmatpush.msra.mxu0 %v1753
    %1821 = vmatpush.msra.mxu0 %v1749
    %1822 = vmatpush.msra.mxu0 %v1745
    %1823 = vmatpush.msra.mxu0 %v1741
    %1824 = vmatpush.msra.mxu0 %v1737
    %1825 = vmatpush.msra.mxu0 %v1733
    %1826 = vmatpush.msra.mxu0 %v1729
    %1827 = vmatpush.msra.mxu0 %v1725
    %1828 = vmatpush.msra.mxu0 %v1721
    %1829 = vmatpush.msra.mxu0 %v1717
    %1830 = vmatmul.f32.gmra.mxu0 %v1791
    %v1831 = vpop.f32.mrf.mxu0
    %v1832 = vadd.f32 %v1812, %v1831
    %1833 = vdwg.mxu0
    %1834 = vmatpush.msra.mxu0 %v1714
    %1835 = vmatpush.msra.mxu0 %v1710
    %1836 = vmatpush.msra.mxu0 %v1706
    %1837 = vmatpush.msra.mxu0 %v1702
    %1838 = vmatpush.msra.mxu0 %v1698
    %1839 = vmatpush.msra.mxu0 %v1694
    %1840 = vmatpush.msra.mxu0 %v1690
    %1841 = vmatpush.msra.mxu0 %v1686
    %1842 = vmatpush.msra.mxu0 %v1682
    %1843 = vmatpush.msra.mxu0 %v1678
    %1844 = vmatpush.msra.mxu0 %v1674
    %1845 = vmatpush.msra.mxu0 %v1670
    %1846 = vmatpush.msra.mxu0 %v1666
    %1847 = vmatpush.msra.mxu0 %v1662
    %1848 = vmatpush.msra.mxu0 %v1658
    %1849 = vmatpush.msra.mxu0 %v1654
    %1850 = vmatmul.f32.gmra.mxu0 %v1788
    %v1851 = vpop.f32.mrf.mxu0
    %v1852 = vadd.f32 0.0, %v1851
    %1853 = vdwg.mxu0
    %1854 = vmatpush.msra.mxu0 %v1778
    %1855 = vmatpush.msra.mxu0 %v1774
    %1856 = vmatpush.msra.mxu0 %v1770
    %1857 = vmatpush.msra.mxu0 %v1766
    %1858 = vmatpush.msra.mxu0 %v1762
    %1859 = vmatpush.msra.mxu0 %v1758
    %1860 = vmatpush.msra.mxu0 %v1754
    %1861 = vmatpush.msra.mxu0 %v1750
    %1862 = vmatpush.msra.mxu0 %v1746
    %1863 = vmatpush.msra.mxu0 %v1742
    %1864 = vmatpush.msra.mxu0 %v1738
    %1865 = vmatpush.msra.mxu0 %v1734
    %1866 = vmatpush.msra.mxu0 %v1730
    %1867 = vmatpush.msra.mxu0 %v1726
    %1868 = vmatpush.msra.mxu0 %v1722
    %1869 = vmatpush.msra.mxu0 %v1718
    %1870 = vmatmul.f32.gmra.mxu0 %v1791
    %v1871 = vpop.f32.mrf.mxu0
    %v1872 = vadd.f32 %v1852, %v1871
    %1873 = vdwg.mxu0
    %1874 = vmatpush.msra.mxu0 %v1715
    %1875 = vmatpush.msra.mxu0 %v1711
    %1876 = vmatpush.msra.mxu0 %v1707
    %1877 = vmatpush.msra.mxu0 %v1703
    %1878 = vmatpush.msra.mxu0 %v1699
    %1879 = vmatpush.msra.mxu0 %v1695
    %1880 = vmatpush.msra.mxu0 %v1691
    %1881 = vmatpush.msra.mxu0 %v1687
    %1882 = vmatpush.msra.mxu0 %v1683
    %1883 = vmatpush.msra.mxu0 %v1679
    %1884 = vmatpush.msra.mxu0 %v1675
    %1885 = vmatpush.msra.mxu0 %v1671
    %1886 = vmatpush.msra.mxu0 %v1667
    %1887 = vmatpush.msra.mxu0 %v1663
    %1888 = vmatpush.msra.mxu0 %v1659
    %1889 = vmatpush.msra.mxu0 %v1655
    %1890 = vmatmul.f32.gmra.mxu0 %v1788
    %v1891 = vpop.f32.mrf.mxu0
    %v1892 = vadd.f32 0.0, %v1891
    %1893 = vdwg.mxu0
    %1894 = vmatpush.msra.mxu0 %v1779
    %1895 = vmatpush.msra.mxu0 %v1775
    %1896 = vmatpush.msra.mxu0 %v1771
    %1897 = vmatpush.msra.mxu0 %v1767
    %1898 = vmatpush.msra.mxu0 %v1763
    %1899 = vmatpush.msra.mxu0 %v1759
    %1900 = vmatpush.msra.mxu0 %v1755
    %1901 = vmatpush.msra.mxu0 %v1751
    %1902 = vmatpush.msra.mxu0 %v1747
    %1903 = vmatpush.msra.mxu0 %v1743
    %1904 = vmatpush.msra.mxu0 %v1739
    %1905 = vmatpush.msra.mxu0 %v1735
    %1906 = vmatpush.msra.mxu0 %v1731
    %1907 = vmatpush.msra.mxu0 %v1727
    %1908 = vmatpush.msra.mxu0 %v1723
    %1909 = vmatpush.msra.mxu0 %v1719
    %1910 = vmatmul.f32.gmra.mxu0 %v1791
    %v1911 = vpop.f32.mrf.mxu0
    %v1912 = vadd.f32 %v1892, %v1911
    %1913 = vdwg.mxu0
    %1914 = vmatpush.msra.mxu0 %v1716
    %1915 = vmatpush.msra.mxu0 %v1712
    %1916 = vmatpush.msra.mxu0 %v1708
    %1917 = vmatpush.msra.mxu0 %v1704
    %1918 = vmatpush.msra.mxu0 %v1700
    %1919 = vmatpush.msra.mxu0 %v1696
    %1920 = vmatpush.msra.mxu0 %v1692
    %1921 = vmatpush.msra.mxu0 %v1688
    %1922 = vmatpush.msra.mxu0 %v1684
    %1923 = vmatpush.msra.mxu0 %v1680
    %1924 = vmatpush.msra.mxu0 %v1676
    %1925 = vmatpush.msra.mxu0 %v1672
    %1926 = vmatpush.msra.mxu0 %v1668
    %1927 = vmatpush.msra.mxu0 %v1664
    %1928 = vmatpush.msra.mxu0 %v1660
    %1929 = vmatpush.msra.mxu0 %v1656
    %1930 = vmatmul.f32.gmra.mxu0 %v1788
    %v1931 = vpop.f32.mrf.mxu0
    %v1932 = vadd.f32 0.0, %v1931
    %1933 = vdwg.mxu0
    %1934 = vmatpush.msra.mxu0 %v1780
    %1935 = vmatpush.msra.mxu0 %v1776
    %1936 = vmatpush.msra.mxu0 %v1772
    %1937 = vmatpush.msra.mxu0 %v1768
    %1938 = vmatpush.msra.mxu0 %v1764
    %1939 = vmatpush.msra.mxu0 %v1760
    %1940 = vmatpush.msra.mxu0 %v1756
    %1941 = vmatpush.msra.mxu0 %v1752
    %1942 = vmatpush.msra.mxu0 %v1748
    %1943 = vmatpush.msra.mxu0 %v1744
    %1944 = vmatpush.msra.mxu0 %v1740
    %1945 = vmatpush.msra.mxu0 %v1736
    %1946 = vmatpush.msra.mxu0 %v1732
    %1947 = vmatpush.msra.mxu0 %v1728
    %1948 = vmatpush.msra.mxu0 %v1724
    %1949 = vmatpush.msra.mxu0 %v1720
    %1950 = vmatmul.f32.gmra.mxu0 %v1791
    %v1951 = vpop.f32.mrf.mxu0
    %v1952 = vadd.f32 %v1932, %v1951
    %1953 = vdwg.mxu0
    %v1954 = vadd.f32 %v1526, %v1832
    %v1955 = vadd.f32 %v1566, %v1872
    %v1956 = vadd.f32 %v1606, %v1912
    %v1957 = vadd.f32 %v1646, %v1952
    %v1958 = vld [vmem:[#allocation3] sm:$0xf8]
    %v1959 = vld [vmem:[#allocation3 + $0x8] sm:$0xf8]
    %v1960 = vld [vmem:[#allocation3 + $0x10] sm:$0x7]
    %v1961 = vld [vmem:[#allocation3 + $0x18] sm:$0x7]
    %s1962 = scalar_lea.vmem [#allocation14], 3072
    %v1963 = vld [vmem:[%s1962] sm:$0xff]
    %v1964 = vld [vmem:[%s1962 + $0x8] sm:$0xff]
    %v1965 = vld [vmem:[%s1962 + $0x10] sm:$0xff]
    %v1966 = vld [vmem:[%s1962 + $0x18] sm:$0xff]
    %v1967 = vld [vmem:[%s1962 + $0x20] sm:$0xff]
    %v1968 = vld [vmem:[%s1962 + $0x28] sm:$0xff]
    %v1969 = vld [vmem:[%s1962 + $0x30] sm:$0xff]
    %v1970 = vld [vmem:[%s1962 + $0x38] sm:$0xff]
    %v1971 = vld [vmem:[%s1962 + $0x40] sm:$0xff]
    %v1972 = vld [vmem:[%s1962 + $0x48] sm:$0xff]
    %v1973 = vld [vmem:[%s1962 + $0x50] sm:$0xff]
    %v1974 = vld [vmem:[%s1962 + $0x58] sm:$0xff]
    %v1975 = vld [vmem:[%s1962 + $0x60] sm:$0xff]
    %v1976 = vld [vmem:[%s1962 + $0x68] sm:$0xff]
    %v1977 = vld [vmem:[%s1962 + $0x70] sm:$0xff]
    %v1978 = vld [vmem:[%s1962 + $0x78] sm:$0xff]
    %v1979 = vld [vmem:[%s1962 + $0x80] sm:$0xff]
    %v1980 = vld [vmem:[%s1962 + $0x88] sm:$0xff]
    %v1981 = vld [vmem:[%s1962 + $0x90] sm:$0xff]
    %v1982 = vld [vmem:[%s1962 + $0x98] sm:$0xff]
    %v1983 = vld [vmem:[%s1962 + $0xa0] sm:$0xff]
    %v1984 = vld [vmem:[%s1962 + $0xa8] sm:$0xff]
    %v1985 = vld [vmem:[%s1962 + $0xb0] sm:$0xff]
    %v1986 = vld [vmem:[%s1962 + $0xb8] sm:$0xff]
    %v1987 = vld [vmem:[%s1962 + $0xc0] sm:$0xff]
    %v1988 = vld [vmem:[%s1962 + $0xc8] sm:$0xff]
    %v1989 = vld [vmem:[%s1962 + $0xd0] sm:$0xff]
    %v1990 = vld [vmem:[%s1962 + $0xd8] sm:$0xff]
    %v1991 = vld [vmem:[%s1962 + $0xe0] sm:$0xff]
    %v1992 = vld [vmem:[%s1962 + $0xe8] sm:$0xff]
    %v1993 = vld [vmem:[%s1962 + $0xf0] sm:$0xff]
    %v1994 = vld [vmem:[%s1962 + $0xf8] sm:$0xff]
    %v1995 = vld [vmem:[%s1962 + $0x100] sm:$0xff]
    %v1996 = vld [vmem:[%s1962 + $0x108] sm:$0xff]
    %v1997 = vld [vmem:[%s1962 + $0x110] sm:$0xff]
    %v1998 = vld [vmem:[%s1962 + $0x118] sm:$0xff]
    %v1999 = vld [vmem:[%s1962 + $0x120] sm:$0xff]
    %v2000 = vld [vmem:[%s1962 + $0x128] sm:$0xff]
    %v2001 = vld [vmem:[%s1962 + $0x130] sm:$0xff]
    %v2002 = vld [vmem:[%s1962 + $0x138] sm:$0xff]
    %v2003 = vld [vmem:[%s1962 + $0x140] sm:$0xff]
    %v2004 = vld [vmem:[%s1962 + $0x148] sm:$0xff]
    %v2005 = vld [vmem:[%s1962 + $0x150] sm:$0xff]
    %v2006 = vld [vmem:[%s1962 + $0x158] sm:$0xff]
    %v2007 = vld [vmem:[%s1962 + $0x160] sm:$0xff]
    %v2008 = vld [vmem:[%s1962 + $0x168] sm:$0xff]
    %v2009 = vld [vmem:[%s1962 + $0x170] sm:$0xff]
    %v2010 = vld [vmem:[%s1962 + $0x178] sm:$0xff]
    %v2011 = vld [vmem:[%s1962 + $0x180] sm:$0xff]
    %v2012 = vld [vmem:[%s1962 + $0x188] sm:$0xff]
    %v2013 = vld [vmem:[%s1962 + $0x190] sm:$0xff]
    %v2014 = vld [vmem:[%s1962 + $0x198] sm:$0xff]
    %v2015 = vld [vmem:[%s1962 + $0x1a0] sm:$0xff]
    %v2016 = vld [vmem:[%s1962 + $0x1a8] sm:$0xff]
    %v2017 = vld [vmem:[%s1962 + $0x1b0] sm:$0xff]
    %v2018 = vld [vmem:[%s1962 + $0x1b8] sm:$0xff]
    %v2019 = vld [vmem:[%s1962 + $0x1c0] sm:$0xff]
    %v2020 = vld [vmem:[%s1962 + $0x1c8] sm:$0xff]
    %v2021 = vld [vmem:[%s1962 + $0x1d0] sm:$0xff]
    %v2022 = vld [vmem:[%s1962 + $0x1d8] sm:$0xff]
    %v2023 = vld [vmem:[%s1962 + $0x1e0] sm:$0xff]
    %v2024 = vld [vmem:[%s1962 + $0x1e8] sm:$0xff]
    %v2025 = vld [vmem:[%s1962 + $0x1f0] sm:$0xff]
    %v2026 = vld [vmem:[%s1962 + $0x1f8] sm:$0xff]
    %v2027 = vld [vmem:[%s1962 + $0x200] sm:$0xff]
    %v2028 = vld [vmem:[%s1962 + $0x208] sm:$0xff]
    %v2029 = vld [vmem:[%s1962 + $0x210] sm:$0xff]
    %v2030 = vld [vmem:[%s1962 + $0x218] sm:$0xff]
    %v2031 = vld [vmem:[%s1962 + $0x220] sm:$0xff]
    %v2032 = vld [vmem:[%s1962 + $0x228] sm:$0xff]
    %v2033 = vld [vmem:[%s1962 + $0x230] sm:$0xff]
    %v2034 = vld [vmem:[%s1962 + $0x238] sm:$0xff]
    %v2035 = vld [vmem:[%s1962 + $0x240] sm:$0xff]
    %v2036 = vld [vmem:[%s1962 + $0x248] sm:$0xff]
    %v2037 = vld [vmem:[%s1962 + $0x250] sm:$0xff]
    %v2038 = vld [vmem:[%s1962 + $0x258] sm:$0xff]
    %v2039 = vld [vmem:[%s1962 + $0x260] sm:$0xff]
    %v2040 = vld [vmem:[%s1962 + $0x268] sm:$0xff]
    %v2041 = vld [vmem:[%s1962 + $0x270] sm:$0xff]
    %v2042 = vld [vmem:[%s1962 + $0x278] sm:$0xff]
    %v2043 = vld [vmem:[%s1962 + $0x280] sm:$0xff]
    %v2044 = vld [vmem:[%s1962 + $0x288] sm:$0xff]
    %v2045 = vld [vmem:[%s1962 + $0x290] sm:$0xff]
    %v2046 = vld [vmem:[%s1962 + $0x298] sm:$0xff]
    %v2047 = vld [vmem:[%s1962 + $0x2a0] sm:$0xff]
    %v2048 = vld [vmem:[%s1962 + $0x2a8] sm:$0xff]
    %v2049 = vld [vmem:[%s1962 + $0x2b0] sm:$0xff]
    %v2050 = vld [vmem:[%s1962 + $0x2b8] sm:$0xff]
    %v2051 = vld [vmem:[%s1962 + $0x2c0] sm:$0xff]
    %v2052 = vld [vmem:[%s1962 + $0x2c8] sm:$0xff]
    %v2053 = vld [vmem:[%s1962 + $0x2d0] sm:$0xff]
    %v2054 = vld [vmem:[%s1962 + $0x2d8] sm:$0xff]
    %v2055 = vld [vmem:[%s1962 + $0x2e0] sm:$0xff]
    %v2056 = vld [vmem:[%s1962 + $0x2e8] sm:$0xff]
    %v2057 = vld [vmem:[%s1962 + $0x2f0] sm:$0xff]
    %v2058 = vld [vmem:[%s1962 + $0x2f8] sm:$0xff]
    %v2059 = vld [vmem:[%s1962 + $0x300] sm:$0xff]
    %v2060 = vld [vmem:[%s1962 + $0x308] sm:$0xff]
    %v2061 = vld [vmem:[%s1962 + $0x310] sm:$0xff]
    %v2062 = vld [vmem:[%s1962 + $0x318] sm:$0xff]
    %v2063 = vld [vmem:[%s1962 + $0x320] sm:$0xff]
    %v2064 = vld [vmem:[%s1962 + $0x328] sm:$0xff]
    %v2065 = vld [vmem:[%s1962 + $0x330] sm:$0xff]
    %v2066 = vld [vmem:[%s1962 + $0x338] sm:$0xff]
    %v2067 = vld [vmem:[%s1962 + $0x340] sm:$0xff]
    %v2068 = vld [vmem:[%s1962 + $0x348] sm:$0xff]
    %v2069 = vld [vmem:[%s1962 + $0x350] sm:$0xff]
    %v2070 = vld [vmem:[%s1962 + $0x358] sm:$0xff]
    %v2071 = vld [vmem:[%s1962 + $0x360] sm:$0xff]
    %v2072 = vld [vmem:[%s1962 + $0x368] sm:$0xff]
    %v2073 = vld [vmem:[%s1962 + $0x370] sm:$0xff]
    %v2074 = vld [vmem:[%s1962 + $0x378] sm:$0xff]
    %v2075 = vld [vmem:[%s1962 + $0x380] sm:$0xff]
    %v2076 = vld [vmem:[%s1962 + $0x388] sm:$0xff]
    %v2077 = vld [vmem:[%s1962 + $0x390] sm:$0xff]
    %v2078 = vld [vmem:[%s1962 + $0x398] sm:$0xff]
    %v2079 = vld [vmem:[%s1962 + $0x3a0] sm:$0xff]
    %v2080 = vld [vmem:[%s1962 + $0x3a8] sm:$0xff]
    %v2081 = vld [vmem:[%s1962 + $0x3b0] sm:$0xff]
    %v2082 = vld [vmem:[%s1962 + $0x3b8] sm:$0xff]
    %v2083 = vld [vmem:[%s1962 + $0x3c0] sm:$0xff]
    %v2084 = vld [vmem:[%s1962 + $0x3c8] sm:$0xff]
    %v2085 = vld [vmem:[%s1962 + $0x3d0] sm:$0xff]
    %v2086 = vld [vmem:[%s1962 + $0x3d8] sm:$0xff]
    %v2087 = vld [vmem:[%s1962 + $0x3e0] sm:$0xff]
    %v2088 = vld [vmem:[%s1962 + $0x3e8] sm:$0xff]
    %v2089 = vld [vmem:[%s1962 + $0x3f0] sm:$0xff]
    %v2090 = vld [vmem:[%s1962 + $0x3f8] sm:$0xff]
    %vm2095 = vcmask 1044480
    %v2096 = vrot.slane %v1958, 3
    %v2097 = vrot.slane %v1960, 3
    %v2098 = vsel %vm2095, %v2096, %v2097
    %v2099 = vrot.slane %v1959, 3
    %v2100 = vrot.slane %v1961, 3
    %v2101 = vsel %vm2095, %v2099, %v2100
    %2104 = vmatpush.msra.mxu0 %v2023
    %2105 = vmatpush.msra.mxu0 %v2019
    %2106 = vmatpush.msra.mxu0 %v2015
    %2107 = vmatpush.msra.mxu0 %v2011
    %2108 = vmatpush.msra.mxu0 %v2007
    %2109 = vmatpush.msra.mxu0 %v2003
    %2110 = vmatpush.msra.mxu0 %v1999
    %2111 = vmatpush.msra.mxu0 %v1995
    %2112 = vmatpush.msra.mxu0 %v1991
    %2113 = vmatpush.msra.mxu0 %v1987
    %2114 = vmatpush.msra.mxu0 %v1983
    %2115 = vmatpush.msra.mxu0 %v1979
    %2116 = vmatpush.msra.mxu0 %v1975
    %2117 = vmatpush.msra.mxu0 %v1971
    %2118 = vmatpush.msra.mxu0 %v1967
    %2119 = vmatpush.msra.mxu0 %v1963
    %2120 = vmatmul.f32.gmra.mxu0 %v2098
    %v2121 = vpop.f32.mrf.mxu0
    %v2122 = vadd.f32 0.0, %v2121
    %2123 = vdwg.mxu0
    %2124 = vmatpush.msra.mxu0 %v2087
    %2125 = vmatpush.msra.mxu0 %v2083
    %2126 = vmatpush.msra.mxu0 %v2079
    %2127 = vmatpush.msra.mxu0 %v2075
    %2128 = vmatpush.msra.mxu0 %v2071
    %2129 = vmatpush.msra.mxu0 %v2067
    %2130 = vmatpush.msra.mxu0 %v2063
    %2131 = vmatpush.msra.mxu0 %v2059
    %2132 = vmatpush.msra.mxu0 %v2055
    %2133 = vmatpush.msra.mxu0 %v2051
    %2134 = vmatpush.msra.mxu0 %v2047
    %2135 = vmatpush.msra.mxu0 %v2043
    %2136 = vmatpush.msra.mxu0 %v2039
    %2137 = vmatpush.msra.mxu0 %v2035
    %2138 = vmatpush.msra.mxu0 %v2031
    %2139 = vmatpush.msra.mxu0 %v2027
    %2140 = vmatmul.f32.gmra.mxu0 %v2101
    %v2141 = vpop.f32.mrf.mxu0
    %v2142 = vadd.f32 %v2122, %v2141
    %2143 = vdwg.mxu0
    %2144 = vmatpush.msra.mxu0 %v2024
    %2145 = vmatpush.msra.mxu0 %v2020
    %2146 = vmatpush.msra.mxu0 %v2016
    %2147 = vmatpush.msra.mxu0 %v2012
    %2148 = vmatpush.msra.mxu0 %v2008
    %2149 = vmatpush.msra.mxu0 %v2004
    %2150 = vmatpush.msra.mxu0 %v2000
    %2151 = vmatpush.msra.mxu0 %v1996
    %2152 = vmatpush.msra.mxu0 %v1992
    %2153 = vmatpush.msra.mxu0 %v1988
    %2154 = vmatpush.msra.mxu0 %v1984
    %2155 = vmatpush.msra.mxu0 %v1980
    %2156 = vmatpush.msra.mxu0 %v1976
    %2157 = vmatpush.msra.mxu0 %v1972
    %2158 = vmatpush.msra.mxu0 %v1968
    %2159 = vmatpush.msra.mxu0 %v1964
    %2160 = vmatmul.f32.gmra.mxu0 %v2098
    %v2161 = vpop.f32.mrf.mxu0
    %v2162 = vadd.f32 0.0, %v2161
    %2163 = vdwg.mxu0
    %2164 = vmatpush.msra.mxu0 %v2088
    %2165 = vmatpush.msra.mxu0 %v2084
    %2166 = vmatpush.msra.mxu0 %v2080
    %2167 = vmatpush.msra.mxu0 %v2076
    %2168 = vmatpush.msra.mxu0 %v2072
    %2169 = vmatpush.msra.mxu0 %v2068
    %2170 = vmatpush.msra.mxu0 %v2064
    %2171 = vmatpush.msra.mxu0 %v2060
    %2172 = vmatpush.msra.mxu0 %v2056
    %2173 = vmatpush.msra.mxu0 %v2052
    %2174 = vmatpush.msra.mxu0 %v2048
    %2175 = vmatpush.msra.mxu0 %v2044
    %2176 = vmatpush.msra.mxu0 %v2040
    %2177 = vmatpush.msra.mxu0 %v2036
    %2178 = vmatpush.msra.mxu0 %v2032
    %2179 = vmatpush.msra.mxu0 %v2028
    %2180 = vmatmul.f32.gmra.mxu0 %v2101
    %v2181 = vpop.f32.mrf.mxu0
    %v2182 = vadd.f32 %v2162, %v2181
    %2183 = vdwg.mxu0
    %2184 = vmatpush.msra.mxu0 %v2025
    %2185 = vmatpush.msra.mxu0 %v2021
    %2186 = vmatpush.msra.mxu0 %v2017
    %2187 = vmatpush.msra.mxu0 %v2013
    %2188 = vmatpush.msra.mxu0 %v2009
    %2189 = vmatpush.msra.mxu0 %v2005
    %2190 = vmatpush.msra.mxu0 %v2001
    %2191 = vmatpush.msra.mxu0 %v1997
    %2192 = vmatpush.msra.mxu0 %v1993
    %2193 = vmatpush.msra.mxu0 %v1989
    %2194 = vmatpush.msra.mxu0 %v1985
    %2195 = vmatpush.msra.mxu0 %v1981
    %2196 = vmatpush.msra.mxu0 %v1977
    %2197 = vmatpush.msra.mxu0 %v1973
    %2198 = vmatpush.msra.mxu0 %v1969
    %2199 = vmatpush.msra.mxu0 %v1965
    %2200 = vmatmul.f32.gmra.mxu0 %v2098
    %v2201 = vpop.f32.mrf.mxu0
    %v2202 = vadd.f32 0.0, %v2201
    %2203 = vdwg.mxu0
    %2204 = vmatpush.msra.mxu0 %v2089
    %2205 = vmatpush.msra.mxu0 %v2085
    %2206 = vmatpush.msra.mxu0 %v2081
    %2207 = vmatpush.msra.mxu0 %v2077
    %2208 = vmatpush.msra.mxu0 %v2073
    %2209 = vmatpush.msra.mxu0 %v2069
    %2210 = vmatpush.msra.mxu0 %v2065
    %2211 = vmatpush.msra.mxu0 %v2061
    %2212 = vmatpush.msra.mxu0 %v2057
    %2213 = vmatpush.msra.mxu0 %v2053
    %2214 = vmatpush.msra.mxu0 %v2049
    %2215 = vmatpush.msra.mxu0 %v2045
    %2216 = vmatpush.msra.mxu0 %v2041
    %2217 = vmatpush.msra.mxu0 %v2037
    %2218 = vmatpush.msra.mxu0 %v2033
    %2219 = vmatpush.msra.mxu0 %v2029
    %2220 = vmatmul.f32.gmra.mxu0 %v2101
    %v2221 = vpop.f32.mrf.mxu0
    %v2222 = vadd.f32 %v2202, %v2221
    %2223 = vdwg.mxu0
    %2224 = vmatpush.msra.mxu0 %v2026
    %2225 = vmatpush.msra.mxu0 %v2022
    %2226 = vmatpush.msra.mxu0 %v2018
    %2227 = vmatpush.msra.mxu0 %v2014
    %2228 = vmatpush.msra.mxu0 %v2010
    %2229 = vmatpush.msra.mxu0 %v2006
    %2230 = vmatpush.msra.mxu0 %v2002
    %2231 = vmatpush.msra.mxu0 %v1998
    %2232 = vmatpush.msra.mxu0 %v1994
    %2233 = vmatpush.msra.mxu0 %v1990
    %2234 = vmatpush.msra.mxu0 %v1986
    %2235 = vmatpush.msra.mxu0 %v1982
    %2236 = vmatpush.msra.mxu0 %v1978
    %2237 = vmatpush.msra.mxu0 %v1974
    %2238 = vmatpush.msra.mxu0 %v1970
    %2239 = vmatpush.msra.mxu0 %v1966
    %2240 = vmatmul.f32.gmra.mxu0 %v2098
    %v2241 = vpop.f32.mrf.mxu0
    %v2242 = vadd.f32 0.0, %v2241
    %2243 = vdwg.mxu0
    %2244 = vmatpush.msra.mxu0 %v2090
    %2245 = vmatpush.msra.mxu0 %v2086
    %2246 = vmatpush.msra.mxu0 %v2082
    %2247 = vmatpush.msra.mxu0 %v2078
    %2248 = vmatpush.msra.mxu0 %v2074
    %2249 = vmatpush.msra.mxu0 %v2070
    %2250 = vmatpush.msra.mxu0 %v2066
    %2251 = vmatpush.msra.mxu0 %v2062
    %2252 = vmatpush.msra.mxu0 %v2058
    %2253 = vmatpush.msra.mxu0 %v2054
    %2254 = vmatpush.msra.mxu0 %v2050
    %2255 = vmatpush.msra.mxu0 %v2046
    %2256 = vmatpush.msra.mxu0 %v2042
    %2257 = vmatpush.msra.mxu0 %v2038
    %2258 = vmatpush.msra.mxu0 %v2034
    %2259 = vmatpush.msra.mxu0 %v2030
    %2260 = vmatmul.f32.gmra.mxu0 %v2101
    %v2261 = vpop.f32.mrf.mxu0
    %v2262 = vadd.f32 %v2242, %v2261
    %2263 = vdwg.mxu0
    %v2264 = vadd.f32 %v1954, %v2142
    %v2265 = vadd.f32 %v1955, %v2182
    %v2266 = vadd.f32 %v1956, %v2222
    %v2267 = vadd.f32 %v1957, %v2262
    %v2268 = vld [vmem:[#allocation3] sm:$0xf0]
    %v2269 = vld [vmem:[#allocation3 + $0x8] sm:$0xf0]
    %v2270 = vld [vmem:[#allocation3 + $0x10] sm:$0xf]
    %v2271 = vld [vmem:[#allocation3 + $0x18] sm:$0xf]
    %s2272 = scalar_lea.vmem [#allocation14], 4096
    %v2273 = vld [vmem:[%s2272] sm:$0xff]
    %v2274 = vld [vmem:[%s2272 + $0x8] sm:$0xff]
    %v2275 = vld [vmem:[%s2272 + $0x10] sm:$0xff]
    %v2276 = vld [vmem:[%s2272 + $0x18] sm:$0xff]
    %v2277 = vld [vmem:[%s2272 + $0x20] sm:$0xff]
    %v2278 = vld [vmem:[%s2272 + $0x28] sm:$0xff]
    %v2279 = vld [vmem:[%s2272 + $0x30] sm:$0xff]
    %v2280 = vld [vmem:[%s2272 + $0x38] sm:$0xff]
    %v2281 = vld [vmem:[%s2272 + $0x40] sm:$0xff]
    %v2282 = vld [vmem:[%s2272 + $0x48] sm:$0xff]
    %v2283 = vld [vmem:[%s2272 + $0x50] sm:$0xff]
    %v2284 = vld [vmem:[%s2272 + $0x58] sm:$0xff]
    %v2285 = vld [vmem:[%s2272 + $0x60] sm:$0xff]
    %v2286 = vld [vmem:[%s2272 + $0x68] sm:$0xff]
    %v2287 = vld [vmem:[%s2272 + $0x70] sm:$0xff]
    %v2288 = vld [vmem:[%s2272 + $0x78] sm:$0xff]
    %v2289 = vld [vmem:[%s2272 + $0x80] sm:$0xff]
    %v2290 = vld [vmem:[%s2272 + $0x88] sm:$0xff]
    %v2291 = vld [vmem:[%s2272 + $0x90] sm:$0xff]
    %v2292 = vld [vmem:[%s2272 + $0x98] sm:$0xff]
    %v2293 = vld [vmem:[%s2272 + $0xa0] sm:$0xff]
    %v2294 = vld [vmem:[%s2272 + $0xa8] sm:$0xff]
    %v2295 = vld [vmem:[%s2272 + $0xb0] sm:$0xff]
    %v2296 = vld [vmem:[%s2272 + $0xb8] sm:$0xff]
    %v2297 = vld [vmem:[%s2272 + $0xc0] sm:$0xff]
    %v2298 = vld [vmem:[%s2272 + $0xc8] sm:$0xff]
    %v2299 = vld [vmem:[%s2272 + $0xd0] sm:$0xff]
    %v2300 = vld [vmem:[%s2272 + $0xd8] sm:$0xff]
    %v2301 = vld [vmem:[%s2272 + $0xe0] sm:$0xff]
    %v2302 = vld [vmem:[%s2272 + $0xe8] sm:$0xff]
    %v2303 = vld [vmem:[%s2272 + $0xf0] sm:$0xff]
    %v2304 = vld [vmem:[%s2272 + $0xf8] sm:$0xff]
    %v2305 = vld [vmem:[%s2272 + $0x100] sm:$0xff]
    %v2306 = vld [vmem:[%s2272 + $0x108] sm:$0xff]
    %v2307 = vld [vmem:[%s2272 + $0x110] sm:$0xff]
    %v2308 = vld [vmem:[%s2272 + $0x118] sm:$0xff]
    %v2309 = vld [vmem:[%s2272 + $0x120] sm:$0xff]
    %v2310 = vld [vmem:[%s2272 + $0x128] sm:$0xff]
    %v2311 = vld [vmem:[%s2272 + $0x130] sm:$0xff]
    %v2312 = vld [vmem:[%s2272 + $0x138] sm:$0xff]
    %v2313 = vld [vmem:[%s2272 + $0x140] sm:$0xff]
    %v2314 = vld [vmem:[%s2272 + $0x148] sm:$0xff]
    %v2315 = vld [vmem:[%s2272 + $0x150] sm:$0xff]
    %v2316 = vld [vmem:[%s2272 + $0x158] sm:$0xff]
    %v2317 = vld [vmem:[%s2272 + $0x160] sm:$0xff]
    %v2318 = vld [vmem:[%s2272 + $0x168] sm:$0xff]
    %v2319 = vld [vmem:[%s2272 + $0x170] sm:$0xff]
    %v2320 = vld [vmem:[%s2272 + $0x178] sm:$0xff]
    %v2321 = vld [vmem:[%s2272 + $0x180] sm:$0xff]
    %v2322 = vld [vmem:[%s2272 + $0x188] sm:$0xff]
    %v2323 = vld [vmem:[%s2272 + $0x190] sm:$0xff]
    %v2324 = vld [vmem:[%s2272 + $0x198] sm:$0xff]
    %v2325 = vld [vmem:[%s2272 + $0x1a0] sm:$0xff]
    %v2326 = vld [vmem:[%s2272 + $0x1a8] sm:$0xff]
    %v2327 = vld [vmem:[%s2272 + $0x1b0] sm:$0xff]
    %v2328 = vld [vmem:[%s2272 + $0x1b8] sm:$0xff]
    %v2329 = vld [vmem:[%s2272 + $0x1c0] sm:$0xff]
    %v2330 = vld [vmem:[%s2272 + $0x1c8] sm:$0xff]
    %v2331 = vld [vmem:[%s2272 + $0x1d0] sm:$0xff]
    %v2332 = vld [vmem:[%s2272 + $0x1d8] sm:$0xff]
    %v2333 = vld [vmem:[%s2272 + $0x1e0] sm:$0xff]
    %v2334 = vld [vmem:[%s2272 + $0x1e8] sm:$0xff]
    %v2335 = vld [vmem:[%s2272 + $0x1f0] sm:$0xff]
    %v2336 = vld [vmem:[%s2272 + $0x1f8] sm:$0xff]
    %v2337 = vld [vmem:[%s2272 + $0x200] sm:$0xff]
    %v2338 = vld [vmem:[%s2272 + $0x208] sm:$0xff]
    %v2339 = vld [vmem:[%s2272 + $0x210] sm:$0xff]
    %v2340 = vld [vmem:[%s2272 + $0x218] sm:$0xff]
    %v2341 = vld [vmem:[%s2272 + $0x220] sm:$0xff]
    %v2342 = vld [vmem:[%s2272 + $0x228] sm:$0xff]
    %v2343 = vld [vmem:[%s2272 + $0x230] sm:$0xff]
    %v2344 = vld [vmem:[%s2272 + $0x238] sm:$0xff]
    %v2345 = vld [vmem:[%s2272 + $0x240] sm:$0xff]
    %v2346 = vld [vmem:[%s2272 + $0x248] sm:$0xff]
    %v2347 = vld [vmem:[%s2272 + $0x250] sm:$0xff]
    %v2348 = vld [vmem:[%s2272 + $0x258] sm:$0xff]
    %v2349 = vld [vmem:[%s2272 + $0x260] sm:$0xff]
    %v2350 = vld [vmem:[%s2272 + $0x268] sm:$0xff]
    %v2351 = vld [vmem:[%s2272 + $0x270] sm:$0xff]
    %v2352 = vld [vmem:[%s2272 + $0x278] sm:$0xff]
    %v2353 = vld [vmem:[%s2272 + $0x280] sm:$0xff]
    %v2354 = vld [vmem:[%s2272 + $0x288] sm:$0xff]
    %v2355 = vld [vmem:[%s2272 + $0x290] sm:$0xff]
    %v2356 = vld [vmem:[%s2272 + $0x298] sm:$0xff]
    %v2357 = vld [vmem:[%s2272 + $0x2a0] sm:$0xff]
    %v2358 = vld [vmem:[%s2272 + $0x2a8] sm:$0xff]
    %v2359 = vld [vmem:[%s2272 + $0x2b0] sm:$0xff]
    %v2360 = vld [vmem:[%s2272 + $0x2b8] sm:$0xff]
    %v2361 = vld [vmem:[%s2272 + $0x2c0] sm:$0xff]
    %v2362 = vld [vmem:[%s2272 + $0x2c8] sm:$0xff]
    %v2363 = vld [vmem:[%s2272 + $0x2d0] sm:$0xff]
    %v2364 = vld [vmem:[%s2272 + $0x2d8] sm:$0xff]
    %v2365 = vld [vmem:[%s2272 + $0x2e0] sm:$0xff]
    %v2366 = vld [vmem:[%s2272 + $0x2e8] sm:$0xff]
    %v2367 = vld [vmem:[%s2272 + $0x2f0] sm:$0xff]
    %v2368 = vld [vmem:[%s2272 + $0x2f8] sm:$0xff]
    %v2369 = vld [vmem:[%s2272 + $0x300] sm:$0xff]
    %v2370 = vld [vmem:[%s2272 + $0x308] sm:$0xff]
    %v2371 = vld [vmem:[%s2272 + $0x310] sm:$0xff]
    %v2372 = vld [vmem:[%s2272 + $0x318] sm:$0xff]
    %v2373 = vld [vmem:[%s2272 + $0x320] sm:$0xff]
    %v2374 = vld [vmem:[%s2272 + $0x328] sm:$0xff]
    %v2375 = vld [vmem:[%s2272 + $0x330] sm:$0xff]
    %v2376 = vld [vmem:[%s2272 + $0x338] sm:$0xff]
    %v2377 = vld [vmem:[%s2272 + $0x340] sm:$0xff]
    %v2378 = vld [vmem:[%s2272 + $0x348] sm:$0xff]
    %v2379 = vld [vmem:[%s2272 + $0x350] sm:$0xff]
    %v2380 = vld [vmem:[%s2272 + $0x358] sm:$0xff]
    %v2381 = vld [vmem:[%s2272 + $0x360] sm:$0xff]
    %v2382 = vld [vmem:[%s2272 + $0x368] sm:$0xff]
    %v2383 = vld [vmem:[%s2272 + $0x370] sm:$0xff]
    %v2384 = vld [vmem:[%s2272 + $0x378] sm:$0xff]
    %v2385 = vld [vmem:[%s2272 + $0x380] sm:$0xff]
    %v2386 = vld [vmem:[%s2272 + $0x388] sm:$0xff]
    %v2387 = vld [vmem:[%s2272 + $0x390] sm:$0xff]
    %v2388 = vld [vmem:[%s2272 + $0x398] sm:$0xff]
    %v2389 = vld [vmem:[%s2272 + $0x3a0] sm:$0xff]
    %v2390 = vld [vmem:[%s2272 + $0x3a8] sm:$0xff]
    %v2391 = vld [vmem:[%s2272 + $0x3b0] sm:$0xff]
    %v2392 = vld [vmem:[%s2272 + $0x3b8] sm:$0xff]
    %v2393 = vld [vmem:[%s2272 + $0x3c0] sm:$0xff]
    %v2394 = vld [vmem:[%s2272 + $0x3c8] sm:$0xff]
    %v2395 = vld [vmem:[%s2272 + $0x3d0] sm:$0xff]
    %v2396 = vld [vmem:[%s2272 + $0x3d8] sm:$0xff]
    %v2397 = vld [vmem:[%s2272 + $0x3e0] sm:$0xff]
    %v2398 = vld [vmem:[%s2272 + $0x3e8] sm:$0xff]
    %v2399 = vld [vmem:[%s2272 + $0x3f0] sm:$0xff]
    %v2400 = vld [vmem:[%s2272 + $0x3f8] sm:$0xff]
    %v2405 = vrot.slane %v2268, 4
    %v2406 = vrot.slane %v2270, 4
    %v2407 = vsel %vm199, %v2405, %v2406
    %v2408 = vrot.slane %v2269, 4
    %v2409 = vrot.slane %v2271, 4
    %v2410 = vsel %vm199, %v2408, %v2409
    %2413 = vmatpush.msra.mxu0 %v2333
    %2414 = vmatpush.msra.mxu0 %v2329
    %2415 = vmatpush.msra.mxu0 %v2325
    %2416 = vmatpush.msra.mxu0 %v2321
    %2417 = vmatpush.msra.mxu0 %v2317
    %2418 = vmatpush.msra.mxu0 %v2313
    %2419 = vmatpush.msra.mxu0 %v2309
    %2420 = vmatpush.msra.mxu0 %v2305
    %2421 = vmatpush.msra.mxu0 %v2301
    %2422 = vmatpush.msra.mxu0 %v2297
    %2423 = vmatpush.msra.mxu0 %v2293
    %2424 = vmatpush.msra.mxu0 %v2289
    %2425 = vmatpush.msra.mxu0 %v2285
    %2426 = vmatpush.msra.mxu0 %v2281
    %2427 = vmatpush.msra.mxu0 %v2277
    %2428 = vmatpush.msra.mxu0 %v2273
    %2429 = vmatmul.f32.gmra.mxu0 %v2407
    %v2430 = vpop.f32.mrf.mxu0
    %v2431 = vadd.f32 0.0, %v2430
    %2432 = vdwg.mxu0
    %2433 = vmatpush.msra.mxu0 %v2397
    %2434 = vmatpush.msra.mxu0 %v2393
    %2435 = vmatpush.msra.mxu0 %v2389
    %2436 = vmatpush.msra.mxu0 %v2385
    %2437 = vmatpush.msra.mxu0 %v2381
    %2438 = vmatpush.msra.mxu0 %v2377
    %2439 = vmatpush.msra.mxu0 %v2373
    %2440 = vmatpush.msra.mxu0 %v2369
    %2441 = vmatpush.msra.mxu0 %v2365
    %2442 = vmatpush.msra.mxu0 %v2361
    %2443 = vmatpush.msra.mxu0 %v2357
    %2444 = vmatpush.msra.mxu0 %v2353
    %2445 = vmatpush.msra.mxu0 %v2349
    %2446 = vmatpush.msra.mxu0 %v2345
    %2447 = vmatpush.msra.mxu0 %v2341
    %2448 = vmatpush.msra.mxu0 %v2337
    %2449 = vmatmul.f32.gmra.mxu0 %v2410
    %v2450 = vpop.f32.mrf.mxu0
    %v2451 = vadd.f32 %v2431, %v2450
    %2452 = vdwg.mxu0
    %2453 = vmatpush.msra.mxu0 %v2334
    %2454 = vmatpush.msra.mxu0 %v2330
    %2455 = vmatpush.msra.mxu0 %v2326
    %2456 = vmatpush.msra.mxu0 %v2322
    %2457 = vmatpush.msra.mxu0 %v2318
    %2458 = vmatpush.msra.mxu0 %v2314
    %2459 = vmatpush.msra.mxu0 %v2310
    %2460 = vmatpush.msra.mxu0 %v2306
    %2461 = vmatpush.msra.mxu0 %v2302
    %2462 = vmatpush.msra.mxu0 %v2298
    %2463 = vmatpush.msra.mxu0 %v2294
    %2464 = vmatpush.msra.mxu0 %v2290
    %2465 = vmatpush.msra.mxu0 %v2286
    %2466 = vmatpush.msra.mxu0 %v2282
    %2467 = vmatpush.msra.mxu0 %v2278
    %2468 = vmatpush.msra.mxu0 %v2274
    %2469 = vmatmul.f32.gmra.mxu0 %v2407
    %v2470 = vpop.f32.mrf.mxu0
    %v2471 = vadd.f32 0.0, %v2470
    %2472 = vdwg.mxu0
    %2473 = vmatpush.msra.mxu0 %v2398
    %2474 = vmatpush.msra.mxu0 %v2394
    %2475 = vmatpush.msra.mxu0 %v2390
    %2476 = vmatpush.msra.mxu0 %v2386
    %2477 = vmatpush.msra.mxu0 %v2382
    %2478 = vmatpush.msra.mxu0 %v2378
    %2479 = vmatpush.msra.mxu0 %v2374
    %2480 = vmatpush.msra.mxu0 %v2370
    %2481 = vmatpush.msra.mxu0 %v2366
    %2482 = vmatpush.msra.mxu0 %v2362
    %2483 = vmatpush.msra.mxu0 %v2358
    %2484 = vmatpush.msra.mxu0 %v2354
    %2485 = vmatpush.msra.mxu0 %v2350
    %2486 = vmatpush.msra.mxu0 %v2346
    %2487 = vmatpush.msra.mxu0 %v2342
    %2488 = vmatpush.msra.mxu0 %v2338
    %2489 = vmatmul.f32.gmra.mxu0 %v2410
    %v2490 = vpop.f32.mrf.mxu0
    %v2491 = vadd.f32 %v2471, %v2490
    %2492 = vdwg.mxu0
    %2493 = vmatpush.msra.mxu0 %v2335
    %2494 = vmatpush.msra.mxu0 %v2331
    %2495 = vmatpush.msra.mxu0 %v2327
    %2496 = vmatpush.msra.mxu0 %v2323
    %2497 = vmatpush.msra.mxu0 %v2319
    %2498 = vmatpush.msra.mxu0 %v2315
    %2499 = vmatpush.msra.mxu0 %v2311
    %2500 = vmatpush.msra.mxu0 %v2307
    %2501 = vmatpush.msra.mxu0 %v2303
    %2502 = vmatpush.msra.mxu0 %v2299
    %2503 = vmatpush.msra.mxu0 %v2295
    %2504 = vmatpush.msra.mxu0 %v2291
    %2505 = vmatpush.msra.mxu0 %v2287
    %2506 = vmatpush.msra.mxu0 %v2283
    %2507 = vmatpush.msra.mxu0 %v2279
    %2508 = vmatpush.msra.mxu0 %v2275
    %2509 = vmatmul.f32.gmra.mxu0 %v2407
    %v2510 = vpop.f32.mrf.mxu0
    %v2511 = vadd.f32 0.0, %v2510
    %2512 = vdwg.mxu0
    %2513 = vmatpush.msra.mxu0 %v2399
    %2514 = vmatpush.msra.mxu0 %v2395
    %2515 = vmatpush.msra.mxu0 %v2391
    %2516 = vmatpush.msra.mxu0 %v2387
    %2517 = vmatpush.msra.mxu0 %v2383
    %2518 = vmatpush.msra.mxu0 %v2379
    %2519 = vmatpush.msra.mxu0 %v2375
    %2520 = vmatpush.msra.mxu0 %v2371
    %2521 = vmatpush.msra.mxu0 %v2367
    %2522 = vmatpush.msra.mxu0 %v2363
    %2523 = vmatpush.msra.mxu0 %v2359
    %2524 = vmatpush.msra.mxu0 %v2355
    %2525 = vmatpush.msra.mxu0 %v2351
    %2526 = vmatpush.msra.mxu0 %v2347
    %2527 = vmatpush.msra.mxu0 %v2343
    %2528 = vmatpush.msra.mxu0 %v2339
    %2529 = vmatmul.f32.gmra.mxu0 %v2410
    %v2530 = vpop.f32.mrf.mxu0
    %v2531 = vadd.f32 %v2511, %v2530
    %2532 = vdwg.mxu0
    %2533 = vmatpush.msra.mxu0 %v2336
    %2534 = vmatpush.msra.mxu0 %v2332
    %2535 = vmatpush.msra.mxu0 %v2328
    %2536 = vmatpush.msra.mxu0 %v2324
    %2537 = vmatpush.msra.mxu0 %v2320
    %2538 = vmatpush.msra.mxu0 %v2316
    %2539 = vmatpush.msra.mxu0 %v2312
    %2540 = vmatpush.msra.mxu0 %v2308
    %2541 = vmatpush.msra.mxu0 %v2304
    %2542 = vmatpush.msra.mxu0 %v2300
    %2543 = vmatpush.msra.mxu0 %v2296
    %2544 = vmatpush.msra.mxu0 %v2292
    %2545 = vmatpush.msra.mxu0 %v2288
    %2546 = vmatpush.msra.mxu0 %v2284
    %2547 = vmatpush.msra.mxu0 %v2280
    %2548 = vmatpush.msra.mxu0 %v2276
    %2549 = vmatmul.f32.gmra.mxu0 %v2407
    %v2550 = vpop.f32.mrf.mxu0
    %v2551 = vadd.f32 0.0, %v2550
    %2552 = vdwg.mxu0
    %2553 = vmatpush.msra.mxu0 %v2400
    %2554 = vmatpush.msra.mxu0 %v2396
    %2555 = vmatpush.msra.mxu0 %v2392
    %2556 = vmatpush.msra.mxu0 %v2388
    %2557 = vmatpush.msra.mxu0 %v2384
    %2558 = vmatpush.msra.mxu0 %v2380
    %2559 = vmatpush.msra.mxu0 %v2376
    %2560 = vmatpush.msra.mxu0 %v2372
    %2561 = vmatpush.msra.mxu0 %v2368
    %2562 = vmatpush.msra.mxu0 %v2364
    %2563 = vmatpush.msra.mxu0 %v2360
    %2564 = vmatpush.msra.mxu0 %v2356
    %2565 = vmatpush.msra.mxu0 %v2352
    %2566 = vmatpush.msra.mxu0 %v2348
    %2567 = vmatpush.msra.mxu0 %v2344
    %2568 = vmatpush.msra.mxu0 %v2340
    %2569 = vmatmul.f32.gmra.mxu0 %v2410
    %v2570 = vpop.f32.mrf.mxu0
    %v2571 = vadd.f32 %v2551, %v2570
    %2572 = vdwg.mxu0
    %v2573 = vadd.f32 %v2264, %v2451
    %v2574 = vadd.f32 %v2265, %v2491
    %v2575 = vadd.f32 %v2266, %v2531
    %v2576 = vadd.f32 %v2267, %v2571
    %v2577 = vld [vmem:[#allocation15] sm:$0x3]
    %v2579 = vperm.slane %v2577, 0
    %v2580 = vperm.slane %v2577, 1
    %v2583 = vadd.f32 %v2573, %v2579
    %v2584 = vadd.f32 %v2574, %v2580
    %v2585 = vmax.f32 %v2583, 0.0
    %v2586 = vmax.f32 %v2584, 0.0
    %v2587 = vadd.f32 %v2575, %v2579
    %v2588 = vadd.f32 %v2576, %v2580
    %v2589 = vmax.f32 %v2587, 0.0
    %v2590 = vmax.f32 %v2588, 0.0
    %v2591 = vmax.f32 %v2585, %v2589
    %v2592 = vmax.f32 %v2586, %v2590
    %2593 = vst [vmem:[#allocation4] sm:$0xff] %v2591
    %2594 = vst [vmem:[#allocation4 + $0x8] sm:$0xff] %v2592
    %v2595 = vld [vmem:[#allocation4] ss:$8 sm:$0x3]
    %s2596 = scalar_lea.vmem [#allocation4], 1
    %v2597 = vld [vmem:[%s2596] ss:$8 sm:$0x3]
    %v2598 = vmax.f32 %v2595, %v2597
    %2599 = vst.msk [vmem:[#allocation5] ss:$2 sm:$0x3] %vm961, %v2598
    %s2600 = scalar_lea.vmem [#allocation4], 2
    %v2601 = vld [vmem:[%s2600] ss:$8 sm:$0x3]
    %s2602 = scalar_lea.vmem [#allocation4], 3
    %v2603 = vld [vmem:[%s2602] ss:$8 sm:$0x3]
    %v2604 = vmax.f32 %v2601, %v2603
    %2605 = vst.msk [vmem:[#allocation6] ss:$2 sm:$0x3] %vm961, %v2604
    %s2606 = scalar_lea.vmem [#allocation4], 4
    %v2607 = vld [vmem:[%s2606] ss:$8 sm:$0x3]
    %s2608 = scalar_lea.vmem [#allocation4], 5
    %v2609 = vld [vmem:[%s2608] ss:$8 sm:$0x3]
    %v2610 = vmax.f32 %v2607, %v2609
    %2611 = vst.msk [vmem:[#allocation7] ss:$2 sm:$0x3] %vm961, %v2610
    %s2612 = scalar_lea.vmem [#allocation4], 6
    %v2613 = vld [vmem:[%s2612] ss:$8 sm:$0x3]
    %s2614 = scalar_lea.vmem [#allocation4], 7
    %v2615 = vld [vmem:[%s2614] ss:$8 sm:$0x3]
    %v2616 = vmax.f32 %v2613, %v2615
    %2617 = vst.msk [vmem:[#allocation8] ss:$2 sm:$0x3] %vm961, %v2616
    %s2618 = scalar_lea.vmem %s0, 32
    %v2619 = vld [vmem:[%s2618] sm:$0xff]
    %v2620 = vld [vmem:[%s2618 + $0x8] sm:$0xff]
    %v2621 = vld [vmem:[%s2618 + $0x10] sm:$0xff]
    %v2622 = vld [vmem:[#allocation9] sm:$0xff]
    %v2623 = vld [vmem:[#allocation9 + $0x8] sm:$0xff]
    %v2624 = vld [vmem:[#allocation9 + $0x10] sm:$0xff]
    %v2625 = vld [vmem:[#allocation9 + $0x18] sm:$0xff]
    %v2626 = vld [vmem:[#allocation9 + $0x20] sm:$0xff]
    %v2627 = vld [vmem:[#allocation9 + $0x28] sm:$0xff]
    %v2628 = vld [vmem:[#allocation9 + $0x30] sm:$0xff]
    %v2629 = vld [vmem:[#allocation9 + $0x38] sm:$0xff]
    %v2630 = vld [vmem:[#allocation9 + $0x40] sm:$0xff]
    %v2631 = vld [vmem:[#allocation9 + $0x48] sm:$0xff]
    %v2632 = vld [vmem:[#allocation9 + $0x50] sm:$0xff]
    %v2633 = vld [vmem:[#allocation9 + $0x58] sm:$0xff]
    %v2634 = vld [vmem:[#allocation9 + $0x60] sm:$0xf]
    %v2635 = vld [vmem:[#allocation9 + $0x68] sm:$0xf]
    %v2636 = vld [vmem:[#allocation9 + $0x70] sm:$0xf]
    %v2637 = vld [vmem:[#allocation9 + $0x78] sm:$0xf]
    %v2638 = vld [vmem:[%s2618 + $0x1] sm:$0xff]
    %v2639 = vld [vmem:[%s2618 + $0x9] sm:$0xff]
    %v2640 = vld [vmem:[%s2618 + $0x11] sm:$0xff]
    %v2641 = vld [vmem:[%s172] sm:$0xff]
    %v2642 = vld [vmem:[%s172 + $0x8] sm:$0xff]
    %v2643 = vld [vmem:[%s172 + $0x10] sm:$0xff]
    %v2644 = vld [vmem:[%s172 + $0x18] sm:$0xff]
    %v2645 = vld [vmem:[%s172 + $0x20] sm:$0xff]
    %v2646 = vld [vmem:[%s172 + $0x28] sm:$0xff]
    %v2647 = vld [vmem:[%s172 + $0x30] sm:$0xff]
    %v2648 = vld [vmem:[%s172 + $0x38] sm:$0xff]
    %v2649 = vld [vmem:[%s172 + $0x40] sm:$0xff]
    %v2650 = vld [vmem:[%s172 + $0x48] sm:$0xff]
    %v2651 = vld [vmem:[%s172 + $0x50] sm:$0xff]
    %v2652 = vld [vmem:[%s172 + $0x58] sm:$0xff]
    %v2653 = vld [vmem:[%s172 + $0x60] sm:$0xf]
    %v2654 = vld [vmem:[%s172 + $0x68] sm:$0xf]
    %v2655 = vld [vmem:[%s172 + $0x70] sm:$0xf]
    %v2656 = vld [vmem:[%s172 + $0x78] sm:$0xf]
    %v2658 = vsel %vm189, %v2638, 0
    %v2661 = vsel %vm189, %v2639, 0
    %v2664 = vsel %vm189, %v2640, 0
    %v2667 = vsel %vm199, %v2653, 0
    %v2670 = vsel %vm199, %v2654, 0
    %v2673 = vsel %vm199, %v2655, 0
    %v2676 = vsel %vm199, %v2656, 0
    %2678 = vmatpush.msra.mxu0 0.0
    %2679 = vmatpush.msra.mxu0 0.0
    %2680 = vmatpush.msra.mxu0 0.0
    %2681 = vmatpush.msra.mxu0 0.0
    %2682 = vmatpush.msra.mxu0 0.0
    %2683 = vmatpush.msra.mxu0 0.0
    %2684 = vmatpush.msra.mxu0 0.0
    %2685 = vmatpush.msra.mxu0 0.0
    %2686 = vmatpush.msra.mxu0 0.0
    %2687 = vmatpush.msra.mxu0 0.0
    %2688 = vmatpush.msra.mxu0 0.0
    %2689 = vmatpush.msra.mxu0 0.0
    %2690 = vmatpush.msra.mxu0 %v2667
    %2691 = vmatpush.msra.mxu0 %v2649
    %2692 = vmatpush.msra.mxu0 %v2645
    %2693 = vmatpush.msra.mxu0 %v2641
    %2694 = vmatmul.f32.gmra.mxu0 %v2658
    %v2695 = vpop.f32.mrf.mxu0
    %v2696 = vadd.f32 0.0, %v2695
    %2697 = vmatmul.f32.gmra.mxu0 %v2661
    %v2698 = vpop.f32.mrf.mxu0
    %v2699 = vadd.f32 0.0, %v2698
    %2700 = vmatmul.f32.gmra.mxu0 %v2664
    %v2701 = vpop.f32.mrf.mxu0
    %v2702 = vadd.f32 0.0, %v2701
    %2703 = vdwg.mxu0
    %2704 = vmatpush.msra.mxu0 0.0
    %2705 = vmatpush.msra.mxu0 0.0
    %2706 = vmatpush.msra.mxu0 0.0
    %2707 = vmatpush.msra.mxu0 0.0
    %2708 = vmatpush.msra.mxu0 0.0
    %2709 = vmatpush.msra.mxu0 0.0
    %2710 = vmatpush.msra.mxu0 0.0
    %2711 = vmatpush.msra.mxu0 0.0
    %2712 = vmatpush.msra.mxu0 0.0
    %2713 = vmatpush.msra.mxu0 0.0
    %2714 = vmatpush.msra.mxu0 0.0
    %2715 = vmatpush.msra.mxu0 0.0
    %2716 = vmatpush.msra.mxu0 %v2670
    %2717 = vmatpush.msra.mxu0 %v2650
    %2718 = vmatpush.msra.mxu0 %v2646
    %2719 = vmatpush.msra.mxu0 %v2642
    %2720 = vmatmul.f32.gmra.mxu0 %v2658
    %v2721 = vpop.f32.mrf.mxu0
    %v2722 = vadd.f32 0.0, %v2721
    %2723 = vmatmul.f32.gmra.mxu0 %v2661
    %v2724 = vpop.f32.mrf.mxu0
    %v2725 = vadd.f32 0.0, %v2724
    %2726 = vmatmul.f32.gmra.mxu0 %v2664
    %v2727 = vpop.f32.mrf.mxu0
    %v2728 = vadd.f32 0.0, %v2727
    %2729 = vdwg.mxu0
    %2730 = vmatpush.msra.mxu0 0.0
    %2731 = vmatpush.msra.mxu0 0.0
    %2732 = vmatpush.msra.mxu0 0.0
    %2733 = vmatpush.msra.mxu0 0.0
    %2734 = vmatpush.msra.mxu0 0.0
    %2735 = vmatpush.msra.mxu0 0.0
    %2736 = vmatpush.msra.mxu0 0.0
    %2737 = vmatpush.msra.mxu0 0.0
    %2738 = vmatpush.msra.mxu0 0.0
    %2739 = vmatpush.msra.mxu0 0.0
    %2740 = vmatpush.msra.mxu0 0.0
    %2741 = vmatpush.msra.mxu0 0.0
    %2742 = vmatpush.msra.mxu0 %v2673
    %2743 = vmatpush.msra.mxu0 %v2651
    %2744 = vmatpush.msra.mxu0 %v2647
    %2745 = vmatpush.msra.mxu0 %v2643
    %2746 = vmatmul.f32.gmra.mxu0 %v2658
    %v2747 = vpop.f32.mrf.mxu0
    %v2748 = vadd.f32 0.0, %v2747
    %2749 = vmatmul.f32.gmra.mxu0 %v2661
    %v2750 = vpop.f32.mrf.mxu0
    %v2751 = vadd.f32 0.0, %v2750
    %2752 = vmatmul.f32.gmra.mxu0 %v2664
    %v2753 = vpop.f32.mrf.mxu0
    %v2754 = vadd.f32 0.0, %v2753
    %2755 = vdwg.mxu0
    %2756 = vmatpush.msra.mxu0 0.0
    %2757 = vmatpush.msra.mxu0 0.0
    %2758 = vmatpush.msra.mxu0 0.0
    %2759 = vmatpush.msra.mxu0 0.0
    %2760 = vmatpush.msra.mxu0 0.0
    %2761 = vmatpush.msra.mxu0 0.0
    %2762 = vmatpush.msra.mxu0 0.0
    %2763 = vmatpush.msra.mxu0 0.0
    %2764 = vmatpush.msra.mxu0 0.0
    %2765 = vmatpush.msra.mxu0 0.0
    %2766 = vmatpush.msra.mxu0 0.0
    %2767 = vmatpush.msra.mxu0 0.0
    %2768 = vmatpush.msra.mxu0 %v2676
    %2769 = vmatpush.msra.mxu0 %v2652
    %2770 = vmatpush.msra.mxu0 %v2648
    %2771 = vmatpush.msra.mxu0 %v2644
    %2772 = vmatmul.f32.gmra.mxu0 %v2658
    %v2773 = vpop.f32.mrf.mxu0
    %v2774 = vadd.f32 0.0, %v2773
    %2775 = vmatmul.f32.gmra.mxu0 %v2661
    %v2776 = vpop.f32.mrf.mxu0
    %v2777 = vadd.f32 0.0, %v2776
    %2778 = vmatmul.f32.gmra.mxu0 %v2664
    %v2779 = vpop.f32.mrf.mxu0
    %v2780 = vadd.f32 0.0, %v2779
    %2781 = vdwg.mxu0
    %v2783 = vsel %vm189, %v2619, 0
    %v2786 = vsel %vm189, %v2620, 0
    %v2789 = vsel %vm189, %v2621, 0
    %v2792 = vsel %vm199, %v2634, 0
    %v2795 = vsel %vm199, %v2635, 0
    %v2798 = vsel %vm199, %v2636, 0
    %v2801 = vsel %vm199, %v2637, 0
    %2803 = vmatpush.msra.mxu0 0.0
    %2804 = vmatpush.msra.mxu0 0.0
    %2805 = vmatpush.msra.mxu0 0.0
    %2806 = vmatpush.msra.mxu0 0.0
    %2807 = vmatpush.msra.mxu0 0.0
    %2808 = vmatpush.msra.mxu0 0.0
    %2809 = vmatpush.msra.mxu0 0.0
    %2810 = vmatpush.msra.mxu0 0.0
    %2811 = vmatpush.msra.mxu0 0.0
    %2812 = vmatpush.msra.mxu0 0.0
    %2813 = vmatpush.msra.mxu0 0.0
    %2814 = vmatpush.msra.mxu0 0.0
    %2815 = vmatpush.msra.mxu0 %v2792
    %2816 = vmatpush.msra.mxu0 %v2630
    %2817 = vmatpush.msra.mxu0 %v2626
    %2818 = vmatpush.msra.mxu0 %v2622
    %2819 = vmatmul.f32.gmra.mxu0 %v2783
    %v2820 = vpop.f32.mrf.mxu0
    %v2821 = vadd.f32 %v2696, %v2820
    %2822 = vmatmul.f32.gmra.mxu0 %v2786
    %v2823 = vpop.f32.mrf.mxu0
    %v2824 = vadd.f32 %v2699, %v2823
    %2825 = vmatmul.f32.gmra.mxu0 %v2789
    %v2826 = vpop.f32.mrf.mxu0
    %v2827 = vadd.f32 %v2702, %v2826
    %2828 = vdwg.mxu0
    %2829 = vmatpush.msra.mxu0 0.0
    %2830 = vmatpush.msra.mxu0 0.0
    %2831 = vmatpush.msra.mxu0 0.0
    %2832 = vmatpush.msra.mxu0 0.0
    %2833 = vmatpush.msra.mxu0 0.0
    %2834 = vmatpush.msra.mxu0 0.0
    %2835 = vmatpush.msra.mxu0 0.0
    %2836 = vmatpush.msra.mxu0 0.0
    %2837 = vmatpush.msra.mxu0 0.0
    %2838 = vmatpush.msra.mxu0 0.0
    %2839 = vmatpush.msra.mxu0 0.0
    %2840 = vmatpush.msra.mxu0 0.0
    %2841 = vmatpush.msra.mxu0 %v2795
    %2842 = vmatpush.msra.mxu0 %v2631
    %2843 = vmatpush.msra.mxu0 %v2627
    %2844 = vmatpush.msra.mxu0 %v2623
    %2845 = vmatmul.f32.gmra.mxu0 %v2783
    %v2846 = vpop.f32.mrf.mxu0
    %v2847 = vadd.f32 %v2722, %v2846
    %2848 = vmatmul.f32.gmra.mxu0 %v2786
    %v2849 = vpop.f32.mrf.mxu0
    %v2850 = vadd.f32 %v2725, %v2849
    %2851 = vmatmul.f32.gmra.mxu0 %v2789
    %v2852 = vpop.f32.mrf.mxu0
    %v2853 = vadd.f32 %v2728, %v2852
    %2854 = vdwg.mxu0
    %2855 = vmatpush.msra.mxu0 0.0
    %2856 = vmatpush.msra.mxu0 0.0
    %2857 = vmatpush.msra.mxu0 0.0
    %2858 = vmatpush.msra.mxu0 0.0
    %2859 = vmatpush.msra.mxu0 0.0
    %2860 = vmatpush.msra.mxu0 0.0
    %2861 = vmatpush.msra.mxu0 0.0
    %2862 = vmatpush.msra.mxu0 0.0
    %2863 = vmatpush.msra.mxu0 0.0
    %2864 = vmatpush.msra.mxu0 0.0
    %2865 = vmatpush.msra.mxu0 0.0
    %2866 = vmatpush.msra.mxu0 0.0
    %2867 = vmatpush.msra.mxu0 %v2798
    %2868 = vmatpush.msra.mxu0 %v2632
    %2869 = vmatpush.msra.mxu0 %v2628
    %2870 = vmatpush.msra.mxu0 %v2624
    %2871 = vmatmul.f32.gmra.mxu0 %v2783
    %v2872 = vpop.f32.mrf.mxu0
    %v2873 = vadd.f32 %v2748, %v2872
    %2874 = vmatmul.f32.gmra.mxu0 %v2786
    %v2875 = vpop.f32.mrf.mxu0
    %v2876 = vadd.f32 %v2751, %v2875
    %2877 = vmatmul.f32.gmra.mxu0 %v2789
    %v2878 = vpop.f32.mrf.mxu0
    %v2879 = vadd.f32 %v2754, %v2878
    %2880 = vdwg.mxu0
    %2881 = vmatpush.msra.mxu0 0.0
    %2882 = vmatpush.msra.mxu0 0.0
    %2883 = vmatpush.msra.mxu0 0.0
    %2884 = vmatpush.msra.mxu0 0.0
    %2885 = vmatpush.msra.mxu0 0.0
    %2886 = vmatpush.msra.mxu0 0.0
    %2887 = vmatpush.msra.mxu0 0.0
    %2888 = vmatpush.msra.mxu0 0.0
    %2889 = vmatpush.msra.mxu0 0.0
    %2890 = vmatpush.msra.mxu0 0.0
    %2891 = vmatpush.msra.mxu0 0.0
    %2892 = vmatpush.msra.mxu0 0.0
    %2893 = vmatpush.msra.mxu0 %v2801
    %2894 = vmatpush.msra.mxu0 %v2633
    %2895 = vmatpush.msra.mxu0 %v2629
    %2896 = vmatpush.msra.mxu0 %v2625
    %2897 = vmatmul.f32.gmra.mxu0 %v2783
    %v2898 = vpop.f32.mrf.mxu0
    %v2899 = vadd.f32 %v2774, %v2898
    %2900 = vmatmul.f32.gmra.mxu0 %v2786
    %v2901 = vpop.f32.mrf.mxu0
    %v2902 = vadd.f32 %v2777, %v2901
    %2903 = vmatmul.f32.gmra.mxu0 %v2789
    %v2904 = vpop.f32.mrf.mxu0
    %v2905 = vadd.f32 %v2780, %v2904
    %2906 = vdwg.mxu0
    %v2907 = vld [vmem:[%s2618 + $0x2] sm:$0xff]
    %v2908 = vld [vmem:[%s2618 + $0xa] sm:$0xff]
    %v2909 = vld [vmem:[%s2618 + $0x12] sm:$0xff]
    %v2910 = vld [vmem:[%s444] sm:$0xff]
    %v2911 = vld [vmem:[%s444 + $0x8] sm:$0xff]
    %v2912 = vld [vmem:[%s444 + $0x10] sm:$0xff]
    %v2913 = vld [vmem:[%s444 + $0x18] sm:$0xff]
    %v2914 = vld [vmem:[%s444 + $0x20] sm:$0xff]
    %v2915 = vld [vmem:[%s444 + $0x28] sm:$0xff]
    %v2916 = vld [vmem:[%s444 + $0x30] sm:$0xff]
    %v2917 = vld [vmem:[%s444 + $0x38] sm:$0xff]
    %v2918 = vld [vmem:[%s444 + $0x40] sm:$0xff]
    %v2919 = vld [vmem:[%s444 + $0x48] sm:$0xff]
    %v2920 = vld [vmem:[%s444 + $0x50] sm:$0xff]
    %v2921 = vld [vmem:[%s444 + $0x58] sm:$0xff]
    %v2922 = vld [vmem:[%s444 + $0x60] sm:$0xf]
    %v2923 = vld [vmem:[%s444 + $0x68] sm:$0xf]
    %v2924 = vld [vmem:[%s444 + $0x70] sm:$0xf]
    %v2925 = vld [vmem:[%s444 + $0x78] sm:$0xf]
    %v2927 = vsel %vm189, %v2907, 0
    %v2930 = vsel %vm189, %v2908, 0
    %v2933 = vsel %vm189, %v2909, 0
    %v2936 = vsel %vm199, %v2922, 0
    %v2939 = vsel %vm199, %v2923, 0
    %v2942 = vsel %vm199, %v2924, 0
    %v2945 = vsel %vm199, %v2925, 0
    %2947 = vmatpush.msra.mxu0 0.0
    %2948 = vmatpush.msra.mxu0 0.0
    %2949 = vmatpush.msra.mxu0 0.0
    %2950 = vmatpush.msra.mxu0 0.0
    %2951 = vmatpush.msra.mxu0 0.0
    %2952 = vmatpush.msra.mxu0 0.0
    %2953 = vmatpush.msra.mxu0 0.0
    %2954 = vmatpush.msra.mxu0 0.0
    %2955 = vmatpush.msra.mxu0 0.0
    %2956 = vmatpush.msra.mxu0 0.0
    %2957 = vmatpush.msra.mxu0 0.0
    %2958 = vmatpush.msra.mxu0 0.0
    %2959 = vmatpush.msra.mxu0 %v2936
    %2960 = vmatpush.msra.mxu0 %v2918
    %2961 = vmatpush.msra.mxu0 %v2914
    %2962 = vmatpush.msra.mxu0 %v2910
    %2963 = vmatmul.f32.gmra.mxu0 %v2927
    %v2964 = vpop.f32.mrf.mxu0
    %v2965 = vadd.f32 0.0, %v2964
    %2966 = vmatmul.f32.gmra.mxu0 %v2930
    %v2967 = vpop.f32.mrf.mxu0
    %v2968 = vadd.f32 0.0, %v2967
    %2969 = vmatmul.f32.gmra.mxu0 %v2933
    %v2970 = vpop.f32.mrf.mxu0
    %v2971 = vadd.f32 0.0, %v2970
    %2972 = vdwg.mxu0
    %2973 = vmatpush.msra.mxu0 0.0
    %2974 = vmatpush.msra.mxu0 0.0
    %2975 = vmatpush.msra.mxu0 0.0
    %2976 = vmatpush.msra.mxu0 0.0
    %2977 = vmatpush.msra.mxu0 0.0
    %2978 = vmatpush.msra.mxu0 0.0
    %2979 = vmatpush.msra.mxu0 0.0
    %2980 = vmatpush.msra.mxu0 0.0
    %2981 = vmatpush.msra.mxu0 0.0
    %2982 = vmatpush.msra.mxu0 0.0
    %2983 = vmatpush.msra.mxu0 0.0
    %2984 = vmatpush.msra.mxu0 0.0
    %2985 = vmatpush.msra.mxu0 %v2939
    %2986 = vmatpush.msra.mxu0 %v2919
    %2987 = vmatpush.msra.mxu0 %v2915
    %2988 = vmatpush.msra.mxu0 %v2911
    %2989 = vmatmul.f32.gmra.mxu0 %v2927
    %v2990 = vpop.f32.mrf.mxu0
    %v2991 = vadd.f32 0.0, %v2990
    %2992 = vmatmul.f32.gmra.mxu0 %v2930
    %v2993 = vpop.f32.mrf.mxu0
    %v2994 = vadd.f32 0.0, %v2993
    %2995 = vmatmul.f32.gmra.mxu0 %v2933
    %v2996 = vpop.f32.mrf.mxu0
    %v2997 = vadd.f32 0.0, %v2996
    %2998 = vdwg.mxu0
    %2999 = vmatpush.msra.mxu0 0.0
    %3000 = vmatpush.msra.mxu0 0.0
    %3001 = vmatpush.msra.mxu0 0.0
    %3002 = vmatpush.msra.mxu0 0.0
    %3003 = vmatpush.msra.mxu0 0.0
    %3004 = vmatpush.msra.mxu0 0.0
    %3005 = vmatpush.msra.mxu0 0.0
    %3006 = vmatpush.msra.mxu0 0.0
    %3007 = vmatpush.msra.mxu0 0.0
    %3008 = vmatpush.msra.mxu0 0.0
    %3009 = vmatpush.msra.mxu0 0.0
    %3010 = vmatpush.msra.mxu0 0.0
    %3011 = vmatpush.msra.mxu0 %v2942
    %3012 = vmatpush.msra.mxu0 %v2920
    %3013 = vmatpush.msra.mxu0 %v2916
    %3014 = vmatpush.msra.mxu0 %v2912
    %3015 = vmatmul.f32.gmra.mxu0 %v2927
    %v3016 = vpop.f32.mrf.mxu0
    %v3017 = vadd.f32 0.0, %v3016
    %3018 = vmatmul.f32.gmra.mxu0 %v2930
    %v3019 = vpop.f32.mrf.mxu0
    %v3020 = vadd.f32 0.0, %v3019
    %3021 = vmatmul.f32.gmra.mxu0 %v2933
    %v3022 = vpop.f32.mrf.mxu0
    %v3023 = vadd.f32 0.0, %v3022
    %3024 = vdwg.mxu0
    %3025 = vmatpush.msra.mxu0 0.0
    %3026 = vmatpush.msra.mxu0 0.0
    %3027 = vmatpush.msra.mxu0 0.0
    %3028 = vmatpush.msra.mxu0 0.0
    %3029 = vmatpush.msra.mxu0 0.0
    %3030 = vmatpush.msra.mxu0 0.0
    %3031 = vmatpush.msra.mxu0 0.0
    %3032 = vmatpush.msra.mxu0 0.0
    %3033 = vmatpush.msra.mxu0 0.0
    %3034 = vmatpush.msra.mxu0 0.0
    %3035 = vmatpush.msra.mxu0 0.0
    %3036 = vmatpush.msra.mxu0 0.0
    %3037 = vmatpush.msra.mxu0 %v2945
    %3038 = vmatpush.msra.mxu0 %v2921
    %3039 = vmatpush.msra.mxu0 %v2917
    %3040 = vmatpush.msra.mxu0 %v2913
    %3041 = vmatmul.f32.gmra.mxu0 %v2927
    %v3042 = vpop.f32.mrf.mxu0
    %v3043 = vadd.f32 0.0, %v3042
    %3044 = vmatmul.f32.gmra.mxu0 %v2930
    %v3045 = vpop.f32.mrf.mxu0
    %v3046 = vadd.f32 0.0, %v3045
    %3047 = vmatmul.f32.gmra.mxu0 %v2933
    %v3048 = vpop.f32.mrf.mxu0
    %v3049 = vadd.f32 0.0, %v3048
    %3050 = vdwg.mxu0
    %v3051 = vadd.f32 %v2821, %v2965
    %v3052 = vadd.f32 %v2847, %v2991
    %v3053 = vadd.f32 %v2873, %v3017
    %v3054 = vadd.f32 %v2899, %v3043
    %v3055 = vadd.f32 %v2824, %v2968
    %v3056 = vadd.f32 %v2850, %v2994
    %v3057 = vadd.f32 %v2876, %v3020
    %v3058 = vadd.f32 %v2902, %v3046
    %v3059 = vadd.f32 %v2827, %v2971
    %v3060 = vadd.f32 %v2853, %v2997
    %v3061 = vadd.f32 %v2879, %v3023
    %v3062 = vadd.f32 %v2905, %v3049
    %v3063 = vld [vmem:[%s2618 + $0x3] sm:$0xff]
    %v3064 = vld [vmem:[%s2618 + $0xb] sm:$0xff]
    %v3065 = vld [vmem:[%s2618 + $0x13] sm:$0xff]
    %v3066 = vld [vmem:[%s601] sm:$0xff]
    %v3067 = vld [vmem:[%s601 + $0x8] sm:$0xff]
    %v3068 = vld [vmem:[%s601 + $0x10] sm:$0xff]
    %v3069 = vld [vmem:[%s601 + $0x18] sm:$0xff]
    %v3070 = vld [vmem:[%s601 + $0x20] sm:$0xff]
    %v3071 = vld [vmem:[%s601 + $0x28] sm:$0xff]
    %v3072 = vld [vmem:[%s601 + $0x30] sm:$0xff]
    %v3073 = vld [vmem:[%s601 + $0x38] sm:$0xff]
    %v3074 = vld [vmem:[%s601 + $0x40] sm:$0xff]
    %v3075 = vld [vmem:[%s601 + $0x48] sm:$0xff]
    %v3076 = vld [vmem:[%s601 + $0x50] sm:$0xff]
    %v3077 = vld [vmem:[%s601 + $0x58] sm:$0xff]
    %v3078 = vld [vmem:[%s601 + $0x60] sm:$0xf]
    %v3079 = vld [vmem:[%s601 + $0x68] sm:$0xf]
    %v3080 = vld [vmem:[%s601 + $0x70] sm:$0xf]
    %v3081 = vld [vmem:[%s601 + $0x78] sm:$0xf]
    %v3083 = vsel %vm189, %v3063, 0
    %v3086 = vsel %vm189, %v3064, 0
    %v3089 = vsel %vm189, %v3065, 0
    %v3092 = vsel %vm199, %v3078, 0
    %v3095 = vsel %vm199, %v3079, 0
    %v3098 = vsel %vm199, %v3080, 0
    %v3101 = vsel %vm199, %v3081, 0
    %3103 = vmatpush.msra.mxu0 0.0
    %3104 = vmatpush.msra.mxu0 0.0
    %3105 = vmatpush.msra.mxu0 0.0
    %3106 = vmatpush.msra.mxu0 0.0
    %3107 = vmatpush.msra.mxu0 0.0
    %3108 = vmatpush.msra.mxu0 0.0
    %3109 = vmatpush.msra.mxu0 0.0
    %3110 = vmatpush.msra.mxu0 0.0
    %3111 = vmatpush.msra.mxu0 0.0
    %3112 = vmatpush.msra.mxu0 0.0
    %3113 = vmatpush.msra.mxu0 0.0
    %3114 = vmatpush.msra.mxu0 0.0
    %3115 = vmatpush.msra.mxu0 %v3092
    %3116 = vmatpush.msra.mxu0 %v3074
    %3117 = vmatpush.msra.mxu0 %v3070
    %3118 = vmatpush.msra.mxu0 %v3066
    %3119 = vmatmul.f32.gmra.mxu0 %v3083
    %v3120 = vpop.f32.mrf.mxu0
    %v3121 = vadd.f32 0.0, %v3120
    %3122 = vmatmul.f32.gmra.mxu0 %v3086
    %v3123 = vpop.f32.mrf.mxu0
    %v3124 = vadd.f32 0.0, %v3123
    %3125 = vmatmul.f32.gmra.mxu0 %v3089
    %v3126 = vpop.f32.mrf.mxu0
    %v3127 = vadd.f32 0.0, %v3126
    %3128 = vdwg.mxu0
    %3129 = vmatpush.msra.mxu0 0.0
    %3130 = vmatpush.msra.mxu0 0.0
    %3131 = vmatpush.msra.mxu0 0.0
    %3132 = vmatpush.msra.mxu0 0.0
    %3133 = vmatpush.msra.mxu0 0.0
    %3134 = vmatpush.msra.mxu0 0.0
    %3135 = vmatpush.msra.mxu0 0.0
    %3136 = vmatpush.msra.mxu0 0.0
    %3137 = vmatpush.msra.mxu0 0.0
    %3138 = vmatpush.msra.mxu0 0.0
    %3139 = vmatpush.msra.mxu0 0.0
    %3140 = vmatpush.msra.mxu0 0.0
    %3141 = vmatpush.msra.mxu0 %v3095
    %3142 = vmatpush.msra.mxu0 %v3075
    %3143 = vmatpush.msra.mxu0 %v3071
    %3144 = vmatpush.msra.mxu0 %v3067
    %3145 = vmatmul.f32.gmra.mxu0 %v3083
    %v3146 = vpop.f32.mrf.mxu0
    %v3147 = vadd.f32 0.0, %v3146
    %3148 = vmatmul.f32.gmra.mxu0 %v3086
    %v3149 = vpop.f32.mrf.mxu0
    %v3150 = vadd.f32 0.0, %v3149
    %3151 = vmatmul.f32.gmra.mxu0 %v3089
    %v3152 = vpop.f32.mrf.mxu0
    %v3153 = vadd.f32 0.0, %v3152
    %3154 = vdwg.mxu0
    %3155 = vmatpush.msra.mxu0 0.0
    %3156 = vmatpush.msra.mxu0 0.0
    %3157 = vmatpush.msra.mxu0 0.0
    %3158 = vmatpush.msra.mxu0 0.0
    %3159 = vmatpush.msra.mxu0 0.0
    %3160 = vmatpush.msra.mxu0 0.0
    %3161 = vmatpush.msra.mxu0 0.0
    %3162 = vmatpush.msra.mxu0 0.0
    %3163 = vmatpush.msra.mxu0 0.0
    %3164 = vmatpush.msra.mxu0 0.0
    %3165 = vmatpush.msra.mxu0 0.0
    %3166 = vmatpush.msra.mxu0 0.0
    %3167 = vmatpush.msra.mxu0 %v3098
    %3168 = vmatpush.msra.mxu0 %v3076
    %3169 = vmatpush.msra.mxu0 %v3072
    %3170 = vmatpush.msra.mxu0 %v3068
    %3171 = vmatmul.f32.gmra.mxu0 %v3083
    %v3172 = vpop.f32.mrf.mxu0
    %v3173 = vadd.f32 0.0, %v3172
    %3174 = vmatmul.f32.gmra.mxu0 %v3086
    %v3175 = vpop.f32.mrf.mxu0
    %v3176 = vadd.f32 0.0, %v3175
    %3177 = vmatmul.f32.gmra.mxu0 %v3089
    %v3178 = vpop.f32.mrf.mxu0
    %v3179 = vadd.f32 0.0, %v3178
    %3180 = vdwg.mxu0
    %3181 = vmatpush.msra.mxu0 0.0
    %3182 = vmatpush.msra.mxu0 0.0
    %3183 = vmatpush.msra.mxu0 0.0
    %3184 = vmatpush.msra.mxu0 0.0
    %3185 = vmatpush.msra.mxu0 0.0
    %3186 = vmatpush.msra.mxu0 0.0
    %3187 = vmatpush.msra.mxu0 0.0
    %3188 = vmatpush.msra.mxu0 0.0
    %3189 = vmatpush.msra.mxu0 0.0
    %3190 = vmatpush.msra.mxu0 0.0
    %3191 = vmatpush.msra.mxu0 0.0
    %3192 = vmatpush.msra.mxu0 0.0
    %3193 = vmatpush.msra.mxu0 %v3101
    %3194 = vmatpush.msra.mxu0 %v3077
    %3195 = vmatpush.msra.mxu0 %v3073
    %3196 = vmatpush.msra.mxu0 %v3069
    %3197 = vmatmul.f32.gmra.mxu0 %v3083
    %v3198 = vpop.f32.mrf.mxu0
    %v3199 = vadd.f32 0.0, %v3198
    %3200 = vmatmul.f32.gmra.mxu0 %v3086
    %v3201 = vpop.f32.mrf.mxu0
    %v3202 = vadd.f32 0.0, %v3201
    %3203 = vmatmul.f32.gmra.mxu0 %v3089
    %v3204 = vpop.f32.mrf.mxu0
    %v3205 = vadd.f32 0.0, %v3204
    %3206 = vdwg.mxu0
    %v3207 = vadd.f32 %v3051, %v3121
    %v3208 = vadd.f32 %v3052, %v3147
    %v3209 = vadd.f32 %v3053, %v3173
    %v3210 = vadd.f32 %v3054, %v3199
    %v3211 = vadd.f32 %v3055, %v3124
    %v3212 = vadd.f32 %v3056, %v3150
    %v3213 = vadd.f32 %v3057, %v3176
    %v3214 = vadd.f32 %v3058, %v3202
    %v3215 = vadd.f32 %v3059, %v3127
    %v3216 = vadd.f32 %v3060, %v3153
    %v3217 = vadd.f32 %v3061, %v3179
    %v3218 = vadd.f32 %v3062, %v3205
    %v3219 = vld [vmem:[%s2618 + $0x4] sm:$0xff]
    %v3220 = vld [vmem:[%s2618 + $0xc] sm:$0xff]
    %v3221 = vld [vmem:[%s2618 + $0x14] sm:$0xff]
    %v3222 = vld [vmem:[%s758] sm:$0xff]
    %v3223 = vld [vmem:[%s758 + $0x8] sm:$0xff]
    %v3224 = vld [vmem:[%s758 + $0x10] sm:$0xff]
    %v3225 = vld [vmem:[%s758 + $0x18] sm:$0xff]
    %v3226 = vld [vmem:[%s758 + $0x20] sm:$0xff]
    %v3227 = vld [vmem:[%s758 + $0x28] sm:$0xff]
    %v3228 = vld [vmem:[%s758 + $0x30] sm:$0xff]
    %v3229 = vld [vmem:[%s758 + $0x38] sm:$0xff]
    %v3230 = vld [vmem:[%s758 + $0x40] sm:$0xff]
    %v3231 = vld [vmem:[%s758 + $0x48] sm:$0xff]
    %v3232 = vld [vmem:[%s758 + $0x50] sm:$0xff]
    %v3233 = vld [vmem:[%s758 + $0x58] sm:$0xff]
    %v3234 = vld [vmem:[%s758 + $0x60] sm:$0xf]
    %v3235 = vld [vmem:[%s758 + $0x68] sm:$0xf]
    %v3236 = vld [vmem:[%s758 + $0x70] sm:$0xf]
    %v3237 = vld [vmem:[%s758 + $0x78] sm:$0xf]
    %v3239 = vsel %vm189, %v3219, 0
    %v3242 = vsel %vm189, %v3220, 0
    %v3245 = vsel %vm189, %v3221, 0
    %v3248 = vsel %vm199, %v3234, 0
    %v3251 = vsel %vm199, %v3235, 0
    %v3254 = vsel %vm199, %v3236, 0
    %v3257 = vsel %vm199, %v3237, 0
    %3259 = vmatpush.msra.mxu0 0.0
    %3260 = vmatpush.msra.mxu0 0.0
    %3261 = vmatpush.msra.mxu0 0.0
    %3262 = vmatpush.msra.mxu0 0.0
    %3263 = vmatpush.msra.mxu0 0.0
    %3264 = vmatpush.msra.mxu0 0.0
    %3265 = vmatpush.msra.mxu0 0.0
    %3266 = vmatpush.msra.mxu0 0.0
    %3267 = vmatpush.msra.mxu0 0.0
    %3268 = vmatpush.msra.mxu0 0.0
    %3269 = vmatpush.msra.mxu0 0.0
    %3270 = vmatpush.msra.mxu0 0.0
    %3271 = vmatpush.msra.mxu0 %v3248
    %3272 = vmatpush.msra.mxu0 %v3230
    %3273 = vmatpush.msra.mxu0 %v3226
    %3274 = vmatpush.msra.mxu0 %v3222
    %3275 = vmatmul.f32.gmra.mxu0 %v3239
    %v3276 = vpop.f32.mrf.mxu0
    %v3277 = vadd.f32 0.0, %v3276
    %3278 = vmatmul.f32.gmra.mxu0 %v3242
    %v3279 = vpop.f32.mrf.mxu0
    %v3280 = vadd.f32 0.0, %v3279
    %3281 = vmatmul.f32.gmra.mxu0 %v3245
    %v3282 = vpop.f32.mrf.mxu0
    %v3283 = vadd.f32 0.0, %v3282
    %3284 = vdwg.mxu0
    %3285 = vmatpush.msra.mxu0 0.0
    %3286 = vmatpush.msra.mxu0 0.0
    %3287 = vmatpush.msra.mxu0 0.0
    %3288 = vmatpush.msra.mxu0 0.0
    %3289 = vmatpush.msra.mxu0 0.0
    %3290 = vmatpush.msra.mxu0 0.0
    %3291 = vmatpush.msra.mxu0 0.0
    %3292 = vmatpush.msra.mxu0 0.0
    %3293 = vmatpush.msra.mxu0 0.0
    %3294 = vmatpush.msra.mxu0 0.0
    %3295 = vmatpush.msra.mxu0 0.0
    %3296 = vmatpush.msra.mxu0 0.0
    %3297 = vmatpush.msra.mxu0 %v3251
    %3298 = vmatpush.msra.mxu0 %v3231
    %3299 = vmatpush.msra.mxu0 %v3227
    %3300 = vmatpush.msra.mxu0 %v3223
    %3301 = vmatmul.f32.gmra.mxu0 %v3239
    %v3302 = vpop.f32.mrf.mxu0
    %v3303 = vadd.f32 0.0, %v3302
    %3304 = vmatmul.f32.gmra.mxu0 %v3242
    %v3305 = vpop.f32.mrf.mxu0
    %v3306 = vadd.f32 0.0, %v3305
    %3307 = vmatmul.f32.gmra.mxu0 %v3245
    %v3308 = vpop.f32.mrf.mxu0
    %v3309 = vadd.f32 0.0, %v3308
    %3310 = vdwg.mxu0
    %3311 = vmatpush.msra.mxu0 0.0
    %3312 = vmatpush.msra.mxu0 0.0
    %3313 = vmatpush.msra.mxu0 0.0
    %3314 = vmatpush.msra.mxu0 0.0
    %3315 = vmatpush.msra.mxu0 0.0
    %3316 = vmatpush.msra.mxu0 0.0
    %3317 = vmatpush.msra.mxu0 0.0
    %3318 = vmatpush.msra.mxu0 0.0
    %3319 = vmatpush.msra.mxu0 0.0
    %3320 = vmatpush.msra.mxu0 0.0
    %3321 = vmatpush.msra.mxu0 0.0
    %3322 = vmatpush.msra.mxu0 0.0
    %3323 = vmatpush.msra.mxu0 %v3254
    %3324 = vmatpush.msra.mxu0 %v3232
    %3325 = vmatpush.msra.mxu0 %v3228
    %3326 = vmatpush.msra.mxu0 %v3224
    %3327 = vmatmul.f32.gmra.mxu0 %v3239
    %v3328 = vpop.f32.mrf.mxu0
    %v3329 = vadd.f32 0.0, %v3328
    %3330 = vmatmul.f32.gmra.mxu0 %v3242
    %v3331 = vpop.f32.mrf.mxu0
    %v3332 = vadd.f32 0.0, %v3331
    %3333 = vmatmul.f32.gmra.mxu0 %v3245
    %v3334 = vpop.f32.mrf.mxu0
    %v3335 = vadd.f32 0.0, %v3334
    %3336 = vdwg.mxu0
    %3337 = vmatpush.msra.mxu0 0.0
    %3338 = vmatpush.msra.mxu0 0.0
    %3339 = vmatpush.msra.mxu0 0.0
    %3340 = vmatpush.msra.mxu0 0.0
    %3341 = vmatpush.msra.mxu0 0.0
    %3342 = vmatpush.msra.mxu0 0.0
    %3343 = vmatpush.msra.mxu0 0.0
    %3344 = vmatpush.msra.mxu0 0.0
    %3345 = vmatpush.msra.mxu0 0.0
    %3346 = vmatpush.msra.mxu0 0.0
    %3347 = vmatpush.msra.mxu0 0.0
    %3348 = vmatpush.msra.mxu0 0.0
    %3349 = vmatpush.msra.mxu0 %v3257
    %3350 = vmatpush.msra.mxu0 %v3233
    %3351 = vmatpush.msra.mxu0 %v3229
    %3352 = vmatpush.msra.mxu0 %v3225
    %3353 = vmatmul.f32.gmra.mxu0 %v3239
    %v3354 = vpop.f32.mrf.mxu0
    %v3355 = vadd.f32 0.0, %v3354
    %3356 = vmatmul.f32.gmra.mxu0 %v3242
    %v3357 = vpop.f32.mrf.mxu0
    %v3358 = vadd.f32 0.0, %v3357
    %3359 = vmatmul.f32.gmra.mxu0 %v3245
    %v3360 = vpop.f32.mrf.mxu0
    %v3361 = vadd.f32 0.0, %v3360
    %3362 = vdwg.mxu0
    %v3363 = vadd.f32 %v3207, %v3277
    %v3364 = vadd.f32 %v3208, %v3303
    %v3365 = vadd.f32 %v3209, %v3329
    %v3366 = vadd.f32 %v3210, %v3355
    %v3367 = vadd.f32 %v3211, %v3280
    %v3368 = vadd.f32 %v3212, %v3306
    %v3369 = vadd.f32 %v3213, %v3332
    %v3370 = vadd.f32 %v3214, %v3358
    %v3371 = vadd.f32 %v3215, %v3283
    %v3372 = vadd.f32 %v3216, %v3309
    %v3373 = vadd.f32 %v3217, %v3335
    %v3374 = vadd.f32 %v3218, %v3361
    %v3375 = vld [vmem:[#allocation12] sm:$0x3]
    %v3377 = vperm.slane %v3375, 0
    %v3378 = vperm.slane %v3375, 1
    %v3381 = vadd.f32 %v3363, %v3377
    %v3382 = vadd.f32 %v3364, %v3378
    %v3383 = vadd.f32 %v3367, %v3377
    %v3384 = vadd.f32 %v3368, %v3378
    %v3385 = vadd.f32 %v3371, %v3377
    %v3386 = vadd.f32 %v3372, %v3378
    %v3387 = vmax.f32 %v3381, 0.0
    %v3388 = vmax.f32 %v3382, 0.0
    %v3389 = vmax.f32 %v3383, 0.0
    %v3390 = vmax.f32 %v3384, 0.0
    %v3391 = vmax.f32 %v3385, 0.0
    %v3392 = vmax.f32 %v3386, 0.0
    %v3393 = vadd.f32 %v3365, %v3377
    %v3394 = vadd.f32 %v3366, %v3378
    %v3395 = vadd.f32 %v3369, %v3377
    %v3396 = vadd.f32 %v3370, %v3378
    %v3397 = vadd.f32 %v3373, %v3377
    %v3398 = vadd.f32 %v3374, %v3378
    %v3399 = vmax.f32 %v3393, 0.0
    %v3400 = vmax.f32 %v3394, 0.0
    %v3401 = vmax.f32 %v3395, 0.0
    %v3402 = vmax.f32 %v3396, 0.0
    %v3403 = vmax.f32 %v3397, 0.0
    %v3404 = vmax.f32 %v3398, 0.0
    %v3405 = vmax.f32 %v3387, %v3399
    %v3406 = vmax.f32 %v3388, %v3400
    %v3407 = vmax.f32 %v3389, %v3401
    %v3408 = vmax.f32 %v3390, %v3402
    %v3409 = vmax.f32 %v3391, %v3403
    %v3410 = vmax.f32 %v3392, %v3404
    %3411 = vst [vmem:[#allocation2] sm:$0xff] %v3405
    %3412 = vst [vmem:[#allocation2 + $0x8] sm:$0xff] %v3406
    %3413 = vst [vmem:[#allocation2 + $0x10] sm:$0xff] %v3407
    %3414 = vst [vmem:[#allocation2 + $0x18] sm:$0xff] %v3408
    %3415 = vst [vmem:[#allocation2 + $0x20] sm:$0xff] %v3409
    %3416 = vst [vmem:[#allocation2 + $0x28] sm:$0xff] %v3410
    %v3417 = vld [vmem:[#allocation2] ss:$8 sm:$0x3]
    %v3418 = vld [vmem:[%s955] ss:$8 sm:$0x3]
    %v3419 = vmax.f32 %v3417, %v3418
    %3420 = vst.msk [vmem:[#allocation3] ss:$8 sm:$0x3] %vm961, %v3419
    %3421 = vst.msk [vmem:[#allocation3] ss:$8 sm:$0x0] %vm961, %v3419
    %v3422 = vld [vmem:[%s964] ss:$8 sm:$0x3]
    %v3423 = vld [vmem:[%s966] ss:$8 sm:$0x3]
    %v3424 = vmax.f32 %v3422, %v3423
    %3425 = vst.msk [vmem:[%s969] ss:$8 sm:$0x3] %vm961, %v3424
    %3426 = vst.msk [vmem:[%s969] ss:$8 sm:$0x0] %vm961, %v3424
    %v3427 = vld [vmem:[%s972] ss:$8 sm:$0x3]
    %v3428 = vld [vmem:[%s974] ss:$8 sm:$0x3]
    %v3429 = vmax.f32 %v3427, %v3428
    %3430 = vst.msk [vmem:[%s977] ss:$8 sm:$0x3] %vm961, %v3429
    %3431 = vst.msk [vmem:[%s977] ss:$8 sm:$0x0] %vm961, %v3429
    %v3432 = vld [vmem:[%s980] ss:$8 sm:$0x3]
    %v3433 = vld [vmem:[%s982] ss:$8 sm:$0x3]
    %v3434 = vmax.f32 %v3432, %v3433
    %3435 = vst.msk [vmem:[%s985] ss:$8 sm:$0x3] %vm961, %v3434
    %3436 = vst.msk [vmem:[%s985] ss:$8 sm:$0x0] %vm961, %v3434
    %v3437 = vld [vmem:[%s988] ss:$8 sm:$0x3]
    %v3438 = vld [vmem:[%s990] ss:$8 sm:$0x3]
    %v3439 = vmax.f32 %v3437, %v3438
    %3440 = vst.msk [vmem:[%s993] ss:$8 sm:$0x3] %vm961, %v3439
    %3441 = vst.msk [vmem:[%s993] ss:$8 sm:$0x0] %vm961, %v3439
    %v3442 = vld [vmem:[%s996] ss:$8 sm:$0x3]
    %v3443 = vld [vmem:[%s998] ss:$8 sm:$0x3]
    %v3444 = vmax.f32 %v3442, %v3443
    %3445 = vst.msk [vmem:[%s1001] ss:$8 sm:$0x3] %vm961, %v3444
    %3446 = vst.msk [vmem:[%s1001] ss:$8 sm:$0x0] %vm961, %v3444
    %v3447 = vld [vmem:[%s1004] ss:$8 sm:$0x3]
    %v3448 = vld [vmem:[%s1006] ss:$8 sm:$0x3]
    %v3449 = vmax.f32 %v3447, %v3448
    %3450 = vst.msk [vmem:[%s1009] ss:$8 sm:$0x3] %vm961, %v3449
    %3451 = vst.msk [vmem:[%s1009] ss:$8 sm:$0x0] %vm961, %v3449
    %v3452 = vld [vmem:[%s1012] ss:$8 sm:$0x3]
    %v3453 = vld [vmem:[%s1014] ss:$8 sm:$0x3]
    %v3454 = vmax.f32 %v3452, %v3453
    %3455 = vst.msk [vmem:[%s1017] ss:$8 sm:$0x3] %vm961, %v3454
    %3456 = vst.msk [vmem:[%s1017] ss:$8 sm:$0x0] %vm961, %v3454
    %v3457 = vld [vmem:[%s1020] ss:$8 sm:$0x3]
    %v3458 = vld [vmem:[%s1022] ss:$8 sm:$0x3]
    %v3459 = vmax.f32 %v3457, %v3458
    %3460 = vst.msk [vmem:[%s1025] ss:$8 sm:$0x3] %vm961, %v3459
    %3461 = vst.msk [vmem:[%s1025] ss:$8 sm:$0x0] %vm961, %v3459
    %v3462 = vld [vmem:[%s1028] ss:$8 sm:$0x3]
    %v3463 = vld [vmem:[%s1030] ss:$8 sm:$0x3]
    %v3464 = vmax.f32 %v3462, %v3463
    %3465 = vst.msk [vmem:[%s1033] ss:$8 sm:$0x3] %vm961, %v3464
    %3466 = vst.msk [vmem:[%s1033] ss:$8 sm:$0x0] %vm961, %v3464
    %v3467 = vld [vmem:[%s1036] ss:$8 sm:$0x3]
    %v3468 = vld [vmem:[%s1038] ss:$8 sm:$0x3]
    %v3469 = vmax.f32 %v3467, %v3468
    %3470 = vst.msk [vmem:[%s1041] ss:$8 sm:$0x3] %vm961, %v3469
    %3471 = vst.msk [vmem:[%s1041] ss:$8 sm:$0x0] %vm961, %v3469
    %v3472 = vld [vmem:[%s1044] ss:$8 sm:$0x3]
    %v3473 = vld [vmem:[%s1046] ss:$8 sm:$0x3]
    %v3474 = vmax.f32 %v3472, %v3473
    %3475 = vst.msk [vmem:[%s1049] ss:$8 sm:$0x3] %vm961, %v3474
    %3476 = vst.msk [vmem:[%s1049] ss:$8 sm:$0x0] %vm961, %v3474
    %v3477 = vld [vmem:[#allocation3] sm:$0xff]
    %v3478 = vld [vmem:[#allocation3 + $0x8] sm:$0xff]
    %v3479 = vld [vmem:[#allocation14] sm:$0xff]
    %v3480 = vld [vmem:[#allocation14 + $0x8] sm:$0xff]
    %v3481 = vld [vmem:[#allocation14 + $0x10] sm:$0xff]
    %v3482 = vld [vmem:[#allocation14 + $0x18] sm:$0xff]
    %v3483 = vld [vmem:[#allocation14 + $0x20] sm:$0xff]
    %v3484 = vld [vmem:[#allocation14 + $0x28] sm:$0xff]
    %v3485 = vld [vmem:[#allocation14 + $0x30] sm:$0xff]
    %v3486 = vld [vmem:[#allocation14 + $0x38] sm:$0xff]
    %v3487 = vld [vmem:[#allocation14 + $0x40] sm:$0xff]
    %v3488 = vld [vmem:[#allocation14 + $0x48] sm:$0xff]
    %v3489 = vld [vmem:[#allocation14 + $0x50] sm:$0xff]
    %v3490 = vld [vmem:[#allocation14 + $0x58] sm:$0xff]
    %v3491 = vld [vmem:[#allocation14 + $0x60] sm:$0xff]
    %v3492 = vld [vmem:[#allocation14 + $0x68] sm:$0xff]
    %v3493 = vld [vmem:[#allocation14 + $0x70] sm:$0xff]
    %v3494 = vld [vmem:[#allocation14 + $0x78] sm:$0xff]
    %v3495 = vld [vmem:[#allocation14 + $0x80] sm:$0xff]
    %v3496 = vld [vmem:[#allocation14 + $0x88] sm:$0xff]
    %v3497 = vld [vmem:[#allocation14 + $0x90] sm:$0xff]
    %v3498 = vld [vmem:[#allocation14 + $0x98] sm:$0xff]
    %v3499 = vld [vmem:[#allocation14 + $0xa0] sm:$0xff]
    %v3500 = vld [vmem:[#allocation14 + $0xa8] sm:$0xff]
    %v3501 = vld [vmem:[#allocation14 + $0xb0] sm:$0xff]
    %v3502 = vld [vmem:[#allocation14 + $0xb8] sm:$0xff]
    %v3503 = vld [vmem:[#allocation14 + $0xc0] sm:$0xff]
    %v3504 = vld [vmem:[#allocation14 + $0xc8] sm:$0xff]
    %v3505 = vld [vmem:[#allocation14 + $0xd0] sm:$0xff]
    %v3506 = vld [vmem:[#allocation14 + $0xd8] sm:$0xff]
    %v3507 = vld [vmem:[#allocation14 + $0xe0] sm:$0xff]
    %v3508 = vld [vmem:[#allocation14 + $0xe8] sm:$0xff]
    %v3509 = vld [vmem:[#allocation14 + $0xf0] sm:$0xff]
    %v3510 = vld [vmem:[#allocation14 + $0xf8] sm:$0xff]
    %v3511 = vld [vmem:[#allocation14 + $0x100] sm:$0xff]
    %v3512 = vld [vmem:[#allocation14 + $0x108] sm:$0xff]
    %v3513 = vld [vmem:[#allocation14 + $0x110] sm:$0xff]
    %v3514 = vld [vmem:[#allocation14 + $0x118] sm:$0xff]
    %v3515 = vld [vmem:[#allocation14 + $0x120] sm:$0xff]
    %v3516 = vld [vmem:[#allocation14 + $0x128] sm:$0xff]
    %v3517 = vld [vmem:[#allocation14 + $0x130] sm:$0xff]
    %v3518 = vld [vmem:[#allocation14 + $0x138] sm:$0xff]
    %v3519 = vld [vmem:[#allocation14 + $0x140] sm:$0xff]
    %v3520 = vld [vmem:[#allocation14 + $0x148] sm:$0xff]
    %v3521 = vld [vmem:[#allocation14 + $0x150] sm:$0xff]
    %v3522 = vld [vmem:[#allocation14 + $0x158] sm:$0xff]
    %v3523 = vld [vmem:[#allocation14 + $0x160] sm:$0xff]
    %v3524 = vld [vmem:[#allocation14 + $0x168] sm:$0xff]
    %v3525 = vld [vmem:[#allocation14 + $0x170] sm:$0xff]
    %v3526 = vld [vmem:[#allocation14 + $0x178] sm:$0xff]
    %v3527 = vld [vmem:[#allocation14 + $0x180] sm:$0xff]
    %v3528 = vld [vmem:[#allocation14 + $0x188] sm:$0xff]
    %v3529 = vld [vmem:[#allocation14 + $0x190] sm:$0xff]
    %v3530 = vld [vmem:[#allocation14 + $0x198] sm:$0xff]
    %v3531 = vld [vmem:[#allocation14 + $0x1a0] sm:$0xff]
    %v3532 = vld [vmem:[#allocation14 + $0x1a8] sm:$0xff]
    %v3533 = vld [vmem:[#allocation14 + $0x1b0] sm:$0xff]
    %v3534 = vld [vmem:[#allocation14 + $0x1b8] sm:$0xff]
    %v3535 = vld [vmem:[#allocation14 + $0x1c0] sm:$0xff]
    %v3536 = vld [vmem:[#allocation14 + $0x1c8] sm:$0xff]
    %v3537 = vld [vmem:[#allocation14 + $0x1d0] sm:$0xff]
    %v3538 = vld [vmem:[#allocation14 + $0x1d8] sm:$0xff]
    %v3539 = vld [vmem:[#allocation14 + $0x1e0] sm:$0xff]
    %v3540 = vld [vmem:[#allocation14 + $0x1e8] sm:$0xff]
    %v3541 = vld [vmem:[#allocation14 + $0x1f0] sm:$0xff]
    %v3542 = vld [vmem:[#allocation14 + $0x1f8] sm:$0xff]
    %v3543 = vld [vmem:[#allocation14 + $0x200] sm:$0xff]
    %v3544 = vld [vmem:[#allocation14 + $0x208] sm:$0xff]
    %v3545 = vld [vmem:[#allocation14 + $0x210] sm:$0xff]
    %v3546 = vld [vmem:[#allocation14 + $0x218] sm:$0xff]
    %v3547 = vld [vmem:[#allocation14 + $0x220] sm:$0xff]
    %v3548 = vld [vmem:[#allocation14 + $0x228] sm:$0xff]
    %v3549 = vld [vmem:[#allocation14 + $0x230] sm:$0xff]
    %v3550 = vld [vmem:[#allocation14 + $0x238] sm:$0xff]
    %v3551 = vld [vmem:[#allocation14 + $0x240] sm:$0xff]
    %v3552 = vld [vmem:[#allocation14 + $0x248] sm:$0xff]
    %v3553 = vld [vmem:[#allocation14 + $0x250] sm:$0xff]
    %v3554 = vld [vmem:[#allocation14 + $0x258] sm:$0xff]
    %v3555 = vld [vmem:[#allocation14 + $0x260] sm:$0xff]
    %v3556 = vld [vmem:[#allocation14 + $0x268] sm:$0xff]
    %v3557 = vld [vmem:[#allocation14 + $0x270] sm:$0xff]
    %v3558 = vld [vmem:[#allocation14 + $0x278] sm:$0xff]
    %v3559 = vld [vmem:[#allocation14 + $0x280] sm:$0xff]
    %v3560 = vld [vmem:[#allocation14 + $0x288] sm:$0xff]
    %v3561 = vld [vmem:[#allocation14 + $0x290] sm:$0xff]
    %v3562 = vld [vmem:[#allocation14 + $0x298] sm:$0xff]
    %v3563 = vld [vmem:[#allocation14 + $0x2a0] sm:$0xff]
    %v3564 = vld [vmem:[#allocation14 + $0x2a8] sm:$0xff]
    %v3565 = vld [vmem:[#allocation14 + $0x2b0] sm:$0xff]
    %v3566 = vld [vmem:[#allocation14 + $0x2b8] sm:$0xff]
    %v3567 = vld [vmem:[#allocation14 + $0x2c0] sm:$0xff]
    %v3568 = vld [vmem:[#allocation14 + $0x2c8] sm:$0xff]
    %v3569 = vld [vmem:[#allocation14 + $0x2d0] sm:$0xff]
    %v3570 = vld [vmem:[#allocation14 + $0x2d8] sm:$0xff]
    %v3571 = vld [vmem:[#allocation14 + $0x2e0] sm:$0xff]
    %v3572 = vld [vmem:[#allocation14 + $0x2e8] sm:$0xff]
    %v3573 = vld [vmem:[#allocation14 + $0x2f0] sm:$0xff]
    %v3574 = vld [vmem:[#allocation14 + $0x2f8] sm:$0xff]
    %v3575 = vld [vmem:[#allocation14 + $0x300] sm:$0xff]
    %v3576 = vld [vmem:[#allocation14 + $0x308] sm:$0xff]
    %v3577 = vld [vmem:[#allocation14 + $0x310] sm:$0xff]
    %v3578 = vld [vmem:[#allocation14 + $0x318] sm:$0xff]
    %v3579 = vld [vmem:[#allocation14 + $0x320] sm:$0xff]
    %v3580 = vld [vmem:[#allocation14 + $0x328] sm:$0xff]
    %v3581 = vld [vmem:[#allocation14 + $0x330] sm:$0xff]
    %v3582 = vld [vmem:[#allocation14 + $0x338] sm:$0xff]
    %v3583 = vld [vmem:[#allocation14 + $0x340] sm:$0xff]
    %v3584 = vld [vmem:[#allocation14 + $0x348] sm:$0xff]
    %v3585 = vld [vmem:[#allocation14 + $0x350] sm:$0xff]
    %v3586 = vld [vmem:[#allocation14 + $0x358] sm:$0xff]
    %v3587 = vld [vmem:[#allocation14 + $0x360] sm:$0xff]
    %v3588 = vld [vmem:[#allocation14 + $0x368] sm:$0xff]
    %v3589 = vld [vmem:[#allocation14 + $0x370] sm:$0xff]
    %v3590 = vld [vmem:[#allocation14 + $0x378] sm:$0xff]
    %v3591 = vld [vmem:[#allocation14 + $0x380] sm:$0xff]
    %v3592 = vld [vmem:[#allocation14 + $0x388] sm:$0xff]
    %v3593 = vld [vmem:[#allocation14 + $0x390] sm:$0xff]
    %v3594 = vld [vmem:[#allocation14 + $0x398] sm:$0xff]
    %v3595 = vld [vmem:[#allocation14 + $0x3a0] sm:$0xff]
    %v3596 = vld [vmem:[#allocation14 + $0x3a8] sm:$0xff]
    %v3597 = vld [vmem:[#allocation14 + $0x3b0] sm:$0xff]
    %v3598 = vld [vmem:[#allocation14 + $0x3b8] sm:$0xff]
    %v3599 = vld [vmem:[#allocation14 + $0x3c0] sm:$0xff]
    %v3600 = vld [vmem:[#allocation14 + $0x3c8] sm:$0xff]
    %v3601 = vld [vmem:[#allocation14 + $0x3d0] sm:$0xff]
    %v3602 = vld [vmem:[#allocation14 + $0x3d8] sm:$0xff]
    %v3603 = vld [vmem:[#allocation14 + $0x3e0] sm:$0xff]
    %v3604 = vld [vmem:[#allocation14 + $0x3e8] sm:$0xff]
    %v3605 = vld [vmem:[#allocation14 + $0x3f0] sm:$0xff]
    %v3606 = vld [vmem:[#allocation14 + $0x3f8] sm:$0xff]
    %v3607 = vld [vmem:[#allocation3] sm:$0xfe]
    %v3608 = vld [vmem:[#allocation3 + $0x8] sm:$0xfe]
    %v3609 = vld [vmem:[#allocation3 + $0x10] sm:$0x1]
    %v3610 = vld [vmem:[#allocation3 + $0x18] sm:$0x1]
    %v3611 = vld [vmem:[%s1186] sm:$0xff]
    %v3612 = vld [vmem:[%s1186 + $0x8] sm:$0xff]
    %v3613 = vld [vmem:[%s1186 + $0x10] sm:$0xff]
    %v3614 = vld [vmem:[%s1186 + $0x18] sm:$0xff]
    %v3615 = vld [vmem:[%s1186 + $0x20] sm:$0xff]
    %v3616 = vld [vmem:[%s1186 + $0x28] sm:$0xff]
    %v3617 = vld [vmem:[%s1186 + $0x30] sm:$0xff]
    %v3618 = vld [vmem:[%s1186 + $0x38] sm:$0xff]
    %v3619 = vld [vmem:[%s1186 + $0x40] sm:$0xff]
    %v3620 = vld [vmem:[%s1186 + $0x48] sm:$0xff]
    %v3621 = vld [vmem:[%s1186 + $0x50] sm:$0xff]
    %v3622 = vld [vmem:[%s1186 + $0x58] sm:$0xff]
    %v3623 = vld [vmem:[%s1186 + $0x60] sm:$0xff]
    %v3624 = vld [vmem:[%s1186 + $0x68] sm:$0xff]
    %v3625 = vld [vmem:[%s1186 + $0x70] sm:$0xff]
    %v3626 = vld [vmem:[%s1186 + $0x78] sm:$0xff]
    %v3627 = vld [vmem:[%s1186 + $0x80] sm:$0xff]
    %v3628 = vld [vmem:[%s1186 + $0x88] sm:$0xff]
    %v3629 = vld [vmem:[%s1186 + $0x90] sm:$0xff]
    %v3630 = vld [vmem:[%s1186 + $0x98] sm:$0xff]
    %v3631 = vld [vmem:[%s1186 + $0xa0] sm:$0xff]
    %v3632 = vld [vmem:[%s1186 + $0xa8] sm:$0xff]
    %v3633 = vld [vmem:[%s1186 + $0xb0] sm:$0xff]
    %v3634 = vld [vmem:[%s1186 + $0xb8] sm:$0xff]
    %v3635 = vld [vmem:[%s1186 + $0xc0] sm:$0xff]
    %v3636 = vld [vmem:[%s1186 + $0xc8] sm:$0xff]
    %v3637 = vld [vmem:[%s1186 + $0xd0] sm:$0xff]
    %v3638 = vld [vmem:[%s1186 + $0xd8] sm:$0xff]
    %v3639 = vld [vmem:[%s1186 + $0xe0] sm:$0xff]
    %v3640 = vld [vmem:[%s1186 + $0xe8] sm:$0xff]
    %v3641 = vld [vmem:[%s1186 + $0xf0] sm:$0xff]
    %v3642 = vld [vmem:[%s1186 + $0xf8] sm:$0xff]
    %v3643 = vld [vmem:[%s1186 + $0x100] sm:$0xff]
    %v3644 = vld [vmem:[%s1186 + $0x108] sm:$0xff]
    %v3645 = vld [vmem:[%s1186 + $0x110] sm:$0xff]
    %v3646 = vld [vmem:[%s1186 + $0x118] sm:$0xff]
    %v3647 = vld [vmem:[%s1186 + $0x120] sm:$0xff]
    %v3648 = vld [vmem:[%s1186 + $0x128] sm:$0xff]
    %v3649 = vld [vmem:[%s1186 + $0x130] sm:$0xff]
    %v3650 = vld [vmem:[%s1186 + $0x138] sm:$0xff]
    %v3651 = vld [vmem:[%s1186 + $0x140] sm:$0xff]
    %v3652 = vld [vmem:[%s1186 + $0x148] sm:$0xff]
    %v3653 = vld [vmem:[%s1186 + $0x150] sm:$0xff]
    %v3654 = vld [vmem:[%s1186 + $0x158] sm:$0xff]
    %v3655 = vld [vmem:[%s1186 + $0x160] sm:$0xff]
    %v3656 = vld [vmem:[%s1186 + $0x168] sm:$0xff]
    %v3657 = vld [vmem:[%s1186 + $0x170] sm:$0xff]
    %v3658 = vld [vmem:[%s1186 + $0x178] sm:$0xff]
    %v3659 = vld [vmem:[%s1186 + $0x180] sm:$0xff]
    %v3660 = vld [vmem:[%s1186 + $0x188] sm:$0xff]
    %v3661 = vld [vmem:[%s1186 + $0x190] sm:$0xff]
    %v3662 = vld [vmem:[%s1186 + $0x198] sm:$0xff]
    %v3663 = vld [vmem:[%s1186 + $0x1a0] sm:$0xff]
    %v3664 = vld [vmem:[%s1186 + $0x1a8] sm:$0xff]
    %v3665 = vld [vmem:[%s1186 + $0x1b0] sm:$0xff]
    %v3666 = vld [vmem:[%s1186 + $0x1b8] sm:$0xff]
    %v3667 = vld [vmem:[%s1186 + $0x1c0] sm:$0xff]
    %v3668 = vld [vmem:[%s1186 + $0x1c8] sm:$0xff]
    %v3669 = vld [vmem:[%s1186 + $0x1d0] sm:$0xff]
    %v3670 = vld [vmem:[%s1186 + $0x1d8] sm:$0xff]
    %v3671 = vld [vmem:[%s1186 + $0x1e0] sm:$0xff]
    %v3672 = vld [vmem:[%s1186 + $0x1e8] sm:$0xff]
    %v3673 = vld [vmem:[%s1186 + $0x1f0] sm:$0xff]
    %v3674 = vld [vmem:[%s1186 + $0x1f8] sm:$0xff]
    %v3675 = vld [vmem:[%s1186 + $0x200] sm:$0xff]
    %v3676 = vld [vmem:[%s1186 + $0x208] sm:$0xff]
    %v3677 = vld [vmem:[%s1186 + $0x210] sm:$0xff]
    %v3678 = vld [vmem:[%s1186 + $0x218] sm:$0xff]
    %v3679 = vld [vmem:[%s1186 + $0x220] sm:$0xff]
    %v3680 = vld [vmem:[%s1186 + $0x228] sm:$0xff]
    %v3681 = vld [vmem:[%s1186 + $0x230] sm:$0xff]
    %v3682 = vld [vmem:[%s1186 + $0x238] sm:$0xff]
    %v3683 = vld [vmem:[%s1186 + $0x240] sm:$0xff]
    %v3684 = vld [vmem:[%s1186 + $0x248] sm:$0xff]
    %v3685 = vld [vmem:[%s1186 + $0x250] sm:$0xff]
    %v3686 = vld [vmem:[%s1186 + $0x258] sm:$0xff]
    %v3687 = vld [vmem:[%s1186 + $0x260] sm:$0xff]
    %v3688 = vld [vmem:[%s1186 + $0x268] sm:$0xff]
    %v3689 = vld [vmem:[%s1186 + $0x270] sm:$0xff]
    %v3690 = vld [vmem:[%s1186 + $0x278] sm:$0xff]
    %v3691 = vld [vmem:[%s1186 + $0x280] sm:$0xff]
    %v3692 = vld [vmem:[%s1186 + $0x288] sm:$0xff]
    %v3693 = vld [vmem:[%s1186 + $0x290] sm:$0xff]
    %v3694 = vld [vmem:[%s1186 + $0x298] sm:$0xff]
    %v3695 = vld [vmem:[%s1186 + $0x2a0] sm:$0xff]
    %v3696 = vld [vmem:[%s1186 + $0x2a8] sm:$0xff]
    %v3697 = vld [vmem:[%s1186 + $0x2b0] sm:$0xff]
    %v3698 = vld [vmem:[%s1186 + $0x2b8] sm:$0xff]
    %v3699 = vld [vmem:[%s1186 + $0x2c0] sm:$0xff]
    %v3700 = vld [vmem:[%s1186 + $0x2c8] sm:$0xff]
    %v3701 = vld [vmem:[%s1186 + $0x2d0] sm:$0xff]
    %v3702 = vld [vmem:[%s1186 + $0x2d8] sm:$0xff]
    %v3703 = vld [vmem:[%s1186 + $0x2e0] sm:$0xff]
    %v3704 = vld [vmem:[%s1186 + $0x2e8] sm:$0xff]
    %v3705 = vld [vmem:[%s1186 + $0x2f0] sm:$0xff]
    %v3706 = vld [vmem:[%s1186 + $0x2f8] sm:$0xff]
    %v3707 = vld [vmem:[%s1186 + $0x300] sm:$0xff]
    %v3708 = vld [vmem:[%s1186 + $0x308] sm:$0xff]
    %v3709 = vld [vmem:[%s1186 + $0x310] sm:$0xff]
    %v3710 = vld [vmem:[%s1186 + $0x318] sm:$0xff]
    %v3711 = vld [vmem:[%s1186 + $0x320] sm:$0xff]
    %v3712 = vld [vmem:[%s1186 + $0x328] sm:$0xff]
    %v3713 = vld [vmem:[%s1186 + $0x330] sm:$0xff]
    %v3714 = vld [vmem:[%s1186 + $0x338] sm:$0xff]
    %v3715 = vld [vmem:[%s1186 + $0x340] sm:$0xff]
    %v3716 = vld [vmem:[%s1186 + $0x348] sm:$0xff]
    %v3717 = vld [vmem:[%s1186 + $0x350] sm:$0xff]
    %v3718 = vld [vmem:[%s1186 + $0x358] sm:$0xff]
    %v3719 = vld [vmem:[%s1186 + $0x360] sm:$0xff]
    %v3720 = vld [vmem:[%s1186 + $0x368] sm:$0xff]
    %v3721 = vld [vmem:[%s1186 + $0x370] sm:$0xff]
    %v3722 = vld [vmem:[%s1186 + $0x378] sm:$0xff]
    %v3723 = vld [vmem:[%s1186 + $0x380] sm:$0xff]
    %v3724 = vld [vmem:[%s1186 + $0x388] sm:$0xff]
    %v3725 = vld [vmem:[%s1186 + $0x390] sm:$0xff]
    %v3726 = vld [vmem:[%s1186 + $0x398] sm:$0xff]
    %v3727 = vld [vmem:[%s1186 + $0x3a0] sm:$0xff]
    %v3728 = vld [vmem:[%s1186 + $0x3a8] sm:$0xff]
    %v3729 = vld [vmem:[%s1186 + $0x3b0] sm:$0xff]
    %v3730 = vld [vmem:[%s1186 + $0x3b8] sm:$0xff]
    %v3731 = vld [vmem:[%s1186 + $0x3c0] sm:$0xff]
    %v3732 = vld [vmem:[%s1186 + $0x3c8] sm:$0xff]
    %v3733 = vld [vmem:[%s1186 + $0x3d0] sm:$0xff]
    %v3734 = vld [vmem:[%s1186 + $0x3d8] sm:$0xff]
    %v3735 = vld [vmem:[%s1186 + $0x3e0] sm:$0xff]
    %v3736 = vld [vmem:[%s1186 + $0x3e8] sm:$0xff]
    %v3737 = vld [vmem:[%s1186 + $0x3f0] sm:$0xff]
    %v3738 = vld [vmem:[%s1186 + $0x3f8] sm:$0xff]
    %v3743 = vrot.slane %v3607, 1
    %v3744 = vrot.slane %v3609, 1
    %v3745 = vsel %vm1319, %v3743, %v3744
    %v3746 = vrot.slane %v3608, 1
    %v3747 = vrot.slane %v3610, 1
    %v3748 = vsel %vm1319, %v3746, %v3747
    %3751 = vmatpush.msra.mxu0 %v3671
    %3752 = vmatpush.msra.mxu0 %v3667
    %3753 = vmatpush.msra.mxu0 %v3663
    %3754 = vmatpush.msra.mxu0 %v3659
    %3755 = vmatpush.msra.mxu0 %v3655
    %3756 = vmatpush.msra.mxu0 %v3651
    %3757 = vmatpush.msra.mxu0 %v3647
    %3758 = vmatpush.msra.mxu0 %v3643
    %3759 = vmatpush.msra.mxu0 %v3639
    %3760 = vmatpush.msra.mxu0 %v3635
    %3761 = vmatpush.msra.mxu0 %v3631
    %3762 = vmatpush.msra.mxu0 %v3627
    %3763 = vmatpush.msra.mxu0 %v3623
    %3764 = vmatpush.msra.mxu0 %v3619
    %3765 = vmatpush.msra.mxu0 %v3615
    %3766 = vmatpush.msra.mxu0 %v3611
    %3767 = vmatmul.f32.gmra.mxu0 %v3745
    %v3768 = vpop.f32.mrf.mxu0
    %v3769 = vadd.f32 0.0, %v3768
    %3770 = vdwg.mxu0
    %3771 = vmatpush.msra.mxu0 %v3735
    %3772 = vmatpush.msra.mxu0 %v3731
    %3773 = vmatpush.msra.mxu0 %v3727
    %3774 = vmatpush.msra.mxu0 %v3723
    %3775 = vmatpush.msra.mxu0 %v3719
    %3776 = vmatpush.msra.mxu0 %v3715
    %3777 = vmatpush.msra.mxu0 %v3711
    %3778 = vmatpush.msra.mxu0 %v3707
    %3779 = vmatpush.msra.mxu0 %v3703
    %3780 = vmatpush.msra.mxu0 %v3699
    %3781 = vmatpush.msra.mxu0 %v3695
    %3782 = vmatpush.msra.mxu0 %v3691
    %3783 = vmatpush.msra.mxu0 %v3687
    %3784 = vmatpush.msra.mxu0 %v3683
    %3785 = vmatpush.msra.mxu0 %v3679
    %3786 = vmatpush.msra.mxu0 %v3675
    %3787 = vmatmul.f32.gmra.mxu0 %v3748
    %v3788 = vpop.f32.mrf.mxu0
    %v3789 = vadd.f32 %v3769, %v3788
    %3790 = vdwg.mxu0
    %3791 = vmatpush.msra.mxu0 %v3672
    %3792 = vmatpush.msra.mxu0 %v3668
    %3793 = vmatpush.msra.mxu0 %v3664
    %3794 = vmatpush.msra.mxu0 %v3660
    %3795 = vmatpush.msra.mxu0 %v3656
    %3796 = vmatpush.msra.mxu0 %v3652
    %3797 = vmatpush.msra.mxu0 %v3648
    %3798 = vmatpush.msra.mxu0 %v3644
    %3799 = vmatpush.msra.mxu0 %v3640
    %3800 = vmatpush.msra.mxu0 %v3636
    %3801 = vmatpush.msra.mxu0 %v3632
    %3802 = vmatpush.msra.mxu0 %v3628
    %3803 = vmatpush.msra.mxu0 %v3624
    %3804 = vmatpush.msra.mxu0 %v3620
    %3805 = vmatpush.msra.mxu0 %v3616
    %3806 = vmatpush.msra.mxu0 %v3612
    %3807 = vmatmul.f32.gmra.mxu0 %v3745
    %v3808 = vpop.f32.mrf.mxu0
    %v3809 = vadd.f32 0.0, %v3808
    %3810 = vdwg.mxu0
    %3811 = vmatpush.msra.mxu0 %v3736
    %3812 = vmatpush.msra.mxu0 %v3732
    %3813 = vmatpush.msra.mxu0 %v3728
    %3814 = vmatpush.msra.mxu0 %v3724
    %3815 = vmatpush.msra.mxu0 %v3720
    %3816 = vmatpush.msra.mxu0 %v3716
    %3817 = vmatpush.msra.mxu0 %v3712
    %3818 = vmatpush.msra.mxu0 %v3708
    %3819 = vmatpush.msra.mxu0 %v3704
    %3820 = vmatpush.msra.mxu0 %v3700
    %3821 = vmatpush.msra.mxu0 %v3696
    %3822 = vmatpush.msra.mxu0 %v3692
    %3823 = vmatpush.msra.mxu0 %v3688
    %3824 = vmatpush.msra.mxu0 %v3684
    %3825 = vmatpush.msra.mxu0 %v3680
    %3826 = vmatpush.msra.mxu0 %v3676
    %3827 = vmatmul.f32.gmra.mxu0 %v3748
    %v3828 = vpop.f32.mrf.mxu0
    %v3829 = vadd.f32 %v3809, %v3828
    %3830 = vdwg.mxu0
    %3831 = vmatpush.msra.mxu0 %v3673
    %3832 = vmatpush.msra.mxu0 %v3669
    %3833 = vmatpush.msra.mxu0 %v3665
    %3834 = vmatpush.msra.mxu0 %v3661
    %3835 = vmatpush.msra.mxu0 %v3657
    %3836 = vmatpush.msra.mxu0 %v3653
    %3837 = vmatpush.msra.mxu0 %v3649
    %3838 = vmatpush.msra.mxu0 %v3645
    %3839 = vmatpush.msra.mxu0 %v3641
    %3840 = vmatpush.msra.mxu0 %v3637
    %3841 = vmatpush.msra.mxu0 %v3633
    %3842 = vmatpush.msra.mxu0 %v3629
    %3843 = vmatpush.msra.mxu0 %v3625
    %3844 = vmatpush.msra.mxu0 %v3621
    %3845 = vmatpush.msra.mxu0 %v3617
    %3846 = vmatpush.msra.mxu0 %v3613
    %3847 = vmatmul.f32.gmra.mxu0 %v3745
    %v3848 = vpop.f32.mrf.mxu0
    %v3849 = vadd.f32 0.0, %v3848
    %3850 = vdwg.mxu0
    %3851 = vmatpush.msra.mxu0 %v3737
    %3852 = vmatpush.msra.mxu0 %v3733
    %3853 = vmatpush.msra.mxu0 %v3729
    %3854 = vmatpush.msra.mxu0 %v3725
    %3855 = vmatpush.msra.mxu0 %v3721
    %3856 = vmatpush.msra.mxu0 %v3717
    %3857 = vmatpush.msra.mxu0 %v3713
    %3858 = vmatpush.msra.mxu0 %v3709
    %3859 = vmatpush.msra.mxu0 %v3705
    %3860 = vmatpush.msra.mxu0 %v3701
    %3861 = vmatpush.msra.mxu0 %v3697
    %3862 = vmatpush.msra.mxu0 %v3693
    %3863 = vmatpush.msra.mxu0 %v3689
    %3864 = vmatpush.msra.mxu0 %v3685
    %3865 = vmatpush.msra.mxu0 %v3681
    %3866 = vmatpush.msra.mxu0 %v3677
    %3867 = vmatmul.f32.gmra.mxu0 %v3748
    %v3868 = vpop.f32.mrf.mxu0
    %v3869 = vadd.f32 %v3849, %v3868
    %3870 = vdwg.mxu0
    %3871 = vmatpush.msra.mxu0 %v3674
    %3872 = vmatpush.msra.mxu0 %v3670
    %3873 = vmatpush.msra.mxu0 %v3666
    %3874 = vmatpush.msra.mxu0 %v3662
    %3875 = vmatpush.msra.mxu0 %v3658
    %3876 = vmatpush.msra.mxu0 %v3654
    %3877 = vmatpush.msra.mxu0 %v3650
    %3878 = vmatpush.msra.mxu0 %v3646
    %3879 = vmatpush.msra.mxu0 %v3642
    %3880 = vmatpush.msra.mxu0 %v3638
    %3881 = vmatpush.msra.mxu0 %v3634
    %3882 = vmatpush.msra.mxu0 %v3630
    %3883 = vmatpush.msra.mxu0 %v3626
    %3884 = vmatpush.msra.mxu0 %v3622
    %3885 = vmatpush.msra.mxu0 %v3618
    %3886 = vmatpush.msra.mxu0 %v3614
    %3887 = vmatmul.f32.gmra.mxu0 %v3745
    %v3888 = vpop.f32.mrf.mxu0
    %v3889 = vadd.f32 0.0, %v3888
    %3890 = vdwg.mxu0
    %3891 = vmatpush.msra.mxu0 %v3738
    %3892 = vmatpush.msra.mxu0 %v3734
    %3893 = vmatpush.msra.mxu0 %v3730
    %3894 = vmatpush.msra.mxu0 %v3726
    %3895 = vmatpush.msra.mxu0 %v3722
    %3896 = vmatpush.msra.mxu0 %v3718
    %3897 = vmatpush.msra.mxu0 %v3714
    %3898 = vmatpush.msra.mxu0 %v3710
    %3899 = vmatpush.msra.mxu0 %v3706
    %3900 = vmatpush.msra.mxu0 %v3702
    %3901 = vmatpush.msra.mxu0 %v3698
    %3902 = vmatpush.msra.mxu0 %v3694
    %3903 = vmatpush.msra.mxu0 %v3690
    %3904 = vmatpush.msra.mxu0 %v3686
    %3905 = vmatpush.msra.mxu0 %v3682
    %3906 = vmatpush.msra.mxu0 %v3678
    %3907 = vmatmul.f32.gmra.mxu0 %v3748
    %v3908 = vpop.f32.mrf.mxu0
    %v3909 = vadd.f32 %v3889, %v3908
    %3910 = vdwg.mxu0
    %3911 = vmatpush.msra.mxu0 %v3539
    %3912 = vmatpush.msra.mxu0 %v3535
    %3913 = vmatpush.msra.mxu0 %v3531
    %3914 = vmatpush.msra.mxu0 %v3527
    %3915 = vmatpush.msra.mxu0 %v3523
    %3916 = vmatpush.msra.mxu0 %v3519
    %3917 = vmatpush.msra.mxu0 %v3515
    %3918 = vmatpush.msra.mxu0 %v3511
    %3919 = vmatpush.msra.mxu0 %v3507
    %3920 = vmatpush.msra.mxu0 %v3503
    %3921 = vmatpush.msra.mxu0 %v3499
    %3922 = vmatpush.msra.mxu0 %v3495
    %3923 = vmatpush.msra.mxu0 %v3491
    %3924 = vmatpush.msra.mxu0 %v3487
    %3925 = vmatpush.msra.mxu0 %v3483
    %3926 = vmatpush.msra.mxu0 %v3479
    %3927 = vmatmul.f32.gmra.mxu0 %v3477
    %v3928 = vpop.f32.mrf.mxu0
    %v3929 = vadd.f32 %v3789, %v3928
    %3930 = vdwg.mxu0
    %3931 = vmatpush.msra.mxu0 %v3603
    %3932 = vmatpush.msra.mxu0 %v3599
    %3933 = vmatpush.msra.mxu0 %v3595
    %3934 = vmatpush.msra.mxu0 %v3591
    %3935 = vmatpush.msra.mxu0 %v3587
    %3936 = vmatpush.msra.mxu0 %v3583
    %3937 = vmatpush.msra.mxu0 %v3579
    %3938 = vmatpush.msra.mxu0 %v3575
    %3939 = vmatpush.msra.mxu0 %v3571
    %3940 = vmatpush.msra.mxu0 %v3567
    %3941 = vmatpush.msra.mxu0 %v3563
    %3942 = vmatpush.msra.mxu0 %v3559
    %3943 = vmatpush.msra.mxu0 %v3555
    %3944 = vmatpush.msra.mxu0 %v3551
    %3945 = vmatpush.msra.mxu0 %v3547
    %3946 = vmatpush.msra.mxu0 %v3543
    %3947 = vmatmul.f32.gmra.mxu0 %v3478
    %v3948 = vpop.f32.mrf.mxu0
    %v3949 = vadd.f32 %v3929, %v3948
    %3950 = vdwg.mxu0
    %3951 = vmatpush.msra.mxu0 %v3540
    %3952 = vmatpush.msra.mxu0 %v3536
    %3953 = vmatpush.msra.mxu0 %v3532
    %3954 = vmatpush.msra.mxu0 %v3528
    %3955 = vmatpush.msra.mxu0 %v3524
    %3956 = vmatpush.msra.mxu0 %v3520
    %3957 = vmatpush.msra.mxu0 %v3516
    %3958 = vmatpush.msra.mxu0 %v3512
    %3959 = vmatpush.msra.mxu0 %v3508
    %3960 = vmatpush.msra.mxu0 %v3504
    %3961 = vmatpush.msra.mxu0 %v3500
    %3962 = vmatpush.msra.mxu0 %v3496
    %3963 = vmatpush.msra.mxu0 %v3492
    %3964 = vmatpush.msra.mxu0 %v3488
    %3965 = vmatpush.msra.mxu0 %v3484
    %3966 = vmatpush.msra.mxu0 %v3480
    %3967 = vmatmul.f32.gmra.mxu0 %v3477
    %v3968 = vpop.f32.mrf.mxu0
    %v3969 = vadd.f32 %v3829, %v3968
    %3970 = vdwg.mxu0
    %3971 = vmatpush.msra.mxu0 %v3604
    %3972 = vmatpush.msra.mxu0 %v3600
    %3973 = vmatpush.msra.mxu0 %v3596
    %3974 = vmatpush.msra.mxu0 %v3592
    %3975 = vmatpush.msra.mxu0 %v3588
    %3976 = vmatpush.msra.mxu0 %v3584
    %3977 = vmatpush.msra.mxu0 %v3580
    %3978 = vmatpush.msra.mxu0 %v3576
    %3979 = vmatpush.msra.mxu0 %v3572
    %3980 = vmatpush.msra.mxu0 %v3568
    %3981 = vmatpush.msra.mxu0 %v3564
    %3982 = vmatpush.msra.mxu0 %v3560
    %3983 = vmatpush.msra.mxu0 %v3556
    %3984 = vmatpush.msra.mxu0 %v3552
    %3985 = vmatpush.msra.mxu0 %v3548
    %3986 = vmatpush.msra.mxu0 %v3544
    %3987 = vmatmul.f32.gmra.mxu0 %v3478
    %v3988 = vpop.f32.mrf.mxu0
    %v3989 = vadd.f32 %v3969, %v3988
    %3990 = vdwg.mxu0
    %3991 = vmatpush.msra.mxu0 %v3541
    %3992 = vmatpush.msra.mxu0 %v3537
    %3993 = vmatpush.msra.mxu0 %v3533
    %3994 = vmatpush.msra.mxu0 %v3529
    %3995 = vmatpush.msra.mxu0 %v3525
    %3996 = vmatpush.msra.mxu0 %v3521
    %3997 = vmatpush.msra.mxu0 %v3517
    %3998 = vmatpush.msra.mxu0 %v3513
    %3999 = vmatpush.msra.mxu0 %v3509
    %4000 = vmatpush.msra.mxu0 %v3505
    %4001 = vmatpush.msra.mxu0 %v3501
    %4002 = vmatpush.msra.mxu0 %v3497
    %4003 = vmatpush.msra.mxu0 %v3493
    %4004 = vmatpush.msra.mxu0 %v3489
    %4005 = vmatpush.msra.mxu0 %v3485
    %4006 = vmatpush.msra.mxu0 %v3481
    %4007 = vmatmul.f32.gmra.mxu0 %v3477
    %v4008 = vpop.f32.mrf.mxu0
    %v4009 = vadd.f32 %v3869, %v4008
    %4010 = vdwg.mxu0
    %4011 = vmatpush.msra.mxu0 %v3605
    %4012 = vmatpush.msra.mxu0 %v3601
    %4013 = vmatpush.msra.mxu0 %v3597
    %4014 = vmatpush.msra.mxu0 %v3593
    %4015 = vmatpush.msra.mxu0 %v3589
    %4016 = vmatpush.msra.mxu0 %v3585
    %4017 = vmatpush.msra.mxu0 %v3581
    %4018 = vmatpush.msra.mxu0 %v3577
    %4019 = vmatpush.msra.mxu0 %v3573
    %4020 = vmatpush.msra.mxu0 %v3569
    %4021 = vmatpush.msra.mxu0 %v3565
    %4022 = vmatpush.msra.mxu0 %v3561
    %4023 = vmatpush.msra.mxu0 %v3557
    %4024 = vmatpush.msra.mxu0 %v3553
    %4025 = vmatpush.msra.mxu0 %v3549
    %4026 = vmatpush.msra.mxu0 %v3545
    %4027 = vmatmul.f32.gmra.mxu0 %v3478
    %v4028 = vpop.f32.mrf.mxu0
    %v4029 = vadd.f32 %v4009, %v4028
    %4030 = vdwg.mxu0
    %4031 = vmatpush.msra.mxu0 %v3542
    %4032 = vmatpush.msra.mxu0 %v3538
    %4033 = vmatpush.msra.mxu0 %v3534
    %4034 = vmatpush.msra.mxu0 %v3530
    %4035 = vmatpush.msra.mxu0 %v3526
    %4036 = vmatpush.msra.mxu0 %v3522
    %4037 = vmatpush.msra.mxu0 %v3518
    %4038 = vmatpush.msra.mxu0 %v3514
    %4039 = vmatpush.msra.mxu0 %v3510
    %4040 = vmatpush.msra.mxu0 %v3506
    %4041 = vmatpush.msra.mxu0 %v3502
    %4042 = vmatpush.msra.mxu0 %v3498
    %4043 = vmatpush.msra.mxu0 %v3494
    %4044 = vmatpush.msra.mxu0 %v3490
    %4045 = vmatpush.msra.mxu0 %v3486
    %4046 = vmatpush.msra.mxu0 %v3482
    %4047 = vmatmul.f32.gmra.mxu0 %v3477
    %v4048 = vpop.f32.mrf.mxu0
    %v4049 = vadd.f32 %v3909, %v4048
    %4050 = vdwg.mxu0
    %4051 = vmatpush.msra.mxu0 %v3606
    %4052 = vmatpush.msra.mxu0 %v3602
    %4053 = vmatpush.msra.mxu0 %v3598
    %4054 = vmatpush.msra.mxu0 %v3594
    %4055 = vmatpush.msra.mxu0 %v3590
    %4056 = vmatpush.msra.mxu0 %v3586
    %4057 = vmatpush.msra.mxu0 %v3582
    %4058 = vmatpush.msra.mxu0 %v3578
    %4059 = vmatpush.msra.mxu0 %v3574
    %4060 = vmatpush.msra.mxu0 %v3570
    %4061 = vmatpush.msra.mxu0 %v3566
    %4062 = vmatpush.msra.mxu0 %v3562
    %4063 = vmatpush.msra.mxu0 %v3558
    %4064 = vmatpush.msra.mxu0 %v3554
    %4065 = vmatpush.msra.mxu0 %v3550
    %4066 = vmatpush.msra.mxu0 %v3546
    %4067 = vmatmul.f32.gmra.mxu0 %v3478
    %v4068 = vpop.f32.mrf.mxu0
    %v4069 = vadd.f32 %v4049, %v4068
    %4070 = vdwg.mxu0
    %v4071 = vld [vmem:[#allocation3] sm:$0xfc]
    %v4072 = vld [vmem:[#allocation3 + $0x8] sm:$0xfc]
    %v4073 = vld [vmem:[#allocation3 + $0x10] sm:$0x3]
    %v4074 = vld [vmem:[#allocation3 + $0x18] sm:$0x3]
    %v4075 = vld [vmem:[%s1652] sm:$0xff]
    %v4076 = vld [vmem:[%s1652 + $0x8] sm:$0xff]
    %v4077 = vld [vmem:[%s1652 + $0x10] sm:$0xff]
    %v4078 = vld [vmem:[%s1652 + $0x18] sm:$0xff]
    %v4079 = vld [vmem:[%s1652 + $0x20] sm:$0xff]
    %v4080 = vld [vmem:[%s1652 + $0x28] sm:$0xff]
    %v4081 = vld [vmem:[%s1652 + $0x30] sm:$0xff]
    %v4082 = vld [vmem:[%s1652 + $0x38] sm:$0xff]
    %v4083 = vld [vmem:[%s1652 + $0x40] sm:$0xff]
    %v4084 = vld [vmem:[%s1652 + $0x48] sm:$0xff]
    %v4085 = vld [vmem:[%s1652 + $0x50] sm:$0xff]
    %v4086 = vld [vmem:[%s1652 + $0x58] sm:$0xff]
    %v4087 = vld [vmem:[%s1652 + $0x60] sm:$0xff]
    %v4088 = vld [vmem:[%s1652 + $0x68] sm:$0xff]
    %v4089 = vld [vmem:[%s1652 + $0x70] sm:$0xff]
    %v4090 = vld [vmem:[%s1652 + $0x78] sm:$0xff]
    %v4091 = vld [vmem:[%s1652 + $0x80] sm:$0xff]
    %v4092 = vld [vmem:[%s1652 + $0x88] sm:$0xff]
    %v4093 = vld [vmem:[%s1652 + $0x90] sm:$0xff]
    %v4094 = vld [vmem:[%s1652 + $0x98] sm:$0xff]
    %v4095 = vld [vmem:[%s1652 + $0xa0] sm:$0xff]
    %v4096 = vld [vmem:[%s1652 + $0xa8] sm:$0xff]
    %v4097 = vld [vmem:[%s1652 + $0xb0] sm:$0xff]
    %v4098 = vld [vmem:[%s1652 + $0xb8] sm:$0xff]
    %v4099 = vld [vmem:[%s1652 + $0xc0] sm:$0xff]
    %v4100 = vld [vmem:[%s1652 + $0xc8] sm:$0xff]
    %v4101 = vld [vmem:[%s1652 + $0xd0] sm:$0xff]
    %v4102 = vld [vmem:[%s1652 + $0xd8] sm:$0xff]
    %v4103 = vld [vmem:[%s1652 + $0xe0] sm:$0xff]
    %v4104 = vld [vmem:[%s1652 + $0xe8] sm:$0xff]
    %v4105 = vld [vmem:[%s1652 + $0xf0] sm:$0xff]
    %v4106 = vld [vmem:[%s1652 + $0xf8] sm:$0xff]
    %v4107 = vld [vmem:[%s1652 + $0x100] sm:$0xff]
    %v4108 = vld [vmem:[%s1652 + $0x108] sm:$0xff]
    %v4109 = vld [vmem:[%s1652 + $0x110] sm:$0xff]
    %v4110 = vld [vmem:[%s1652 + $0x118] sm:$0xff]
    %v4111 = vld [vmem:[%s1652 + $0x120] sm:$0xff]
    %v4112 = vld [vmem:[%s1652 + $0x128] sm:$0xff]
    %v4113 = vld [vmem:[%s1652 + $0x130] sm:$0xff]
    %v4114 = vld [vmem:[%s1652 + $0x138] sm:$0xff]
    %v4115 = vld [vmem:[%s1652 + $0x140] sm:$0xff]
    %v4116 = vld [vmem:[%s1652 + $0x148] sm:$0xff]
    %v4117 = vld [vmem:[%s1652 + $0x150] sm:$0xff]
    %v4118 = vld [vmem:[%s1652 + $0x158] sm:$0xff]
    %v4119 = vld [vmem:[%s1652 + $0x160] sm:$0xff]
    %v4120 = vld [vmem:[%s1652 + $0x168] sm:$0xff]
    %v4121 = vld [vmem:[%s1652 + $0x170] sm:$0xff]
    %v4122 = vld [vmem:[%s1652 + $0x178] sm:$0xff]
    %v4123 = vld [vmem:[%s1652 + $0x180] sm:$0xff]
    %v4124 = vld [vmem:[%s1652 + $0x188] sm:$0xff]
    %v4125 = vld [vmem:[%s1652 + $0x190] sm:$0xff]
    %v4126 = vld [vmem:[%s1652 + $0x198] sm:$0xff]
    %v4127 = vld [vmem:[%s1652 + $0x1a0] sm:$0xff]
    %v4128 = vld [vmem:[%s1652 + $0x1a8] sm:$0xff]
    %v4129 = vld [vmem:[%s1652 + $0x1b0] sm:$0xff]
    %v4130 = vld [vmem:[%s1652 + $0x1b8] sm:$0xff]
    %v4131 = vld [vmem:[%s1652 + $0x1c0] sm:$0xff]
    %v4132 = vld [vmem:[%s1652 + $0x1c8] sm:$0xff]
    %v4133 = vld [vmem:[%s1652 + $0x1d0] sm:$0xff]
    %v4134 = vld [vmem:[%s1652 + $0x1d8] sm:$0xff]
    %v4135 = vld [vmem:[%s1652 + $0x1e0] sm:$0xff]
    %v4136 = vld [vmem:[%s1652 + $0x1e8] sm:$0xff]
    %v4137 = vld [vmem:[%s1652 + $0x1f0] sm:$0xff]
    %v4138 = vld [vmem:[%s1652 + $0x1f8] sm:$0xff]
    %v4139 = vld [vmem:[%s1652 + $0x200] sm:$0xff]
    %v4140 = vld [vmem:[%s1652 + $0x208] sm:$0xff]
    %v4141 = vld [vmem:[%s1652 + $0x210] sm:$0xff]
    %v4142 = vld [vmem:[%s1652 + $0x218] sm:$0xff]
    %v4143 = vld [vmem:[%s1652 + $0x220] sm:$0xff]
    %v4144 = vld [vmem:[%s1652 + $0x228] sm:$0xff]
    %v4145 = vld [vmem:[%s1652 + $0x230] sm:$0xff]
    %v4146 = vld [vmem:[%s1652 + $0x238] sm:$0xff]
    %v4147 = vld [vmem:[%s1652 + $0x240] sm:$0xff]
    %v4148 = vld [vmem:[%s1652 + $0x248] sm:$0xff]
    %v4149 = vld [vmem:[%s1652 + $0x250] sm:$0xff]
    %v4150 = vld [vmem:[%s1652 + $0x258] sm:$0xff]
    %v4151 = vld [vmem:[%s1652 + $0x260] sm:$0xff]
    %v4152 = vld [vmem:[%s1652 + $0x268] sm:$0xff]
    %v4153 = vld [vmem:[%s1652 + $0x270] sm:$0xff]
    %v4154 = vld [vmem:[%s1652 + $0x278] sm:$0xff]
    %v4155 = vld [vmem:[%s1652 + $0x280] sm:$0xff]
    %v4156 = vld [vmem:[%s1652 + $0x288] sm:$0xff]
    %v4157 = vld [vmem:[%s1652 + $0x290] sm:$0xff]
    %v4158 = vld [vmem:[%s1652 + $0x298] sm:$0xff]
    %v4159 = vld [vmem:[%s1652 + $0x2a0] sm:$0xff]
    %v4160 = vld [vmem:[%s1652 + $0x2a8] sm:$0xff]
    %v4161 = vld [vmem:[%s1652 + $0x2b0] sm:$0xff]
    %v4162 = vld [vmem:[%s1652 + $0x2b8] sm:$0xff]
    %v4163 = vld [vmem:[%s1652 + $0x2c0] sm:$0xff]
    %v4164 = vld [vmem:[%s1652 + $0x2c8] sm:$0xff]
    %v4165 = vld [vmem:[%s1652 + $0x2d0] sm:$0xff]
    %v4166 = vld [vmem:[%s1652 + $0x2d8] sm:$0xff]
    %v4167 = vld [vmem:[%s1652 + $0x2e0] sm:$0xff]
    %v4168 = vld [vmem:[%s1652 + $0x2e8] sm:$0xff]
    %v4169 = vld [vmem:[%s1652 + $0x2f0] sm:$0xff]
    %v4170 = vld [vmem:[%s1652 + $0x2f8] sm:$0xff]
    %v4171 = vld [vmem:[%s1652 + $0x300] sm:$0xff]
    %v4172 = vld [vmem:[%s1652 + $0x308] sm:$0xff]
    %v4173 = vld [vmem:[%s1652 + $0x310] sm:$0xff]
    %v4174 = vld [vmem:[%s1652 + $0x318] sm:$0xff]
    %v4175 = vld [vmem:[%s1652 + $0x320] sm:$0xff]
    %v4176 = vld [vmem:[%s1652 + $0x328] sm:$0xff]
    %v4177 = vld [vmem:[%s1652 + $0x330] sm:$0xff]
    %v4178 = vld [vmem:[%s1652 + $0x338] sm:$0xff]
    %v4179 = vld [vmem:[%s1652 + $0x340] sm:$0xff]
    %v4180 = vld [vmem:[%s1652 + $0x348] sm:$0xff]
    %v4181 = vld [vmem:[%s1652 + $0x350] sm:$0xff]
    %v4182 = vld [vmem:[%s1652 + $0x358] sm:$0xff]
    %v4183 = vld [vmem:[%s1652 + $0x360] sm:$0xff]
    %v4184 = vld [vmem:[%s1652 + $0x368] sm:$0xff]
    %v4185 = vld [vmem:[%s1652 + $0x370] sm:$0xff]
    %v4186 = vld [vmem:[%s1652 + $0x378] sm:$0xff]
    %v4187 = vld [vmem:[%s1652 + $0x380] sm:$0xff]
    %v4188 = vld [vmem:[%s1652 + $0x388] sm:$0xff]
    %v4189 = vld [vmem:[%s1652 + $0x390] sm:$0xff]
    %v4190 = vld [vmem:[%s1652 + $0x398] sm:$0xff]
    %v4191 = vld [vmem:[%s1652 + $0x3a0] sm:$0xff]
    %v4192 = vld [vmem:[%s1652 + $0x3a8] sm:$0xff]
    %v4193 = vld [vmem:[%s1652 + $0x3b0] sm:$0xff]
    %v4194 = vld [vmem:[%s1652 + $0x3b8] sm:$0xff]
    %v4195 = vld [vmem:[%s1652 + $0x3c0] sm:$0xff]
    %v4196 = vld [vmem:[%s1652 + $0x3c8] sm:$0xff]
    %v4197 = vld [vmem:[%s1652 + $0x3d0] sm:$0xff]
    %v4198 = vld [vmem:[%s1652 + $0x3d8] sm:$0xff]
    %v4199 = vld [vmem:[%s1652 + $0x3e0] sm:$0xff]
    %v4200 = vld [vmem:[%s1652 + $0x3e8] sm:$0xff]
    %v4201 = vld [vmem:[%s1652 + $0x3f0] sm:$0xff]
    %v4202 = vld [vmem:[%s1652 + $0x3f8] sm:$0xff]
    %v4207 = vrot.slane %v4071, 2
    %v4208 = vrot.slane %v4073, 2
    %v4209 = vsel %vm1785, %v4207, %v4208
    %v4210 = vrot.slane %v4072, 2
    %v4211 = vrot.slane %v4074, 2
    %v4212 = vsel %vm1785, %v4210, %v4211
    %4215 = vmatpush.msra.mxu0 %v4135
    %4216 = vmatpush.msra.mxu0 %v4131
    %4217 = vmatpush.msra.mxu0 %v4127
    %4218 = vmatpush.msra.mxu0 %v4123
    %4219 = vmatpush.msra.mxu0 %v4119
    %4220 = vmatpush.msra.mxu0 %v4115
    %4221 = vmatpush.msra.mxu0 %v4111
    %4222 = vmatpush.msra.mxu0 %v4107
    %4223 = vmatpush.msra.mxu0 %v4103
    %4224 = vmatpush.msra.mxu0 %v4099
    %4225 = vmatpush.msra.mxu0 %v4095
    %4226 = vmatpush.msra.mxu0 %v4091
    %4227 = vmatpush.msra.mxu0 %v4087
    %4228 = vmatpush.msra.mxu0 %v4083
    %4229 = vmatpush.msra.mxu0 %v4079
    %4230 = vmatpush.msra.mxu0 %v4075
    %4231 = vmatmul.f32.gmra.mxu0 %v4209
    %v4232 = vpop.f32.mrf.mxu0
    %v4233 = vadd.f32 0.0, %v4232
    %4234 = vdwg.mxu0
    %4235 = vmatpush.msra.mxu0 %v4199
    %4236 = vmatpush.msra.mxu0 %v4195
    %4237 = vmatpush.msra.mxu0 %v4191
    %4238 = vmatpush.msra.mxu0 %v4187
    %4239 = vmatpush.msra.mxu0 %v4183
    %4240 = vmatpush.msra.mxu0 %v4179
    %4241 = vmatpush.msra.mxu0 %v4175
    %4242 = vmatpush.msra.mxu0 %v4171
    %4243 = vmatpush.msra.mxu0 %v4167
    %4244 = vmatpush.msra.mxu0 %v4163
    %4245 = vmatpush.msra.mxu0 %v4159
    %4246 = vmatpush.msra.mxu0 %v4155
    %4247 = vmatpush.msra.mxu0 %v4151
    %4248 = vmatpush.msra.mxu0 %v4147
    %4249 = vmatpush.msra.mxu0 %v4143
    %4250 = vmatpush.msra.mxu0 %v4139
    %4251 = vmatmul.f32.gmra.mxu0 %v4212
    %v4252 = vpop.f32.mrf.mxu0
    %v4253 = vadd.f32 %v4233, %v4252
    %4254 = vdwg.mxu0
    %4255 = vmatpush.msra.mxu0 %v4136
    %4256 = vmatpush.msra.mxu0 %v4132
    %4257 = vmatpush.msra.mxu0 %v4128
    %4258 = vmatpush.msra.mxu0 %v4124
    %4259 = vmatpush.msra.mxu0 %v4120
    %4260 = vmatpush.msra.mxu0 %v4116
    %4261 = vmatpush.msra.mxu0 %v4112
    %4262 = vmatpush.msra.mxu0 %v4108
    %4263 = vmatpush.msra.mxu0 %v4104
    %4264 = vmatpush.msra.mxu0 %v4100
    %4265 = vmatpush.msra.mxu0 %v4096
    %4266 = vmatpush.msra.mxu0 %v4092
    %4267 = vmatpush.msra.mxu0 %v4088
    %4268 = vmatpush.msra.mxu0 %v4084
    %4269 = vmatpush.msra.mxu0 %v4080
    %4270 = vmatpush.msra.mxu0 %v4076
    %4271 = vmatmul.f32.gmra.mxu0 %v4209
    %v4272 = vpop.f32.mrf.mxu0
    %v4273 = vadd.f32 0.0, %v4272
    %4274 = vdwg.mxu0
    %4275 = vmatpush.msra.mxu0 %v4200
    %4276 = vmatpush.msra.mxu0 %v4196
    %4277 = vmatpush.msra.mxu0 %v4192
    %4278 = vmatpush.msra.mxu0 %v4188
    %4279 = vmatpush.msra.mxu0 %v4184
    %4280 = vmatpush.msra.mxu0 %v4180
    %4281 = vmatpush.msra.mxu0 %v4176
    %4282 = vmatpush.msra.mxu0 %v4172
    %4283 = vmatpush.msra.mxu0 %v4168
    %4284 = vmatpush.msra.mxu0 %v4164
    %4285 = vmatpush.msra.mxu0 %v4160
    %4286 = vmatpush.msra.mxu0 %v4156
    %4287 = vmatpush.msra.mxu0 %v4152
    %4288 = vmatpush.msra.mxu0 %v4148
    %4289 = vmatpush.msra.mxu0 %v4144
    %4290 = vmatpush.msra.mxu0 %v4140
    %4291 = vmatmul.f32.gmra.mxu0 %v4212
    %v4292 = vpop.f32.mrf.mxu0
    %v4293 = vadd.f32 %v4273, %v4292
    %4294 = vdwg.mxu0
    %4295 = vmatpush.msra.mxu0 %v4137
    %4296 = vmatpush.msra.mxu0 %v4133
    %4297 = vmatpush.msra.mxu0 %v4129
    %4298 = vmatpush.msra.mxu0 %v4125
    %4299 = vmatpush.msra.mxu0 %v4121
    %4300 = vmatpush.msra.mxu0 %v4117
    %4301 = vmatpush.msra.mxu0 %v4113
    %4302 = vmatpush.msra.mxu0 %v4109
    %4303 = vmatpush.msra.mxu0 %v4105
    %4304 = vmatpush.msra.mxu0 %v4101
    %4305 = vmatpush.msra.mxu0 %v4097
    %4306 = vmatpush.msra.mxu0 %v4093
    %4307 = vmatpush.msra.mxu0 %v4089
    %4308 = vmatpush.msra.mxu0 %v4085
    %4309 = vmatpush.msra.mxu0 %v4081
    %4310 = vmatpush.msra.mxu0 %v4077
    %4311 = vmatmul.f32.gmra.mxu0 %v4209
    %v4312 = vpop.f32.mrf.mxu0
    %v4313 = vadd.f32 0.0, %v4312
    %4314 = vdwg.mxu0
    %4315 = vmatpush.msra.mxu0 %v4201
    %4316 = vmatpush.msra.mxu0 %v4197
    %4317 = vmatpush.msra.mxu0 %v4193
    %4318 = vmatpush.msra.mxu0 %v4189
    %4319 = vmatpush.msra.mxu0 %v4185
    %4320 = vmatpush.msra.mxu0 %v4181
    %4321 = vmatpush.msra.mxu0 %v4177
    %4322 = vmatpush.msra.mxu0 %v4173
    %4323 = vmatpush.msra.mxu0 %v4169
    %4324 = vmatpush.msra.mxu0 %v4165
    %4325 = vmatpush.msra.mxu0 %v4161
    %4326 = vmatpush.msra.mxu0 %v4157
    %4327 = vmatpush.msra.mxu0 %v4153
    %4328 = vmatpush.msra.mxu0 %v4149
    %4329 = vmatpush.msra.mxu0 %v4145
    %4330 = vmatpush.msra.mxu0 %v4141
    %4331 = vmatmul.f32.gmra.mxu0 %v4212
    %v4332 = vpop.f32.mrf.mxu0
    %v4333 = vadd.f32 %v4313, %v4332
    %4334 = vdwg.mxu0
    %4335 = vmatpush.msra.mxu0 %v4138
    %4336 = vmatpush.msra.mxu0 %v4134
    %4337 = vmatpush.msra.mxu0 %v4130
    %4338 = vmatpush.msra.mxu0 %v4126
    %4339 = vmatpush.msra.mxu0 %v4122
    %4340 = vmatpush.msra.mxu0 %v4118
    %4341 = vmatpush.msra.mxu0 %v4114
    %4342 = vmatpush.msra.mxu0 %v4110
    %4343 = vmatpush.msra.mxu0 %v4106
    %4344 = vmatpush.msra.mxu0 %v4102
    %4345 = vmatpush.msra.mxu0 %v4098
    %4346 = vmatpush.msra.mxu0 %v4094
    %4347 = vmatpush.msra.mxu0 %v4090
    %4348 = vmatpush.msra.mxu0 %v4086
    %4349 = vmatpush.msra.mxu0 %v4082
    %4350 = vmatpush.msra.mxu0 %v4078
    %4351 = vmatmul.f32.gmra.mxu0 %v4209
    %v4352 = vpop.f32.mrf.mxu0
    %v4353 = vadd.f32 0.0, %v4352
    %4354 = vdwg.mxu0
    %4355 = vmatpush.msra.mxu0 %v4202
    %4356 = vmatpush.msra.mxu0 %v4198
    %4357 = vmatpush.msra.mxu0 %v4194
    %4358 = vmatpush.msra.mxu0 %v4190
    %4359 = vmatpush.msra.mxu0 %v4186
    %4360 = vmatpush.msra.mxu0 %v4182
    %4361 = vmatpush.msra.mxu0 %v4178
    %4362 = vmatpush.msra.mxu0 %v4174
    %4363 = vmatpush.msra.mxu0 %v4170
    %4364 = vmatpush.msra.mxu0 %v4166
    %4365 = vmatpush.msra.mxu0 %v4162
    %4366 = vmatpush.msra.mxu0 %v4158
    %4367 = vmatpush.msra.mxu0 %v4154
    %4368 = vmatpush.msra.mxu0 %v4150
    %4369 = vmatpush.msra.mxu0 %v4146
    %4370 = vmatpush.msra.mxu0 %v4142
    %4371 = vmatmul.f32.gmra.mxu0 %v4212
    %v4372 = vpop.f32.mrf.mxu0
    %v4373 = vadd.f32 %v4353, %v4372
    %4374 = vdwg.mxu0
    %v4375 = vadd.f32 %v3949, %v4253
    %v4376 = vadd.f32 %v3989, %v4293
    %v4377 = vadd.f32 %v4029, %v4333
    %v4378 = vadd.f32 %v4069, %v4373
    %v4379 = vld [vmem:[#allocation3] sm:$0xf8]
    %v4380 = vld [vmem:[#allocation3 + $0x8] sm:$0xf8]
    %v4381 = vld [vmem:[#allocation3 + $0x10] sm:$0x7]
    %v4382 = vld [vmem:[#allocation3 + $0x18] sm:$0x7]
    %v4383 = vld [vmem:[%s1962] sm:$0xff]
    %v4384 = vld [vmem:[%s1962 + $0x8] sm:$0xff]
    %v4385 = vld [vmem:[%s1962 + $0x10] sm:$0xff]
    %v4386 = vld [vmem:[%s1962 + $0x18] sm:$0xff]
    %v4387 = vld [vmem:[%s1962 + $0x20] sm:$0xff]
    %v4388 = vld [vmem:[%s1962 + $0x28] sm:$0xff]
    %v4389 = vld [vmem:[%s1962 + $0x30] sm:$0xff]
    %v4390 = vld [vmem:[%s1962 + $0x38] sm:$0xff]
    %v4391 = vld [vmem:[%s1962 + $0x40] sm:$0xff]
    %v4392 = vld [vmem:[%s1962 + $0x48] sm:$0xff]
    %v4393 = vld [vmem:[%s1962 + $0x50] sm:$0xff]
    %v4394 = vld [vmem:[%s1962 + $0x58] sm:$0xff]
    %v4395 = vld [vmem:[%s1962 + $0x60] sm:$0xff]
    %v4396 = vld [vmem:[%s1962 + $0x68] sm:$0xff]
    %v4397 = vld [vmem:[%s1962 + $0x70] sm:$0xff]
    %v4398 = vld [vmem:[%s1962 + $0x78] sm:$0xff]
    %v4399 = vld [vmem:[%s1962 + $0x80] sm:$0xff]
    %v4400 = vld [vmem:[%s1962 + $0x88] sm:$0xff]
    %v4401 = vld [vmem:[%s1962 + $0x90] sm:$0xff]
    %v4402 = vld [vmem:[%s1962 + $0x98] sm:$0xff]
    %v4403 = vld [vmem:[%s1962 + $0xa0] sm:$0xff]
    %v4404 = vld [vmem:[%s1962 + $0xa8] sm:$0xff]
    %v4405 = vld [vmem:[%s1962 + $0xb0] sm:$0xff]
    %v4406 = vld [vmem:[%s1962 + $0xb8] sm:$0xff]
    %v4407 = vld [vmem:[%s1962 + $0xc0] sm:$0xff]
    %v4408 = vld [vmem:[%s1962 + $0xc8] sm:$0xff]
    %v4409 = vld [vmem:[%s1962 + $0xd0] sm:$0xff]
    %v4410 = vld [vmem:[%s1962 + $0xd8] sm:$0xff]
    %v4411 = vld [vmem:[%s1962 + $0xe0] sm:$0xff]
    %v4412 = vld [vmem:[%s1962 + $0xe8] sm:$0xff]
    %v4413 = vld [vmem:[%s1962 + $0xf0] sm:$0xff]
    %v4414 = vld [vmem:[%s1962 + $0xf8] sm:$0xff]
    %v4415 = vld [vmem:[%s1962 + $0x100] sm:$0xff]
    %v4416 = vld [vmem:[%s1962 + $0x108] sm:$0xff]
    %v4417 = vld [vmem:[%s1962 + $0x110] sm:$0xff]
    %v4418 = vld [vmem:[%s1962 + $0x118] sm:$0xff]
    %v4419 = vld [vmem:[%s1962 + $0x120] sm:$0xff]
    %v4420 = vld [vmem:[%s1962 + $0x128] sm:$0xff]
    %v4421 = vld [vmem:[%s1962 + $0x130] sm:$0xff]
    %v4422 = vld [vmem:[%s1962 + $0x138] sm:$0xff]
    %v4423 = vld [vmem:[%s1962 + $0x140] sm:$0xff]
    %v4424 = vld [vmem:[%s1962 + $0x148] sm:$0xff]
    %v4425 = vld [vmem:[%s1962 + $0x150] sm:$0xff]
    %v4426 = vld [vmem:[%s1962 + $0x158] sm:$0xff]
    %v4427 = vld [vmem:[%s1962 + $0x160] sm:$0xff]
    %v4428 = vld [vmem:[%s1962 + $0x168] sm:$0xff]
    %v4429 = vld [vmem:[%s1962 + $0x170] sm:$0xff]
    %v4430 = vld [vmem:[%s1962 + $0x178] sm:$0xff]
    %v4431 = vld [vmem:[%s1962 + $0x180] sm:$0xff]
    %v4432 = vld [vmem:[%s1962 + $0x188] sm:$0xff]
    %v4433 = vld [vmem:[%s1962 + $0x190] sm:$0xff]
    %v4434 = vld [vmem:[%s1962 + $0x198] sm:$0xff]
    %v4435 = vld [vmem:[%s1962 + $0x1a0] sm:$0xff]
    %v4436 = vld [vmem:[%s1962 + $0x1a8] sm:$0xff]
    %v4437 = vld [vmem:[%s1962 + $0x1b0] sm:$0xff]
    %v4438 = vld [vmem:[%s1962 + $0x1b8] sm:$0xff]
    %v4439 = vld [vmem:[%s1962 + $0x1c0] sm:$0xff]
    %v4440 = vld [vmem:[%s1962 + $0x1c8] sm:$0xff]
    %v4441 = vld [vmem:[%s1962 + $0x1d0] sm:$0xff]
    %v4442 = vld [vmem:[%s1962 + $0x1d8] sm:$0xff]
    %v4443 = vld [vmem:[%s1962 + $0x1e0] sm:$0xff]
    %v4444 = vld [vmem:[%s1962 + $0x1e8] sm:$0xff]
    %v4445 = vld [vmem:[%s1962 + $0x1f0] sm:$0xff]
    %v4446 = vld [vmem:[%s1962 + $0x1f8] sm:$0xff]
    %v4447 = vld [vmem:[%s1962 + $0x200] sm:$0xff]
    %v4448 = vld [vmem:[%s1962 + $0x208] sm:$0xff]
    %v4449 = vld [vmem:[%s1962 + $0x210] sm:$0xff]
    %v4450 = vld [vmem:[%s1962 + $0x218] sm:$0xff]
    %v4451 = vld [vmem:[%s1962 + $0x220] sm:$0xff]
    %v4452 = vld [vmem:[%s1962 + $0x228] sm:$0xff]
    %v4453 = vld [vmem:[%s1962 + $0x230] sm:$0xff]
    %v4454 = vld [vmem:[%s1962 + $0x238] sm:$0xff]
    %v4455 = vld [vmem:[%s1962 + $0x240] sm:$0xff]
    %v4456 = vld [vmem:[%s1962 + $0x248] sm:$0xff]
    %v4457 = vld [vmem:[%s1962 + $0x250] sm:$0xff]
    %v4458 = vld [vmem:[%s1962 + $0x258] sm:$0xff]
    %v4459 = vld [vmem:[%s1962 + $0x260] sm:$0xff]
    %v4460 = vld [vmem:[%s1962 + $0x268] sm:$0xff]
    %v4461 = vld [vmem:[%s1962 + $0x270] sm:$0xff]
    %v4462 = vld [vmem:[%s1962 + $0x278] sm:$0xff]
    %v4463 = vld [vmem:[%s1962 + $0x280] sm:$0xff]
    %v4464 = vld [vmem:[%s1962 + $0x288] sm:$0xff]
    %v4465 = vld [vmem:[%s1962 + $0x290] sm:$0xff]
    %v4466 = vld [vmem:[%s1962 + $0x298] sm:$0xff]
    %v4467 = vld [vmem:[%s1962 + $0x2a0] sm:$0xff]
    %v4468 = vld [vmem:[%s1962 + $0x2a8] sm:$0xff]
    %v4469 = vld [vmem:[%s1962 + $0x2b0] sm:$0xff]
    %v4470 = vld [vmem:[%s1962 + $0x2b8] sm:$0xff]
    %v4471 = vld [vmem:[%s1962 + $0x2c0] sm:$0xff]
    %v4472 = vld [vmem:[%s1962 + $0x2c8] sm:$0xff]
    %v4473 = vld [vmem:[%s1962 + $0x2d0] sm:$0xff]
    %v4474 = vld [vmem:[%s1962 + $0x2d8] sm:$0xff]
    %v4475 = vld [vmem:[%s1962 + $0x2e0] sm:$0xff]
    %v4476 = vld [vmem:[%s1962 + $0x2e8] sm:$0xff]
    %v4477 = vld [vmem:[%s1962 + $0x2f0] sm:$0xff]
    %v4478 = vld [vmem:[%s1962 + $0x2f8] sm:$0xff]
    %v4479 = vld [vmem:[%s1962 + $0x300] sm:$0xff]
    %v4480 = vld [vmem:[%s1962 + $0x308] sm:$0xff]
    %v4481 = vld [vmem:[%s1962 + $0x310] sm:$0xff]
    %v4482 = vld [vmem:[%s1962 + $0x318] sm:$0xff]
    %v4483 = vld [vmem:[%s1962 + $0x320] sm:$0xff]
    %v4484 = vld [vmem:[%s1962 + $0x328] sm:$0xff]
    %v4485 = vld [vmem:[%s1962 + $0x330] sm:$0xff]
    %v4486 = vld [vmem:[%s1962 + $0x338] sm:$0xff]
    %v4487 = vld [vmem:[%s1962 + $0x340] sm:$0xff]
    %v4488 = vld [vmem:[%s1962 + $0x348] sm:$0xff]
    %v4489 = vld [vmem:[%s1962 + $0x350] sm:$0xff]
    %v4490 = vld [vmem:[%s1962 + $0x358] sm:$0xff]
    %v4491 = vld [vmem:[%s1962 + $0x360] sm:$0xff]
    %v4492 = vld [vmem:[%s1962 + $0x368] sm:$0xff]
    %v4493 = vld [vmem:[%s1962 + $0x370] sm:$0xff]
    %v4494 = vld [vmem:[%s1962 + $0x378] sm:$0xff]
    %v4495 = vld [vmem:[%s1962 + $0x380] sm:$0xff]
    %v4496 = vld [vmem:[%s1962 + $0x388] sm:$0xff]
    %v4497 = vld [vmem:[%s1962 + $0x390] sm:$0xff]
    %v4498 = vld [vmem:[%s1962 + $0x398] sm:$0xff]
    %v4499 = vld [vmem:[%s1962 + $0x3a0] sm:$0xff]
    %v4500 = vld [vmem:[%s1962 + $0x3a8] sm:$0xff]
    %v4501 = vld [vmem:[%s1962 + $0x3b0] sm:$0xff]
    %v4502 = vld [vmem:[%s1962 + $0x3b8] sm:$0xff]
    %v4503 = vld [vmem:[%s1962 + $0x3c0] sm:$0xff]
    %v4504 = vld [vmem:[%s1962 + $0x3c8] sm:$0xff]
    %v4505 = vld [vmem:[%s1962 + $0x3d0] sm:$0xff]
    %v4506 = vld [vmem:[%s1962 + $0x3d8] sm:$0xff]
    %v4507 = vld [vmem:[%s1962 + $0x3e0] sm:$0xff]
    %v4508 = vld [vmem:[%s1962 + $0x3e8] sm:$0xff]
    %v4509 = vld [vmem:[%s1962 + $0x3f0] sm:$0xff]
    %v4510 = vld [vmem:[%s1962 + $0x3f8] sm:$0xff]
    %v4515 = vrot.slane %v4379, 3
    %v4516 = vrot.slane %v4381, 3
    %v4517 = vsel %vm2095, %v4515, %v4516
    %v4518 = vrot.slane %v4380, 3
    %v4519 = vrot.slane %v4382, 3
    %v4520 = vsel %vm2095, %v4518, %v4519
    %4523 = vmatpush.msra.mxu0 %v4443
    %4524 = vmatpush.msra.mxu0 %v4439
    %4525 = vmatpush.msra.mxu0 %v4435
    %4526 = vmatpush.msra.mxu0 %v4431
    %4527 = vmatpush.msra.mxu0 %v4427
    %4528 = vmatpush.msra.mxu0 %v4423
    %4529 = vmatpush.msra.mxu0 %v4419
    %4530 = vmatpush.msra.mxu0 %v4415
    %4531 = vmatpush.msra.mxu0 %v4411
    %4532 = vmatpush.msra.mxu0 %v4407
    %4533 = vmatpush.msra.mxu0 %v4403
    %4534 = vmatpush.msra.mxu0 %v4399
    %4535 = vmatpush.msra.mxu0 %v4395
    %4536 = vmatpush.msra.mxu0 %v4391
    %4537 = vmatpush.msra.mxu0 %v4387
    %4538 = vmatpush.msra.mxu0 %v4383
    %4539 = vmatmul.f32.gmra.mxu0 %v4517
    %v4540 = vpop.f32.mrf.mxu0
    %v4541 = vadd.f32 0.0, %v4540
    %4542 = vdwg.mxu0
    %4543 = vmatpush.msra.mxu0 %v4507
    %4544 = vmatpush.msra.mxu0 %v4503
    %4545 = vmatpush.msra.mxu0 %v4499
    %4546 = vmatpush.msra.mxu0 %v4495
    %4547 = vmatpush.msra.mxu0 %v4491
    %4548 = vmatpush.msra.mxu0 %v4487
    %4549 = vmatpush.msra.mxu0 %v4483
    %4550 = vmatpush.msra.mxu0 %v4479
    %4551 = vmatpush.msra.mxu0 %v4475
    %4552 = vmatpush.msra.mxu0 %v4471
    %4553 = vmatpush.msra.mxu0 %v4467
    %4554 = vmatpush.msra.mxu0 %v4463
    %4555 = vmatpush.msra.mxu0 %v4459
    %4556 = vmatpush.msra.mxu0 %v4455
    %4557 = vmatpush.msra.mxu0 %v4451
    %4558 = vmatpush.msra.mxu0 %v4447
    %4559 = vmatmul.f32.gmra.mxu0 %v4520
    %v4560 = vpop.f32.mrf.mxu0
    %v4561 = vadd.f32 %v4541, %v4560
    %4562 = vdwg.mxu0
    %4563 = vmatpush.msra.mxu0 %v4444
    %4564 = vmatpush.msra.mxu0 %v4440
    %4565 = vmatpush.msra.mxu0 %v4436
    %4566 = vmatpush.msra.mxu0 %v4432
    %4567 = vmatpush.msra.mxu0 %v4428
    %4568 = vmatpush.msra.mxu0 %v4424
    %4569 = vmatpush.msra.mxu0 %v4420
    %4570 = vmatpush.msra.mxu0 %v4416
    %4571 = vmatpush.msra.mxu0 %v4412
    %4572 = vmatpush.msra.mxu0 %v4408
    %4573 = vmatpush.msra.mxu0 %v4404
    %4574 = vmatpush.msra.mxu0 %v4400
    %4575 = vmatpush.msra.mxu0 %v4396
    %4576 = vmatpush.msra.mxu0 %v4392
    %4577 = vmatpush.msra.mxu0 %v4388
    %4578 = vmatpush.msra.mxu0 %v4384
    %4579 = vmatmul.f32.gmra.mxu0 %v4517
    %v4580 = vpop.f32.mrf.mxu0
    %v4581 = vadd.f32 0.0, %v4580
    %4582 = vdwg.mxu0
    %4583 = vmatpush.msra.mxu0 %v4508
    %4584 = vmatpush.msra.mxu0 %v4504
    %4585 = vmatpush.msra.mxu0 %v4500
    %4586 = vmatpush.msra.mxu0 %v4496
    %4587 = vmatpush.msra.mxu0 %v4492
    %4588 = vmatpush.msra.mxu0 %v4488
    %4589 = vmatpush.msra.mxu0 %v4484
    %4590 = vmatpush.msra.mxu0 %v4480
    %4591 = vmatpush.msra.mxu0 %v4476
    %4592 = vmatpush.msra.mxu0 %v4472
    %4593 = vmatpush.msra.mxu0 %v4468
    %4594 = vmatpush.msra.mxu0 %v4464
    %4595 = vmatpush.msra.mxu0 %v4460
    %4596 = vmatpush.msra.mxu0 %v4456
    %4597 = vmatpush.msra.mxu0 %v4452
    %4598 = vmatpush.msra.mxu0 %v4448
    %4599 = vmatmul.f32.gmra.mxu0 %v4520
    %v4600 = vpop.f32.mrf.mxu0
    %v4601 = vadd.f32 %v4581, %v4600
    %4602 = vdwg.mxu0
    %4603 = vmatpush.msra.mxu0 %v4445
    %4604 = vmatpush.msra.mxu0 %v4441
    %4605 = vmatpush.msra.mxu0 %v4437
    %4606 = vmatpush.msra.mxu0 %v4433
    %4607 = vmatpush.msra.mxu0 %v4429
    %4608 = vmatpush.msra.mxu0 %v4425
    %4609 = vmatpush.msra.mxu0 %v4421
    %4610 = vmatpush.msra.mxu0 %v4417
    %4611 = vmatpush.msra.mxu0 %v4413
    %4612 = vmatpush.msra.mxu0 %v4409
    %4613 = vmatpush.msra.mxu0 %v4405
    %4614 = vmatpush.msra.mxu0 %v4401
    %4615 = vmatpush.msra.mxu0 %v4397
    %4616 = vmatpush.msra.mxu0 %v4393
    %4617 = vmatpush.msra.mxu0 %v4389
    %4618 = vmatpush.msra.mxu0 %v4385
    %4619 = vmatmul.f32.gmra.mxu0 %v4517
    %v4620 = vpop.f32.mrf.mxu0
    %v4621 = vadd.f32 0.0, %v4620
    %4622 = vdwg.mxu0
    %4623 = vmatpush.msra.mxu0 %v4509
    %4624 = vmatpush.msra.mxu0 %v4505
    %4625 = vmatpush.msra.mxu0 %v4501
    %4626 = vmatpush.msra.mxu0 %v4497
    %4627 = vmatpush.msra.mxu0 %v4493
    %4628 = vmatpush.msra.mxu0 %v4489
    %4629 = vmatpush.msra.mxu0 %v4485
    %4630 = vmatpush.msra.mxu0 %v4481
    %4631 = vmatpush.msra.mxu0 %v4477
    %4632 = vmatpush.msra.mxu0 %v4473
    %4633 = vmatpush.msra.mxu0 %v4469
    %4634 = vmatpush.msra.mxu0 %v4465
    %4635 = vmatpush.msra.mxu0 %v4461
    %4636 = vmatpush.msra.mxu0 %v4457
    %4637 = vmatpush.msra.mxu0 %v4453
    %4638 = vmatpush.msra.mxu0 %v4449
    %4639 = vmatmul.f32.gmra.mxu0 %v4520
    %v4640 = vpop.f32.mrf.mxu0
    %v4641 = vadd.f32 %v4621, %v4640
    %4642 = vdwg.mxu0
    %4643 = vmatpush.msra.mxu0 %v4446
    %4644 = vmatpush.msra.mxu0 %v4442
    %4645 = vmatpush.msra.mxu0 %v4438
    %4646 = vmatpush.msra.mxu0 %v4434
    %4647 = vmatpush.msra.mxu0 %v4430
    %4648 = vmatpush.msra.mxu0 %v4426
    %4649 = vmatpush.msra.mxu0 %v4422
    %4650 = vmatpush.msra.mxu0 %v4418
    %4651 = vmatpush.msra.mxu0 %v4414
    %4652 = vmatpush.msra.mxu0 %v4410
    %4653 = vmatpush.msra.mxu0 %v4406
    %4654 = vmatpush.msra.mxu0 %v4402
    %4655 = vmatpush.msra.mxu0 %v4398
    %4656 = vmatpush.msra.mxu0 %v4394
    %4657 = vmatpush.msra.mxu0 %v4390
    %4658 = vmatpush.msra.mxu0 %v4386
    %4659 = vmatmul.f32.gmra.mxu0 %v4517
    %v4660 = vpop.f32.mrf.mxu0
    %v4661 = vadd.f32 0.0, %v4660
    %4662 = vdwg.mxu0
    %4663 = vmatpush.msra.mxu0 %v4510
    %4664 = vmatpush.msra.mxu0 %v4506
    %4665 = vmatpush.msra.mxu0 %v4502
    %4666 = vmatpush.msra.mxu0 %v4498
    %4667 = vmatpush.msra.mxu0 %v4494
    %4668 = vmatpush.msra.mxu0 %v4490
    %4669 = vmatpush.msra.mxu0 %v4486
    %4670 = vmatpush.msra.mxu0 %v4482
    %4671 = vmatpush.msra.mxu0 %v4478
    %4672 = vmatpush.msra.mxu0 %v4474
    %4673 = vmatpush.msra.mxu0 %v4470
    %4674 = vmatpush.msra.mxu0 %v4466
    %4675 = vmatpush.msra.mxu0 %v4462
    %4676 = vmatpush.msra.mxu0 %v4458
    %4677 = vmatpush.msra.mxu0 %v4454
    %4678 = vmatpush.msra.mxu0 %v4450
    %4679 = vmatmul.f32.gmra.mxu0 %v4520
    %v4680 = vpop.f32.mrf.mxu0
    %v4681 = vadd.f32 %v4661, %v4680
    %4682 = vdwg.mxu0
    %v4683 = vadd.f32 %v4375, %v4561
    %v4684 = vadd.f32 %v4376, %v4601
    %v4685 = vadd.f32 %v4377, %v4641
    %v4686 = vadd.f32 %v4378, %v4681
    %v4687 = vld [vmem:[#allocation3] sm:$0xf0]
    %v4688 = vld [vmem:[#allocation3 + $0x8] sm:$0xf0]
    %v4689 = vld [vmem:[#allocation3 + $0x10] sm:$0xf]
    %v4690 = vld [vmem:[#allocation3 + $0x18] sm:$0xf]
    %v4691 = vld [vmem:[%s2272] sm:$0xff]
    %v4692 = vld [vmem:[%s2272 + $0x8] sm:$0xff]
    %v4693 = vld [vmem:[%s2272 + $0x10] sm:$0xff]
    %v4694 = vld [vmem:[%s2272 + $0x18] sm:$0xff]
    %v4695 = vld [vmem:[%s2272 + $0x20] sm:$0xff]
    %v4696 = vld [vmem:[%s2272 + $0x28] sm:$0xff]
    %v4697 = vld [vmem:[%s2272 + $0x30] sm:$0xff]
    %v4698 = vld [vmem:[%s2272 + $0x38] sm:$0xff]
    %v4699 = vld [vmem:[%s2272 + $0x40] sm:$0xff]
    %v4700 = vld [vmem:[%s2272 + $0x48] sm:$0xff]
    %v4701 = vld [vmem:[%s2272 + $0x50] sm:$0xff]
    %v4702 = vld [vmem:[%s2272 + $0x58] sm:$0xff]
    %v4703 = vld [vmem:[%s2272 + $0x60] sm:$0xff]
    %v4704 = vld [vmem:[%s2272 + $0x68] sm:$0xff]
    %v4705 = vld [vmem:[%s2272 + $0x70] sm:$0xff]
    %v4706 = vld [vmem:[%s2272 + $0x78] sm:$0xff]
    %v4707 = vld [vmem:[%s2272 + $0x80] sm:$0xff]
    %v4708 = vld [vmem:[%s2272 + $0x88] sm:$0xff]
    %v4709 = vld [vmem:[%s2272 + $0x90] sm:$0xff]
    %v4710 = vld [vmem:[%s2272 + $0x98] sm:$0xff]
    %v4711 = vld [vmem:[%s2272 + $0xa0] sm:$0xff]
    %v4712 = vld [vmem:[%s2272 + $0xa8] sm:$0xff]
    %v4713 = vld [vmem:[%s2272 + $0xb0] sm:$0xff]
    %v4714 = vld [vmem:[%s2272 + $0xb8] sm:$0xff]
    %v4715 = vld [vmem:[%s2272 + $0xc0] sm:$0xff]
    %v4716 = vld [vmem:[%s2272 + $0xc8] sm:$0xff]
    %v4717 = vld [vmem:[%s2272 + $0xd0] sm:$0xff]
    %v4718 = vld [vmem:[%s2272 + $0xd8] sm:$0xff]
    %v4719 = vld [vmem:[%s2272 + $0xe0] sm:$0xff]
    %v4720 = vld [vmem:[%s2272 + $0xe8] sm:$0xff]
    %v4721 = vld [vmem:[%s2272 + $0xf0] sm:$0xff]
    %v4722 = vld [vmem:[%s2272 + $0xf8] sm:$0xff]
    %v4723 = vld [vmem:[%s2272 + $0x100] sm:$0xff]
    %v4724 = vld [vmem:[%s2272 + $0x108] sm:$0xff]
    %v4725 = vld [vmem:[%s2272 + $0x110] sm:$0xff]
    %v4726 = vld [vmem:[%s2272 + $0x118] sm:$0xff]
    %v4727 = vld [vmem:[%s2272 + $0x120] sm:$0xff]
    %v4728 = vld [vmem:[%s2272 + $0x128] sm:$0xff]
    %v4729 = vld [vmem:[%s2272 + $0x130] sm:$0xff]
    %v4730 = vld [vmem:[%s2272 + $0x138] sm:$0xff]
    %v4731 = vld [vmem:[%s2272 + $0x140] sm:$0xff]
    %v4732 = vld [vmem:[%s2272 + $0x148] sm:$0xff]
    %v4733 = vld [vmem:[%s2272 + $0x150] sm:$0xff]
    %v4734 = vld [vmem:[%s2272 + $0x158] sm:$0xff]
    %v4735 = vld [vmem:[%s2272 + $0x160] sm:$0xff]
    %v4736 = vld [vmem:[%s2272 + $0x168] sm:$0xff]
    %v4737 = vld [vmem:[%s2272 + $0x170] sm:$0xff]
    %v4738 = vld [vmem:[%s2272 + $0x178] sm:$0xff]
    %v4739 = vld [vmem:[%s2272 + $0x180] sm:$0xff]
    %v4740 = vld [vmem:[%s2272 + $0x188] sm:$0xff]
    %v4741 = vld [vmem:[%s2272 + $0x190] sm:$0xff]
    %v4742 = vld [vmem:[%s2272 + $0x198] sm:$0xff]
    %v4743 = vld [vmem:[%s2272 + $0x1a0] sm:$0xff]
    %v4744 = vld [vmem:[%s2272 + $0x1a8] sm:$0xff]
    %v4745 = vld [vmem:[%s2272 + $0x1b0] sm:$0xff]
    %v4746 = vld [vmem:[%s2272 + $0x1b8] sm:$0xff]
    %v4747 = vld [vmem:[%s2272 + $0x1c0] sm:$0xff]
    %v4748 = vld [vmem:[%s2272 + $0x1c8] sm:$0xff]
    %v4749 = vld [vmem:[%s2272 + $0x1d0] sm:$0xff]
    %v4750 = vld [vmem:[%s2272 + $0x1d8] sm:$0xff]
    %v4751 = vld [vmem:[%s2272 + $0x1e0] sm:$0xff]
    %v4752 = vld [vmem:[%s2272 + $0x1e8] sm:$0xff]
    %v4753 = vld [vmem:[%s2272 + $0x1f0] sm:$0xff]
    %v4754 = vld [vmem:[%s2272 + $0x1f8] sm:$0xff]
    %v4755 = vld [vmem:[%s2272 + $0x200] sm:$0xff]
    %v4756 = vld [vmem:[%s2272 + $0x208] sm:$0xff]
    %v4757 = vld [vmem:[%s2272 + $0x210] sm:$0xff]
    %v4758 = vld [vmem:[%s2272 + $0x218] sm:$0xff]
    %v4759 = vld [vmem:[%s2272 + $0x220] sm:$0xff]
    %v4760 = vld [vmem:[%s2272 + $0x228] sm:$0xff]
    %v4761 = vld [vmem:[%s2272 + $0x230] sm:$0xff]
    %v4762 = vld [vmem:[%s2272 + $0x238] sm:$0xff]
    %v4763 = vld [vmem:[%s2272 + $0x240] sm:$0xff]
    %v4764 = vld [vmem:[%s2272 + $0x248] sm:$0xff]
    %v4765 = vld [vmem:[%s2272 + $0x250] sm:$0xff]
    %v4766 = vld [vmem:[%s2272 + $0x258] sm:$0xff]
    %v4767 = vld [vmem:[%s2272 + $0x260] sm:$0xff]
    %v4768 = vld [vmem:[%s2272 + $0x268] sm:$0xff]
    %v4769 = vld [vmem:[%s2272 + $0x270] sm:$0xff]
    %v4770 = vld [vmem:[%s2272 + $0x278] sm:$0xff]
    %v4771 = vld [vmem:[%s2272 + $0x280] sm:$0xff]
    %v4772 = vld [vmem:[%s2272 + $0x288] sm:$0xff]
    %v4773 = vld [vmem:[%s2272 + $0x290] sm:$0xff]
    %v4774 = vld [vmem:[%s2272 + $0x298] sm:$0xff]
    %v4775 = vld [vmem:[%s2272 + $0x2a0] sm:$0xff]
    %v4776 = vld [vmem:[%s2272 + $0x2a8] sm:$0xff]
    %v4777 = vld [vmem:[%s2272 + $0x2b0] sm:$0xff]
    %v4778 = vld [vmem:[%s2272 + $0x2b8] sm:$0xff]
    %v4779 = vld [vmem:[%s2272 + $0x2c0] sm:$0xff]
    %v4780 = vld [vmem:[%s2272 + $0x2c8] sm:$0xff]
    %v4781 = vld [vmem:[%s2272 + $0x2d0] sm:$0xff]
    %v4782 = vld [vmem:[%s2272 + $0x2d8] sm:$0xff]
    %v4783 = vld [vmem:[%s2272 + $0x2e0] sm:$0xff]
    %v4784 = vld [vmem:[%s2272 + $0x2e8] sm:$0xff]
    %v4785 = vld [vmem:[%s2272 + $0x2f0] sm:$0xff]
    %v4786 = vld [vmem:[%s2272 + $0x2f8] sm:$0xff]
    %v4787 = vld [vmem:[%s2272 + $0x300] sm:$0xff]
    %v4788 = vld [vmem:[%s2272 + $0x308] sm:$0xff]
    %v4789 = vld [vmem:[%s2272 + $0x310] sm:$0xff]
    %v4790 = vld [vmem:[%s2272 + $0x318] sm:$0xff]
    %v4791 = vld [vmem:[%s2272 + $0x320] sm:$0xff]
    %v4792 = vld [vmem:[%s2272 + $0x328] sm:$0xff]
    %v4793 = vld [vmem:[%s2272 + $0x330] sm:$0xff]
    %v4794 = vld [vmem:[%s2272 + $0x338] sm:$0xff]
    %v4795 = vld [vmem:[%s2272 + $0x340] sm:$0xff]
    %v4796 = vld [vmem:[%s2272 + $0x348] sm:$0xff]
    %v4797 = vld [vmem:[%s2272 + $0x350] sm:$0xff]
    %v4798 = vld [vmem:[%s2272 + $0x358] sm:$0xff]
    %v4799 = vld [vmem:[%s2272 + $0x360] sm:$0xff]
    %v4800 = vld [vmem:[%s2272 + $0x368] sm:$0xff]
    %v4801 = vld [vmem:[%s2272 + $0x370] sm:$0xff]
    %v4802 = vld [vmem:[%s2272 + $0x378] sm:$0xff]
    %v4803 = vld [vmem:[%s2272 + $0x380] sm:$0xff]
    %v4804 = vld [vmem:[%s2272 + $0x388] sm:$0xff]
    %v4805 = vld [vmem:[%s2272 + $0x390] sm:$0xff]
    %v4806 = vld [vmem:[%s2272 + $0x398] sm:$0xff]
    %v4807 = vld [vmem:[%s2272 + $0x3a0] sm:$0xff]
    %v4808 = vld [vmem:[%s2272 + $0x3a8] sm:$0xff]
    %v4809 = vld [vmem:[%s2272 + $0x3b0] sm:$0xff]
    %v4810 = vld [vmem:[%s2272 + $0x3b8] sm:$0xff]
    %v4811 = vld [vmem:[%s2272 + $0x3c0] sm:$0xff]
    %v4812 = vld [vmem:[%s2272 + $0x3c8] sm:$0xff]
    %v4813 = vld [vmem:[%s2272 + $0x3d0] sm:$0xff]
    %v4814 = vld [vmem:[%s2272 + $0x3d8] sm:$0xff]
    %v4815 = vld [vmem:[%s2272 + $0x3e0] sm:$0xff]
    %v4816 = vld [vmem:[%s2272 + $0x3e8] sm:$0xff]
    %v4817 = vld [vmem:[%s2272 + $0x3f0] sm:$0xff]
    %v4818 = vld [vmem:[%s2272 + $0x3f8] sm:$0xff]
    %v4823 = vrot.slane %v4687, 4
    %v4824 = vrot.slane %v4689, 4
    %v4825 = vsel %vm199, %v4823, %v4824
    %v4826 = vrot.slane %v4688, 4
    %v4827 = vrot.slane %v4690, 4
    %v4828 = vsel %vm199, %v4826, %v4827
    %4831 = vmatpush.msra.mxu0 %v4751
    %4832 = vmatpush.msra.mxu0 %v4747
    %4833 = vmatpush.msra.mxu0 %v4743
    %4834 = vmatpush.msra.mxu0 %v4739
    %4835 = vmatpush.msra.mxu0 %v4735
    %4836 = vmatpush.msra.mxu0 %v4731
    %4837 = vmatpush.msra.mxu0 %v4727
    %4838 = vmatpush.msra.mxu0 %v4723
    %4839 = vmatpush.msra.mxu0 %v4719
    %4840 = vmatpush.msra.mxu0 %v4715
    %4841 = vmatpush.msra.mxu0 %v4711
    %4842 = vmatpush.msra.mxu0 %v4707
    %4843 = vmatpush.msra.mxu0 %v4703
    %4844 = vmatpush.msra.mxu0 %v4699
    %4845 = vmatpush.msra.mxu0 %v4695
    %4846 = vmatpush.msra.mxu0 %v4691
    %4847 = vmatmul.f32.gmra.mxu0 %v4825
    %v4848 = vpop.f32.mrf.mxu0
    %v4849 = vadd.f32 0.0, %v4848
    %4850 = vdwg.mxu0
    %4851 = vmatpush.msra.mxu0 %v4815
    %4852 = vmatpush.msra.mxu0 %v4811
    %4853 = vmatpush.msra.mxu0 %v4807
    %4854 = vmatpush.msra.mxu0 %v4803
    %4855 = vmatpush.msra.mxu0 %v4799
    %4856 = vmatpush.msra.mxu0 %v4795
    %4857 = vmatpush.msra.mxu0 %v4791
    %4858 = vmatpush.msra.mxu0 %v4787
    %4859 = vmatpush.msra.mxu0 %v4783
    %4860 = vmatpush.msra.mxu0 %v4779
    %4861 = vmatpush.msra.mxu0 %v4775
    %4862 = vmatpush.msra.mxu0 %v4771
    %4863 = vmatpush.msra.mxu0 %v4767
    %4864 = vmatpush.msra.mxu0 %v4763
    %4865 = vmatpush.msra.mxu0 %v4759
    %4866 = vmatpush.msra.mxu0 %v4755
    %4867 = vmatmul.f32.gmra.mxu0 %v4828
    %v4868 = vpop.f32.mrf.mxu0
    %v4869 = vadd.f32 %v4849, %v4868
    %4870 = vdwg.mxu0
    %4871 = vmatpush.msra.mxu0 %v4752
    %4872 = vmatpush.msra.mxu0 %v4748
    %4873 = vmatpush.msra.mxu0 %v4744
    %4874 = vmatpush.msra.mxu0 %v4740
    %4875 = vmatpush.msra.mxu0 %v4736
    %4876 = vmatpush.msra.mxu0 %v4732
    %4877 = vmatpush.msra.mxu0 %v4728
    %4878 = vmatpush.msra.mxu0 %v4724
    %4879 = vmatpush.msra.mxu0 %v4720
    %4880 = vmatpush.msra.mxu0 %v4716
    %4881 = vmatpush.msra.mxu0 %v4712
    %4882 = vmatpush.msra.mxu0 %v4708
    %4883 = vmatpush.msra.mxu0 %v4704
    %4884 = vmatpush.msra.mxu0 %v4700
    %4885 = vmatpush.msra.mxu0 %v4696
    %4886 = vmatpush.msra.mxu0 %v4692
    %4887 = vmatmul.f32.gmra.mxu0 %v4825
    %v4888 = vpop.f32.mrf.mxu0
    %v4889 = vadd.f32 0.0, %v4888
    %4890 = vdwg.mxu0
    %4891 = vmatpush.msra.mxu0 %v4816
    %4892 = vmatpush.msra.mxu0 %v4812
    %4893 = vmatpush.msra.mxu0 %v4808
    %4894 = vmatpush.msra.mxu0 %v4804
    %4895 = vmatpush.msra.mxu0 %v4800
    %4896 = vmatpush.msra.mxu0 %v4796
    %4897 = vmatpush.msra.mxu0 %v4792
    %4898 = vmatpush.msra.mxu0 %v4788
    %4899 = vmatpush.msra.mxu0 %v4784
    %4900 = vmatpush.msra.mxu0 %v4780
    %4901 = vmatpush.msra.mxu0 %v4776
    %4902 = vmatpush.msra.mxu0 %v4772
    %4903 = vmatpush.msra.mxu0 %v4768
    %4904 = vmatpush.msra.mxu0 %v4764
    %4905 = vmatpush.msra.mxu0 %v4760
    %4906 = vmatpush.msra.mxu0 %v4756
    %4907 = vmatmul.f32.gmra.mxu0 %v4828
    %v4908 = vpop.f32.mrf.mxu0
    %v4909 = vadd.f32 %v4889, %v4908
    %4910 = vdwg.mxu0
    %4911 = vmatpush.msra.mxu0 %v4753
    %4912 = vmatpush.msra.mxu0 %v4749
    %4913 = vmatpush.msra.mxu0 %v4745
    %4914 = vmatpush.msra.mxu0 %v4741
    %4915 = vmatpush.msra.mxu0 %v4737
    %4916 = vmatpush.msra.mxu0 %v4733
    %4917 = vmatpush.msra.mxu0 %v4729
    %4918 = vmatpush.msra.mxu0 %v4725
    %4919 = vmatpush.msra.mxu0 %v4721
    %4920 = vmatpush.msra.mxu0 %v4717
    %4921 = vmatpush.msra.mxu0 %v4713
    %4922 = vmatpush.msra.mxu0 %v4709
    %4923 = vmatpush.msra.mxu0 %v4705
    %4924 = vmatpush.msra.mxu0 %v4701
    %4925 = vmatpush.msra.mxu0 %v4697
    %4926 = vmatpush.msra.mxu0 %v4693
    %4927 = vmatmul.f32.gmra.mxu0 %v4825
    %v4928 = vpop.f32.mrf.mxu0
    %v4929 = vadd.f32 0.0, %v4928
    %4930 = vdwg.mxu0
    %4931 = vmatpush.msra.mxu0 %v4817
    %4932 = vmatpush.msra.mxu0 %v4813
    %4933 = vmatpush.msra.mxu0 %v4809
    %4934 = vmatpush.msra.mxu0 %v4805
    %4935 = vmatpush.msra.mxu0 %v4801
    %4936 = vmatpush.msra.mxu0 %v4797
    %4937 = vmatpush.msra.mxu0 %v4793
    %4938 = vmatpush.msra.mxu0 %v4789
    %4939 = vmatpush.msra.mxu0 %v4785
    %4940 = vmatpush.msra.mxu0 %v4781
    %4941 = vmatpush.msra.mxu0 %v4777
    %4942 = vmatpush.msra.mxu0 %v4773
    %4943 = vmatpush.msra.mxu0 %v4769
    %4944 = vmatpush.msra.mxu0 %v4765
    %4945 = vmatpush.msra.mxu0 %v4761
    %4946 = vmatpush.msra.mxu0 %v4757
    %4947 = vmatmul.f32.gmra.mxu0 %v4828
    %v4948 = vpop.f32.mrf.mxu0
    %v4949 = vadd.f32 %v4929, %v4948
    %4950 = vdwg.mxu0
    %4951 = vmatpush.msra.mxu0 %v4754
    %4952 = vmatpush.msra.mxu0 %v4750
    %4953 = vmatpush.msra.mxu0 %v4746
    %4954 = vmatpush.msra.mxu0 %v4742
    %4955 = vmatpush.msra.mxu0 %v4738
    %4956 = vmatpush.msra.mxu0 %v4734
    %4957 = vmatpush.msra.mxu0 %v4730
    %4958 = vmatpush.msra.mxu0 %v4726
    %4959 = vmatpush.msra.mxu0 %v4722
    %4960 = vmatpush.msra.mxu0 %v4718
    %4961 = vmatpush.msra.mxu0 %v4714
    %4962 = vmatpush.msra.mxu0 %v4710
    %4963 = vmatpush.msra.mxu0 %v4706
    %4964 = vmatpush.msra.mxu0 %v4702
    %4965 = vmatpush.msra.mxu0 %v4698
    %4966 = vmatpush.msra.mxu0 %v4694
    %4967 = vmatmul.f32.gmra.mxu0 %v4825
    %v4968 = vpop.f32.mrf.mxu0
    %v4969 = vadd.f32 0.0, %v4968
    %4970 = vdwg.mxu0
    %4971 = vmatpush.msra.mxu0 %v4818
    %4972 = vmatpush.msra.mxu0 %v4814
    %4973 = vmatpush.msra.mxu0 %v4810
    %4974 = vmatpush.msra.mxu0 %v4806
    %4975 = vmatpush.msra.mxu0 %v4802
    %4976 = vmatpush.msra.mxu0 %v4798
    %4977 = vmatpush.msra.mxu0 %v4794
    %4978 = vmatpush.msra.mxu0 %v4790
    %4979 = vmatpush.msra.mxu0 %v4786
    %4980 = vmatpush.msra.mxu0 %v4782
    %4981 = vmatpush.msra.mxu0 %v4778
    %4982 = vmatpush.msra.mxu0 %v4774
    %4983 = vmatpush.msra.mxu0 %v4770
    %4984 = vmatpush.msra.mxu0 %v4766
    %4985 = vmatpush.msra.mxu0 %v4762
    %4986 = vmatpush.msra.mxu0 %v4758
    %4987 = vmatmul.f32.gmra.mxu0 %v4828
    %v4988 = vpop.f32.mrf.mxu0
    %v4989 = vadd.f32 %v4969, %v4988
    %4990 = vdwg.mxu0
    %v4991 = vadd.f32 %v4683, %v4869
    %v4992 = vadd.f32 %v4684, %v4909
    %v4993 = vadd.f32 %v4685, %v4949
    %v4994 = vadd.f32 %v4686, %v4989
    %v4995 = vld [vmem:[#allocation15] sm:$0x3]
    %v4997 = vperm.slane %v4995, 0
    %v4998 = vperm.slane %v4995, 1
    %v5001 = vadd.f32 %v4991, %v4997
    %v5002 = vadd.f32 %v4992, %v4998
    %v5003 = vmax.f32 %v5001, 0.0
    %v5004 = vmax.f32 %v5002, 0.0
    %v5005 = vadd.f32 %v4993, %v4997
    %v5006 = vadd.f32 %v4994, %v4998
    %v5007 = vmax.f32 %v5005, 0.0
    %v5008 = vmax.f32 %v5006, 0.0
    %v5009 = vmax.f32 %v5003, %v5007
    %v5010 = vmax.f32 %v5004, %v5008
    %5011 = vst [vmem:[#allocation4] sm:$0xff] %v5009
    %5012 = vst [vmem:[#allocation4 + $0x8] sm:$0xff] %v5010
    %v5013 = vld [vmem:[#allocation4] ss:$8 sm:$0x3]
    %v5014 = vld [vmem:[%s2596] ss:$8 sm:$0x3]
    %v5015 = vmax.f32 %v5013, %v5014
    %s5016 = scalar_lea.vmem [#allocation5], 1
    %5017 = vst.msk [vmem:[%s5016] ss:$2 sm:$0x3] %vm961, %v5015
    %v5018 = vld [vmem:[%s2600] ss:$8 sm:$0x3]
    %v5019 = vld [vmem:[%s2602] ss:$8 sm:$0x3]
    %v5020 = vmax.f32 %v5018, %v5019
    %s5021 = scalar_lea.vmem [#allocation6], 1
    %5022 = vst.msk [vmem:[%s5021] ss:$2 sm:$0x3] %vm961, %v5020
    %v5023 = vld [vmem:[%s2606] ss:$8 sm:$0x3]
    %v5024 = vld [vmem:[%s2608] ss:$8 sm:$0x3]
    %v5025 = vmax.f32 %v5023, %v5024
    %s5026 = scalar_lea.vmem [#allocation7], 1
    %5027 = vst.msk [vmem:[%s5026] ss:$2 sm:$0x3] %vm961, %v5025
    %v5028 = vld [vmem:[%s2612] ss:$8 sm:$0x3]
    %v5029 = vld [vmem:[%s2614] ss:$8 sm:$0x3]
    %v5030 = vmax.f32 %v5028, %v5029
    %s5031 = scalar_lea.vmem [#allocation8], 1
    %5032 = vst.msk [vmem:[%s5031] ss:$2 sm:$0x3] %vm961, %v5030
    %v5033 = vld [vmem:[#allocation18] sm:$0xf]
    %v5034 = vld [vmem:[#allocation5] sm:$0xf]
    %v5035 = vld [vmem:[#allocation17] sm:$0xff]
    %v5036 = vld [vmem:[#allocation17 + $0x8] sm:$0xff]
    %v5037 = vld [vmem:[#allocation17 + $0x10] sm:$0xff]
    %v5038 = vld [vmem:[#allocation17 + $0x18] sm:$0xff]
    %v5039 = vld [vmem:[#allocation17 + $0x20] sm:$0xff]
    %v5040 = vld [vmem:[#allocation17 + $0x28] sm:$0xff]
    %v5041 = vld [vmem:[#allocation17 + $0x30] sm:$0xff]
    %v5042 = vld [vmem:[#allocation17 + $0x38] sm:$0xff]
    %v5043 = vld [vmem:[#allocation17 + $0x40] sm:$0xff]
    %v5044 = vld [vmem:[#allocation17 + $0x48] sm:$0xff]
    %v5045 = vld [vmem:[#allocation17 + $0x50] sm:$0xff]
    %v5046 = vld [vmem:[#allocation17 + $0x58] sm:$0xff]
    %v5047 = vld [vmem:[#allocation17 + $0x60] sm:$0xff]
    %v5048 = vld [vmem:[#allocation17 + $0x68] sm:$0xff]
    %v5049 = vld [vmem:[#allocation17 + $0x70] sm:$0xff]
    %v5050 = vld [vmem:[#allocation17 + $0x78] sm:$0xff]
    %v5051 = vld [vmem:[#allocation17 + $0x80] sm:$0xff]
    %v5052 = vld [vmem:[#allocation17 + $0x88] sm:$0xff]
    %v5053 = vld [vmem:[#allocation17 + $0x90] sm:$0xff]
    %v5054 = vld [vmem:[#allocation17 + $0x98] sm:$0xff]
    %v5055 = vld [vmem:[#allocation17 + $0xa0] sm:$0xff]
    %v5056 = vld [vmem:[#allocation17 + $0xa8] sm:$0xff]
    %v5057 = vld [vmem:[#allocation17 + $0xb0] sm:$0xff]
    %v5058 = vld [vmem:[#allocation17 + $0xb8] sm:$0xff]
    %v5059 = vld [vmem:[#allocation17 + $0xc0] sm:$0xff]
    %v5060 = vld [vmem:[#allocation17 + $0xc8] sm:$0xff]
    %v5061 = vld [vmem:[#allocation17 + $0xd0] sm:$0xff]
    %v5062 = vld [vmem:[#allocation17 + $0xd8] sm:$0xff]
    %v5063 = vld [vmem:[#allocation17 + $0xe0] sm:$0xff]
    %v5064 = vld [vmem:[#allocation17 + $0xe8] sm:$0xff]
    %v5065 = vld [vmem:[#allocation17 + $0xf0] sm:$0xff]
    %v5066 = vld [vmem:[#allocation17 + $0xf8] sm:$0xff]
    %v5067 = vld [vmem:[#allocation17 + $0x100] sm:$0xff]
    %v5068 = vld [vmem:[#allocation17 + $0x108] sm:$0xff]
    %v5069 = vld [vmem:[#allocation17 + $0x110] sm:$0xff]
    %v5070 = vld [vmem:[#allocation17 + $0x118] sm:$0xff]
    %v5071 = vld [vmem:[#allocation17 + $0x120] sm:$0xff]
    %v5072 = vld [vmem:[#allocation17 + $0x128] sm:$0xff]
    %v5073 = vld [vmem:[#allocation17 + $0x130] sm:$0xff]
    %v5074 = vld [vmem:[#allocation17 + $0x138] sm:$0xff]
    %v5075 = vld [vmem:[#allocation17 + $0x140] sm:$0xff]
    %v5076 = vld [vmem:[#allocation17 + $0x148] sm:$0xff]
    %v5077 = vld [vmem:[#allocation17 + $0x150] sm:$0xff]
    %v5078 = vld [vmem:[#allocation17 + $0x158] sm:$0xff]
    %v5079 = vld [vmem:[#allocation17 + $0x160] sm:$0xff]
    %v5080 = vld [vmem:[#allocation17 + $0x168] sm:$0xff]
    %v5081 = vld [vmem:[#allocation17 + $0x170] sm:$0xff]
    %v5082 = vld [vmem:[#allocation17 + $0x178] sm:$0xff]
    %v5083 = vld [vmem:[#allocation17 + $0x180] sm:$0xff]
    %v5084 = vld [vmem:[#allocation17 + $0x188] sm:$0xff]
    %v5085 = vld [vmem:[#allocation17 + $0x190] sm:$0xff]
    %v5086 = vld [vmem:[#allocation17 + $0x198] sm:$0xff]
    %v5087 = vld [vmem:[#allocation17 + $0x1a0] sm:$0xff]
    %v5088 = vld [vmem:[#allocation17 + $0x1a8] sm:$0xff]
    %v5089 = vld [vmem:[#allocation17 + $0x1b0] sm:$0xff]
    %v5090 = vld [vmem:[#allocation17 + $0x1b8] sm:$0xff]
    %v5091 = vld [vmem:[#allocation17 + $0x1c0] sm:$0xff]
    %v5092 = vld [vmem:[#allocation17 + $0x1c8] sm:$0xff]
    %v5093 = vld [vmem:[#allocation17 + $0x1d0] sm:$0xff]
    %v5094 = vld [vmem:[#allocation17 + $0x1d8] sm:$0xff]
    %v5095 = vld [vmem:[#allocation17 + $0x1e0] sm:$0xff]
    %v5096 = vld [vmem:[#allocation17 + $0x1e8] sm:$0xff]
    %v5097 = vld [vmem:[#allocation17 + $0x1f0] sm:$0xff]
    %v5098 = vld [vmem:[#allocation17 + $0x1f8] sm:$0xff]
    %v5099 = vld [vmem:[#allocation17 + $0x200] sm:$0xff]
    %v5100 = vld [vmem:[#allocation17 + $0x208] sm:$0xff]
    %v5101 = vld [vmem:[#allocation17 + $0x210] sm:$0xff]
    %v5102 = vld [vmem:[#allocation17 + $0x218] sm:$0xff]
    %v5103 = vld [vmem:[#allocation17 + $0x220] sm:$0xff]
    %v5104 = vld [vmem:[#allocation17 + $0x228] sm:$0xff]
    %v5105 = vld [vmem:[#allocation17 + $0x230] sm:$0xff]
    %v5106 = vld [vmem:[#allocation17 + $0x238] sm:$0xff]
    %v5107 = vld [vmem:[#allocation17 + $0x240] sm:$0xff]
    %v5108 = vld [vmem:[#allocation17 + $0x248] sm:$0xff]
    %v5109 = vld [vmem:[#allocation17 + $0x250] sm:$0xff]
    %v5110 = vld [vmem:[#allocation17 + $0x258] sm:$0xff]
    %v5111 = vld [vmem:[#allocation17 + $0x260] sm:$0xff]
    %v5112 = vld [vmem:[#allocation17 + $0x268] sm:$0xff]
    %v5113 = vld [vmem:[#allocation17 + $0x270] sm:$0xff]
    %v5114 = vld [vmem:[#allocation17 + $0x278] sm:$0xff]
    %v5115 = vld [vmem:[#allocation17 + $0x280] sm:$0xff]
    %v5116 = vld [vmem:[#allocation17 + $0x288] sm:$0xff]
    %v5117 = vld [vmem:[#allocation17 + $0x290] sm:$0xff]
    %v5118 = vld [vmem:[#allocation17 + $0x298] sm:$0xff]
    %v5119 = vld [vmem:[#allocation17 + $0x2a0] sm:$0xff]
    %v5120 = vld [vmem:[#allocation17 + $0x2a8] sm:$0xff]
    %v5121 = vld [vmem:[#allocation17 + $0x2b0] sm:$0xff]
    %v5122 = vld [vmem:[#allocation17 + $0x2b8] sm:$0xff]
    %v5123 = vld [vmem:[#allocation17 + $0x2c0] sm:$0xff]
    %v5124 = vld [vmem:[#allocation17 + $0x2c8] sm:$0xff]
    %v5125 = vld [vmem:[#allocation17 + $0x2d0] sm:$0xff]
    %v5126 = vld [vmem:[#allocation17 + $0x2d8] sm:$0xff]
    %v5127 = vld [vmem:[#allocation17 + $0x2e0] sm:$0xff]
    %v5128 = vld [vmem:[#allocation17 + $0x2e8] sm:$0xff]
    %v5129 = vld [vmem:[#allocation17 + $0x2f0] sm:$0xff]
    %v5130 = vld [vmem:[#allocation17 + $0x2f8] sm:$0xff]
    %v5131 = vld [vmem:[#allocation17 + $0x300] sm:$0xff]
    %v5132 = vld [vmem:[#allocation17 + $0x308] sm:$0xff]
    %v5133 = vld [vmem:[#allocation17 + $0x310] sm:$0xff]
    %v5134 = vld [vmem:[#allocation17 + $0x318] sm:$0xff]
    %v5135 = vld [vmem:[#allocation17 + $0x320] sm:$0xff]
    %v5136 = vld [vmem:[#allocation17 + $0x328] sm:$0xff]
    %v5137 = vld [vmem:[#allocation17 + $0x330] sm:$0xff]
    %v5138 = vld [vmem:[#allocation17 + $0x338] sm:$0xff]
    %v5139 = vld [vmem:[#allocation17 + $0x340] sm:$0xff]
    %v5140 = vld [vmem:[#allocation17 + $0x348] sm:$0xff]
    %v5141 = vld [vmem:[#allocation17 + $0x350] sm:$0xff]
    %v5142 = vld [vmem:[#allocation17 + $0x358] sm:$0xff]
    %v5143 = vld [vmem:[#allocation17 + $0x360] sm:$0xff]
    %v5144 = vld [vmem:[#allocation17 + $0x368] sm:$0xff]
    %v5145 = vld [vmem:[#allocation17 + $0x370] sm:$0xff]
    %v5146 = vld [vmem:[#allocation17 + $0x378] sm:$0xff]
    %v5147 = vld [vmem:[#allocation17 + $0x380] sm:$0xff]
    %v5148 = vld [vmem:[#allocation17 + $0x388] sm:$0xff]
    %v5149 = vld [vmem:[#allocation17 + $0x390] sm:$0xff]
    %v5150 = vld [vmem:[#allocation17 + $0x398] sm:$0xff]
    %v5151 = vld [vmem:[#allocation17 + $0x3a0] sm:$0xff]
    %v5152 = vld [vmem:[#allocation17 + $0x3a8] sm:$0xff]
    %v5153 = vld [vmem:[#allocation17 + $0x3b0] sm:$0xff]
    %v5154 = vld [vmem:[#allocation17 + $0x3b8] sm:$0xff]
    %v5155 = vld [vmem:[#allocation17 + $0x3c0] sm:$0xff]
    %v5156 = vld [vmem:[#allocation17 + $0x3c8] sm:$0xff]
    %v5157 = vld [vmem:[#allocation17 + $0x3d0] sm:$0xff]
    %v5158 = vld [vmem:[#allocation17 + $0x3d8] sm:$0xff]
    %v5159 = vld [vmem:[#allocation17 + $0x3e0] sm:$0xff]
    %v5160 = vld [vmem:[#allocation17 + $0x3e8] sm:$0xff]
    %v5161 = vld [vmem:[#allocation17 + $0x3f0] sm:$0xff]
    %v5162 = vld [vmem:[#allocation17 + $0x3f8] sm:$0xff]
    %5164 = vst [vmem:[#allocation1] ss:$4 sm:$0xff] %v5034
    %v5165 = vld.sshfl [vmem:[#allocation1] sm:$0xff pattern:$0x73625140]
    %v5166 = vld.sshfl [vmem:[#allocation1 + $0x8] sm:$0xff pattern:$0x73625140]
    %5169 = vmatpush.msra.mxu0 %v5095
    %5170 = vmatpush.msra.mxu0 %v5091
    %5171 = vmatpush.msra.mxu0 %v5087
    %5172 = vmatpush.msra.mxu0 %v5083
    %5173 = vmatpush.msra.mxu0 %v5079
    %5174 = vmatpush.msra.mxu0 %v5075
    %5175 = vmatpush.msra.mxu0 %v5071
    %5176 = vmatpush.msra.mxu0 %v5067
    %5177 = vmatpush.msra.mxu0 %v5063
    %5178 = vmatpush.msra.mxu0 %v5059
    %5179 = vmatpush.msra.mxu0 %v5055
    %5180 = vmatpush.msra.mxu0 %v5051
    %5181 = vmatpush.msra.mxu0 %v5047
    %5182 = vmatpush.msra.mxu0 %v5043
    %5183 = vmatpush.msra.mxu0 %v5039
    %5184 = vmatpush.msra.mxu0 %v5035
    %5185 = vmatmul.f32.gmra.mxu0 %v5165
    %v5186 = vpop.f32.mrf.mxu0
    %v5187 = vadd.f32 0.0, %v5186
    %5188 = vdwg.mxu0
    %5189 = vmatpush.msra.mxu0 %v5159
    %5190 = vmatpush.msra.mxu0 %v5155
    %5191 = vmatpush.msra.mxu0 %v5151
    %5192 = vmatpush.msra.mxu0 %v5147
    %5193 = vmatpush.msra.mxu0 %v5143
    %5194 = vmatpush.msra.mxu0 %v5139
    %5195 = vmatpush.msra.mxu0 %v5135
    %5196 = vmatpush.msra.mxu0 %v5131
    %5197 = vmatpush.msra.mxu0 %v5127
    %5198 = vmatpush.msra.mxu0 %v5123
    %5199 = vmatpush.msra.mxu0 %v5119
    %5200 = vmatpush.msra.mxu0 %v5115
    %5201 = vmatpush.msra.mxu0 %v5111
    %5202 = vmatpush.msra.mxu0 %v5107
    %5203 = vmatpush.msra.mxu0 %v5103
    %5204 = vmatpush.msra.mxu0 %v5099
    %5205 = vmatmul.f32.gmra.mxu0 %v5166
    %v5206 = vpop.f32.mrf.mxu0
    %v5207 = vadd.f32 %v5187, %v5206
    %5208 = vdwg.mxu0
    %5209 = vmatpush.msra.mxu0 %v5096
    %5210 = vmatpush.msra.mxu0 %v5092
    %5211 = vmatpush.msra.mxu0 %v5088
    %5212 = vmatpush.msra.mxu0 %v5084
    %5213 = vmatpush.msra.mxu0 %v5080
    %5214 = vmatpush.msra.mxu0 %v5076
    %5215 = vmatpush.msra.mxu0 %v5072
    %5216 = vmatpush.msra.mxu0 %v5068
    %5217 = vmatpush.msra.mxu0 %v5064
    %5218 = vmatpush.msra.mxu0 %v5060
    %5219 = vmatpush.msra.mxu0 %v5056
    %5220 = vmatpush.msra.mxu0 %v5052
    %5221 = vmatpush.msra.mxu0 %v5048
    %5222 = vmatpush.msra.mxu0 %v5044
    %5223 = vmatpush.msra.mxu0 %v5040
    %5224 = vmatpush.msra.mxu0 %v5036
    %5225 = vmatmul.f32.gmra.mxu0 %v5165
    %v5226 = vpop.f32.mrf.mxu0
    %v5227 = vadd.f32 0.0, %v5226
    %5228 = vdwg.mxu0
    %5229 = vmatpush.msra.mxu0 %v5160
    %5230 = vmatpush.msra.mxu0 %v5156
    %5231 = vmatpush.msra.mxu0 %v5152
    %5232 = vmatpush.msra.mxu0 %v5148
    %5233 = vmatpush.msra.mxu0 %v5144
    %5234 = vmatpush.msra.mxu0 %v5140
    %5235 = vmatpush.msra.mxu0 %v5136
    %5236 = vmatpush.msra.mxu0 %v5132
    %5237 = vmatpush.msra.mxu0 %v5128
    %5238 = vmatpush.msra.mxu0 %v5124
    %5239 = vmatpush.msra.mxu0 %v5120
    %5240 = vmatpush.msra.mxu0 %v5116
    %5241 = vmatpush.msra.mxu0 %v5112
    %5242 = vmatpush.msra.mxu0 %v5108
    %5243 = vmatpush.msra.mxu0 %v5104
    %5244 = vmatpush.msra.mxu0 %v5100
    %5245 = vmatmul.f32.gmra.mxu0 %v5166
    %v5246 = vpop.f32.mrf.mxu0
    %v5247 = vadd.f32 %v5227, %v5246
    %5248 = vdwg.mxu0
    %5249 = vmatpush.msra.mxu0 %v5097
    %5250 = vmatpush.msra.mxu0 %v5093
    %5251 = vmatpush.msra.mxu0 %v5089
    %5252 = vmatpush.msra.mxu0 %v5085
    %5253 = vmatpush.msra.mxu0 %v5081
    %5254 = vmatpush.msra.mxu0 %v5077
    %5255 = vmatpush.msra.mxu0 %v5073
    %5256 = vmatpush.msra.mxu0 %v5069
    %5257 = vmatpush.msra.mxu0 %v5065
    %5258 = vmatpush.msra.mxu0 %v5061
    %5259 = vmatpush.msra.mxu0 %v5057
    %5260 = vmatpush.msra.mxu0 %v5053
    %5261 = vmatpush.msra.mxu0 %v5049
    %5262 = vmatpush.msra.mxu0 %v5045
    %5263 = vmatpush.msra.mxu0 %v5041
    %5264 = vmatpush.msra.mxu0 %v5037
    %5265 = vmatmul.f32.gmra.mxu0 %v5165
    %v5266 = vpop.f32.mrf.mxu0
    %v5267 = vadd.f32 0.0, %v5266
    %5268 = vdwg.mxu0
    %5269 = vmatpush.msra.mxu0 %v5161
    %5270 = vmatpush.msra.mxu0 %v5157
    %5271 = vmatpush.msra.mxu0 %v5153
    %5272 = vmatpush.msra.mxu0 %v5149
    %5273 = vmatpush.msra.mxu0 %v5145
    %5274 = vmatpush.msra.mxu0 %v5141
    %5275 = vmatpush.msra.mxu0 %v5137
    %5276 = vmatpush.msra.mxu0 %v5133
    %5277 = vmatpush.msra.mxu0 %v5129
    %5278 = vmatpush.msra.mxu0 %v5125
    %5279 = vmatpush.msra.mxu0 %v5121
    %5280 = vmatpush.msra.mxu0 %v5117
    %5281 = vmatpush.msra.mxu0 %v5113
    %5282 = vmatpush.msra.mxu0 %v5109
    %5283 = vmatpush.msra.mxu0 %v5105
    %5284 = vmatpush.msra.mxu0 %v5101
    %5285 = vmatmul.f32.gmra.mxu0 %v5166
    %v5286 = vpop.f32.mrf.mxu0
    %v5287 = vadd.f32 %v5267, %v5286
    %5288 = vdwg.mxu0
    %5289 = vmatpush.msra.mxu0 %v5098
    %5290 = vmatpush.msra.mxu0 %v5094
    %5291 = vmatpush.msra.mxu0 %v5090
    %5292 = vmatpush.msra.mxu0 %v5086
    %5293 = vmatpush.msra.mxu0 %v5082
    %5294 = vmatpush.msra.mxu0 %v5078
    %5295 = vmatpush.msra.mxu0 %v5074
    %5296 = vmatpush.msra.mxu0 %v5070
    %5297 = vmatpush.msra.mxu0 %v5066
    %5298 = vmatpush.msra.mxu0 %v5062
    %5299 = vmatpush.msra.mxu0 %v5058
    %5300 = vmatpush.msra.mxu0 %v5054
    %5301 = vmatpush.msra.mxu0 %v5050
    %5302 = vmatpush.msra.mxu0 %v5046
    %5303 = vmatpush.msra.mxu0 %v5042
    %5304 = vmatpush.msra.mxu0 %v5038
    %5305 = vmatmul.f32.gmra.mxu0 %v5165
    %v5306 = vpop.f32.mrf.mxu0
    %v5307 = vadd.f32 0.0, %v5306
    %5308 = vdwg.mxu0
    %5309 = vmatpush.msra.mxu0 %v5162
    %5310 = vmatpush.msra.mxu0 %v5158
    %5311 = vmatpush.msra.mxu0 %v5154
    %5312 = vmatpush.msra.mxu0 %v5150
    %5313 = vmatpush.msra.mxu0 %v5146
    %5314 = vmatpush.msra.mxu0 %v5142
    %5315 = vmatpush.msra.mxu0 %v5138
    %5316 = vmatpush.msra.mxu0 %v5134
    %5317 = vmatpush.msra.mxu0 %v5130
    %5318 = vmatpush.msra.mxu0 %v5126
    %5319 = vmatpush.msra.mxu0 %v5122
    %5320 = vmatpush.msra.mxu0 %v5118
    %5321 = vmatpush.msra.mxu0 %v5114
    %5322 = vmatpush.msra.mxu0 %v5110
    %5323 = vmatpush.msra.mxu0 %v5106
    %5324 = vmatpush.msra.mxu0 %v5102
    %5325 = vmatmul.f32.gmra.mxu0 %v5166
    %v5326 = vpop.f32.mrf.mxu0
    %v5327 = vadd.f32 %v5307, %v5326
    %5328 = vdwg.mxu0
    %v5330 = vperm.slane %v5033, 0
    %v5331 = vperm.slane %v5033, 1
    %v5332 = vperm.slane %v5033, 2
    %v5333 = vperm.slane %v5033, 3
    %v5338 = vadd.f32 %v5330, %v5207
    %v5339 = vadd.f32 %v5331, %v5247
    %v5340 = vadd.f32 %v5332, %v5287
    %v5341 = vadd.f32 %v5333, %v5327
    %v5342 = vld [vmem:[#allocation6] sm:$0xf]
    %s5343 = scalar_lea.vmem [#allocation17], 1024
    %v5344 = vld [vmem:[%s5343] sm:$0xff]
    %v5345 = vld [vmem:[%s5343 + $0x8] sm:$0xff]
    %v5346 = vld [vmem:[%s5343 + $0x10] sm:$0xff]
    %v5347 = vld [vmem:[%s5343 + $0x18] sm:$0xff]
    %v5348 = vld [vmem:[%s5343 + $0x20] sm:$0xff]
    %v5349 = vld [vmem:[%s5343 + $0x28] sm:$0xff]
    %v5350 = vld [vmem:[%s5343 + $0x30] sm:$0xff]
    %v5351 = vld [vmem:[%s5343 + $0x38] sm:$0xff]
    %v5352 = vld [vmem:[%s5343 + $0x40] sm:$0xff]
    %v5353 = vld [vmem:[%s5343 + $0x48] sm:$0xff]
    %v5354 = vld [vmem:[%s5343 + $0x50] sm:$0xff]
    %v5355 = vld [vmem:[%s5343 + $0x58] sm:$0xff]
    %v5356 = vld [vmem:[%s5343 + $0x60] sm:$0xff]
    %v5357 = vld [vmem:[%s5343 + $0x68] sm:$0xff]
    %v5358 = vld [vmem:[%s5343 + $0x70] sm:$0xff]
    %v5359 = vld [vmem:[%s5343 + $0x78] sm:$0xff]
    %v5360 = vld [vmem:[%s5343 + $0x80] sm:$0xff]
    %v5361 = vld [vmem:[%s5343 + $0x88] sm:$0xff]
    %v5362 = vld [vmem:[%s5343 + $0x90] sm:$0xff]
    %v5363 = vld [vmem:[%s5343 + $0x98] sm:$0xff]
    %v5364 = vld [vmem:[%s5343 + $0xa0] sm:$0xff]
    %v5365 = vld [vmem:[%s5343 + $0xa8] sm:$0xff]
    %v5366 = vld [vmem:[%s5343 + $0xb0] sm:$0xff]
    %v5367 = vld [vmem:[%s5343 + $0xb8] sm:$0xff]
    %v5368 = vld [vmem:[%s5343 + $0xc0] sm:$0xff]
    %v5369 = vld [vmem:[%s5343 + $0xc8] sm:$0xff]
    %v5370 = vld [vmem:[%s5343 + $0xd0] sm:$0xff]
    %v5371 = vld [vmem:[%s5343 + $0xd8] sm:$0xff]
    %v5372 = vld [vmem:[%s5343 + $0xe0] sm:$0xff]
    %v5373 = vld [vmem:[%s5343 + $0xe8] sm:$0xff]
    %v5374 = vld [vmem:[%s5343 + $0xf0] sm:$0xff]
    %v5375 = vld [vmem:[%s5343 + $0xf8] sm:$0xff]
    %v5376 = vld [vmem:[%s5343 + $0x100] sm:$0xff]
    %v5377 = vld [vmem:[%s5343 + $0x108] sm:$0xff]
    %v5378 = vld [vmem:[%s5343 + $0x110] sm:$0xff]
    %v5379 = vld [vmem:[%s5343 + $0x118] sm:$0xff]
    %v5380 = vld [vmem:[%s5343 + $0x120] sm:$0xff]
    %v5381 = vld [vmem:[%s5343 + $0x128] sm:$0xff]
    %v5382 = vld [vmem:[%s5343 + $0x130] sm:$0xff]
    %v5383 = vld [vmem:[%s5343 + $0x138] sm:$0xff]
    %v5384 = vld [vmem:[%s5343 + $0x140] sm:$0xff]
    %v5385 = vld [vmem:[%s5343 + $0x148] sm:$0xff]
    %v5386 = vld [vmem:[%s5343 + $0x150] sm:$0xff]
    %v5387 = vld [vmem:[%s5343 + $0x158] sm:$0xff]
    %v5388 = vld [vmem:[%s5343 + $0x160] sm:$0xff]
    %v5389 = vld [vmem:[%s5343 + $0x168] sm:$0xff]
    %v5390 = vld [vmem:[%s5343 + $0x170] sm:$0xff]
    %v5391 = vld [vmem:[%s5343 + $0x178] sm:$0xff]
    %v5392 = vld [vmem:[%s5343 + $0x180] sm:$0xff]
    %v5393 = vld [vmem:[%s5343 + $0x188] sm:$0xff]
    %v5394 = vld [vmem:[%s5343 + $0x190] sm:$0xff]
    %v5395 = vld [vmem:[%s5343 + $0x198] sm:$0xff]
    %v5396 = vld [vmem:[%s5343 + $0x1a0] sm:$0xff]
    %v5397 = vld [vmem:[%s5343 + $0x1a8] sm:$0xff]
    %v5398 = vld [vmem:[%s5343 + $0x1b0] sm:$0xff]
    %v5399 = vld [vmem:[%s5343 + $0x1b8] sm:$0xff]
    %v5400 = vld [vmem:[%s5343 + $0x1c0] sm:$0xff]
    %v5401 = vld [vmem:[%s5343 + $0x1c8] sm:$0xff]
    %v5402 = vld [vmem:[%s5343 + $0x1d0] sm:$0xff]
    %v5403 = vld [vmem:[%s5343 + $0x1d8] sm:$0xff]
    %v5404 = vld [vmem:[%s5343 + $0x1e0] sm:$0xff]
    %v5405 = vld [vmem:[%s5343 + $0x1e8] sm:$0xff]
    %v5406 = vld [vmem:[%s5343 + $0x1f0] sm:$0xff]
    %v5407 = vld [vmem:[%s5343 + $0x1f8] sm:$0xff]
    %v5408 = vld [vmem:[%s5343 + $0x200] sm:$0xff]
    %v5409 = vld [vmem:[%s5343 + $0x208] sm:$0xff]
    %v5410 = vld [vmem:[%s5343 + $0x210] sm:$0xff]
    %v5411 = vld [vmem:[%s5343 + $0x218] sm:$0xff]
    %v5412 = vld [vmem:[%s5343 + $0x220] sm:$0xff]
    %v5413 = vld [vmem:[%s5343 + $0x228] sm:$0xff]
    %v5414 = vld [vmem:[%s5343 + $0x230] sm:$0xff]
    %v5415 = vld [vmem:[%s5343 + $0x238] sm:$0xff]
    %v5416 = vld [vmem:[%s5343 + $0x240] sm:$0xff]
    %v5417 = vld [vmem:[%s5343 + $0x248] sm:$0xff]
    %v5418 = vld [vmem:[%s5343 + $0x250] sm:$0xff]
    %v5419 = vld [vmem:[%s5343 + $0x258] sm:$0xff]
    %v5420 = vld [vmem:[%s5343 + $0x260] sm:$0xff]
    %v5421 = vld [vmem:[%s5343 + $0x268] sm:$0xff]
    %v5422 = vld [vmem:[%s5343 + $0x270] sm:$0xff]
    %v5423 = vld [vmem:[%s5343 + $0x278] sm:$0xff]
    %v5424 = vld [vmem:[%s5343 + $0x280] sm:$0xff]
    %v5425 = vld [vmem:[%s5343 + $0x288] sm:$0xff]
    %v5426 = vld [vmem:[%s5343 + $0x290] sm:$0xff]
    %v5427 = vld [vmem:[%s5343 + $0x298] sm:$0xff]
    %v5428 = vld [vmem:[%s5343 + $0x2a0] sm:$0xff]
    %v5429 = vld [vmem:[%s5343 + $0x2a8] sm:$0xff]
    %v5430 = vld [vmem:[%s5343 + $0x2b0] sm:$0xff]
    %v5431 = vld [vmem:[%s5343 + $0x2b8] sm:$0xff]
    %v5432 = vld [vmem:[%s5343 + $0x2c0] sm:$0xff]
    %v5433 = vld [vmem:[%s5343 + $0x2c8] sm:$0xff]
    %v5434 = vld [vmem:[%s5343 + $0x2d0] sm:$0xff]
    %v5435 = vld [vmem:[%s5343 + $0x2d8] sm:$0xff]
    %v5436 = vld [vmem:[%s5343 + $0x2e0] sm:$0xff]
    %v5437 = vld [vmem:[%s5343 + $0x2e8] sm:$0xff]
    %v5438 = vld [vmem:[%s5343 + $0x2f0] sm:$0xff]
    %v5439 = vld [vmem:[%s5343 + $0x2f8] sm:$0xff]
    %v5440 = vld [vmem:[%s5343 + $0x300] sm:$0xff]
    %v5441 = vld [vmem:[%s5343 + $0x308] sm:$0xff]
    %v5442 = vld [vmem:[%s5343 + $0x310] sm:$0xff]
    %v5443 = vld [vmem:[%s5343 + $0x318] sm:$0xff]
    %v5444 = vld [vmem:[%s5343 + $0x320] sm:$0xff]
    %v5445 = vld [vmem:[%s5343 + $0x328] sm:$0xff]
    %v5446 = vld [vmem:[%s5343 + $0x330] sm:$0xff]
    %v5447 = vld [vmem:[%s5343 + $0x338] sm:$0xff]
    %v5448 = vld [vmem:[%s5343 + $0x340] sm:$0xff]
    %v5449 = vld [vmem:[%s5343 + $0x348] sm:$0xff]
    %v5450 = vld [vmem:[%s5343 + $0x350] sm:$0xff]
    %v5451 = vld [vmem:[%s5343 + $0x358] sm:$0xff]
    %v5452 = vld [vmem:[%s5343 + $0x360] sm:$0xff]
    %v5453 = vld [vmem:[%s5343 + $0x368] sm:$0xff]
    %v5454 = vld [vmem:[%s5343 + $0x370] sm:$0xff]
    %v5455 = vld [vmem:[%s5343 + $0x378] sm:$0xff]
    %v5456 = vld [vmem:[%s5343 + $0x380] sm:$0xff]
    %v5457 = vld [vmem:[%s5343 + $0x388] sm:$0xff]
    %v5458 = vld [vmem:[%s5343 + $0x390] sm:$0xff]
    %v5459 = vld [vmem:[%s5343 + $0x398] sm:$0xff]
    %v5460 = vld [vmem:[%s5343 + $0x3a0] sm:$0xff]
    %v5461 = vld [vmem:[%s5343 + $0x3a8] sm:$0xff]
    %v5462 = vld [vmem:[%s5343 + $0x3b0] sm:$0xff]
    %v5463 = vld [vmem:[%s5343 + $0x3b8] sm:$0xff]
    %v5464 = vld [vmem:[%s5343 + $0x3c0] sm:$0xff]
    %v5465 = vld [vmem:[%s5343 + $0x3c8] sm:$0xff]
    %v5466 = vld [vmem:[%s5343 + $0x3d0] sm:$0xff]
    %v5467 = vld [vmem:[%s5343 + $0x3d8] sm:$0xff]
    %v5468 = vld [vmem:[%s5343 + $0x3e0] sm:$0xff]
    %v5469 = vld [vmem:[%s5343 + $0x3e8] sm:$0xff]
    %v5470 = vld [vmem:[%s5343 + $0x3f0] sm:$0xff]
    %v5471 = vld [vmem:[%s5343 + $0x3f8] sm:$0xff]
    %5473 = vst [vmem:[#allocation1] ss:$4 sm:$0xff] %v5342
    %v5474 = vld.sshfl [vmem:[#allocation1] sm:$0xff pattern:$0x73625140]
    %v5475 = vld.sshfl [vmem:[#allocation1 + $0x8] sm:$0xff pattern:$0x73625140]
    %5478 = vmatpush.msra.mxu0 %v5404
    %5479 = vmatpush.msra.mxu0 %v5400
    %5480 = vmatpush.msra.mxu0 %v5396
    %5481 = vmatpush.msra.mxu0 %v5392
    %5482 = vmatpush.msra.mxu0 %v5388
    %5483 = vmatpush.msra.mxu0 %v5384
    %5484 = vmatpush.msra.mxu0 %v5380
    %5485 = vmatpush.msra.mxu0 %v5376
    %5486 = vmatpush.msra.mxu0 %v5372
    %5487 = vmatpush.msra.mxu0 %v5368
    %5488 = vmatpush.msra.mxu0 %v5364
    %5489 = vmatpush.msra.mxu0 %v5360
    %5490 = vmatpush.msra.mxu0 %v5356
    %5491 = vmatpush.msra.mxu0 %v5352
    %5492 = vmatpush.msra.mxu0 %v5348
    %5493 = vmatpush.msra.mxu0 %v5344
    %5494 = vmatmul.f32.gmra.mxu0 %v5474
    %v5495 = vpop.f32.mrf.mxu0
    %v5496 = vadd.f32 0.0, %v5495
    %5497 = vdwg.mxu0
    %5498 = vmatpush.msra.mxu0 %v5468
    %5499 = vmatpush.msra.mxu0 %v5464
    %5500 = vmatpush.msra.mxu0 %v5460
    %5501 = vmatpush.msra.mxu0 %v5456
    %5502 = vmatpush.msra.mxu0 %v5452
    %5503 = vmatpush.msra.mxu0 %v5448
    %5504 = vmatpush.msra.mxu0 %v5444
    %5505 = vmatpush.msra.mxu0 %v5440
    %5506 = vmatpush.msra.mxu0 %v5436
    %5507 = vmatpush.msra.mxu0 %v5432
    %5508 = vmatpush.msra.mxu0 %v5428
    %5509 = vmatpush.msra.mxu0 %v5424
    %5510 = vmatpush.msra.mxu0 %v5420
    %5511 = vmatpush.msra.mxu0 %v5416
    %5512 = vmatpush.msra.mxu0 %v5412
    %5513 = vmatpush.msra.mxu0 %v5408
    %5514 = vmatmul.f32.gmra.mxu0 %v5475
    %v5515 = vpop.f32.mrf.mxu0
    %v5516 = vadd.f32 %v5496, %v5515
    %5517 = vdwg.mxu0
    %5518 = vmatpush.msra.mxu0 %v5405
    %5519 = vmatpush.msra.mxu0 %v5401
    %5520 = vmatpush.msra.mxu0 %v5397
    %5521 = vmatpush.msra.mxu0 %v5393
    %5522 = vmatpush.msra.mxu0 %v5389
    %5523 = vmatpush.msra.mxu0 %v5385
    %5524 = vmatpush.msra.mxu0 %v5381
    %5525 = vmatpush.msra.mxu0 %v5377
    %5526 = vmatpush.msra.mxu0 %v5373
    %5527 = vmatpush.msra.mxu0 %v5369
    %5528 = vmatpush.msra.mxu0 %v5365
    %5529 = vmatpush.msra.mxu0 %v5361
    %5530 = vmatpush.msra.mxu0 %v5357
    %5531 = vmatpush.msra.mxu0 %v5353
    %5532 = vmatpush.msra.mxu0 %v5349
    %5533 = vmatpush.msra.mxu0 %v5345
    %5534 = vmatmul.f32.gmra.mxu0 %v5474
    %v5535 = vpop.f32.mrf.mxu0
    %v5536 = vadd.f32 0.0, %v5535
    %5537 = vdwg.mxu0
    %5538 = vmatpush.msra.mxu0 %v5469
    %5539 = vmatpush.msra.mxu0 %v5465
    %5540 = vmatpush.msra.mxu0 %v5461
    %5541 = vmatpush.msra.mxu0 %v5457
    %5542 = vmatpush.msra.mxu0 %v5453
    %5543 = vmatpush.msra.mxu0 %v5449
    %5544 = vmatpush.msra.mxu0 %v5445
    %5545 = vmatpush.msra.mxu0 %v5441
    %5546 = vmatpush.msra.mxu0 %v5437
    %5547 = vmatpush.msra.mxu0 %v5433
    %5548 = vmatpush.msra.mxu0 %v5429
    %5549 = vmatpush.msra.mxu0 %v5425
    %5550 = vmatpush.msra.mxu0 %v5421
    %5551 = vmatpush.msra.mxu0 %v5417
    %5552 = vmatpush.msra.mxu0 %v5413
    %5553 = vmatpush.msra.mxu0 %v5409
    %5554 = vmatmul.f32.gmra.mxu0 %v5475
    %v5555 = vpop.f32.mrf.mxu0
    %v5556 = vadd.f32 %v5536, %v5555
    %5557 = vdwg.mxu0
    %5558 = vmatpush.msra.mxu0 %v5406
    %5559 = vmatpush.msra.mxu0 %v5402
    %5560 = vmatpush.msra.mxu0 %v5398
    %5561 = vmatpush.msra.mxu0 %v5394
    %5562 = vmatpush.msra.mxu0 %v5390
    %5563 = vmatpush.msra.mxu0 %v5386
    %5564 = vmatpush.msra.mxu0 %v5382
    %5565 = vmatpush.msra.mxu0 %v5378
    %5566 = vmatpush.msra.mxu0 %v5374
    %5567 = vmatpush.msra.mxu0 %v5370
    %5568 = vmatpush.msra.mxu0 %v5366
    %5569 = vmatpush.msra.mxu0 %v5362
    %5570 = vmatpush.msra.mxu0 %v5358
    %5571 = vmatpush.msra.mxu0 %v5354
    %5572 = vmatpush.msra.mxu0 %v5350
    %5573 = vmatpush.msra.mxu0 %v5346
    %5574 = vmatmul.f32.gmra.mxu0 %v5474
    %v5575 = vpop.f32.mrf.mxu0
    %v5576 = vadd.f32 0.0, %v5575
    %5577 = vdwg.mxu0
    %5578 = vmatpush.msra.mxu0 %v5470
    %5579 = vmatpush.msra.mxu0 %v5466
    %5580 = vmatpush.msra.mxu0 %v5462
    %5581 = vmatpush.msra.mxu0 %v5458
    %5582 = vmatpush.msra.mxu0 %v5454
    %5583 = vmatpush.msra.mxu0 %v5450
    %5584 = vmatpush.msra.mxu0 %v5446
    %5585 = vmatpush.msra.mxu0 %v5442
    %5586 = vmatpush.msra.mxu0 %v5438
    %5587 = vmatpush.msra.mxu0 %v5434
    %5588 = vmatpush.msra.mxu0 %v5430
    %5589 = vmatpush.msra.mxu0 %v5426
    %5590 = vmatpush.msra.mxu0 %v5422
    %5591 = vmatpush.msra.mxu0 %v5418
    %5592 = vmatpush.msra.mxu0 %v5414
    %5593 = vmatpush.msra.mxu0 %v5410
    %5594 = vmatmul.f32.gmra.mxu0 %v5475
    %v5595 = vpop.f32.mrf.mxu0
    %v5596 = vadd.f32 %v5576, %v5595
    %5597 = vdwg.mxu0
    %5598 = vmatpush.msra.mxu0 %v5407
    %5599 = vmatpush.msra.mxu0 %v5403
    %5600 = vmatpush.msra.mxu0 %v5399
    %5601 = vmatpush.msra.mxu0 %v5395
    %5602 = vmatpush.msra.mxu0 %v5391
    %5603 = vmatpush.msra.mxu0 %v5387
    %5604 = vmatpush.msra.mxu0 %v5383
    %5605 = vmatpush.msra.mxu0 %v5379
    %5606 = vmatpush.msra.mxu0 %v5375
    %5607 = vmatpush.msra.mxu0 %v5371
    %5608 = vmatpush.msra.mxu0 %v5367
    %5609 = vmatpush.msra.mxu0 %v5363
    %5610 = vmatpush.msra.mxu0 %v5359
    %5611 = vmatpush.msra.mxu0 %v5355
    %5612 = vmatpush.msra.mxu0 %v5351
    %5613 = vmatpush.msra.mxu0 %v5347
    %5614 = vmatmul.f32.gmra.mxu0 %v5474
    %v5615 = vpop.f32.mrf.mxu0
    %v5616 = vadd.f32 0.0, %v5615
    %5617 = vdwg.mxu0
    %5618 = vmatpush.msra.mxu0 %v5471
    %5619 = vmatpush.msra.mxu0 %v5467
    %5620 = vmatpush.msra.mxu0 %v5463
    %5621 = vmatpush.msra.mxu0 %v5459
    %5622 = vmatpush.msra.mxu0 %v5455
    %5623 = vmatpush.msra.mxu0 %v5451
    %5624 = vmatpush.msra.mxu0 %v5447
    %5625 = vmatpush.msra.mxu0 %v5443
    %5626 = vmatpush.msra.mxu0 %v5439
    %5627 = vmatpush.msra.mxu0 %v5435
    %5628 = vmatpush.msra.mxu0 %v5431
    %5629 = vmatpush.msra.mxu0 %v5427
    %5630 = vmatpush.msra.mxu0 %v5423
    %5631 = vmatpush.msra.mxu0 %v5419
    %5632 = vmatpush.msra.mxu0 %v5415
    %5633 = vmatpush.msra.mxu0 %v5411
    %5634 = vmatmul.f32.gmra.mxu0 %v5475
    %v5635 = vpop.f32.mrf.mxu0
    %v5636 = vadd.f32 %v5616, %v5635
    %5637 = vdwg.mxu0
    %v5638 = vadd.f32 %v5338, %v5516
    %v5639 = vadd.f32 %v5339, %v5556
    %v5640 = vadd.f32 %v5340, %v5596
    %v5641 = vadd.f32 %v5341, %v5636
    %v5642 = vld [vmem:[#allocation7] sm:$0xf]
    %s5643 = scalar_lea.vmem [#allocation17], 2048
    %v5644 = vld [vmem:[%s5643] sm:$0xff]
    %v5645 = vld [vmem:[%s5643 + $0x8] sm:$0xff]
    %v5646 = vld [vmem:[%s5643 + $0x10] sm:$0xff]
    %v5647 = vld [vmem:[%s5643 + $0x18] sm:$0xff]
    %v5648 = vld [vmem:[%s5643 + $0x20] sm:$0xff]
    %v5649 = vld [vmem:[%s5643 + $0x28] sm:$0xff]
    %v5650 = vld [vmem:[%s5643 + $0x30] sm:$0xff]
    %v5651 = vld [vmem:[%s5643 + $0x38] sm:$0xff]
    %v5652 = vld [vmem:[%s5643 + $0x40] sm:$0xff]
    %v5653 = vld [vmem:[%s5643 + $0x48] sm:$0xff]
    %v5654 = vld [vmem:[%s5643 + $0x50] sm:$0xff]
    %v5655 = vld [vmem:[%s5643 + $0x58] sm:$0xff]
    %v5656 = vld [vmem:[%s5643 + $0x60] sm:$0xff]
    %v5657 = vld [vmem:[%s5643 + $0x68] sm:$0xff]
    %v5658 = vld [vmem:[%s5643 + $0x70] sm:$0xff]
    %v5659 = vld [vmem:[%s5643 + $0x78] sm:$0xff]
    %v5660 = vld [vmem:[%s5643 + $0x80] sm:$0xff]
    %v5661 = vld [vmem:[%s5643 + $0x88] sm:$0xff]
    %v5662 = vld [vmem:[%s5643 + $0x90] sm:$0xff]
    %v5663 = vld [vmem:[%s5643 + $0x98] sm:$0xff]
    %v5664 = vld [vmem:[%s5643 + $0xa0] sm:$0xff]
    %v5665 = vld [vmem:[%s5643 + $0xa8] sm:$0xff]
    %v5666 = vld [vmem:[%s5643 + $0xb0] sm:$0xff]
    %v5667 = vld [vmem:[%s5643 + $0xb8] sm:$0xff]
    %v5668 = vld [vmem:[%s5643 + $0xc0] sm:$0xff]
    %v5669 = vld [vmem:[%s5643 + $0xc8] sm:$0xff]
    %v5670 = vld [vmem:[%s5643 + $0xd0] sm:$0xff]
    %v5671 = vld [vmem:[%s5643 + $0xd8] sm:$0xff]
    %v5672 = vld [vmem:[%s5643 + $0xe0] sm:$0xff]
    %v5673 = vld [vmem:[%s5643 + $0xe8] sm:$0xff]
    %v5674 = vld [vmem:[%s5643 + $0xf0] sm:$0xff]
    %v5675 = vld [vmem:[%s5643 + $0xf8] sm:$0xff]
    %v5676 = vld [vmem:[%s5643 + $0x100] sm:$0xff]
    %v5677 = vld [vmem:[%s5643 + $0x108] sm:$0xff]
    %v5678 = vld [vmem:[%s5643 + $0x110] sm:$0xff]
    %v5679 = vld [vmem:[%s5643 + $0x118] sm:$0xff]
    %v5680 = vld [vmem:[%s5643 + $0x120] sm:$0xff]
    %v5681 = vld [vmem:[%s5643 + $0x128] sm:$0xff]
    %v5682 = vld [vmem:[%s5643 + $0x130] sm:$0xff]
    %v5683 = vld [vmem:[%s5643 + $0x138] sm:$0xff]
    %v5684 = vld [vmem:[%s5643 + $0x140] sm:$0xff]
    %v5685 = vld [vmem:[%s5643 + $0x148] sm:$0xff]
    %v5686 = vld [vmem:[%s5643 + $0x150] sm:$0xff]
    %v5687 = vld [vmem:[%s5643 + $0x158] sm:$0xff]
    %v5688 = vld [vmem:[%s5643 + $0x160] sm:$0xff]
    %v5689 = vld [vmem:[%s5643 + $0x168] sm:$0xff]
    %v5690 = vld [vmem:[%s5643 + $0x170] sm:$0xff]
    %v5691 = vld [vmem:[%s5643 + $0x178] sm:$0xff]
    %v5692 = vld [vmem:[%s5643 + $0x180] sm:$0xff]
    %v5693 = vld [vmem:[%s5643 + $0x188] sm:$0xff]
    %v5694 = vld [vmem:[%s5643 + $0x190] sm:$0xff]
    %v5695 = vld [vmem:[%s5643 + $0x198] sm:$0xff]
    %v5696 = vld [vmem:[%s5643 + $0x1a0] sm:$0xff]
    %v5697 = vld [vmem:[%s5643 + $0x1a8] sm:$0xff]
    %v5698 = vld [vmem:[%s5643 + $0x1b0] sm:$0xff]
    %v5699 = vld [vmem:[%s5643 + $0x1b8] sm:$0xff]
    %v5700 = vld [vmem:[%s5643 + $0x1c0] sm:$0xff]
    %v5701 = vld [vmem:[%s5643 + $0x1c8] sm:$0xff]
    %v5702 = vld [vmem:[%s5643 + $0x1d0] sm:$0xff]
    %v5703 = vld [vmem:[%s5643 + $0x1d8] sm:$0xff]
    %v5704 = vld [vmem:[%s5643 + $0x1e0] sm:$0xff]
    %v5705 = vld [vmem:[%s5643 + $0x1e8] sm:$0xff]
    %v5706 = vld [vmem:[%s5643 + $0x1f0] sm:$0xff]
    %v5707 = vld [vmem:[%s5643 + $0x1f8] sm:$0xff]
    %v5708 = vld [vmem:[%s5643 + $0x200] sm:$0xff]
    %v5709 = vld [vmem:[%s5643 + $0x208] sm:$0xff]
    %v5710 = vld [vmem:[%s5643 + $0x210] sm:$0xff]
    %v5711 = vld [vmem:[%s5643 + $0x218] sm:$0xff]
    %v5712 = vld [vmem:[%s5643 + $0x220] sm:$0xff]
    %v5713 = vld [vmem:[%s5643 + $0x228] sm:$0xff]
    %v5714 = vld [vmem:[%s5643 + $0x230] sm:$0xff]
    %v5715 = vld [vmem:[%s5643 + $0x238] sm:$0xff]
    %v5716 = vld [vmem:[%s5643 + $0x240] sm:$0xff]
    %v5717 = vld [vmem:[%s5643 + $0x248] sm:$0xff]
    %v5718 = vld [vmem:[%s5643 + $0x250] sm:$0xff]
    %v5719 = vld [vmem:[%s5643 + $0x258] sm:$0xff]
    %v5720 = vld [vmem:[%s5643 + $0x260] sm:$0xff]
    %v5721 = vld [vmem:[%s5643 + $0x268] sm:$0xff]
    %v5722 = vld [vmem:[%s5643 + $0x270] sm:$0xff]
    %v5723 = vld [vmem:[%s5643 + $0x278] sm:$0xff]
    %v5724 = vld [vmem:[%s5643 + $0x280] sm:$0xff]
    %v5725 = vld [vmem:[%s5643 + $0x288] sm:$0xff]
    %v5726 = vld [vmem:[%s5643 + $0x290] sm:$0xff]
    %v5727 = vld [vmem:[%s5643 + $0x298] sm:$0xff]
    %v5728 = vld [vmem:[%s5643 + $0x2a0] sm:$0xff]
    %v5729 = vld [vmem:[%s5643 + $0x2a8] sm:$0xff]
    %v5730 = vld [vmem:[%s5643 + $0x2b0] sm:$0xff]
    %v5731 = vld [vmem:[%s5643 + $0x2b8] sm:$0xff]
    %v5732 = vld [vmem:[%s5643 + $0x2c0] sm:$0xff]
    %v5733 = vld [vmem:[%s5643 + $0x2c8] sm:$0xff]
    %v5734 = vld [vmem:[%s5643 + $0x2d0] sm:$0xff]
    %v5735 = vld [vmem:[%s5643 + $0x2d8] sm:$0xff]
    %v5736 = vld [vmem:[%s5643 + $0x2e0] sm:$0xff]
    %v5737 = vld [vmem:[%s5643 + $0x2e8] sm:$0xff]
    %v5738 = vld [vmem:[%s5643 + $0x2f0] sm:$0xff]
    %v5739 = vld [vmem:[%s5643 + $0x2f8] sm:$0xff]
    %v5740 = vld [vmem:[%s5643 + $0x300] sm:$0xff]
    %v5741 = vld [vmem:[%s5643 + $0x308] sm:$0xff]
    %v5742 = vld [vmem:[%s5643 + $0x310] sm:$0xff]
    %v5743 = vld [vmem:[%s5643 + $0x318] sm:$0xff]
    %v5744 = vld [vmem:[%s5643 + $0x320] sm:$0xff]
    %v5745 = vld [vmem:[%s5643 + $0x328] sm:$0xff]
    %v5746 = vld [vmem:[%s5643 + $0x330] sm:$0xff]
    %v5747 = vld [vmem:[%s5643 + $0x338] sm:$0xff]
    %v5748 = vld [vmem:[%s5643 + $0x340] sm:$0xff]
    %v5749 = vld [vmem:[%s5643 + $0x348] sm:$0xff]
    %v5750 = vld [vmem:[%s5643 + $0x350] sm:$0xff]
    %v5751 = vld [vmem:[%s5643 + $0x358] sm:$0xff]
    %v5752 = vld [vmem:[%s5643 + $0x360] sm:$0xff]
    %v5753 = vld [vmem:[%s5643 + $0x368] sm:$0xff]
    %v5754 = vld [vmem:[%s5643 + $0x370] sm:$0xff]
    %v5755 = vld [vmem:[%s5643 + $0x378] sm:$0xff]
    %v5756 = vld [vmem:[%s5643 + $0x380] sm:$0xff]
    %v5757 = vld [vmem:[%s5643 + $0x388] sm:$0xff]
    %v5758 = vld [vmem:[%s5643 + $0x390] sm:$0xff]
    %v5759 = vld [vmem:[%s5643 + $0x398] sm:$0xff]
    %v5760 = vld [vmem:[%s5643 + $0x3a0] sm:$0xff]
    %v5761 = vld [vmem:[%s5643 + $0x3a8] sm:$0xff]
    %v5762 = vld [vmem:[%s5643 + $0x3b0] sm:$0xff]
    %v5763 = vld [vmem:[%s5643 + $0x3b8] sm:$0xff]
    %v5764 = vld [vmem:[%s5643 + $0x3c0] sm:$0xff]
    %v5765 = vld [vmem:[%s5643 + $0x3c8] sm:$0xff]
    %v5766 = vld [vmem:[%s5643 + $0x3d0] sm:$0xff]
    %v5767 = vld [vmem:[%s5643 + $0x3d8] sm:$0xff]
    %v5768 = vld [vmem:[%s5643 + $0x3e0] sm:$0xff]
    %v5769 = vld [vmem:[%s5643 + $0x3e8] sm:$0xff]
    %v5770 = vld [vmem:[%s5643 + $0x3f0] sm:$0xff]
    %v5771 = vld [vmem:[%s5643 + $0x3f8] sm:$0xff]
    %5773 = vst [vmem:[#allocation1] ss:$4 sm:$0xff] %v5642
    %v5774 = vld.sshfl [vmem:[#allocation1] sm:$0xff pattern:$0x73625140]
    %v5775 = vld.sshfl [vmem:[#allocation1 + $0x8] sm:$0xff pattern:$0x73625140]
    %5778 = vmatpush.msra.mxu0 %v5704
    %5779 = vmatpush.msra.mxu0 %v5700
    %5780 = vmatpush.msra.mxu0 %v5696
    %5781 = vmatpush.msra.mxu0 %v5692
    %5782 = vmatpush.msra.mxu0 %v5688
    %5783 = vmatpush.msra.mxu0 %v5684
    %5784 = vmatpush.msra.mxu0 %v5680
    %5785 = vmatpush.msra.mxu0 %v5676
    %5786 = vmatpush.msra.mxu0 %v5672
    %5787 = vmatpush.msra.mxu0 %v5668
    %5788 = vmatpush.msra.mxu0 %v5664
    %5789 = vmatpush.msra.mxu0 %v5660
    %5790 = vmatpush.msra.mxu0 %v5656
    %5791 = vmatpush.msra.mxu0 %v5652
    %5792 = vmatpush.msra.mxu0 %v5648
    %5793 = vmatpush.msra.mxu0 %v5644
    %5794 = vmatmul.f32.gmra.mxu0 %v5774
    %v5795 = vpop.f32.mrf.mxu0
    %v5796 = vadd.f32 0.0, %v5795
    %5797 = vdwg.mxu0
    %5798 = vmatpush.msra.mxu0 %v5768
    %5799 = vmatpush.msra.mxu0 %v5764
    %5800 = vmatpush.msra.mxu0 %v5760
    %5801 = vmatpush.msra.mxu0 %v5756
    %5802 = vmatpush.msra.mxu0 %v5752
    %5803 = vmatpush.msra.mxu0 %v5748
    %5804 = vmatpush.msra.mxu0 %v5744
    %5805 = vmatpush.msra.mxu0 %v5740
    %5806 = vmatpush.msra.mxu0 %v5736
    %5807 = vmatpush.msra.mxu0 %v5732
    %5808 = vmatpush.msra.mxu0 %v5728
    %5809 = vmatpush.msra.mxu0 %v5724
    %5810 = vmatpush.msra.mxu0 %v5720
    %5811 = vmatpush.msra.mxu0 %v5716
    %5812 = vmatpush.msra.mxu0 %v5712
    %5813 = vmatpush.msra.mxu0 %v5708
    %5814 = vmatmul.f32.gmra.mxu0 %v5775
    %v5815 = vpop.f32.mrf.mxu0
    %v5816 = vadd.f32 %v5796, %v5815
    %5817 = vdwg.mxu0
    %5818 = vmatpush.msra.mxu0 %v5705
    %5819 = vmatpush.msra.mxu0 %v5701
    %5820 = vmatpush.msra.mxu0 %v5697
    %5821 = vmatpush.msra.mxu0 %v5693
    %5822 = vmatpush.msra.mxu0 %v5689
    %5823 = vmatpush.msra.mxu0 %v5685
    %5824 = vmatpush.msra.mxu0 %v5681
    %5825 = vmatpush.msra.mxu0 %v5677
    %5826 = vmatpush.msra.mxu0 %v5673
    %5827 = vmatpush.msra.mxu0 %v5669
    %5828 = vmatpush.msra.mxu0 %v5665
    %5829 = vmatpush.msra.mxu0 %v5661
    %5830 = vmatpush.msra.mxu0 %v5657
    %5831 = vmatpush.msra.mxu0 %v5653
    %5832 = vmatpush.msra.mxu0 %v5649
    %5833 = vmatpush.msra.mxu0 %v5645
    %5834 = vmatmul.f32.gmra.mxu0 %v5774
    %v5835 = vpop.f32.mrf.mxu0
    %v5836 = vadd.f32 0.0, %v5835
    %5837 = vdwg.mxu0
    %5838 = vmatpush.msra.mxu0 %v5769
    %5839 = vmatpush.msra.mxu0 %v5765
    %5840 = vmatpush.msra.mxu0 %v5761
    %5841 = vmatpush.msra.mxu0 %v5757
    %5842 = vmatpush.msra.mxu0 %v5753
    %5843 = vmatpush.msra.mxu0 %v5749
    %5844 = vmatpush.msra.mxu0 %v5745
    %5845 = vmatpush.msra.mxu0 %v5741
    %5846 = vmatpush.msra.mxu0 %v5737
    %5847 = vmatpush.msra.mxu0 %v5733
    %5848 = vmatpush.msra.mxu0 %v5729
    %5849 = vmatpush.msra.mxu0 %v5725
    %5850 = vmatpush.msra.mxu0 %v5721
    %5851 = vmatpush.msra.mxu0 %v5717
    %5852 = vmatpush.msra.mxu0 %v5713
    %5853 = vmatpush.msra.mxu0 %v5709
    %5854 = vmatmul.f32.gmra.mxu0 %v5775
    %v5855 = vpop.f32.mrf.mxu0
    %v5856 = vadd.f32 %v5836, %v5855
    %5857 = vdwg.mxu0
    %5858 = vmatpush.msra.mxu0 %v5706
    %5859 = vmatpush.msra.mxu0 %v5702
    %5860 = vmatpush.msra.mxu0 %v5698
    %5861 = vmatpush.msra.mxu0 %v5694
    %5862 = vmatpush.msra.mxu0 %v5690
    %5863 = vmatpush.msra.mxu0 %v5686
    %5864 = vmatpush.msra.mxu0 %v5682
    %5865 = vmatpush.msra.mxu0 %v5678
    %5866 = vmatpush.msra.mxu0 %v5674
    %5867 = vmatpush.msra.mxu0 %v5670
    %5868 = vmatpush.msra.mxu0 %v5666
    %5869 = vmatpush.msra.mxu0 %v5662
    %5870 = vmatpush.msra.mxu0 %v5658
    %5871 = vmatpush.msra.mxu0 %v5654
    %5872 = vmatpush.msra.mxu0 %v5650
    %5873 = vmatpush.msra.mxu0 %v5646
    %5874 = vmatmul.f32.gmra.mxu0 %v5774
    %v5875 = vpop.f32.mrf.mxu0
    %v5876 = vadd.f32 0.0, %v5875
    %5877 = vdwg.mxu0
    %5878 = vmatpush.msra.mxu0 %v5770
    %5879 = vmatpush.msra.mxu0 %v5766
    %5880 = vmatpush.msra.mxu0 %v5762
    %5881 = vmatpush.msra.mxu0 %v5758
    %5882 = vmatpush.msra.mxu0 %v5754
    %5883 = vmatpush.msra.mxu0 %v5750
    %5884 = vmatpush.msra.mxu0 %v5746
    %5885 = vmatpush.msra.mxu0 %v5742
    %5886 = vmatpush.msra.mxu0 %v5738
    %5887 = vmatpush.msra.mxu0 %v5734
    %5888 = vmatpush.msra.mxu0 %v5730
    %5889 = vmatpush.msra.mxu0 %v5726
    %5890 = vmatpush.msra.mxu0 %v5722
    %5891 = vmatpush.msra.mxu0 %v5718
    %5892 = vmatpush.msra.mxu0 %v5714
    %5893 = vmatpush.msra.mxu0 %v5710
    %5894 = vmatmul.f32.gmra.mxu0 %v5775
    %v5895 = vpop.f32.mrf.mxu0
    %v5896 = vadd.f32 %v5876, %v5895
    %5897 = vdwg.mxu0
    %5898 = vmatpush.msra.mxu0 %v5707
    %5899 = vmatpush.msra.mxu0 %v5703
    %5900 = vmatpush.msra.mxu0 %v5699
    %5901 = vmatpush.msra.mxu0 %v5695
    %5902 = vmatpush.msra.mxu0 %v5691
    %5903 = vmatpush.msra.mxu0 %v5687
    %5904 = vmatpush.msra.mxu0 %v5683
    %5905 = vmatpush.msra.mxu0 %v5679
    %5906 = vmatpush.msra.mxu0 %v5675
    %5907 = vmatpush.msra.mxu0 %v5671
    %5908 = vmatpush.msra.mxu0 %v5667
    %5909 = vmatpush.msra.mxu0 %v5663
    %5910 = vmatpush.msra.mxu0 %v5659
    %5911 = vmatpush.msra.mxu0 %v5655
    %5912 = vmatpush.msra.mxu0 %v5651
    %5913 = vmatpush.msra.mxu0 %v5647
    %5914 = vmatmul.f32.gmra.mxu0 %v5774
    %v5915 = vpop.f32.mrf.mxu0
    %v5916 = vadd.f32 0.0, %v5915
    %5917 = vdwg.mxu0
    %5918 = vmatpush.msra.mxu0 %v5771
    %5919 = vmatpush.msra.mxu0 %v5767
    %5920 = vmatpush.msra.mxu0 %v5763
    %5921 = vmatpush.msra.mxu0 %v5759
    %5922 = vmatpush.msra.mxu0 %v5755
    %5923 = vmatpush.msra.mxu0 %v5751
    %5924 = vmatpush.msra.mxu0 %v5747
    %5925 = vmatpush.msra.mxu0 %v5743
    %5926 = vmatpush.msra.mxu0 %v5739
    %5927 = vmatpush.msra.mxu0 %v5735
    %5928 = vmatpush.msra.mxu0 %v5731
    %5929 = vmatpush.msra.mxu0 %v5727
    %5930 = vmatpush.msra.mxu0 %v5723
    %5931 = vmatpush.msra.mxu0 %v5719
    %5932 = vmatpush.msra.mxu0 %v5715
    %5933 = vmatpush.msra.mxu0 %v5711
    %5934 = vmatmul.f32.gmra.mxu0 %v5775
    %v5935 = vpop.f32.mrf.mxu0
    %v5936 = vadd.f32 %v5916, %v5935
    %5937 = vdwg.mxu0
    %v5938 = vadd.f32 %v5638, %v5816
    %v5939 = vadd.f32 %v5639, %v5856
    %v5940 = vadd.f32 %v5640, %v5896
    %v5941 = vadd.f32 %v5641, %v5936
    %v5942 = vld [vmem:[#allocation8] sm:$0xf]
    %s5943 = scalar_lea.vmem [#allocation17], 3072
    %v5944 = vld [vmem:[%s5943] sm:$0xff]
    %v5945 = vld [vmem:[%s5943 + $0x8] sm:$0xff]
    %v5946 = vld [vmem:[%s5943 + $0x10] sm:$0xff]
    %v5947 = vld [vmem:[%s5943 + $0x18] sm:$0xff]
    %v5948 = vld [vmem:[%s5943 + $0x20] sm:$0xff]
    %v5949 = vld [vmem:[%s5943 + $0x28] sm:$0xff]
    %v5950 = vld [vmem:[%s5943 + $0x30] sm:$0xff]
    %v5951 = vld [vmem:[%s5943 + $0x38] sm:$0xff]
    %v5952 = vld [vmem:[%s5943 + $0x40] sm:$0xff]
    %v5953 = vld [vmem:[%s5943 + $0x48] sm:$0xff]
    %v5954 = vld [vmem:[%s5943 + $0x50] sm:$0xff]
    %v5955 = vld [vmem:[%s5943 + $0x58] sm:$0xff]
    %v5956 = vld [vmem:[%s5943 + $0x60] sm:$0xff]
    %v5957 = vld [vmem:[%s5943 + $0x68] sm:$0xff]
    %v5958 = vld [vmem:[%s5943 + $0x70] sm:$0xff]
    %v5959 = vld [vmem:[%s5943 + $0x78] sm:$0xff]
    %v5960 = vld [vmem:[%s5943 + $0x80] sm:$0xff]
    %v5961 = vld [vmem:[%s5943 + $0x88] sm:$0xff]
    %v5962 = vld [vmem:[%s5943 + $0x90] sm:$0xff]
    %v5963 = vld [vmem:[%s5943 + $0x98] sm:$0xff]
    %v5964 = vld [vmem:[%s5943 + $0xa0] sm:$0xff]
    %v5965 = vld [vmem:[%s5943 + $0xa8] sm:$0xff]
    %v5966 = vld [vmem:[%s5943 + $0xb0] sm:$0xff]
    %v5967 = vld [vmem:[%s5943 + $0xb8] sm:$0xff]
    %v5968 = vld [vmem:[%s5943 + $0xc0] sm:$0xff]
    %v5969 = vld [vmem:[%s5943 + $0xc8] sm:$0xff]
    %v5970 = vld [vmem:[%s5943 + $0xd0] sm:$0xff]
    %v5971 = vld [vmem:[%s5943 + $0xd8] sm:$0xff]
    %v5972 = vld [vmem:[%s5943 + $0xe0] sm:$0xff]
    %v5973 = vld [vmem:[%s5943 + $0xe8] sm:$0xff]
    %v5974 = vld [vmem:[%s5943 + $0xf0] sm:$0xff]
    %v5975 = vld [vmem:[%s5943 + $0xf8] sm:$0xff]
    %v5976 = vld [vmem:[%s5943 + $0x100] sm:$0xff]
    %v5977 = vld [vmem:[%s5943 + $0x108] sm:$0xff]
    %v5978 = vld [vmem:[%s5943 + $0x110] sm:$0xff]
    %v5979 = vld [vmem:[%s5943 + $0x118] sm:$0xff]
    %v5980 = vld [vmem:[%s5943 + $0x120] sm:$0xff]
    %v5981 = vld [vmem:[%s5943 + $0x128] sm:$0xff]
    %v5982 = vld [vmem:[%s5943 + $0x130] sm:$0xff]
    %v5983 = vld [vmem:[%s5943 + $0x138] sm:$0xff]
    %v5984 = vld [vmem:[%s5943 + $0x140] sm:$0xff]
    %v5985 = vld [vmem:[%s5943 + $0x148] sm:$0xff]
    %v5986 = vld [vmem:[%s5943 + $0x150] sm:$0xff]
    %v5987 = vld [vmem:[%s5943 + $0x158] sm:$0xff]
    %v5988 = vld [vmem:[%s5943 + $0x160] sm:$0xff]
    %v5989 = vld [vmem:[%s5943 + $0x168] sm:$0xff]
    %v5990 = vld [vmem:[%s5943 + $0x170] sm:$0xff]
    %v5991 = vld [vmem:[%s5943 + $0x178] sm:$0xff]
    %v5992 = vld [vmem:[%s5943 + $0x180] sm:$0xff]
    %v5993 = vld [vmem:[%s5943 + $0x188] sm:$0xff]
    %v5994 = vld [vmem:[%s5943 + $0x190] sm:$0xff]
    %v5995 = vld [vmem:[%s5943 + $0x198] sm:$0xff]
    %v5996 = vld [vmem:[%s5943 + $0x1a0] sm:$0xff]
    %v5997 = vld [vmem:[%s5943 + $0x1a8] sm:$0xff]
    %v5998 = vld [vmem:[%s5943 + $0x1b0] sm:$0xff]
    %v5999 = vld [vmem:[%s5943 + $0x1b8] sm:$0xff]
    %v6000 = vld [vmem:[%s5943 + $0x1c0] sm:$0xff]
    %v6001 = vld [vmem:[%s5943 + $0x1c8] sm:$0xff]
    %v6002 = vld [vmem:[%s5943 + $0x1d0] sm:$0xff]
    %v6003 = vld [vmem:[%s5943 + $0x1d8] sm:$0xff]
    %v6004 = vld [vmem:[%s5943 + $0x1e0] sm:$0xff]
    %v6005 = vld [vmem:[%s5943 + $0x1e8] sm:$0xff]
    %v6006 = vld [vmem:[%s5943 + $0x1f0] sm:$0xff]
    %v6007 = vld [vmem:[%s5943 + $0x1f8] sm:$0xff]
    %v6008 = vld [vmem:[%s5943 + $0x200] sm:$0xff]
    %v6009 = vld [vmem:[%s5943 + $0x208] sm:$0xff]
    %v6010 = vld [vmem:[%s5943 + $0x210] sm:$0xff]
    %v6011 = vld [vmem:[%s5943 + $0x218] sm:$0xff]
    %v6012 = vld [vmem:[%s5943 + $0x220] sm:$0xff]
    %v6013 = vld [vmem:[%s5943 + $0x228] sm:$0xff]
    %v6014 = vld [vmem:[%s5943 + $0x230] sm:$0xff]
    %v6015 = vld [vmem:[%s5943 + $0x238] sm:$0xff]
    %v6016 = vld [vmem:[%s5943 + $0x240] sm:$0xff]
    %v6017 = vld [vmem:[%s5943 + $0x248] sm:$0xff]
    %v6018 = vld [vmem:[%s5943 + $0x250] sm:$0xff]
    %v6019 = vld [vmem:[%s5943 + $0x258] sm:$0xff]
    %v6020 = vld [vmem:[%s5943 + $0x260] sm:$0xff]
    %v6021 = vld [vmem:[%s5943 + $0x268] sm:$0xff]
    %v6022 = vld [vmem:[%s5943 + $0x270] sm:$0xff]
    %v6023 = vld [vmem:[%s5943 + $0x278] sm:$0xff]
    %v6024 = vld [vmem:[%s5943 + $0x280] sm:$0xff]
    %v6025 = vld [vmem:[%s5943 + $0x288] sm:$0xff]
    %v6026 = vld [vmem:[%s5943 + $0x290] sm:$0xff]
    %v6027 = vld [vmem:[%s5943 + $0x298] sm:$0xff]
    %v6028 = vld [vmem:[%s5943 + $0x2a0] sm:$0xff]
    %v6029 = vld [vmem:[%s5943 + $0x2a8] sm:$0xff]
    %v6030 = vld [vmem:[%s5943 + $0x2b0] sm:$0xff]
    %v6031 = vld [vmem:[%s5943 + $0x2b8] sm:$0xff]
    %v6032 = vld [vmem:[%s5943 + $0x2c0] sm:$0xff]
    %v6033 = vld [vmem:[%s5943 + $0x2c8] sm:$0xff]
    %v6034 = vld [vmem:[%s5943 + $0x2d0] sm:$0xff]
    %v6035 = vld [vmem:[%s5943 + $0x2d8] sm:$0xff]
    %v6036 = vld [vmem:[%s5943 + $0x2e0] sm:$0xff]
    %v6037 = vld [vmem:[%s5943 + $0x2e8] sm:$0xff]
    %v6038 = vld [vmem:[%s5943 + $0x2f0] sm:$0xff]
    %v6039 = vld [vmem:[%s5943 + $0x2f8] sm:$0xff]
    %v6040 = vld [vmem:[%s5943 + $0x300] sm:$0xff]
    %v6041 = vld [vmem:[%s5943 + $0x308] sm:$0xff]
    %v6042 = vld [vmem:[%s5943 + $0x310] sm:$0xff]
    %v6043 = vld [vmem:[%s5943 + $0x318] sm:$0xff]
    %v6044 = vld [vmem:[%s5943 + $0x320] sm:$0xff]
    %v6045 = vld [vmem:[%s5943 + $0x328] sm:$0xff]
    %v6046 = vld [vmem:[%s5943 + $0x330] sm:$0xff]
    %v6047 = vld [vmem:[%s5943 + $0x338] sm:$0xff]
    %v6048 = vld [vmem:[%s5943 + $0x340] sm:$0xff]
    %v6049 = vld [vmem:[%s5943 + $0x348] sm:$0xff]
    %v6050 = vld [vmem:[%s5943 + $0x350] sm:$0xff]
    %v6051 = vld [vmem:[%s5943 + $0x358] sm:$0xff]
    %v6052 = vld [vmem:[%s5943 + $0x360] sm:$0xff]
    %v6053 = vld [vmem:[%s5943 + $0x368] sm:$0xff]
    %v6054 = vld [vmem:[%s5943 + $0x370] sm:$0xff]
    %v6055 = vld [vmem:[%s5943 + $0x378] sm:$0xff]
    %v6056 = vld [vmem:[%s5943 + $0x380] sm:$0xff]
    %v6057 = vld [vmem:[%s5943 + $0x388] sm:$0xff]
    %v6058 = vld [vmem:[%s5943 + $0x390] sm:$0xff]
    %v6059 = vld [vmem:[%s5943 + $0x398] sm:$0xff]
    %v6060 = vld [vmem:[%s5943 + $0x3a0] sm:$0xff]
    %v6061 = vld [vmem:[%s5943 + $0x3a8] sm:$0xff]
    %v6062 = vld [vmem:[%s5943 + $0x3b0] sm:$0xff]
    %v6063 = vld [vmem:[%s5943 + $0x3b8] sm:$0xff]
    %v6064 = vld [vmem:[%s5943 + $0x3c0] sm:$0xff]
    %v6065 = vld [vmem:[%s5943 + $0x3c8] sm:$0xff]
    %v6066 = vld [vmem:[%s5943 + $0x3d0] sm:$0xff]
    %v6067 = vld [vmem:[%s5943 + $0x3d8] sm:$0xff]
    %v6068 = vld [vmem:[%s5943 + $0x3e0] sm:$0xff]
    %v6069 = vld [vmem:[%s5943 + $0x3e8] sm:$0xff]
    %v6070 = vld [vmem:[%s5943 + $0x3f0] sm:$0xff]
    %v6071 = vld [vmem:[%s5943 + $0x3f8] sm:$0xff]
    %6073 = vst [vmem:[#allocation1] ss:$4 sm:$0xff] %v5942
    %v6074 = vld.sshfl [vmem:[#allocation1] sm:$0xff pattern:$0x73625140]
    %v6075 = vld.sshfl [vmem:[#allocation1 + $0x8] sm:$0xff pattern:$0x73625140]
    %6078 = vmatpush.msra.mxu0 %v6004
    %6079 = vmatpush.msra.mxu0 %v6000
    %6080 = vmatpush.msra.mxu0 %v5996
    %6081 = vmatpush.msra.mxu0 %v5992
    %6082 = vmatpush.msra.mxu0 %v5988
    %6083 = vmatpush.msra.mxu0 %v5984
    %6084 = vmatpush.msra.mxu0 %v5980
    %6085 = vmatpush.msra.mxu0 %v5976
    %6086 = vmatpush.msra.mxu0 %v5972
    %6087 = vmatpush.msra.mxu0 %v5968
    %6088 = vmatpush.msra.mxu0 %v5964
    %6089 = vmatpush.msra.mxu0 %v5960
    %6090 = vmatpush.msra.mxu0 %v5956
    %6091 = vmatpush.msra.mxu0 %v5952
    %6092 = vmatpush.msra.mxu0 %v5948
    %6093 = vmatpush.msra.mxu0 %v5944
    %6094 = vmatmul.f32.gmra.mxu0 %v6074
    %v6095 = vpop.f32.mrf.mxu0
    %v6096 = vadd.f32 0.0, %v6095
    %6097 = vdwg.mxu0
    %6098 = vmatpush.msra.mxu0 %v6068
    %6099 = vmatpush.msra.mxu0 %v6064
    %6100 = vmatpush.msra.mxu0 %v6060
    %6101 = vmatpush.msra.mxu0 %v6056
    %6102 = vmatpush.msra.mxu0 %v6052
    %6103 = vmatpush.msra.mxu0 %v6048
    %6104 = vmatpush.msra.mxu0 %v6044
    %6105 = vmatpush.msra.mxu0 %v6040
    %6106 = vmatpush.msra.mxu0 %v6036
    %6107 = vmatpush.msra.mxu0 %v6032
    %6108 = vmatpush.msra.mxu0 %v6028
    %6109 = vmatpush.msra.mxu0 %v6024
    %6110 = vmatpush.msra.mxu0 %v6020
    %6111 = vmatpush.msra.mxu0 %v6016
    %6112 = vmatpush.msra.mxu0 %v6012
    %6113 = vmatpush.msra.mxu0 %v6008
    %6114 = vmatmul.f32.gmra.mxu0 %v6075
    %v6115 = vpop.f32.mrf.mxu0
    %v6116 = vadd.f32 %v6096, %v6115
    %6117 = vdwg.mxu0
    %6118 = vmatpush.msra.mxu0 %v6005
    %6119 = vmatpush.msra.mxu0 %v6001
    %6120 = vmatpush.msra.mxu0 %v5997
    %6121 = vmatpush.msra.mxu0 %v5993
    %6122 = vmatpush.msra.mxu0 %v5989
    %6123 = vmatpush.msra.mxu0 %v5985
    %6124 = vmatpush.msra.mxu0 %v5981
    %6125 = vmatpush.msra.mxu0 %v5977
    %6126 = vmatpush.msra.mxu0 %v5973
    %6127 = vmatpush.msra.mxu0 %v5969
    %6128 = vmatpush.msra.mxu0 %v5965
    %6129 = vmatpush.msra.mxu0 %v5961
    %6130 = vmatpush.msra.mxu0 %v5957
    %6131 = vmatpush.msra.mxu0 %v5953
    %6132 = vmatpush.msra.mxu0 %v5949
    %6133 = vmatpush.msra.mxu0 %v5945
    %6134 = vmatmul.f32.gmra.mxu0 %v6074
    %v6135 = vpop.f32.mrf.mxu0
    %v6136 = vadd.f32 0.0, %v6135
    %6137 = vdwg.mxu0
    %6138 = vmatpush.msra.mxu0 %v6069
    %6139 = vmatpush.msra.mxu0 %v6065
    %6140 = vmatpush.msra.mxu0 %v6061
    %6141 = vmatpush.msra.mxu0 %v6057
    %6142 = vmatpush.msra.mxu0 %v6053
    %6143 = vmatpush.msra.mxu0 %v6049
    %6144 = vmatpush.msra.mxu0 %v6045
    %6145 = vmatpush.msra.mxu0 %v6041
    %6146 = vmatpush.msra.mxu0 %v6037
    %6147 = vmatpush.msra.mxu0 %v6033
    %6148 = vmatpush.msra.mxu0 %v6029
    %6149 = vmatpush.msra.mxu0 %v6025
    %6150 = vmatpush.msra.mxu0 %v6021
    %6151 = vmatpush.msra.mxu0 %v6017
    %6152 = vmatpush.msra.mxu0 %v6013
    %6153 = vmatpush.msra.mxu0 %v6009
    %6154 = vmatmul.f32.gmra.mxu0 %v6075
    %v6155 = vpop.f32.mrf.mxu0
    %v6156 = vadd.f32 %v6136, %v6155
    %6157 = vdwg.mxu0
    %6158 = vmatpush.msra.mxu0 %v6006
    %6159 = vmatpush.msra.mxu0 %v6002
    %6160 = vmatpush.msra.mxu0 %v5998
    %6161 = vmatpush.msra.mxu0 %v5994
    %6162 = vmatpush.msra.mxu0 %v5990
    %6163 = vmatpush.msra.mxu0 %v5986
    %6164 = vmatpush.msra.mxu0 %v5982
    %6165 = vmatpush.msra.mxu0 %v5978
    %6166 = vmatpush.msra.mxu0 %v5974
    %6167 = vmatpush.msra.mxu0 %v5970
    %6168 = vmatpush.msra.mxu0 %v5966
    %6169 = vmatpush.msra.mxu0 %v5962
    %6170 = vmatpush.msra.mxu0 %v5958
    %6171 = vmatpush.msra.mxu0 %v5954
    %6172 = vmatpush.msra.mxu0 %v5950
    %6173 = vmatpush.msra.mxu0 %v5946
    %6174 = vmatmul.f32.gmra.mxu0 %v6074
    %v6175 = vpop.f32.mrf.mxu0
    %v6176 = vadd.f32 0.0, %v6175
    %6177 = vdwg.mxu0
    %6178 = vmatpush.msra.mxu0 %v6070
    %6179 = vmatpush.msra.mxu0 %v6066
    %6180 = vmatpush.msra.mxu0 %v6062
    %6181 = vmatpush.msra.mxu0 %v6058
    %6182 = vmatpush.msra.mxu0 %v6054
    %6183 = vmatpush.msra.mxu0 %v6050
    %6184 = vmatpush.msra.mxu0 %v6046
    %6185 = vmatpush.msra.mxu0 %v6042
    %6186 = vmatpush.msra.mxu0 %v6038
    %6187 = vmatpush.msra.mxu0 %v6034
    %6188 = vmatpush.msra.mxu0 %v6030
    %6189 = vmatpush.msra.mxu0 %v6026
    %6190 = vmatpush.msra.mxu0 %v6022
    %6191 = vmatpush.msra.mxu0 %v6018
    %6192 = vmatpush.msra.mxu0 %v6014
    %6193 = vmatpush.msra.mxu0 %v6010
    %6194 = vmatmul.f32.gmra.mxu0 %v6075
    %v6195 = vpop.f32.mrf.mxu0
    %v6196 = vadd.f32 %v6176, %v6195
    %6197 = vdwg.mxu0
    %6198 = vmatpush.msra.mxu0 %v6007
    %6199 = vmatpush.msra.mxu0 %v6003
    %6200 = vmatpush.msra.mxu0 %v5999
    %6201 = vmatpush.msra.mxu0 %v5995
    %6202 = vmatpush.msra.mxu0 %v5991
    %6203 = vmatpush.msra.mxu0 %v5987
    %6204 = vmatpush.msra.mxu0 %v5983
    %6205 = vmatpush.msra.mxu0 %v5979
    %6206 = vmatpush.msra.mxu0 %v5975
    %6207 = vmatpush.msra.mxu0 %v5971
    %6208 = vmatpush.msra.mxu0 %v5967
    %6209 = vmatpush.msra.mxu0 %v5963
    %6210 = vmatpush.msra.mxu0 %v5959
    %6211 = vmatpush.msra.mxu0 %v5955
    %6212 = vmatpush.msra.mxu0 %v5951
    %6213 = vmatpush.msra.mxu0 %v5947
    %6214 = vmatmul.f32.gmra.mxu0 %v6074
    %v6215 = vpop.f32.mrf.mxu0
    %v6216 = vadd.f32 0.0, %v6215
    %6217 = vdwg.mxu0
    %6218 = vmatpush.msra.mxu0 %v6071
    %6219 = vmatpush.msra.mxu0 %v6067
    %6220 = vmatpush.msra.mxu0 %v6063
    %6221 = vmatpush.msra.mxu0 %v6059
    %6222 = vmatpush.msra.mxu0 %v6055
    %6223 = vmatpush.msra.mxu0 %v6051
    %6224 = vmatpush.msra.mxu0 %v6047
    %6225 = vmatpush.msra.mxu0 %v6043
    %6226 = vmatpush.msra.mxu0 %v6039
    %6227 = vmatpush.msra.mxu0 %v6035
    %6228 = vmatpush.msra.mxu0 %v6031
    %6229 = vmatpush.msra.mxu0 %v6027
    %6230 = vmatpush.msra.mxu0 %v6023
    %6231 = vmatpush.msra.mxu0 %v6019
    %6232 = vmatpush.msra.mxu0 %v6015
    %6233 = vmatpush.msra.mxu0 %v6011
    %6234 = vmatmul.f32.gmra.mxu0 %v6075
    %v6235 = vpop.f32.mrf.mxu0
    %v6236 = vadd.f32 %v6216, %v6235
    %6237 = vdwg.mxu0
    %v6238 = vadd.f32 %v5938, %v6116
    %v6239 = vadd.f32 %v5939, %v6156
    %v6240 = vadd.f32 %v5940, %v6196
    %v6241 = vadd.f32 %v5941, %v6236
    %v6242 = vmax.f32 %v6238, 0.0
    %v6243 = vmax.f32 %v6239, 0.0
    %v6244 = vmax.f32 %v6240, 0.0
    %v6245 = vmax.f32 %v6241, 0.0
    %v6246 = vld [vmem:[#allocation20] sm:$0xff]
    %v6247 = vld [vmem:[#allocation20 + $0x8] sm:$0xff]
    %v6248 = vld [vmem:[#allocation20 + $0x10] sm:$0xff]
    %v6249 = vld [vmem:[#allocation20 + $0x18] sm:$0xff]
    %v6250 = vld [vmem:[#allocation20 + $0x20] sm:$0xff]
    %v6251 = vld [vmem:[#allocation20 + $0x28] sm:$0xff]
    %v6252 = vld [vmem:[#allocation20 + $0x30] sm:$0xff]
    %v6253 = vld [vmem:[#allocation20 + $0x38] sm:$0xff]
    %v6254 = vld [vmem:[#allocation20 + $0x40] sm:$0xff]
    %v6255 = vld [vmem:[#allocation20 + $0x48] sm:$0xff]
    %v6256 = vld [vmem:[#allocation20 + $0x50] sm:$0xff]
    %v6257 = vld [vmem:[#allocation20 + $0x58] sm:$0xff]
    %v6258 = vld [vmem:[#allocation20 + $0x60] sm:$0xff]
    %v6259 = vld [vmem:[#allocation20 + $0x68] sm:$0xff]
    %v6260 = vld [vmem:[#allocation20 + $0x70] sm:$0xff]
    %v6261 = vld [vmem:[#allocation20 + $0x78] sm:$0xff]
    %v6262 = vld [vmem:[#allocation20 + $0x80] sm:$0xff]
    %v6263 = vld [vmem:[#allocation20 + $0x88] sm:$0xff]
    %v6264 = vld [vmem:[#allocation20 + $0x90] sm:$0xff]
    %v6265 = vld [vmem:[#allocation20 + $0x98] sm:$0xff]
    %v6266 = vld [vmem:[#allocation20 + $0xa0] sm:$0xff]
    %v6267 = vld [vmem:[#allocation20 + $0xa8] sm:$0xff]
    %v6268 = vld [vmem:[#allocation20 + $0xb0] sm:$0xff]
    %v6269 = vld [vmem:[#allocation20 + $0xb8] sm:$0xff]
    %v6270 = vld [vmem:[#allocation20 + $0xc0] sm:$0xff]
    %v6271 = vld [vmem:[#allocation20 + $0xc8] sm:$0xff]
    %v6272 = vld [vmem:[#allocation20 + $0xd0] sm:$0xff]
    %v6273 = vld [vmem:[#allocation20 + $0xd8] sm:$0xff]
    %v6274 = vld [vmem:[#allocation20 + $0xe0] sm:$0xff]
    %v6275 = vld [vmem:[#allocation20 + $0xe8] sm:$0xff]
    %v6276 = vld [vmem:[#allocation20 + $0xf0] sm:$0xff]
    %v6277 = vld [vmem:[#allocation20 + $0xf8] sm:$0xff]
    %v6278 = vld [vmem:[#allocation20 + $0x100] sm:$0xff]
    %v6279 = vld [vmem:[#allocation20 + $0x108] sm:$0xff]
    %v6280 = vld [vmem:[#allocation20 + $0x110] sm:$0xff]
    %v6281 = vld [vmem:[#allocation20 + $0x118] sm:$0xff]
    %v6282 = vld [vmem:[#allocation20 + $0x120] sm:$0xff]
    %v6283 = vld [vmem:[#allocation20 + $0x128] sm:$0xff]
    %v6284 = vld [vmem:[#allocation20 + $0x130] sm:$0xff]
    %v6285 = vld [vmem:[#allocation20 + $0x138] sm:$0xff]
    %v6286 = vld [vmem:[#allocation20 + $0x140] sm:$0xff]
    %v6287 = vld [vmem:[#allocation20 + $0x148] sm:$0xff]
    %v6288 = vld [vmem:[#allocation20 + $0x150] sm:$0xff]
    %v6289 = vld [vmem:[#allocation20 + $0x158] sm:$0xff]
    %v6290 = vld [vmem:[#allocation20 + $0x160] sm:$0xff]
    %v6291 = vld [vmem:[#allocation20 + $0x168] sm:$0xff]
    %v6292 = vld [vmem:[#allocation20 + $0x170] sm:$0xff]
    %v6293 = vld [vmem:[#allocation20 + $0x178] sm:$0xff]
    %v6294 = vld [vmem:[#allocation20 + $0x180] sm:$0xff]
    %v6295 = vld [vmem:[#allocation20 + $0x188] sm:$0xff]
    %v6296 = vld [vmem:[#allocation20 + $0x190] sm:$0xff]
    %v6297 = vld [vmem:[#allocation20 + $0x198] sm:$0xff]
    %v6298 = vld [vmem:[#allocation20 + $0x1a0] sm:$0xff]
    %v6299 = vld [vmem:[#allocation20 + $0x1a8] sm:$0xff]
    %v6300 = vld [vmem:[#allocation20 + $0x1b0] sm:$0xff]
    %v6301 = vld [vmem:[#allocation20 + $0x1b8] sm:$0xff]
    %v6302 = vld [vmem:[#allocation20 + $0x1c0] sm:$0xff]
    %v6303 = vld [vmem:[#allocation20 + $0x1c8] sm:$0xff]
    %v6304 = vld [vmem:[#allocation20 + $0x1d0] sm:$0xff]
    %v6305 = vld [vmem:[#allocation20 + $0x1d8] sm:$0xff]
    %v6306 = vld [vmem:[#allocation20 + $0x1e0] sm:$0xff]
    %v6307 = vld [vmem:[#allocation20 + $0x1e8] sm:$0xff]
    %v6308 = vld [vmem:[#allocation20 + $0x1f0] sm:$0xff]
    %v6309 = vld [vmem:[#allocation20 + $0x1f8] sm:$0xff]
    %v6310 = vld [vmem:[#allocation21] sm:$0x1]
    %v6312 = vperm.slane %v6310, 0
    %6314 = vmatpush.msra.mxu0 %v6261
    %6315 = vmatpush.msra.mxu0 %v6260
    %6316 = vmatpush.msra.mxu0 %v6259
    %6317 = vmatpush.msra.mxu0 %v6258
    %6318 = vmatpush.msra.mxu0 %v6257
    %6319 = vmatpush.msra.mxu0 %v6256
    %6320 = vmatpush.msra.mxu0 %v6255
    %6321 = vmatpush.msra.mxu0 %v6254
    %6322 = vmatpush.msra.mxu0 %v6253
    %6323 = vmatpush.msra.mxu0 %v6252
    %6324 = vmatpush.msra.mxu0 %v6251
    %6325 = vmatpush.msra.mxu0 %v6250
    %6326 = vmatpush.msra.mxu0 %v6249
    %6327 = vmatpush.msra.mxu0 %v6248
    %6328 = vmatpush.msra.mxu0 %v6247
    %6329 = vmatpush.msra.mxu0 %v6246
    %6330 = vmatmul.f32.gmra.mxu0 %v6242
    %v6331 = vpop.f32.mrf.mxu0
    %v6332 = vadd.f32 %v6312, %v6331
    %6333 = vdwg.mxu0
    %6334 = vmatpush.msra.mxu0 %v6277
    %6335 = vmatpush.msra.mxu0 %v6276
    %6336 = vmatpush.msra.mxu0 %v6275
    %6337 = vmatpush.msra.mxu0 %v6274
    %6338 = vmatpush.msra.mxu0 %v6273
    %6339 = vmatpush.msra.mxu0 %v6272
    %6340 = vmatpush.msra.mxu0 %v6271
    %6341 = vmatpush.msra.mxu0 %v6270
    %6342 = vmatpush.msra.mxu0 %v6269
    %6343 = vmatpush.msra.mxu0 %v6268
    %6344 = vmatpush.msra.mxu0 %v6267
    %6345 = vmatpush.msra.mxu0 %v6266
    %6346 = vmatpush.msra.mxu0 %v6265
    %6347 = vmatpush.msra.mxu0 %v6264
    %6348 = vmatpush.msra.mxu0 %v6263
    %6349 = vmatpush.msra.mxu0 %v6262
    %6350 = vmatmul.f32.gmra.mxu0 %v6243
    %v6351 = vpop.f32.mrf.mxu0
    %v6352 = vadd.f32 %v6332, %v6351
    %6353 = vdwg.mxu0
    %6354 = vmatpush.msra.mxu0 %v6293
    %6355 = vmatpush.msra.mxu0 %v6292
    %6356 = vmatpush.msra.mxu0 %v6291
    %6357 = vmatpush.msra.mxu0 %v6290
    %6358 = vmatpush.msra.mxu0 %v6289
    %6359 = vmatpush.msra.mxu0 %v6288
    %6360 = vmatpush.msra.mxu0 %v6287
    %6361 = vmatpush.msra.mxu0 %v6286
    %6362 = vmatpush.msra.mxu0 %v6285
    %6363 = vmatpush.msra.mxu0 %v6284
    %6364 = vmatpush.msra.mxu0 %v6283
    %6365 = vmatpush.msra.mxu0 %v6282
    %6366 = vmatpush.msra.mxu0 %v6281
    %6367 = vmatpush.msra.mxu0 %v6280
    %6368 = vmatpush.msra.mxu0 %v6279
    %6369 = vmatpush.msra.mxu0 %v6278
    %6370 = vmatmul.f32.gmra.mxu0 %v6244
    %v6371 = vpop.f32.mrf.mxu0
    %v6372 = vadd.f32 %v6352, %v6371
    %6373 = vdwg.mxu0
    %6374 = vmatpush.msra.mxu0 %v6309
    %6375 = vmatpush.msra.mxu0 %v6308
    %6376 = vmatpush.msra.mxu0 %v6307
    %6377 = vmatpush.msra.mxu0 %v6306
    %6378 = vmatpush.msra.mxu0 %v6305
    %6379 = vmatpush.msra.mxu0 %v6304
    %6380 = vmatpush.msra.mxu0 %v6303
    %6381 = vmatpush.msra.mxu0 %v6302
    %6382 = vmatpush.msra.mxu0 %v6301
    %6383 = vmatpush.msra.mxu0 %v6300
    %6384 = vmatpush.msra.mxu0 %v6299
    %6385 = vmatpush.msra.mxu0 %v6298
    %6386 = vmatpush.msra.mxu0 %v6297
    %6387 = vmatpush.msra.mxu0 %v6296
    %6388 = vmatpush.msra.mxu0 %v6295
    %6389 = vmatpush.msra.mxu0 %v6294
    %6390 = vmatmul.f32.gmra.mxu0 %v6245
    %v6391 = vpop.f32.mrf.mxu0
    %v6392 = vadd.f32 %v6372, %v6391
    %6393 = vdwg.mxu0
    %6394 = vst [vmem:[#allocation23] sm:$0x3] %v6392
    // Predicated region
    $region70: #{tpu_custom_call.1} parent=1 // pred_check
      _
    $region71: #{tpu_custom_call.1} parent=1 // pred_check_branch
      %6396 = sbr.rel (0) target = $region73
    $region72: #{tpu_custom_call.1} parent=1 // pred_region
      %6398 = vsyncadd [#allocation11], 0
      %s6400 = sshll.u32 [#allocation23], 4
      %s6401 = int_to_ptr.vmem [resolvable:$true] %s6400
      %s6402 = sshll.u32 %s9, 4
      %s6403 = int_to_ptr.hbm [resolvable:$true] %s6402
      %6405 = dma.vmem_to_hbm [thread:$0]  %s6401, 32, %s6403, [#allocation11]
    $region73: #{tpu_custom_call.1} parent=1 // pred_fallthru
      _
    // Predicated region
    $region74: #{tpu_custom_call.1} parent=1 // pred_check
      _
    $region75: #{tpu_custom_call.1} parent=1 // pred_check_branch
      %6407 = sbr.rel (0) target = $region77
    $region76: #{tpu_custom_call.1} parent=1 // pred_region
      %6409 = dma.done [#allocation11], 32
    $region77: #{tpu_custom_call.1} parent=1 // pred_fallthru
      _
    %6410 = vsyncpa [#allocation10], 1
    %6411 = vsyncpa [#allocation13], 1
    %6412 = vsyncpa [#allocation16], 1
    %6413 = vsyncpa [#allocation19], 1
    %6414 = vsyncpa [#allocation22], 1
    %6415 = vsyncpa [#allocation11], 1

</llo_original>
